<compile_context>
chip_gen: v7x
topology: tpu7x:2x2x1
jax: 0.10.0
libtpu: 0.0.40
codegen_flags: <defaults>
</compile_context>

<pallas_src>
import functools

import jax
import jax.numpy as jnp
from jax import lax
from jax.experimental import pallas as pl
from jax.experimental.pallas import tpu as pltpu


# ----------------------------------------------------------------------------
# Pallas kernels
# ----------------------------------------------------------------------------
def _conv_relu_pool_kernel(x_ref, w_ref, b_ref, o_ref, *, L, Wh, cin_is_one):
    """Fused 3x3 'same' conv + bias + ReLU + 2x2/2 maxpool for one image.

    x_ref: [1, 4, Lp, Cin]  the 4 (row,col)-parity phases of the zero-padded
                            input, each flattened to rows of length Wh (with a
                            few trailing zero rows so every tap slice is in range)
    w_ref: [9, Cin, Cout]   3x3 taps, (di*3+dj)-major, HWIO layout
    b_ref: [1, Cout]
    o_ref: [1, L, Cout]     pooled rows r = ho*Wh + wo (columns wo >= W//2 are
                            don't-care and dropped by the caller)
    """
    pooled = None
    for a in range(2):              # pooling-window row offset
        for b in range(2):          # pooling-window col offset
            acc = None
            for di in range(3):
                for dj in range(3):
                    s, t = a + di, b + dj
                    phase = (s % 2) * 2 + (t % 2)
                    off = (s // 2) * Wh + (t // 2)
                    patch = x_ref[0, phase, off:off + L, :]      # [L, Cin] static slice
                    w_tap = w_ref[di * 3 + dj]                   # [Cin, Cout]
                    if cin_is_one:
                        contrib = patch * w_tap                  # [L,1]*[1,Cout] on VPU
                    else:
                        contrib = jnp.dot(patch, w_tap,
                                          preferred_element_type=jnp.float32)
                    acc = contrib if acc is None else acc + contrib
            y = jnp.maximum(acc + b_ref[...], 0.0)               # bias + ReLU
            pooled = y if pooled is None else jnp.maximum(pooled, y)
    o_ref[0] = pooled.astype(o_ref.dtype)


def _fc_kernel(x_ref, w_ref, b_ref, o_ref):
    acc = jnp.dot(x_ref[...], w_ref[...], preferred_element_type=jnp.float32)
    o_ref[...] = (acc + b_ref[...]).astype(o_ref.dtype)


# ----------------------------------------------------------------------------
# Wrappers around pallas_call
# ----------------------------------------------------------------------------
def conv3x3_relu_pool(a_nhwc, w_hwio, b_row):
    """NHWC 3x3 'same' conv + bias + ReLU + 2x2/2 maxpool, one fused kernel."""
    N, H, W, Cin = a_nhwc.shape
    Cout = w_hwio.shape[-1]
    HO, WO = H // 2, W // 2
    Hh, Wh = (H + 2) // 2, (W + 2) // 2     # parity-phase image dims (pad=1 => even)
    L = HO * Wh                             # pooled rows computed per image
    Lp = Hh * Wh + 8                        # slack so every [off, off+L) slice is in bounds

    # Host glue (tiny): zero-pad spatially, split into 2x2 parity phases, flatten.
    ap = jnp.pad(a_nhwc, ((0, 0), (1, 1), (1, 1), (0, 0)))
    ph = ap.reshape(N, Hh, 2, Wh, 2, Cin).transpose(0, 2, 4, 1, 3, 5)
    ph = ph.reshape(N, 4, Hh * Wh, Cin)
    ph = jnp.pad(ph, ((0, 0), (0, 0), (0, Lp - Hh * Wh), (0, 0)))

    w9 = w_hwio.reshape(9, Cin, Cout)       # (kh,kw) taps major, HWIO minor

    kernel = functools.partial(_conv_relu_pool_kernel,
                               L=L, Wh=Wh, cin_is_one=(Cin == 1))
    out = pl.pallas_call(
        kernel,
        out_shape=jax.ShapeDtypeStruct((N, L, Cout), jnp.float32),
        grid_spec=pltpu.PrefetchScalarGridSpec(
            num_scalar_prefetch=0,
            grid=(N,),
            in_specs=[
                pl.BlockSpec((1, 4, Lp, Cin), lambda n: (n, 0, 0, 0)),
                pl.BlockSpec((9, Cin, Cout), lambda n: (0, 0, 0)),
                pl.BlockSpec((1, Cout), lambda n: (0, 0)),
            ],
            out_specs=pl.BlockSpec((1, L, Cout), lambda n: (n, 0, 0)),
        ),
        compiler_params=pltpu.CompilerParams(dimension_semantics=("parallel",)),
    )(ph, w9, b_row)

    # rows are ho*Wh + wo; drop the (Wh - WO) don't-care columns of each pooled row
    return out.reshape(N, HO, Wh, Cout)[:, :, :WO, :]


def linear_lane_dense(x, w, b, cout):
    """x:[M,K] @ w:[K,cout] + b with cout zero-padded to 128 lanes (dense stores)."""
    M, K = x.shape
    Cp = max(128, ((cout + 127) // 128) * 128)
    wp = jnp.pad(w, ((0, 0), (0, Cp - cout)))
    bp = jnp.pad(b.reshape(1, -1), ((0, 0), (0, Cp - cout)))
    out = pl.pallas_call(
        _fc_kernel,
        out_shape=jax.ShapeDtypeStruct((M, Cp), jnp.float32),
        grid_spec=pltpu.PrefetchScalarGridSpec(
            num_scalar_prefetch=0,
            grid=(1,),
            in_specs=[
                pl.BlockSpec((M, K), lambda i: (0, 0)),
                pl.BlockSpec((K, Cp), lambda i: (0, 0)),
                pl.BlockSpec((1, Cp), lambda i: (0, 0)),
            ],
            out_specs=pl.BlockSpec((M, Cp), lambda i: (0, 0)),
        ),
        compiler_params=pltpu.CompilerParams(dimension_semantics=("arbitrary",)),
    )(x, wp, bp)
    return out[:, :cout]


# ----------------------------------------------------------------------------
# Net forward (matches the PyTorch module semantics)
# ----------------------------------------------------------------------------
def net_forward(x_nchw, params):
    N = x_nchw.shape[0]
    x = jnp.transpose(x_nchw, (0, 2, 3, 1))                       # NCHW -> NHWC

    h1 = conv3x3_relu_pool(x, params["w1"], params["b1"])         # [N,14,14,32]
    h2 = conv3x3_relu_pool(h1, params["w2"], params["b2"])        # [N,7,7,64]

    # fc: PyTorch flattens NCHW -> (C,H,W) order
    xf = jnp.transpose(h2, (0, 3, 1, 2)).reshape(N, 64 * 7 * 7)
    return linear_lane_dense(xf, params["wf"], params["bf"], 10)  # [N,10]


# Pure-JAX reference (independent lowering) for a correctness check.
def reference_forward(x_nchw, params):
    x = jnp.transpose(x_nchw, (0, 2, 3, 1))
    dn = ("NHWC", "HWIO", "NHWC")

    def conv_relu_pool(h, w, b):
        y = lax.conv_general_dilated(h, w, (1, 1), "SAME", dimension_numbers=dn)
        y = jnp.maximum(y + b.reshape(1, 1, 1, -1), 0.0)
        return lax.reduce_window(y, -jnp.inf, lax.max, (1, 2, 2, 1), (1, 2, 2, 1), "VALID")

    h1 = conv_relu_pool(x, params["w1"], params["b1"][0])
    h2 = conv_relu_pool(h1, params["w2"], params["b2"][0])
    xf = jnp.transpose(h2, (0, 3, 1, 2)).reshape(x.shape[0], 64 * 7 * 7)
    return xf @ params["wf"] + params["bf"]


# ----------------------------------------------------------------------------
if __name__ == "__main__":
    key = jax.random.PRNGKey(0)
    kx, k1, k2, k3, k4, k5, k6 = jax.random.split(key, 7)

    # MNIST-like input implied by fc = Linear(64*7*7, 10): 28x28, 1 channel.
    x = jax.random.normal(kx, (2, 1, 28, 28), dtype=jnp.float32)

    params = {
        "w1": jax.random.normal(k1, (3, 3, 1, 32), jnp.float32) * 0.1,    # HWIO
        "b1": jax.random.normal(k2, (1, 32), jnp.float32) * 0.05,
        "w2": jax.random.normal(k3, (3, 3, 32, 64), jnp.float32) * 0.05,  # HWIO
        "b2": jax.random.normal(k4, (1, 64), jnp.float32) * 0.05,
        "wf": jax.random.normal(k5, (64 * 7 * 7, 10), jnp.float32) * 0.02,
        "bf": jax.random.normal(k6, (1, 10), jnp.float32) * 0.05,
    }

    out = jax.jit(net_forward)(x, params)
    out = jax.block_until_ready(out)
    assert out.shape == (2, 10) and out.dtype == jnp.float32

    ref = jax.block_until_ready(reference_forward(x, params))
    assert jnp.allclose(out, ref, atol=5e-3, rtol=5e-3), (
        f"mismatch: max abs err {jnp.max(jnp.abs(out - ref))}")

    print("KERNEL_OK")
</pallas_src>

<mosaic_0001>
module attributes {stable_mosaic.version = 11 : i64} {
  func.func @_conv_relu_pool_kernel(%arg0: i32, %arg1: memref<1x4x233x1xf32, #tpu.memory_space<vmem>>, %arg2: memref<9x1x32xf32, #tpu.memory_space<vmem>>, %arg3: memref<1x32xf32, #tpu.memory_space<vmem>>, %arg4: memref<1x210x32xf32, #tpu.memory_space<vmem>>) attributes {dimension_semantics = [#tpu.dimension_semantics<parallel>], iteration_bounds = array<i64: 2>, scalar_prefetch = 0 : i64, scratch_operands = 0 : i64, tpu.core_type = #tpu.core_type<tc>, window_params = [{transform_indices = @transform_0, window_bounds = array<i64: 1, 4, 233, 1>}, {pipeline_mode = #tpu.pipeline_mode<synchronous>, transform_indices = @transform_1, window_bounds = array<i64: 9, 1, 32>}, {pipeline_mode = #tpu.pipeline_mode<synchronous>, transform_indices = @transform_2, window_bounds = array<i64: 1, 32>}, {transform_indices = @transform_3, window_bounds = array<i64: 1, 210, 32>}]} {
    %c0 = arith.constant 0 : index
    %c0_0 = arith.constant 0 : index
    %c0_1 = arith.constant 0 : index
    %c0_2 = arith.constant 0 : index
    %0 = vector.load %arg1[%c0, %c0_0, %c0_1, %c0_2] : memref<1x4x233x1xf32, #tpu.memory_space<vmem>>, vector<1x1x210x1xf32>
    %1 = vector.shape_cast %0 : vector<1x1x210x1xf32> to vector<210x1xf32>
    %c0_3 = arith.constant 0 : index
    %c0_4 = arith.constant 0 : index
    %c0_5 = arith.constant 0 : index
    %2 = vector.load %arg2[%c0_3, %c0_4, %c0_5] : memref<9x1x32xf32, #tpu.memory_space<vmem>>, vector<1x1x32xf32>
    %3 = vector.shape_cast %2 : vector<1x1x32xf32> to vector<1x32xf32>
    %4 = vector.broadcast %1 : vector<210x1xf32> to vector<210x32xf32>
    %5 = vector.broadcast %3 : vector<1x32xf32> to vector<210x32xf32>
    %6 = arith.mulf %4, %5 : vector<210x32xf32>
    %c0_6 = arith.constant 0 : index
    %c1 = arith.constant 1 : index
    %c0_7 = arith.constant 0 : index
    %c0_8 = arith.constant 0 : index
    %7 = vector.load %arg1[%c0_6, %c1, %c0_7, %c0_8] : memref<1x4x233x1xf32, #tpu.memory_space<vmem>>, vector<1x1x210x1xf32>
    %8 = vector.shape_cast %7 : vector<1x1x210x1xf32> to vector<210x1xf32>
    %c1_9 = arith.constant 1 : index
    %c0_10 = arith.constant 0 : index
    %c0_11 = arith.constant 0 : index
    %9 = vector.load %arg2[%c1_9, %c0_10, %c0_11] : memref<9x1x32xf32, #tpu.memory_space<vmem>>, vector<1x1x32xf32>
    %10 = vector.shape_cast %9 : vector<1x1x32xf32> to vector<1x32xf32>
    %11 = vector.broadcast %8 : vector<210x1xf32> to vector<210x32xf32>
    %12 = vector.broadcast %10 : vector<1x32xf32> to vector<210x32xf32>
    %13 = arith.mulf %11, %12 : vector<210x32xf32>
    %14 = arith.addf %6, %13 : vector<210x32xf32>
    %c0_12 = arith.constant 0 : index
    %c0_13 = arith.constant 0 : index
    %c1_14 = arith.constant 1 : index
    %c0_15 = arith.constant 0 : index
    %15 = vector.load %arg1[%c0_12, %c0_13, %c1_14, %c0_15] : memref<1x4x233x1xf32, #tpu.memory_space<vmem>>, vector<1x1x210x1xf32>
    %16 = vector.shape_cast %15 : vector<1x1x210x1xf32> to vector<210x1xf32>
    %c2 = arith.constant 2 : index
    %c0_16 = arith.constant 0 : index
    %c0_17 = arith.constant 0 : index
    %17 = vector.load %arg2[%c2, %c0_16, %c0_17] : memref<9x1x32xf32, #tpu.memory_space<vmem>>, vector<1x1x32xf32>
    %18 = vector.shape_cast %17 : vector<1x1x32xf32> to vector<1x32xf32>
    %19 = vector.broadcast %16 : vector<210x1xf32> to vector<210x32xf32>
    %20 = vector.broadcast %18 : vector<1x32xf32> to vector<210x32xf32>
    %21 = arith.mulf %19, %20 : vector<210x32xf32>
    %22 = arith.addf %14, %21 : vector<210x32xf32>
    %c0_18 = arith.constant 0 : index
    %c2_19 = arith.constant 2 : index
    %c0_20 = arith.constant 0 : index
    %c0_21 = arith.constant 0 : index
    %23 = vector.load %arg1[%c0_18, %c2_19, %c0_20, %c0_21] : memref<1x4x233x1xf32, #tpu.memory_space<vmem>>, vector<1x1x210x1xf32>
    %24 = vector.shape_cast %23 : vector<1x1x210x1xf32> to vector<210x1xf32>
    %c3 = arith.constant 3 : index
    %c0_22 = arith.constant 0 : index
    %c0_23 = arith.constant 0 : index
    %25 = vector.load %arg2[%c3, %c0_22, %c0_23] : memref<9x1x32xf32, #tpu.memory_space<vmem>>, vector<1x1x32xf32>
    %26 = vector.shape_cast %25 : vector<1x1x32xf32> to vector<1x32xf32>
    %27 = vector.broadcast %24 : vector<210x1xf32> to vector<210x32xf32>
    %28 = vector.broadcast %26 : vector<1x32xf32> to vector<210x32xf32>
    %29 = arith.mulf %27, %28 : vector<210x32xf32>
    %30 = arith.addf %22, %29 : vector<210x32xf32>
    %c0_24 = arith.constant 0 : index
    %c3_25 = arith.constant 3 : index
    %c0_26 = arith.constant 0 : index
    %c0_27 = arith.constant 0 : index
    %31 = vector.load %arg1[%c0_24, %c3_25, %c0_26, %c0_27] : memref<1x4x233x1xf32, #tpu.memory_space<vmem>>, vector<1x1x210x1xf32>
    %32 = vector.shape_cast %31 : vector<1x1x210x1xf32> to vector<210x1xf32>
    %c4 = arith.constant 4 : index
    %c0_28 = arith.constant 0 : index
    %c0_29 = arith.constant 0 : index
    %33 = vector.load %arg2[%c4, %c0_28, %c0_29] : memref<9x1x32xf32, #tpu.memory_space<vmem>>, vector<1x1x32xf32>
    %34 = vector.shape_cast %33 : vector<1x1x32xf32> to vector<1x32xf32>
    %35 = vector.broadcast %32 : vector<210x1xf32> to vector<210x32xf32>
    %36 = vector.broadcast %34 : vector<1x32xf32> to vector<210x32xf32>
    %37 = arith.mulf %35, %36 : vector<210x32xf32>
    %38 = arith.addf %30, %37 : vector<210x32xf32>
    %c0_30 = arith.constant 0 : index
    %c2_31 = arith.constant 2 : index
    %c1_32 = arith.constant 1 : index
    %c0_33 = arith.constant 0 : index
    %39 = vector.load %arg1[%c0_30, %c2_31, %c1_32, %c0_33] : memref<1x4x233x1xf32, #tpu.memory_space<vmem>>, vector<1x1x210x1xf32>
    %40 = vector.shape_cast %39 : vector<1x1x210x1xf32> to vector<210x1xf32>
    %c5 = arith.constant 5 : index
    %c0_34 = arith.constant 0 : index
    %c0_35 = arith.constant 0 : index
    %41 = vector.load %arg2[%c5, %c0_34, %c0_35] : memref<9x1x32xf32, #tpu.memory_space<vmem>>, vector<1x1x32xf32>
    %42 = vector.shape_cast %41 : vector<1x1x32xf32> to vector<1x32xf32>
    %43 = vector.broadcast %40 : vector<210x1xf32> to vector<210x32xf32>
    %44 = vector.broadcast %42 : vector<1x32xf32> to vector<210x32xf32>
    %45 = arith.mulf %43, %44 : vector<210x32xf32>
    %46 = arith.addf %38, %45 : vector<210x32xf32>
    %c0_36 = arith.constant 0 : index
    %c0_37 = arith.constant 0 : index
    %c15 = arith.constant 15 : index
    %c0_38 = arith.constant 0 : index
    %47 = vector.load %arg1[%c0_36, %c0_37, %c15, %c0_38] : memref<1x4x233x1xf32, #tpu.memory_space<vmem>>, vector<1x1x210x1xf32>
    %48 = vector.shape_cast %47 : vector<1x1x210x1xf32> to vector<210x1xf32>
    %c6 = arith.constant 6 : index
    %c0_39 = arith.constant 0 : index
    %c0_40 = arith.constant 0 : index
    %49 = vector.load %arg2[%c6, %c0_39, %c0_40] : memref<9x1x32xf32, #tpu.memory_space<vmem>>, vector<1x1x32xf32>
    %50 = vector.shape_cast %49 : vector<1x1x32xf32> to vector<1x32xf32>
    %51 = vector.broadcast %48 : vector<210x1xf32> to vector<210x32xf32>
    %52 = vector.broadcast %50 : vector<1x32xf32> to vector<210x32xf32>
    %53 = arith.mulf %51, %52 : vector<210x32xf32>
    %54 = arith.addf %46, %53 : vector<210x32xf32>
    %c0_41 = arith.constant 0 : index
    %c1_42 = arith.constant 1 : index
    %c15_43 = arith.constant 15 : index
    %c0_44 = arith.constant 0 : index
    %55 = vector.load %arg1[%c0_41, %c1_42, %c15_43, %c0_44] : memref<1x4x233x1xf32, #tpu.memory_space<vmem>>, vector<1x1x210x1xf32>
    %56 = vector.shape_cast %55 : vector<1x1x210x1xf32> to vector<210x1xf32>
    %c7 = arith.constant 7 : index
    %c0_45 = arith.constant 0 : index
    %c0_46 = arith.constant 0 : index
    %57 = vector.load %arg2[%c7, %c0_45, %c0_46] : memref<9x1x32xf32, #tpu.memory_space<vmem>>, vector<1x1x32xf32>
    %58 = vector.shape_cast %57 : vector<1x1x32xf32> to vector<1x32xf32>
    %59 = vector.broadcast %56 : vector<210x1xf32> to vector<210x32xf32>
    %60 = vector.broadcast %58 : vector<1x32xf32> to vector<210x32xf32>
    %61 = arith.mulf %59, %60 : vector<210x32xf32>
    %62 = arith.addf %54, %61 : vector<210x32xf32>
    %c0_47 = arith.constant 0 : index
    %c0_48 = arith.constant 0 : index
    %c16 = arith.constant 16 : index
    %c0_49 = arith.constant 0 : index
    %63 = vector.load %arg1[%c0_47, %c0_48, %c16, %c0_49] : memref<1x4x233x1xf32, #tpu.memory_space<vmem>>, vector<1x1x210x1xf32>
    %64 = vector.shape_cast %63 : vector<1x1x210x1xf32> to vector<210x1xf32>
    %c8 = arith.constant 8 : index
    %c0_50 = arith.constant 0 : index
    %c0_51 = arith.constant 0 : index
    %65 = vector.load %arg2[%c8, %c0_50, %c0_51] : memref<9x1x32xf32, #tpu.memory_space<vmem>>, vector<1x1x32xf32>
    %66 = vector.shape_cast %65 : vector<1x1x32xf32> to vector<1x32xf32>
    %67 = vector.broadcast %64 : vector<210x1xf32> to vector<210x32xf32>
    %68 = vector.broadcast %66 : vector<1x32xf32> to vector<210x32xf32>
    %69 = arith.mulf %67, %68 : vector<210x32xf32>
    %70 = arith.addf %62, %69 : vector<210x32xf32>
    %c0_52 = arith.constant 0 : index
    %c0_53 = arith.constant 0 : index
    %71 = vector.load %arg3[%c0_52, %c0_53] : memref<1x32xf32, #tpu.memory_space<vmem>>, vector<1x32xf32>
    %72 = vector.broadcast %71 : vector<1x32xf32> to vector<210x32xf32>
    %73 = arith.addf %70, %72 : vector<210x32xf32>
    %cst = arith.constant 0.000000e+00 : f32
    %74 = vector.broadcast %cst : f32 to vector<210x32xf32>
    %75 = arith.maximumf %73, %74 : vector<210x32xf32>
    %c0_54 = arith.constant 0 : index
    %c1_55 = arith.constant 1 : index
    %c0_56 = arith.constant 0 : index
    %c0_57 = arith.constant 0 : index
    %76 = vector.load %arg1[%c0_54, %c1_55, %c0_56, %c0_57] : memref<1x4x233x1xf32, #tpu.memory_space<vmem>>, vector<1x1x210x1xf32>
    %77 = vector.shape_cast %76 : vector<1x1x210x1xf32> to vector<210x1xf32>
    %c0_58 = arith.constant 0 : index
    %c0_59 = arith.constant 0 : index
    %c0_60 = arith.constant 0 : index
    %78 = vector.load %arg2[%c0_58, %c0_59, %c0_60] : memref<9x1x32xf32, #tpu.memory_space<vmem>>, vector<1x1x32xf32>
    %79 = vector.shape_cast %78 : vector<1x1x32xf32> to vector<1x32xf32>
    %80 = vector.broadcast %77 : vector<210x1xf32> to vector<210x32xf32>
    %81 = vector.broadcast %79 : vector<1x32xf32> to vector<210x32xf32>
    %82 = arith.mulf %80, %81 : vector<210x32xf32>
    %c0_61 = arith.constant 0 : index
    %c0_62 = arith.constant 0 : index
    %c1_63 = arith.constant 1 : index
    %c0_64 = arith.constant 0 : index
    %83 = vector.load %arg1[%c0_61, %c0_62, %c1_63, %c0_64] : memref<1x4x233x1xf32, #tpu.memory_space<vmem>>, vector<1x1x210x1xf32>
    %84 = vector.shape_cast %83 : vector<1x1x210x1xf32> to vector<210x1xf32>
    %c1_65 = arith.constant 1 : index
    %c0_66 = arith.constant 0 : index
    %c0_67 = arith.constant 0 : index
    %85 = vector.load %arg2[%c1_65, %c0_66, %c0_67] : memref<9x1x32xf32, #tpu.memory_space<vmem>>, vector<1x1x32xf32>
    %86 = vector.shape_cast %85 : vector<1x1x32xf32> to vector<1x32xf32>
    %87 = vector.broadcast %84 : vector<210x1xf32> to vector<210x32xf32>
    %88 = vector.broadcast %86 : vector<1x32xf32> to vector<210x32xf32>
    %89 = arith.mulf %87, %88 : vector<210x32xf32>
    %90 = arith.addf %82, %89 : vector<210x32xf32>
    %c0_68 = arith.constant 0 : index
    %c1_69 = arith.constant 1 : index
    %c1_70 = arith.constant 1 : index
    %c0_71 = arith.constant 0 : index
    %91 = vector.load %arg1[%c0_68, %c1_69, %c1_70, %c0_71] : memref<1x4x233x1xf32, #tpu.memory_space<vmem>>, vector<1x1x210x1xf32>
    %92 = vector.shape_cast %91 : vector<1x1x210x1xf32> to vector<210x1xf32>
    %c2_72 = arith.constant 2 : index
    %c0_73 = arith.constant 0 : index
    %c0_74 = arith.constant 0 : index
    %93 = vector.load %arg2[%c2_72, %c0_73, %c0_74] : memref<9x1x32xf32, #tpu.memory_space<vmem>>, vector<1x1x32xf32>
    %94 = vector.shape_cast %93 : vector<1x1x32xf32> to vector<1x32xf32>
    %95 = vector.broadcast %92 : vector<210x1xf32> to vector<210x32xf32>
    %96 = vector.broadcast %94 : vector<1x32xf32> to vector<210x32xf32>
    %97 = arith.mulf %95, %96 : vector<210x32xf32>
    %98 = arith.addf %90, %97 : vector<210x32xf32>
    %c0_75 = arith.constant 0 : index
    %c3_76 = arith.constant 3 : index
    %c0_77 = arith.constant 0 : index
    %c0_78 = arith.constant 0 : index
    %99 = vector.load %arg1[%c0_75, %c3_76, %c0_77, %c0_78] : memref<1x4x233x1xf32, #tpu.memory_space<vmem>>, vector<1x1x210x1xf32>
    %100 = vector.shape_cast %99 : vector<1x1x210x1xf32> to vector<210x1xf32>
    %c3_79 = arith.constant 3 : index
    %c0_80 = arith.constant 0 : index
    %c0_81 = arith.constant 0 : index
    %101 = vector.load %arg2[%c3_79, %c0_80, %c0_81] : memref<9x1x32xf32, #tpu.memory_space<vmem>>, vector<1x1x32xf32>
    %102 = vector.shape_cast %101 : vector<1x1x32xf32> to vector<1x32xf32>
    %103 = vector.broadcast %100 : vector<210x1xf32> to vector<210x32xf32>
    %104 = vector.broadcast %102 : vector<1x32xf32> to vector<210x32xf32>
    %105 = arith.mulf %103, %104 : vector<210x32xf32>
    %106 = arith.addf %98, %105 : vector<210x32xf32>
    %c0_82 = arith.constant 0 : index
    %c2_83 = arith.constant 2 : index
    %c1_84 = arith.constant 1 : index
    %c0_85 = arith.constant 0 : index
    %107 = vector.load %arg1[%c0_82, %c2_83, %c1_84, %c0_85] : memref<1x4x233x1xf32, #tpu.memory_space<vmem>>, vector<1x1x210x1xf32>
    %108 = vector.shape_cast %107 : vector<1x1x210x1xf32> to vector<210x1xf32>
    %c4_86 = arith.constant 4 : index
    %c0_87 = arith.constant 0 : index
    %c0_88 = arith.constant 0 : index
    %109 = vector.load %arg2[%c4_86, %c0_87, %c0_88] : memref<9x1x32xf32, #tpu.memory_space<vmem>>, vector<1x1x32xf32>
    %110 = vector.shape_cast %109 : vector<1x1x32xf32> to vector<1x32xf32>
    %111 = vector.broadcast %108 : vector<210x1xf32> to vector<210x32xf32>
    %112 = vector.broadcast %110 : vector<1x32xf32> to vector<210x32xf32>
    %113 = arith.mulf %111, %112 : vector<210x32xf32>
    %114 = arith.addf %106, %113 : vector<210x32xf32>
    %c0_89 = arith.constant 0 : index
    %c3_90 = arith.constant 3 : index
    %c1_91 = arith.constant 1 : index
    %c0_92 = arith.constant 0 : index
    %115 = vector.load %arg1[%c0_89, %c3_90, %c1_91, %c0_92] : memref<1x4x233x1xf32, #tpu.memory_space<vmem>>, vector<1x1x210x1xf32>
    %116 = vector.shape_cast %115 : vector<1x1x210x1xf32> to vector<210x1xf32>
    %c5_93 = arith.constant 5 : index
    %c0_94 = arith.constant 0 : index
    %c0_95 = arith.constant 0 : index
    %117 = vector.load %arg2[%c5_93, %c0_94, %c0_95] : memref<9x1x32xf32, #tpu.memory_space<vmem>>, vector<1x1x32xf32>
    %118 = vector.shape_cast %117 : vector<1x1x32xf32> to vector<1x32xf32>
    %119 = vector.broadcast %116 : vector<210x1xf32> to vector<210x32xf32>
    %120 = vector.broadcast %118 : vector<1x32xf32> to vector<210x32xf32>
    %121 = arith.mulf %119, %120 : vector<210x32xf32>
    %122 = arith.addf %114, %121 : vector<210x32xf32>
    %c0_96 = arith.constant 0 : index
    %c1_97 = arith.constant 1 : index
    %c15_98 = arith.constant 15 : index
    %c0_99 = arith.constant 0 : index
    %123 = vector.load %arg1[%c0_96, %c1_97, %c15_98, %c0_99] : memref<1x4x233x1xf32, #tpu.memory_space<vmem>>, vector<1x1x210x1xf32>
    %124 = vector.shape_cast %123 : vector<1x1x210x1xf32> to vector<210x1xf32>
    %c6_100 = arith.constant 6 : index
    %c0_101 = arith.constant 0 : index
    %c0_102 = arith.constant 0 : index
    %125 = vector.load %arg2[%c6_100, %c0_101, %c0_102] : memref<9x1x32xf32, #tpu.memory_space<vmem>>, vector<1x1x32xf32>
    %126 = vector.shape_cast %125 : vector<1x1x32xf32> to vector<1x32xf32>
    %127 = vector.broadcast %124 : vector<210x1xf32> to vector<210x32xf32>
    %128 = vector.broadcast %126 : vector<1x32xf32> to vector<210x32xf32>
    %129 = arith.mulf %127, %128 : vector<210x32xf32>
    %130 = arith.addf %122, %129 : vector<210x32xf32>
    %c0_103 = arith.constant 0 : index
    %c0_104 = arith.constant 0 : index
    %c16_105 = arith.constant 16 : index
    %c0_106 = arith.constant 0 : index
    %131 = vector.load %arg1[%c0_103, %c0_104, %c16_105, %c0_106] : memref<1x4x233x1xf32, #tpu.memory_space<vmem>>, vector<1x1x210x1xf32>
    %132 = vector.shape_cast %131 : vector<1x1x210x1xf32> to vector<210x1xf32>
    %c7_107 = arith.constant 7 : index
    %c0_108 = arith.constant 0 : index
    %c0_109 = arith.constant 0 : index
    %133 = vector.load %arg2[%c7_107, %c0_108, %c0_109] : memref<9x1x32xf32, #tpu.memory_space<vmem>>, vector<1x1x32xf32>
    %134 = vector.shape_cast %133 : vector<1x1x32xf32> to vector<1x32xf32>
    %135 = vector.broadcast %132 : vector<210x1xf32> to vector<210x32xf32>
    %136 = vector.broadcast %134 : vector<1x32xf32> to vector<210x32xf32>
    %137 = arith.mulf %135, %136 : vector<210x32xf32>
    %138 = arith.addf %130, %137 : vector<210x32xf32>
    %c0_110 = arith.constant 0 : index
    %c1_111 = arith.constant 1 : index
    %c16_112 = arith.constant 16 : index
    %c0_113 = arith.constant 0 : index
    %139 = vector.load %arg1[%c0_110, %c1_111, %c16_112, %c0_113] : memref<1x4x233x1xf32, #tpu.memory_space<vmem>>, vector<1x1x210x1xf32>
    %140 = vector.shape_cast %139 : vector<1x1x210x1xf32> to vector<210x1xf32>
    %c8_114 = arith.constant 8 : index
    %c0_115 = arith.constant 0 : index
    %c0_116 = arith.constant 0 : index
    %141 = vector.load %arg2[%c8_114, %c0_115, %c0_116] : memref<9x1x32xf32, #tpu.memory_space<vmem>>, vector<1x1x32xf32>
    %142 = vector.shape_cast %141 : vector<1x1x32xf32> to vector<1x32xf32>
    %143 = vector.broadcast %140 : vector<210x1xf32> to vector<210x32xf32>
    %144 = vector.broadcast %142 : vector<1x32xf32> to vector<210x32xf32>
    %145 = arith.mulf %143, %144 : vector<210x32xf32>
    %146 = arith.addf %138, %145 : vector<210x32xf32>
    %c0_117 = arith.constant 0 : index
    %c0_118 = arith.constant 0 : index
    %147 = vector.load %arg3[%c0_117, %c0_118] : memref<1x32xf32, #tpu.memory_space<vmem>>, vector<1x32xf32>
    %148 = vector.broadcast %147 : vector<1x32xf32> to vector<210x32xf32>
    %149 = arith.addf %146, %148 : vector<210x32xf32>
    %cst_119 = arith.constant 0.000000e+00 : f32
    %150 = vector.broadcast %cst_119 : f32 to vector<210x32xf32>
    %151 = arith.maximumf %149, %150 : vector<210x32xf32>
    %152 = arith.maximumf %75, %151 : vector<210x32xf32>
    %c0_120 = arith.constant 0 : index
    %c2_121 = arith.constant 2 : index
    %c0_122 = arith.constant 0 : index
    %c0_123 = arith.constant 0 : index
    %153 = vector.load %arg1[%c0_120, %c2_121, %c0_122, %c0_123] : memref<1x4x233x1xf32, #tpu.memory_space<vmem>>, vector<1x1x210x1xf32>
    %154 = vector.shape_cast %153 : vector<1x1x210x1xf32> to vector<210x1xf32>
    %c0_124 = arith.constant 0 : index
    %c0_125 = arith.constant 0 : index
    %c0_126 = arith.constant 0 : index
    %155 = vector.load %arg2[%c0_124, %c0_125, %c0_126] : memref<9x1x32xf32, #tpu.memory_space<vmem>>, vector<1x1x32xf32>
    %156 = vector.shape_cast %155 : vector<1x1x32xf32> to vector<1x32xf32>
    %157 = vector.broadcast %154 : vector<210x1xf32> to vector<210x32xf32>
    %158 = vector.broadcast %156 : vector<1x32xf32> to vector<210x32xf32>
    %159 = arith.mulf %157, %158 : vector<210x32xf32>
    %c0_127 = arith.constant 0 : index
    %c3_128 = arith.constant 3 : index
    %c0_129 = arith.constant 0 : index
    %c0_130 = arith.constant 0 : index
    %160 = vector.load %arg1[%c0_127, %c3_128, %c0_129, %c0_130] : memref<1x4x233x1xf32, #tpu.memory_space<vmem>>, vector<1x1x210x1xf32>
    %161 = vector.shape_cast %160 : vector<1x1x210x1xf32> to vector<210x1xf32>
    %c1_131 = arith.constant 1 : index
    %c0_132 = arith.constant 0 : index
    %c0_133 = arith.constant 0 : index
    %162 = vector.load %arg2[%c1_131, %c0_132, %c0_133] : memref<9x1x32xf32, #tpu.memory_space<vmem>>, vector<1x1x32xf32>
    %163 = vector.shape_cast %162 : vector<1x1x32xf32> to vector<1x32xf32>
    %164 = vector.broadcast %161 : vector<210x1xf32> to vector<210x32xf32>
    %165 = vector.broadcast %163 : vector<1x32xf32> to vector<210x32xf32>
    %166 = arith.mulf %164, %165 : vector<210x32xf32>
    %167 = arith.addf %159, %166 : vector<210x32xf32>
    %c0_134 = arith.constant 0 : index
    %c2_135 = arith.constant 2 : index
    %c1_136 = arith.constant 1 : index
    %c0_137 = arith.constant 0 : index
    %168 = vector.load %arg1[%c0_134, %c2_135, %c1_136, %c0_137] : memref<1x4x233x1xf32, #tpu.memory_space<vmem>>, vector<1x1x210x1xf32>
    %169 = vector.shape_cast %168 : vector<1x1x210x1xf32> to vector<210x1xf32>
    %c2_138 = arith.constant 2 : index
    %c0_139 = arith.constant 0 : index
    %c0_140 = arith.constant 0 : index
    %170 = vector.load %arg2[%c2_138, %c0_139, %c0_140] : memref<9x1x32xf32, #tpu.memory_space<vmem>>, vector<1x1x32xf32>
    %171 = vector.shape_cast %170 : vector<1x1x32xf32> to vector<1x32xf32>
    %172 = vector.broadcast %169 : vector<210x1xf32> to vector<210x32xf32>
    %173 = vector.broadcast %171 : vector<1x32xf32> to vector<210x32xf32>
    %174 = arith.mulf %172, %173 : vector<210x32xf32>
    %175 = arith.addf %167, %174 : vector<210x32xf32>
    %c0_141 = arith.constant 0 : index
    %c0_142 = arith.constant 0 : index
    %c15_143 = arith.constant 15 : index
    %c0_144 = arith.constant 0 : index
    %176 = vector.load %arg1[%c0_141, %c0_142, %c15_143, %c0_144] : memref<1x4x233x1xf32, #tpu.memory_space<vmem>>, vector<1x1x210x1xf32>
    %177 = vector.shape_cast %176 : vector<1x1x210x1xf32> to vector<210x1xf32>
    %c3_145 = arith.constant 3 : index
    %c0_146 = arith.constant 0 : index
    %c0_147 = arith.constant 0 : index
    %178 = vector.load %arg2[%c3_145, %c0_146, %c0_147] : memref<9x1x32xf32, #tpu.memory_space<vmem>>, vector<1x1x32xf32>
    %179 = vector.shape_cast %178 : vector<1x1x32xf32> to vector<1x32xf32>
    %180 = vector.broadcast %177 : vector<210x1xf32> to vector<210x32xf32>
    %181 = vector.broadcast %179 : vector<1x32xf32> to vector<210x32xf32>
    %182 = arith.mulf %180, %181 : vector<210x32xf32>
    %183 = arith.addf %175, %182 : vector<210x32xf32>
    %c0_148 = arith.constant 0 : index
    %c1_149 = arith.constant 1 : index
    %c15_150 = arith.constant 15 : index
    %c0_151 = arith.constant 0 : index
    %184 = vector.load %arg1[%c0_148, %c1_149, %c15_150, %c0_151] : memref<1x4x233x1xf32, #tpu.memory_space<vmem>>, vector<1x1x210x1xf32>
    %185 = vector.shape_cast %184 : vector<1x1x210x1xf32> to vector<210x1xf32>
    %c4_152 = arith.constant 4 : index
    %c0_153 = arith.constant 0 : index
    %c0_154 = arith.constant 0 : index
    %186 = vector.load %arg2[%c4_152, %c0_153, %c0_154] : memref<9x1x32xf32, #tpu.memory_space<vmem>>, vector<1x1x32xf32>
    %187 = vector.shape_cast %186 : vector<1x1x32xf32> to vector<1x32xf32>
    %188 = vector.broadcast %185 : vector<210x1xf32> to vector<210x32xf32>
    %189 = vector.broadcast %187 : vector<1x32xf32> to vector<210x32xf32>
    %190 = arith.mulf %188, %189 : vector<210x32xf32>
    %191 = arith.addf %183, %190 : vector<210x32xf32>
    %c0_155 = arith.constant 0 : index
    %c0_156 = arith.constant 0 : index
    %c16_157 = arith.constant 16 : index
    %c0_158 = arith.constant 0 : index
    %192 = vector.load %arg1[%c0_155, %c0_156, %c16_157, %c0_158] : memref<1x4x233x1xf32, #tpu.memory_space<vmem>>, vector<1x1x210x1xf32>
    %193 = vector.shape_cast %192 : vector<1x1x210x1xf32> to vector<210x1xf32>
    %c5_159 = arith.constant 5 : index
    %c0_160 = arith.constant 0 : index
    %c0_161 = arith.constant 0 : index
    %194 = vector.load %arg2[%c5_159, %c0_160, %c0_161] : memref<9x1x32xf32, #tpu.memory_space<vmem>>, vector<1x1x32xf32>
    %195 = vector.shape_cast %194 : vector<1x1x32xf32> to vector<1x32xf32>
    %196 = vector.broadcast %193 : vector<210x1xf32> to vector<210x32xf32>
    %197 = vector.broadcast %195 : vector<1x32xf32> to vector<210x32xf32>
    %198 = arith.mulf %196, %197 : vector<210x32xf32>
    %199 = arith.addf %191, %198 : vector<210x32xf32>
    %c0_162 = arith.constant 0 : index
    %c2_163 = arith.constant 2 : index
    %c15_164 = arith.constant 15 : index
    %c0_165 = arith.constant 0 : index
    %200 = vector.load %arg1[%c0_162, %c2_163, %c15_164, %c0_165] : memref<1x4x233x1xf32, #tpu.memory_space<vmem>>, vector<1x1x210x1xf32>
    %201 = vector.shape_cast %200 : vector<1x1x210x1xf32> to vector<210x1xf32>
    %c6_166 = arith.constant 6 : index
    %c0_167 = arith.constant 0 : index
    %c0_168 = arith.constant 0 : index
    %202 = vector.load %arg2[%c6_166, %c0_167, %c0_168] : memref<9x1x32xf32, #tpu.memory_space<vmem>>, vector<1x1x32xf32>
    %203 = vector.shape_cast %202 : vector<1x1x32xf32> to vector<1x32xf32>
    %204 = vector.broadcast %201 : vector<210x1xf32> to vector<210x32xf32>
    %205 = vector.broadcast %203 : vector<1x32xf32> to vector<210x32xf32>
    %206 = arith.mulf %204, %205 : vector<210x32xf32>
    %207 = arith.addf %199, %206 : vector<210x32xf32>
    %c0_169 = arith.constant 0 : index
    %c3_170 = arith.constant 3 : index
    %c15_171 = arith.constant 15 : index
    %c0_172 = arith.constant 0 : index
    %208 = vector.load %arg1[%c0_169, %c3_170, %c15_171, %c0_172] : memref<1x4x233x1xf32, #tpu.memory_space<vmem>>, vector<1x1x210x1xf32>
    %209 = vector.shape_cast %208 : vector<1x1x210x1xf32> to vector<210x1xf32>
    %c7_173 = arith.constant 7 : index
    %c0_174 = arith.constant 0 : index
    %c0_175 = arith.constant 0 : index
    %210 = vector.load %arg2[%c7_173, %c0_174, %c0_175] : memref<9x1x32xf32, #tpu.memory_space<vmem>>, vector<1x1x32xf32>
    %211 = vector.shape_cast %210 : vector<1x1x32xf32> to vector<1x32xf32>
    %212 = vector.broadcast %209 : vector<210x1xf32> to vector<210x32xf32>
    %213 = vector.broadcast %211 : vector<1x32xf32> to vector<210x32xf32>
    %214 = arith.mulf %212, %213 : vector<210x32xf32>
    %215 = arith.addf %207, %214 : vector<210x32xf32>
    %c0_176 = arith.constant 0 : index
    %c2_177 = arith.constant 2 : index
    %c16_178 = arith.constant 16 : index
    %c0_179 = arith.constant 0 : index
    %216 = vector.load %arg1[%c0_176, %c2_177, %c16_178, %c0_179] : memref<1x4x233x1xf32, #tpu.memory_space<vmem>>, vector<1x1x210x1xf32>
    %217 = vector.shape_cast %216 : vector<1x1x210x1xf32> to vector<210x1xf32>
    %c8_180 = arith.constant 8 : index
    %c0_181 = arith.constant 0 : index
    %c0_182 = arith.constant 0 : index
    %218 = vector.load %arg2[%c8_180, %c0_181, %c0_182] : memref<9x1x32xf32, #tpu.memory_space<vmem>>, vector<1x1x32xf32>
    %219 = vector.shape_cast %218 : vector<1x1x32xf32> to vector<1x32xf32>
    %220 = vector.broadcast %217 : vector<210x1xf32> to vector<210x32xf32>
    %221 = vector.broadcast %219 : vector<1x32xf32> to vector<210x32xf32>
    %222 = arith.mulf %220, %221 : vector<210x32xf32>
    %223 = arith.addf %215, %222 : vector<210x32xf32>
    %c0_183 = arith.constant 0 : index
    %c0_184 = arith.constant 0 : index
    %224 = vector.load %arg3[%c0_183, %c0_184] : memref<1x32xf32, #tpu.memory_space<vmem>>, vector<1x32xf32>
    %225 = vector.broadcast %224 : vector<1x32xf32> to vector<210x32xf32>
    %226 = arith.addf %223, %225 : vector<210x32xf32>
    %cst_185 = arith.constant 0.000000e+00 : f32
    %227 = vector.broadcast %cst_185 : f32 to vector<210x32xf32>
    %228 = arith.maximumf %226, %227 : vector<210x32xf32>
    %229 = arith.maximumf %152, %228 : vector<210x32xf32>
    %c0_186 = arith.constant 0 : index
    %c3_187 = arith.constant 3 : index
    %c0_188 = arith.constant 0 : index
    %c0_189 = arith.constant 0 : index
    %230 = vector.load %arg1[%c0_186, %c3_187, %c0_188, %c0_189] : memref<1x4x233x1xf32, #tpu.memory_space<vmem>>, vector<1x1x210x1xf32>
    %231 = vector.shape_cast %230 : vector<1x1x210x1xf32> to vector<210x1xf32>
    %c0_190 = arith.constant 0 : index
    %c0_191 = arith.constant 0 : index
    %c0_192 = arith.constant 0 : index
    %232 = vector.load %arg2[%c0_190, %c0_191, %c0_192] : memref<9x1x32xf32, #tpu.memory_space<vmem>>, vector<1x1x32xf32>
    %233 = vector.shape_cast %232 : vector<1x1x32xf32> to vector<1x32xf32>
    %234 = vector.broadcast %231 : vector<210x1xf32> to vector<210x32xf32>
    %235 = vector.broadcast %233 : vector<1x32xf32> to vector<210x32xf32>
    %236 = arith.mulf %234, %235 : vector<210x32xf32>
    %c0_193 = arith.constant 0 : index
    %c2_194 = arith.constant 2 : index
    %c1_195 = arith.constant 1 : index
    %c0_196 = arith.constant 0 : index
    %237 = vector.load %arg1[%c0_193, %c2_194, %c1_195, %c0_196] : memref<1x4x233x1xf32, #tpu.memory_space<vmem>>, vector<1x1x210x1xf32>
    %238 = vector.shape_cast %237 : vector<1x1x210x1xf32> to vector<210x1xf32>
    %c1_197 = arith.constant 1 : index
    %c0_198 = arith.constant 0 : index
    %c0_199 = arith.constant 0 : index
    %239 = vector.load %arg2[%c1_197, %c0_198, %c0_199] : memref<9x1x32xf32, #tpu.memory_space<vmem>>, vector<1x1x32xf32>
    %240 = vector.shape_cast %239 : vector<1x1x32xf32> to vector<1x32xf32>
    %241 = vector.broadcast %238 : vector<210x1xf32> to vector<210x32xf32>
    %242 = vector.broadcast %240 : vector<1x32xf32> to vector<210x32xf32>
    %243 = arith.mulf %241, %242 : vector<210x32xf32>
    %244 = arith.addf %236, %243 : vector<210x32xf32>
    %c0_200 = arith.constant 0 : index
    %c3_201 = arith.constant 3 : index
    %c1_202 = arith.constant 1 : index
    %c0_203 = arith.constant 0 : index
    %245 = vector.load %arg1[%c0_200, %c3_201, %c1_202, %c0_203] : memref<1x4x233x1xf32, #tpu.memory_space<vmem>>, vector<1x1x210x1xf32>
    %246 = vector.shape_cast %245 : vector<1x1x210x1xf32> to vector<210x1xf32>
    %c2_204 = arith.constant 2 : index
    %c0_205 = arith.constant 0 : index
    %c0_206 = arith.constant 0 : index
    %247 = vector.load %arg2[%c2_204, %c0_205, %c0_206] : memref<9x1x32xf32, #tpu.memory_space<vmem>>, vector<1x1x32xf32>
    %248 = vector.shape_cast %247 : vector<1x1x32xf32> to vector<1x32xf32>
    %249 = vector.broadcast %246 : vector<210x1xf32> to vector<210x32xf32>
    %250 = vector.broadcast %248 : vector<1x32xf32> to vector<210x32xf32>
    %251 = arith.mulf %249, %250 : vector<210x32xf32>
    %252 = arith.addf %244, %251 : vector<210x32xf32>
    %c0_207 = arith.constant 0 : index
    %c1_208 = arith.constant 1 : index
    %c15_209 = arith.constant 15 : index
    %c0_210 = arith.constant 0 : index
    %253 = vector.load %arg1[%c0_207, %c1_208, %c15_209, %c0_210] : memref<1x4x233x1xf32, #tpu.memory_space<vmem>>, vector<1x1x210x1xf32>
    %254 = vector.shape_cast %253 : vector<1x1x210x1xf32> to vector<210x1xf32>
    %c3_211 = arith.constant 3 : index
    %c0_212 = arith.constant 0 : index
    %c0_213 = arith.constant 0 : index
    %255 = vector.load %arg2[%c3_211, %c0_212, %c0_213] : memref<9x1x32xf32, #tpu.memory_space<vmem>>, vector<1x1x32xf32>
    %256 = vector.shape_cast %255 : vector<1x1x32xf32> to vector<1x32xf32>
    %257 = vector.broadcast %254 : vector<210x1xf32> to vector<210x32xf32>
    %258 = vector.broadcast %256 : vector<1x32xf32> to vector<210x32xf32>
    %259 = arith.mulf %257, %258 : vector<210x32xf32>
    %260 = arith.addf %252, %259 : vector<210x32xf32>
    %c0_214 = arith.constant 0 : index
    %c0_215 = arith.constant 0 : index
    %c16_216 = arith.constant 16 : index
    %c0_217 = arith.constant 0 : index
    %261 = vector.load %arg1[%c0_214, %c0_215, %c16_216, %c0_217] : memref<1x4x233x1xf32, #tpu.memory_space<vmem>>, vector<1x1x210x1xf32>
    %262 = vector.shape_cast %261 : vector<1x1x210x1xf32> to vector<210x1xf32>
    %c4_218 = arith.constant 4 : index
    %c0_219 = arith.constant 0 : index
    %c0_220 = arith.constant 0 : index
    %263 = vector.load %arg2[%c4_218, %c0_219, %c0_220] : memref<9x1x32xf32, #tpu.memory_space<vmem>>, vector<1x1x32xf32>
    %264 = vector.shape_cast %263 : vector<1x1x32xf32> to vector<1x32xf32>
    %265 = vector.broadcast %262 : vector<210x1xf32> to vector<210x32xf32>
    %266 = vector.broadcast %264 : vector<1x32xf32> to vector<210x32xf32>
    %267 = arith.mulf %265, %266 : vector<210x32xf32>
    %268 = arith.addf %260, %267 : vector<210x32xf32>
    %c0_221 = arith.constant 0 : index
    %c1_222 = arith.constant 1 : index
    %c16_223 = arith.constant 16 : index
    %c0_224 = arith.constant 0 : index
    %269 = vector.load %arg1[%c0_221, %c1_222, %c16_223, %c0_224] : memref<1x4x233x1xf32, #tpu.memory_space<vmem>>, vector<1x1x210x1xf32>
    %270 = vector.shape_cast %269 : vector<1x1x210x1xf32> to vector<210x1xf32>
    %c5_225 = arith.constant 5 : index
    %c0_226 = arith.constant 0 : index
    %c0_227 = arith.constant 0 : index
    %271 = vector.load %arg2[%c5_225, %c0_226, %c0_227] : memref<9x1x32xf32, #tpu.memory_space<vmem>>, vector<1x1x32xf32>
    %272 = vector.shape_cast %271 : vector<1x1x32xf32> to vector<1x32xf32>
    %273 = vector.broadcast %270 : vector<210x1xf32> to vector<210x32xf32>
    %274 = vector.broadcast %272 : vector<1x32xf32> to vector<210x32xf32>
    %275 = arith.mulf %273, %274 : vector<210x32xf32>
    %276 = arith.addf %268, %275 : vector<210x32xf32>
    %c0_228 = arith.constant 0 : index
    %c3_229 = arith.constant 3 : index
    %c15_230 = arith.constant 15 : index
    %c0_231 = arith.constant 0 : index
    %277 = vector.load %arg1[%c0_228, %c3_229, %c15_230, %c0_231] : memref<1x4x233x1xf32, #tpu.memory_space<vmem>>, vector<1x1x210x1xf32>
    %278 = vector.shape_cast %277 : vector<1x1x210x1xf32> to vector<210x1xf32>
    %c6_232 = arith.constant 6 : index
    %c0_233 = arith.constant 0 : index
    %c0_234 = arith.constant 0 : index
    %279 = vector.load %arg2[%c6_232, %c0_233, %c0_234] : memref<9x1x32xf32, #tpu.memory_space<vmem>>, vector<1x1x32xf32>
    %280 = vector.shape_cast %279 : vector<1x1x32xf32> to vector<1x32xf32>
    %281 = vector.broadcast %278 : vector<210x1xf32> to vector<210x32xf32>
    %282 = vector.broadcast %280 : vector<1x32xf32> to vector<210x32xf32>
    %283 = arith.mulf %281, %282 : vector<210x32xf32>
    %284 = arith.addf %276, %283 : vector<210x32xf32>
    %c0_235 = arith.constant 0 : index
    %c2_236 = arith.constant 2 : index
    %c16_237 = arith.constant 16 : index
    %c0_238 = arith.constant 0 : index
    %285 = vector.load %arg1[%c0_235, %c2_236, %c16_237, %c0_238] : memref<1x4x233x1xf32, #tpu.memory_space<vmem>>, vector<1x1x210x1xf32>
    %286 = vector.shape_cast %285 : vector<1x1x210x1xf32> to vector<210x1xf32>
    %c7_239 = arith.constant 7 : index
    %c0_240 = arith.constant 0 : index
    %c0_241 = arith.constant 0 : index
    %287 = vector.load %arg2[%c7_239, %c0_240, %c0_241] : memref<9x1x32xf32, #tpu.memory_space<vmem>>, vector<1x1x32xf32>
    %288 = vector.shape_cast %287 : vector<1x1x32xf32> to vector<1x32xf32>
    %289 = vector.broadcast %286 : vector<210x1xf32> to vector<210x32xf32>
    %290 = vector.broadcast %288 : vector<1x32xf32> to vector<210x32xf32>
    %291 = arith.mulf %289, %290 : vector<210x32xf32>
    %292 = arith.addf %284, %291 : vector<210x32xf32>
    %c0_242 = arith.constant 0 : index
    %c3_243 = arith.constant 3 : index
    %c16_244 = arith.constant 16 : index
    %c0_245 = arith.constant 0 : index
    %293 = vector.load %arg1[%c0_242, %c3_243, %c16_244, %c0_245] : memref<1x4x233x1xf32, #tpu.memory_space<vmem>>, vector<1x1x210x1xf32>
    %294 = vector.shape_cast %293 : vector<1x1x210x1xf32> to vector<210x1xf32>
    %c8_246 = arith.constant 8 : index
    %c0_247 = arith.constant 0 : index
    %c0_248 = arith.constant 0 : index
    %295 = vector.load %arg2[%c8_246, %c0_247, %c0_248] : memref<9x1x32xf32, #tpu.memory_space<vmem>>, vector<1x1x32xf32>
    %296 = vector.shape_cast %295 : vector<1x1x32xf32> to vector<1x32xf32>
    %297 = vector.broadcast %294 : vector<210x1xf32> to vector<210x32xf32>
    %298 = vector.broadcast %296 : vector<1x32xf32> to vector<210x32xf32>
    %299 = arith.mulf %297, %298 : vector<210x32xf32>
    %300 = arith.addf %292, %299 : vector<210x32xf32>
    %c0_249 = arith.constant 0 : index
    %c0_250 = arith.constant 0 : index
    %301 = vector.load %arg3[%c0_249, %c0_250] : memref<1x32xf32, #tpu.memory_space<vmem>>, vector<1x32xf32>
    %302 = vector.broadcast %301 : vector<1x32xf32> to vector<210x32xf32>
    %303 = arith.addf %300, %302 : vector<210x32xf32>
    %cst_251 = arith.constant 0.000000e+00 : f32
    %304 = vector.broadcast %cst_251 : f32 to vector<210x32xf32>
    %305 = arith.maximumf %303, %304 : vector<210x32xf32>
    %306 = arith.maximumf %229, %305 : vector<210x32xf32>
    %c0_252 = arith.constant 0 : index
    %c0_253 = arith.constant 0 : index
    %c0_254 = arith.constant 0 : index
    %307 = vector.load %arg4[%c0_252, %c0_253, %c0_254] : memref<1x210x32xf32, #tpu.memory_space<vmem>>, vector<1x210x32xf32>
    %308 = vector.shape_cast %307 : vector<1x210x32xf32> to vector<210x32xf32>
    %309 = vector.shape_cast %306 : vector<210x32xf32> to vector<1x210x32xf32>
    tpu.vector_store %arg4[%c0_252, %c0_253, %c0_254], %309 {strides = array<i32>} : memref<1x210x32xf32, #tpu.memory_space<vmem>>, vector<1x210x32xf32>,
    return
  }
  func.func @transform_0(%arg0: i32) -> (i32, i32, i32, i32) {
    %c0_i32 = arith.constant 0 : i32
    %c0_i32_0 = arith.constant 0 : i32
    %c0_i32_1 = arith.constant 0 : i32
    %c0_i32_2 = arith.constant 0 : i32
    return %arg0, %c0_i32, %c0_i32_0, %c0_i32_1 : i32, i32, i32, i32
  }
  func.func @transform_1(%arg0: i32) -> (i32, i32, i32) {
    %c0_i32 = arith.constant 0 : i32
    %c0_i32_0 = arith.constant 0 : i32
    %c0_i32_1 = arith.constant 0 : i32
    %c0_i32_2 = arith.constant 0 : i32
    return %c0_i32, %c0_i32_0, %c0_i32_1 : i32, i32, i32
  }
  func.func @transform_2(%arg0: i32) -> (i32, i32) {
    %c0_i32 = arith.constant 0 : i32
    %c0_i32_0 = arith.constant 0 : i32
    %c0_i32_1 = arith.constant 0 : i32
    return %c0_i32, %c0_i32_0 : i32, i32
  }
  func.func @transform_3(%arg0: i32) -> (i32, i32, i32) {
    %c0_i32 = arith.constant 0 : i32
    %c0_i32_0 = arith.constant 0 : i32
    %c0_i32_1 = arith.constant 0 : i32
    return %arg0, %c0_i32, %c0_i32_0 : i32, i32, i32
  }
}

module attributes {stable_mosaic.version = 11 : i64} {
  func.func @_conv_relu_pool_kernel(%arg0: i32, %arg1: memref<1x4x72x32xf32, #tpu.memory_space<vmem>>, %arg2: memref<9x32x64xf32, #tpu.memory_space<vmem>>, %arg3: memref<1x64xf32, #tpu.memory_space<vmem>>, %arg4: memref<1x56x64xf32, #tpu.memory_space<vmem>>) attributes {dimension_semantics = [#tpu.dimension_semantics<parallel>], iteration_bounds = array<i64: 2>, scalar_prefetch = 0 : i64, scratch_operands = 0 : i64, tpu.core_type = #tpu.core_type<tc>, window_params = [{transform_indices = @transform_0, window_bounds = array<i64: 1, 4, 72, 32>}, {pipeline_mode = #tpu.pipeline_mode<synchronous>, transform_indices = @transform_1, window_bounds = array<i64: 9, 32, 64>}, {pipeline_mode = #tpu.pipeline_mode<synchronous>, transform_indices = @transform_2, window_bounds = array<i64: 1, 64>}, {transform_indices = @transform_3, window_bounds = array<i64: 1, 56, 64>}]} {
    %c0 = arith.constant 0 : index
    %c0_0 = arith.constant 0 : index
    %c0_1 = arith.constant 0 : index
    %c0_2 = arith.constant 0 : index
    %0 = vector.load %arg1[%c0, %c0_0, %c0_1, %c0_2] : memref<1x4x72x32xf32, #tpu.memory_space<vmem>>, vector<1x1x56x32xf32>
    %1 = vector.shape_cast %0 : vector<1x1x56x32xf32> to vector<56x32xf32>
    %c0_3 = arith.constant 0 : index
    %c0_4 = arith.constant 0 : index
    %c0_5 = arith.constant 0 : index
    %2 = vector.load %arg2[%c0_3, %c0_4, %c0_5] : memref<9x32x64xf32, #tpu.memory_space<vmem>>, vector<1x32x64xf32>
    %3 = vector.shape_cast %2 : vector<1x32x64xf32> to vector<32x64xf32>
    %cst = arith.constant dense<0.000000e+00> : vector<56x64xf32>
    %4 = tpu.matmul %1, %3, %cst {dimension_numbers = #tpu.dot_dimension_numbers<[1], [0], [0], [1], [0, 0, 1, 1], [], []>} : vector<56x32xf32>, vector<32x64xf32>, vector<56x64xf32> -> vector<56x64xf32>
    %c0_6 = arith.constant 0 : index
    %c1 = arith.constant 1 : index
    %c0_7 = arith.constant 0 : index
    %c0_8 = arith.constant 0 : index
    %5 = vector.load %arg1[%c0_6, %c1, %c0_7, %c0_8] : memref<1x4x72x32xf32, #tpu.memory_space<vmem>>, vector<1x1x56x32xf32>
    %6 = vector.shape_cast %5 : vector<1x1x56x32xf32> to vector<56x32xf32>
    %c1_9 = arith.constant 1 : index
    %c0_10 = arith.constant 0 : index
    %c0_11 = arith.constant 0 : index
    %7 = vector.load %arg2[%c1_9, %c0_10, %c0_11] : memref<9x32x64xf32, #tpu.memory_space<vmem>>, vector<1x32x64xf32>
    %8 = vector.shape_cast %7 : vector<1x32x64xf32> to vector<32x64xf32>
    %cst_12 = arith.constant dense<0.000000e+00> : vector<56x64xf32>
    %9 = tpu.matmul %6, %8, %cst_12 {dimension_numbers = #tpu.dot_dimension_numbers<[1], [0], [0], [1], [0, 0, 1, 1], [], []>} : vector<56x32xf32>, vector<32x64xf32>, vector<56x64xf32> -> vector<56x64xf32>
    %10 = arith.addf %4, %9 : vector<56x64xf32>
    %c0_13 = arith.constant 0 : index
    %c0_14 = arith.constant 0 : index
    %c1_15 = arith.constant 1 : index
    %c0_16 = arith.constant 0 : index
    %11 = vector.load %arg1[%c0_13, %c0_14, %c1_15, %c0_16] : memref<1x4x72x32xf32, #tpu.memory_space<vmem>>, vector<1x1x56x32xf32>
    %12 = vector.shape_cast %11 : vector<1x1x56x32xf32> to vector<56x32xf32>
    %c2 = arith.constant 2 : index
    %c0_17 = arith.constant 0 : index
    %c0_18 = arith.constant 0 : index
    %13 = vector.load %arg2[%c2, %c0_17, %c0_18] : memref<9x32x64xf32, #tpu.memory_space<vmem>>, vector<1x32x64xf32>
    %14 = vector.shape_cast %13 : vector<1x32x64xf32> to vector<32x64xf32>
    %cst_19 = arith.constant dense<0.000000e+00> : vector<56x64xf32>
    %15 = tpu.matmul %12, %14, %cst_19 {dimension_numbers = #tpu.dot_dimension_numbers<[1], [0], [0], [1], [0, 0, 1, 1], [], []>} : vector<56x32xf32>, vector<32x64xf32>, vector<56x64xf32> -> vector<56x64xf32>
    %16 = arith.addf %10, %15 : vector<56x64xf32>
    %c0_20 = arith.constant 0 : index
    %c2_21 = arith.constant 2 : index
    %c0_22 = arith.constant 0 : index
    %c0_23 = arith.constant 0 : index
    %17 = vector.load %arg1[%c0_20, %c2_21, %c0_22, %c0_23] : memref<1x4x72x32xf32, #tpu.memory_space<vmem>>, vector<1x1x56x32xf32>
    %18 = vector.shape_cast %17 : vector<1x1x56x32xf32> to vector<56x32xf32>
    %c3 = arith.constant 3 : index
    %c0_24 = arith.constant 0 : index
    %c0_25 = arith.constant 0 : index
    %19 = vector.load %arg2[%c3, %c0_24, %c0_25] : memref<9x32x64xf32, #tpu.memory_space<vmem>>, vector<1x32x64xf32>
    %20 = vector.shape_cast %19 : vector<1x32x64xf32> to vector<32x64xf32>
    %cst_26 = arith.constant dense<0.000000e+00> : vector<56x64xf32>
    %21 = tpu.matmul %18, %20, %cst_26 {dimension_numbers = #tpu.dot_dimension_numbers<[1], [0], [0], [1], [0, 0, 1, 1], [], []>} : vector<56x32xf32>, vector<32x64xf32>, vector<56x64xf32> -> vector<56x64xf32>
    %22 = arith.addf %16, %21 : vector<56x64xf32>
    %c0_27 = arith.constant 0 : index
    %c3_28 = arith.constant 3 : index
    %c0_29 = arith.constant 0 : index
    %c0_30 = arith.constant 0 : index
    %23 = vector.load %arg1[%c0_27, %c3_28, %c0_29, %c0_30] : memref<1x4x72x32xf32, #tpu.memory_space<vmem>>, vector<1x1x56x32xf32>
    %24 = vector.shape_cast %23 : vector<1x1x56x32xf32> to vector<56x32xf32>
    %c4 = arith.constant 4 : index
    %c0_31 = arith.constant 0 : index
    %c0_32 = arith.constant 0 : index
    %25 = vector.load %arg2[%c4, %c0_31, %c0_32] : memref<9x32x64xf32, #tpu.memory_space<vmem>>, vector<1x32x64xf32>
    %26 = vector.shape_cast %25 : vector<1x32x64xf32> to vector<32x64xf32>
    %cst_33 = arith.constant dense<0.000000e+00> : vector<56x64xf32>
    %27 = tpu.matmul %24, %26, %cst_33 {dimension_numbers = #tpu.dot_dimension_numbers<[1], [0], [0], [1], [0, 0, 1, 1], [], []>} : vector<56x32xf32>, vector<32x64xf32>, vector<56x64xf32> -> vector<56x64xf32>
    %28 = arith.addf %22, %27 : vector<56x64xf32>
    %c0_34 = arith.constant 0 : index
    %c2_35 = arith.constant 2 : index
    %c1_36 = arith.constant 1 : index
    %c0_37 = arith.constant 0 : index
    %29 = vector.load %arg1[%c0_34, %c2_35, %c1_36, %c0_37] : memref<1x4x72x32xf32, #tpu.memory_space<vmem>>, vector<1x1x56x32xf32>
    %30 = vector.shape_cast %29 : vector<1x1x56x32xf32> to vector<56x32xf32>
    %c5 = arith.constant 5 : index
    %c0_38 = arith.constant 0 : index
    %c0_39 = arith.constant 0 : index
    %31 = vector.load %arg2[%c5, %c0_38, %c0_39] : memref<9x32x64xf32, #tpu.memory_space<vmem>>, vector<1x32x64xf32>
    %32 = vector.shape_cast %31 : vector<1x32x64xf32> to vector<32x64xf32>
    %cst_40 = arith.constant dense<0.000000e+00> : vector<56x64xf32>
    %33 = tpu.matmul %30, %32, %cst_40 {dimension_numbers = #tpu.dot_dimension_numbers<[1], [0], [0], [1], [0, 0, 1, 1], [], []>} : vector<56x32xf32>, vector<32x64xf32>, vector<56x64xf32> -> vector<56x64xf32>
    %34 = arith.addf %28, %33 : vector<56x64xf32>
    %c0_41 = arith.constant 0 : index
    %c0_42 = arith.constant 0 : index
    %c8 = arith.constant 8 : index
    %c0_43 = arith.constant 0 : index
    %35 = vector.load %arg1[%c0_41, %c0_42, %c8, %c0_43] : memref<1x4x72x32xf32, #tpu.memory_space<vmem>>, vector<1x1x56x32xf32>
    %36 = vector.shape_cast %35 : vector<1x1x56x32xf32> to vector<56x32xf32>
    %c6 = arith.constant 6 : index
    %c0_44 = arith.constant 0 : index
    %c0_45 = arith.constant 0 : index
    %37 = vector.load %arg2[%c6, %c0_44, %c0_45] : memref<9x32x64xf32, #tpu.memory_space<vmem>>, vector<1x32x64xf32>
    %38 = vector.shape_cast %37 : vector<1x32x64xf32> to vector<32x64xf32>
    %cst_46 = arith.constant dense<0.000000e+00> : vector<56x64xf32>
    %39 = tpu.matmul %36, %38, %cst_46 {dimension_numbers = #tpu.dot_dimension_numbers<[1], [0], [0], [1], [0, 0, 1, 1], [], []>} : vector<56x32xf32>, vector<32x64xf32>, vector<56x64xf32> -> vector<56x64xf32>
    %40 = arith.addf %34, %39 : vector<56x64xf32>
    %c0_47 = arith.constant 0 : index
    %c1_48 = arith.constant 1 : index
    %c8_49 = arith.constant 8 : index
    %c0_50 = arith.constant 0 : index
    %41 = vector.load %arg1[%c0_47, %c1_48, %c8_49, %c0_50] : memref<1x4x72x32xf32, #tpu.memory_space<vmem>>, vector<1x1x56x32xf32>
    %42 = vector.shape_cast %41 : vector<1x1x56x32xf32> to vector<56x32xf32>
    %c7 = arith.constant 7 : index
    %c0_51 = arith.constant 0 : index
    %c0_52 = arith.constant 0 : index
    %43 = vector.load %arg2[%c7, %c0_51, %c0_52] : memref<9x32x64xf32, #tpu.memory_space<vmem>>, vector<1x32x64xf32>
    %44 = vector.shape_cast %43 : vector<1x32x64xf32> to vector<32x64xf32>
    %cst_53 = arith.constant dense<0.000000e+00> : vector<56x64xf32>
    %45 = tpu.matmul %42, %44, %cst_53 {dimension_numbers = #tpu.dot_dimension_numbers<[1], [0], [0], [1], [0, 0, 1, 1], [], []>} : vector<56x32xf32>, vector<32x64xf32>, vector<56x64xf32> -> vector<56x64xf32>
    %46 = arith.addf %40, %45 : vector<56x64xf32>
    %c0_54 = arith.constant 0 : index
    %c0_55 = arith.constant 0 : index
    %c9 = arith.constant 9 : index
    %c0_56 = arith.constant 0 : index
    %47 = vector.load %arg1[%c0_54, %c0_55, %c9, %c0_56] : memref<1x4x72x32xf32, #tpu.memory_space<vmem>>, vector<1x1x56x32xf32>
    %48 = vector.shape_cast %47 : vector<1x1x56x32xf32> to vector<56x32xf32>
    %c8_57 = arith.constant 8 : index
    %c0_58 = arith.constant 0 : index
    %c0_59 = arith.constant 0 : index
    %49 = vector.load %arg2[%c8_57, %c0_58, %c0_59] : memref<9x32x64xf32, #tpu.memory_space<vmem>>, vector<1x32x64xf32>
    %50 = vector.shape_cast %49 : vector<1x32x64xf32> to vector<32x64xf32>
    %cst_60 = arith.constant dense<0.000000e+00> : vector<56x64xf32>
    %51 = tpu.matmul %48, %50, %cst_60 {dimension_numbers = #tpu.dot_dimension_numbers<[1], [0], [0], [1], [0, 0, 1, 1], [], []>} : vector<56x32xf32>, vector<32x64xf32>, vector<56x64xf32> -> vector<56x64xf32>
    %52 = arith.addf %46, %51 : vector<56x64xf32>
    %c0_61 = arith.constant 0 : index
    %c0_62 = arith.constant 0 : index
    %53 = vector.load %arg3[%c0_61, %c0_62] : memref<1x64xf32, #tpu.memory_space<vmem>>, vector<1x64xf32>
    %54 = vector.broadcast %53 : vector<1x64xf32> to vector<56x64xf32>
    %55 = arith.addf %52, %54 : vector<56x64xf32>
    %cst_63 = arith.constant 0.000000e+00 : f32
    %56 = vector.broadcast %cst_63 : f32 to vector<56x64xf32>
    %57 = arith.maximumf %55, %56 : vector<56x64xf32>
    %c0_64 = arith.constant 0 : index
    %c1_65 = arith.constant 1 : index
    %c0_66 = arith.constant 0 : index
    %c0_67 = arith.constant 0 : index
    %58 = vector.load %arg1[%c0_64, %c1_65, %c0_66, %c0_67] : memref<1x4x72x32xf32, #tpu.memory_space<vmem>>, vector<1x1x56x32xf32>
    %59 = vector.shape_cast %58 : vector<1x1x56x32xf32> to vector<56x32xf32>
    %c0_68 = arith.constant 0 : index
    %c0_69 = arith.constant 0 : index
    %c0_70 = arith.constant 0 : index
    %60 = vector.load %arg2[%c0_68, %c0_69, %c0_70] : memref<9x32x64xf32, #tpu.memory_space<vmem>>, vector<1x32x64xf32>
    %61 = vector.shape_cast %60 : vector<1x32x64xf32> to vector<32x64xf32>
    %cst_71 = arith.constant dense<0.000000e+00> : vector<56x64xf32>
    %62 = tpu.matmul %59, %61, %cst_71 {dimension_numbers = #tpu.dot_dimension_numbers<[1], [0], [0], [1], [0, 0, 1, 1], [], []>} : vector<56x32xf32>, vector<32x64xf32>, vector<56x64xf32> -> vector<56x64xf32>
    %c0_72 = arith.constant 0 : index
    %c0_73 = arith.constant 0 : index
    %c1_74 = arith.constant 1 : index
    %c0_75 = arith.constant 0 : index
    %63 = vector.load %arg1[%c0_72, %c0_73, %c1_74, %c0_75] : memref<1x4x72x32xf32, #tpu.memory_space<vmem>>, vector<1x1x56x32xf32>
    %64 = vector.shape_cast %63 : vector<1x1x56x32xf32> to vector<56x32xf32>
    %c1_76 = arith.constant 1 : index
    %c0_77 = arith.constant 0 : index
    %c0_78 = arith.constant 0 : index
    %65 = vector.load %arg2[%c1_76, %c0_77, %c0_78] : memref<9x32x64xf32, #tpu.memory_space<vmem>>, vector<1x32x64xf32>
    %66 = vector.shape_cast %65 : vector<1x32x64xf32> to vector<32x64xf32>
    %cst_79 = arith.constant dense<0.000000e+00> : vector<56x64xf32>
    %67 = tpu.matmul %64, %66, %cst_79 {dimension_numbers = #tpu.dot_dimension_numbers<[1], [0], [0], [1], [0, 0, 1, 1], [], []>} : vector<56x32xf32>, vector<32x64xf32>, vector<56x64xf32> -> vector<56x64xf32>
    %68 = arith.addf %62, %67 : vector<56x64xf32>
    %c0_80 = arith.constant 0 : index
    %c1_81 = arith.constant 1 : index
    %c1_82 = arith.constant 1 : index
    %c0_83 = arith.constant 0 : index
    %69 = vector.load %arg1[%c0_80, %c1_81, %c1_82, %c0_83] : memref<1x4x72x32xf32, #tpu.memory_space<vmem>>, vector<1x1x56x32xf32>
    %70 = vector.shape_cast %69 : vector<1x1x56x32xf32> to vector<56x32xf32>
    %c2_84 = arith.constant 2 : index
    %c0_85 = arith.constant 0 : index
    %c0_86 = arith.constant 0 : index
    %71 = vector.load %arg2[%c2_84, %c0_85, %c0_86] : memref<9x32x64xf32, #tpu.memory_space<vmem>>, vector<1x32x64xf32>
    %72 = vector.shape_cast %71 : vector<1x32x64xf32> to vector<32x64xf32>
    %cst_87 = arith.constant dense<0.000000e+00> : vector<56x64xf32>
    %73 = tpu.matmul %70, %72, %cst_87 {dimension_numbers = #tpu.dot_dimension_numbers<[1], [0], [0], [1], [0, 0, 1, 1], [], []>} : vector<56x32xf32>, vector<32x64xf32>, vector<56x64xf32> -> vector<56x64xf32>
    %74 = arith.addf %68, %73 : vector<56x64xf32>
    %c0_88 = arith.constant 0 : index
    %c3_89 = arith.constant 3 : index
    %c0_90 = arith.constant 0 : index
    %c0_91 = arith.constant 0 : index
    %75 = vector.load %arg1[%c0_88, %c3_89, %c0_90, %c0_91] : memref<1x4x72x32xf32, #tpu.memory_space<vmem>>, vector<1x1x56x32xf32>
    %76 = vector.shape_cast %75 : vector<1x1x56x32xf32> to vector<56x32xf32>
    %c3_92 = arith.constant 3 : index
    %c0_93 = arith.constant 0 : index
    %c0_94 = arith.constant 0 : index
    %77 = vector.load %arg2[%c3_92, %c0_93, %c0_94] : memref<9x32x64xf32, #tpu.memory_space<vmem>>, vector<1x32x64xf32>
    %78 = vector.shape_cast %77 : vector<1x32x64xf32> to vector<32x64xf32>
    %cst_95 = arith.constant dense<0.000000e+00> : vector<56x64xf32>
    %79 = tpu.matmul %76, %78, %cst_95 {dimension_numbers = #tpu.dot_dimension_numbers<[1], [0], [0], [1], [0, 0, 1, 1], [], []>} : vector<56x32xf32>, vector<32x64xf32>, vector<56x64xf32> -> vector<56x64xf32>
    %80 = arith.addf %74, %79 : vector<56x64xf32>
    %c0_96 = arith.constant 0 : index
    %c2_97 = arith.constant 2 : index
    %c1_98 = arith.constant 1 : index
    %c0_99 = arith.constant 0 : index
    %81 = vector.load %arg1[%c0_96, %c2_97, %c1_98, %c0_99] : memref<1x4x72x32xf32, #tpu.memory_space<vmem>>, vector<1x1x56x32xf32>
    %82 = vector.shape_cast %81 : vector<1x1x56x32xf32> to vector<56x32xf32>
    %c4_100 = arith.constant 4 : index
    %c0_101 = arith.constant 0 : index
    %c0_102 = arith.constant 0 : index
    %83 = vector.load %arg2[%c4_100, %c0_101, %c0_102] : memref<9x32x64xf32, #tpu.memory_space<vmem>>, vector<1x32x64xf32>
    %84 = vector.shape_cast %83 : vector<1x32x64xf32> to vector<32x64xf32>
    %cst_103 = arith.constant dense<0.000000e+00> : vector<56x64xf32>
    %85 = tpu.matmul %82, %84, %cst_103 {dimension_numbers = #tpu.dot_dimension_numbers<[1], [0], [0], [1], [0, 0, 1, 1], [], []>} : vector<56x32xf32>, vector<32x64xf32>, vector<56x64xf32> -> vector<56x64xf32>
    %86 = arith.addf %80, %85 : vector<56x64xf32>
    %c0_104 = arith.constant 0 : index
    %c3_105 = arith.constant 3 : index
    %c1_106 = arith.constant 1 : index
    %c0_107 = arith.constant 0 : index
    %87 = vector.load %arg1[%c0_104, %c3_105, %c1_106, %c0_107] : memref<1x4x72x32xf32, #tpu.memory_space<vmem>>, vector<1x1x56x32xf32>
    %88 = vector.shape_cast %87 : vector<1x1x56x32xf32> to vector<56x32xf32>
    %c5_108 = arith.constant 5 : index
    %c0_109 = arith.constant 0 : index
    %c0_110 = arith.constant 0 : index
    %89 = vector.load %arg2[%c5_108, %c0_109, %c0_110] : memref<9x32x64xf32, #tpu.memory_space<vmem>>, vector<1x32x64xf32>
    %90 = vector.shape_cast %89 : vector<1x32x64xf32> to vector<32x64xf32>
    %cst_111 = arith.constant dense<0.000000e+00> : vector<56x64xf32>
    %91 = tpu.matmul %88, %90, %cst_111 {dimension_numbers = #tpu.dot_dimension_numbers<[1], [0], [0], [1], [0, 0, 1, 1], [], []>} : vector<56x32xf32>, vector<32x64xf32>, vector<56x64xf32> -> vector<56x64xf32>
    %92 = arith.addf %86, %91 : vector<56x64xf32>
    %c0_112 = arith.constant 0 : index
    %c1_113 = arith.constant 1 : index
    %c8_114 = arith.constant 8 : index
    %c0_115 = arith.constant 0 : index
    %93 = vector.load %arg1[%c0_112, %c1_113, %c8_114, %c0_115] : memref<1x4x72x32xf32, #tpu.memory_space<vmem>>, vector<1x1x56x32xf32>
    %94 = vector.shape_cast %93 : vector<1x1x56x32xf32> to vector<56x32xf32>
    %c6_116 = arith.constant 6 : index
    %c0_117 = arith.constant 0 : index
    %c0_118 = arith.constant 0 : index
    %95 = vector.load %arg2[%c6_116, %c0_117, %c0_118] : memref<9x32x64xf32, #tpu.memory_space<vmem>>, vector<1x32x64xf32>
    %96 = vector.shape_cast %95 : vector<1x32x64xf32> to vector<32x64xf32>
    %cst_119 = arith.constant dense<0.000000e+00> : vector<56x64xf32>
    %97 = tpu.matmul %94, %96, %cst_119 {dimension_numbers = #tpu.dot_dimension_numbers<[1], [0], [0], [1], [0, 0, 1, 1], [], []>} : vector<56x32xf32>, vector<32x64xf32>, vector<56x64xf32> -> vector<56x64xf32>
    %98 = arith.addf %92, %97 : vector<56x64xf32>
    %c0_120 = arith.constant 0 : index
    %c0_121 = arith.constant 0 : index
    %c9_122 = arith.constant 9 : index
    %c0_123 = arith.constant 0 : index
    %99 = vector.load %arg1[%c0_120, %c0_121, %c9_122, %c0_123] : memref<1x4x72x32xf32, #tpu.memory_space<vmem>>, vector<1x1x56x32xf32>
    %100 = vector.shape_cast %99 : vector<1x1x56x32xf32> to vector<56x32xf32>
    %c7_124 = arith.constant 7 : index
    %c0_125 = arith.constant 0 : index
    %c0_126 = arith.constant 0 : index
    %101 = vector.load %arg2[%c7_124, %c0_125, %c0_126] : memref<9x32x64xf32, #tpu.memory_space<vmem>>, vector<1x32x64xf32>
    %102 = vector.shape_cast %101 : vector<1x32x64xf32> to vector<32x64xf32>
    %cst_127 = arith.constant dense<0.000000e+00> : vector<56x64xf32>
    %103 = tpu.matmul %100, %102, %cst_127 {dimension_numbers = #tpu.dot_dimension_numbers<[1], [0], [0], [1], [0, 0, 1, 1], [], []>} : vector<56x32xf32>, vector<32x64xf32>, vector<56x64xf32> -> vector<56x64xf32>
    %104 = arith.addf %98, %103 : vector<56x64xf32>
    %c0_128 = arith.constant 0 : index
    %c1_129 = arith.constant 1 : index
    %c9_130 = arith.constant 9 : index
    %c0_131 = arith.constant 0 : index
    %105 = vector.load %arg1[%c0_128, %c1_129, %c9_130, %c0_131] : memref<1x4x72x32xf32, #tpu.memory_space<vmem>>, vector<1x1x56x32xf32>
    %106 = vector.shape_cast %105 : vector<1x1x56x32xf32> to vector<56x32xf32>
    %c8_132 = arith.constant 8 : index
    %c0_133 = arith.constant 0 : index
    %c0_134 = arith.constant 0 : index
    %107 = vector.load %arg2[%c8_132, %c0_133, %c0_134] : memref<9x32x64xf32, #tpu.memory_space<vmem>>, vector<1x32x64xf32>
    %108 = vector.shape_cast %107 : vector<1x32x64xf32> to vector<32x64xf32>
    %cst_135 = arith.constant dense<0.000000e+00> : vector<56x64xf32>
    %109 = tpu.matmul %106, %108, %cst_135 {dimension_numbers = #tpu.dot_dimension_numbers<[1], [0], [0], [1], [0, 0, 1, 1], [], []>} : vector<56x32xf32>, vector<32x64xf32>, vector<56x64xf32> -> vector<56x64xf32>
    %110 = arith.addf %104, %109 : vector<56x64xf32>
    %c0_136 = arith.constant 0 : index
    %c0_137 = arith.constant 0 : index
    %111 = vector.load %arg3[%c0_136, %c0_137] : memref<1x64xf32, #tpu.memory_space<vmem>>, vector<1x64xf32>
    %112 = vector.broadcast %111 : vector<1x64xf32> to vector<56x64xf32>
    %113 = arith.addf %110, %112 : vector<56x64xf32>
    %cst_138 = arith.constant 0.000000e+00 : f32
    %114 = vector.broadcast %cst_138 : f32 to vector<56x64xf32>
    %115 = arith.maximumf %113, %114 : vector<56x64xf32>
    %116 = arith.maximumf %57, %115 : vector<56x64xf32>
    %c0_139 = arith.constant 0 : index
    %c2_140 = arith.constant 2 : index
    %c0_141 = arith.constant 0 : index
    %c0_142 = arith.constant 0 : index
    %117 = vector.load %arg1[%c0_139, %c2_140, %c0_141, %c0_142] : memref<1x4x72x32xf32, #tpu.memory_space<vmem>>, vector<1x1x56x32xf32>
    %118 = vector.shape_cast %117 : vector<1x1x56x32xf32> to vector<56x32xf32>
    %c0_143 = arith.constant 0 : index
    %c0_144 = arith.constant 0 : index
    %c0_145 = arith.constant 0 : index
    %119 = vector.load %arg2[%c0_143, %c0_144, %c0_145] : memref<9x32x64xf32, #tpu.memory_space<vmem>>, vector<1x32x64xf32>
    %120 = vector.shape_cast %119 : vector<1x32x64xf32> to vector<32x64xf32>
    %cst_146 = arith.constant dense<0.000000e+00> : vector<56x64xf32>
    %121 = tpu.matmul %118, %120, %cst_146 {dimension_numbers = #tpu.dot_dimension_numbers<[1], [0], [0], [1], [0, 0, 1, 1], [], []>} : vector<56x32xf32>, vector<32x64xf32>, vector<56x64xf32> -> vector<56x64xf32>
    %c0_147 = arith.constant 0 : index
    %c3_148 = arith.constant 3 : index
    %c0_149 = arith.constant 0 : index
    %c0_150 = arith.constant 0 : index
    %122 = vector.load %arg1[%c0_147, %c3_148, %c0_149, %c0_150] : memref<1x4x72x32xf32, #tpu.memory_space<vmem>>, vector<1x1x56x32xf32>
    %123 = vector.shape_cast %122 : vector<1x1x56x32xf32> to vector<56x32xf32>
    %c1_151 = arith.constant 1 : index
    %c0_152 = arith.constant 0 : index
    %c0_153 = arith.constant 0 : index
    %124 = vector.load %arg2[%c1_151, %c0_152, %c0_153] : memref<9x32x64xf32, #tpu.memory_space<vmem>>, vector<1x32x64xf32>
    %125 = vector.shape_cast %124 : vector<1x32x64xf32> to vector<32x64xf32>
    %cst_154 = arith.constant dense<0.000000e+00> : vector<56x64xf32>
    %126 = tpu.matmul %123, %125, %cst_154 {dimension_numbers = #tpu.dot_dimension_numbers<[1], [0], [0], [1], [0, 0, 1, 1], [], []>} : vector<56x32xf32>, vector<32x64xf32>, vector<56x64xf32> -> vector<56x64xf32>
    %127 = arith.addf %121, %126 : vector<56x64xf32>
    %c0_155 = arith.constant 0 : index
    %c2_156 = arith.constant 2 : index
    %c1_157 = arith.constant 1 : index
    %c0_158 = arith.constant 0 : index
    %128 = vector.load %arg1[%c0_155, %c2_156, %c1_157, %c0_158] : memref<1x4x72x32xf32, #tpu.memory_space<vmem>>, vector<1x1x56x32xf32>
    %129 = vector.shape_cast %128 : vector<1x1x56x32xf32> to vector<56x32xf32>
    %c2_159 = arith.constant 2 : index
    %c0_160 = arith.constant 0 : index
    %c0_161 = arith.constant 0 : index
    %130 = vector.load %arg2[%c2_159, %c0_160, %c0_161] : memref<9x32x64xf32, #tpu.memory_space<vmem>>, vector<1x32x64xf32>
    %131 = vector.shape_cast %130 : vector<1x32x64xf32> to vector<32x64xf32>
    %cst_162 = arith.constant dense<0.000000e+00> : vector<56x64xf32>
    %132 = tpu.matmul %129, %131, %cst_162 {dimension_numbers = #tpu.dot_dimension_numbers<[1], [0], [0], [1], [0, 0, 1, 1], [], []>} : vector<56x32xf32>, vector<32x64xf32>, vector<56x64xf32> -> vector<56x64xf32>
    %133 = arith.addf %127, %132 : vector<56x64xf32>
    %c0_163 = arith.constant 0 : index
    %c0_164 = arith.constant 0 : index
    %c8_165 = arith.constant 8 : index
    %c0_166 = arith.constant 0 : index
    %134 = vector.load %arg1[%c0_163, %c0_164, %c8_165, %c0_166] : memref<1x4x72x32xf32, #tpu.memory_space<vmem>>, vector<1x1x56x32xf32>
    %135 = vector.shape_cast %134 : vector<1x1x56x32xf32> to vector<56x32xf32>
    %c3_167 = arith.constant 3 : index
    %c0_168 = arith.constant 0 : index
    %c0_169 = arith.constant 0 : index
    %136 = vector.load %arg2[%c3_167, %c0_168, %c0_169] : memref<9x32x64xf32, #tpu.memory_space<vmem>>, vector<1x32x64xf32>
    %137 = vector.shape_cast %136 : vector<1x32x64xf32> to vector<32x64xf32>
    %cst_170 = arith.constant dense<0.000000e+00> : vector<56x64xf32>
    %138 = tpu.matmul %135, %137, %cst_170 {dimension_numbers = #tpu.dot_dimension_numbers<[1], [0], [0], [1], [0, 0, 1, 1], [], []>} : vector<56x32xf32>, vector<32x64xf32>, vector<56x64xf32> -> vector<56x64xf32>
    %139 = arith.addf %133, %138 : vector<56x64xf32>
    %c0_171 = arith.constant 0 : index
    %c1_172 = arith.constant 1 : index
    %c8_173 = arith.constant 8 : index
    %c0_174 = arith.constant 0 : index
    %140 = vector.load %arg1[%c0_171, %c1_172, %c8_173, %c0_174] : memref<1x4x72x32xf32, #tpu.memory_space<vmem>>, vector<1x1x56x32xf32>
    %141 = vector.shape_cast %140 : vector<1x1x56x32xf32> to vector<56x32xf32>
    %c4_175 = arith.constant 4 : index
    %c0_176 = arith.constant 0 : index
    %c0_177 = arith.constant 0 : index
    %142 = vector.load %arg2[%c4_175, %c0_176, %c0_177] : memref<9x32x64xf32, #tpu.memory_space<vmem>>, vector<1x32x64xf32>
    %143 = vector.shape_cast %142 : vector<1x32x64xf32> to vector<32x64xf32>
    %cst_178 = arith.constant dense<0.000000e+00> : vector<56x64xf32>
    %144 = tpu.matmul %141, %143, %cst_178 {dimension_numbers = #tpu.dot_dimension_numbers<[1], [0], [0], [1], [0, 0, 1, 1], [], []>} : vector<56x32xf32>, vector<32x64xf32>, vector<56x64xf32> -> vector<56x64xf32>
    %145 = arith.addf %139, %144 : vector<56x64xf32>
    %c0_179 = arith.constant 0 : index
    %c0_180 = arith.constant 0 : index
    %c9_181 = arith.constant 9 : index
    %c0_182 = arith.constant 0 : index
    %146 = vector.load %arg1[%c0_179, %c0_180, %c9_181, %c0_182] : memref<1x4x72x32xf32, #tpu.memory_space<vmem>>, vector<1x1x56x32xf32>
    %147 = vector.shape_cast %146 : vector<1x1x56x32xf32> to vector<56x32xf32>
    %c5_183 = arith.constant 5 : index
    %c0_184 = arith.constant 0 : index
    %c0_185 = arith.constant 0 : index
    %148 = vector.load %arg2[%c5_183, %c0_184, %c0_185] : memref<9x32x64xf32, #tpu.memory_space<vmem>>, vector<1x32x64xf32>
    %149 = vector.shape_cast %148 : vector<1x32x64xf32> to vector<32x64xf32>
    %cst_186 = arith.constant dense<0.000000e+00> : vector<56x64xf32>
    %150 = tpu.matmul %147, %149, %cst_186 {dimension_numbers = #tpu.dot_dimension_numbers<[1], [0], [0], [1], [0, 0, 1, 1], [], []>} : vector<56x32xf32>, vector<32x64xf32>, vector<56x64xf32> -> vector<56x64xf32>
    %151 = arith.addf %145, %150 : vector<56x64xf32>
    %c0_187 = arith.constant 0 : index
    %c2_188 = arith.constant 2 : index
    %c8_189 = arith.constant 8 : index
    %c0_190 = arith.constant 0 : index
    %152 = vector.load %arg1[%c0_187, %c2_188, %c8_189, %c0_190] : memref<1x4x72x32xf32, #tpu.memory_space<vmem>>, vector<1x1x56x32xf32>
    %153 = vector.shape_cast %152 : vector<1x1x56x32xf32> to vector<56x32xf32>
    %c6_191 = arith.constant 6 : index
    %c0_192 = arith.constant 0 : index
    %c0_193 = arith.constant 0 : index
    %154 = vector.load %arg2[%c6_191, %c0_192, %c0_193] : memref<9x32x64xf32, #tpu.memory_space<vmem>>, vector<1x32x64xf32>
    %155 = vector.shape_cast %154 : vector<1x32x64xf32> to vector<32x64xf32>
    %cst_194 = arith.constant dense<0.000000e+00> : vector<56x64xf32>
    %156 = tpu.matmul %153, %155, %cst_194 {dimension_numbers = #tpu.dot_dimension_numbers<[1], [0], [0], [1], [0, 0, 1, 1], [], []>} : vector<56x32xf32>, vector<32x64xf32>, vector<56x64xf32> -> vector<56x64xf32>
    %157 = arith.addf %151, %156 : vector<56x64xf32>
    %c0_195 = arith.constant 0 : index
    %c3_196 = arith.constant 3 : index
    %c8_197 = arith.constant 8 : index
    %c0_198 = arith.constant 0 : index
    %158 = vector.load %arg1[%c0_195, %c3_196, %c8_197, %c0_198] : memref<1x4x72x32xf32, #tpu.memory_space<vmem>>, vector<1x1x56x32xf32>
    %159 = vector.shape_cast %158 : vector<1x1x56x32xf32> to vector<56x32xf32>
    %c7_199 = arith.constant 7 : index
    %c0_200 = arith.constant 0 : index
    %c0_201 = arith.constant 0 : index
    %160 = vector.load %arg2[%c7_199, %c0_200, %c0_201] : memref<9x32x64xf32, #tpu.memory_space<vmem>>, vector<1x32x64xf32>
    %161 = vector.shape_cast %160 : vector<1x32x64xf32> to vector<32x64xf32>
    %cst_202 = arith.constant dense<0.000000e+00> : vector<56x64xf32>
    %162 = tpu.matmul %159, %161, %cst_202 {dimension_numbers = #tpu.dot_dimension_numbers<[1], [0], [0], [1], [0, 0, 1, 1], [], []>} : vector<56x32xf32>, vector<32x64xf32>, vector<56x64xf32> -> vector<56x64xf32>
    %163 = arith.addf %157, %162 : vector<56x64xf32>
    %c0_203 = arith.constant 0 : index
    %c2_204 = arith.constant 2 : index
    %c9_205 = arith.constant 9 : index
    %c0_206 = arith.constant 0 : index
    %164 = vector.load %arg1[%c0_203, %c2_204, %c9_205, %c0_206] : memref<1x4x72x32xf32, #tpu.memory_space<vmem>>, vector<1x1x56x32xf32>
    %165 = vector.shape_cast %164 : vector<1x1x56x32xf32> to vector<56x32xf32>
    %c8_207 = arith.constant 8 : index
    %c0_208 = arith.constant 0 : index
    %c0_209 = arith.constant 0 : index
    %166 = vector.load %arg2[%c8_207, %c0_208, %c0_209] : memref<9x32x64xf32, #tpu.memory_space<vmem>>, vector<1x32x64xf32>
    %167 = vector.shape_cast %166 : vector<1x32x64xf32> to vector<32x64xf32>
    %cst_210 = arith.constant dense<0.000000e+00> : vector<56x64xf32>
    %168 = tpu.matmul %165, %167, %cst_210 {dimension_numbers = #tpu.dot_dimension_numbers<[1], [0], [0], [1], [0, 0, 1, 1], [], []>} : vector<56x32xf32>, vector<32x64xf32>, vector<56x64xf32> -> vector<56x64xf32>
    %169 = arith.addf %163, %168 : vector<56x64xf32>
    %c0_211 = arith.constant 0 : index
    %c0_212 = arith.constant 0 : index
    %170 = vector.load %arg3[%c0_211, %c0_212] : memref<1x64xf32, #tpu.memory_space<vmem>>, vector<1x64xf32>
    %171 = vector.broadcast %170 : vector<1x64xf32> to vector<56x64xf32>
    %172 = arith.addf %169, %171 : vector<56x64xf32>
    %cst_213 = arith.constant 0.000000e+00 : f32
    %173 = vector.broadcast %cst_213 : f32 to vector<56x64xf32>
    %174 = arith.maximumf %172, %173 : vector<56x64xf32>
    %175 = arith.maximumf %116, %174 : vector<56x64xf32>
    %c0_214 = arith.constant 0 : index
    %c3_215 = arith.constant 3 : index
    %c0_216 = arith.constant 0 : index
    %c0_217 = arith.constant 0 : index
    %176 = vector.load %arg1[%c0_214, %c3_215, %c0_216, %c0_217] : memref<1x4x72x32xf32, #tpu.memory_space<vmem>>, vector<1x1x56x32xf32>
    %177 = vector.shape_cast %176 : vector<1x1x56x32xf32> to vector<56x32xf32>
    %c0_218 = arith.constant 0 : index
    %c0_219 = arith.constant 0 : index
    %c0_220 = arith.constant 0 : index
    %178 = vector.load %arg2[%c0_218, %c0_219, %c0_220] : memref<9x32x64xf32, #tpu.memory_space<vmem>>, vector<1x32x64xf32>
    %179 = vector.shape_cast %178 : vector<1x32x64xf32> to vector<32x64xf32>
    %cst_221 = arith.constant dense<0.000000e+00> : vector<56x64xf32>
    %180 = tpu.matmul %177, %179, %cst_221 {dimension_numbers = #tpu.dot_dimension_numbers<[1], [0], [0], [1], [0, 0, 1, 1], [], []>} : vector<56x32xf32>, vector<32x64xf32>, vector<56x64xf32> -> vector<56x64xf32>
    %c0_222 = arith.constant 0 : index
    %c2_223 = arith.constant 2 : index
    %c1_224 = arith.constant 1 : index
    %c0_225 = arith.constant 0 : index
    %181 = vector.load %arg1[%c0_222, %c2_223, %c1_224, %c0_225] : memref<1x4x72x32xf32, #tpu.memory_space<vmem>>, vector<1x1x56x32xf32>
    %182 = vector.shape_cast %181 : vector<1x1x56x32xf32> to vector<56x32xf32>
    %c1_226 = arith.constant 1 : index
    %c0_227 = arith.constant 0 : index
    %c0_228 = arith.constant 0 : index
    %183 = vector.load %arg2[%c1_226, %c0_227, %c0_228] : memref<9x32x64xf32, #tpu.memory_space<vmem>>, vector<1x32x64xf32>
    %184 = vector.shape_cast %183 : vector<1x32x64xf32> to vector<32x64xf32>
    %cst_229 = arith.constant dense<0.000000e+00> : vector<56x64xf32>
    %185 = tpu.matmul %182, %184, %cst_229 {dimension_numbers = #tpu.dot_dimension_numbers<[1], [0], [0], [1], [0, 0, 1, 1], [], []>} : vector<56x32xf32>, vector<32x64xf32>, vector<56x64xf32> -> vector<56x64xf32>
    %186 = arith.addf %180, %185 : vector<56x64xf32>
    %c0_230 = arith.constant 0 : index
    %c3_231 = arith.constant 3 : index
    %c1_232 = arith.constant 1 : index
    %c0_233 = arith.constant 0 : index
    %187 = vector.load %arg1[%c0_230, %c3_231, %c1_232, %c0_233] : memref<1x4x72x32xf32, #tpu.memory_space<vmem>>, vector<1x1x56x32xf32>
    %188 = vector.shape_cast %187 : vector<1x1x56x32xf32> to vector<56x32xf32>
    %c2_234 = arith.constant 2 : index
    %c0_235 = arith.constant 0 : index
    %c0_236 = arith.constant 0 : index
    %189 = vector.load %arg2[%c2_234, %c0_235, %c0_236] : memref<9x32x64xf32, #tpu.memory_space<vmem>>, vector<1x32x64xf32>
    %190 = vector.shape_cast %189 : vector<1x32x64xf32> to vector<32x64xf32>
    %cst_237 = arith.constant dense<0.000000e+00> : vector<56x64xf32>
    %191 = tpu.matmul %188, %190, %cst_237 {dimension_numbers = #tpu.dot_dimension_numbers<[1], [0], [0], [1], [0, 0, 1, 1], [], []>} : vector<56x32xf32>, vector<32x64xf32>, vector<56x64xf32> -> vector<56x64xf32>
    %192 = arith.addf %186, %191 : vector<56x64xf32>
    %c0_238 = arith.constant 0 : index
    %c1_239 = arith.constant 1 : index
    %c8_240 = arith.constant 8 : index
    %c0_241 = arith.constant 0 : index
    %193 = vector.load %arg1[%c0_238, %c1_239, %c8_240, %c0_241] : memref<1x4x72x32xf32, #tpu.memory_space<vmem>>, vector<1x1x56x32xf32>
    %194 = vector.shape_cast %193 : vector<1x1x56x32xf32> to vector<56x32xf32>
    %c3_242 = arith.constant 3 : index
    %c0_243 = arith.constant 0 : index
    %c0_244 = arith.constant 0 : index
    %195 = vector.load %arg2[%c3_242, %c0_243, %c0_244] : memref<9x32x64xf32, #tpu.memory_space<vmem>>, vector<1x32x64xf32>
    %196 = vector.shape_cast %195 : vector<1x32x64xf32> to vector<32x64xf32>
    %cst_245 = arith.constant dense<0.000000e+00> : vector<56x64xf32>
    %197 = tpu.matmul %194, %196, %cst_245 {dimension_numbers = #tpu.dot_dimension_numbers<[1], [0], [0], [1], [0, 0, 1, 1], [], []>} : vector<56x32xf32>, vector<32x64xf32>, vector<56x64xf32> -> vector<56x64xf32>
    %198 = arith.addf %192, %197 : vector<56x64xf32>
    %c0_246 = arith.constant 0 : index
    %c0_247 = arith.constant 0 : index
    %c9_248 = arith.constant 9 : index
    %c0_249 = arith.constant 0 : index
    %199 = vector.load %arg1[%c0_246, %c0_247, %c9_248, %c0_249] : memref<1x4x72x32xf32, #tpu.memory_space<vmem>>, vector<1x1x56x32xf32>
    %200 = vector.shape_cast %199 : vector<1x1x56x32xf32> to vector<56x32xf32>
    %c4_250 = arith.constant 4 : index
    %c0_251 = arith.constant 0 : index
    %c0_252 = arith.constant 0 : index
    %201 = vector.load %arg2[%c4_250, %c0_251, %c0_252] : memref<9x32x64xf32, #tpu.memory_space<vmem>>, vector<1x32x64xf32>
    %202 = vector.shape_cast %201 : vector<1x32x64xf32> to vector<32x64xf32>
    %cst_253 = arith.constant dense<0.000000e+00> : vector<56x64xf32>
    %203 = tpu.matmul %200, %202, %cst_253 {dimension_numbers = #tpu.dot_dimension_numbers<[1], [0], [0], [1], [0, 0, 1, 1], [], []>} : vector<56x32xf32>, vector<32x64xf32>, vector<56x64xf32> -> vector<56x64xf32>
    %204 = arith.addf %198, %203 : vector<56x64xf32>
    %c0_254 = arith.constant 0 : index
    %c1_255 = arith.constant 1 : index
    %c9_256 = arith.constant 9 : index
    %c0_257 = arith.constant 0 : index
    %205 = vector.load %arg1[%c0_254, %c1_255, %c9_256, %c0_257] : memref<1x4x72x32xf32, #tpu.memory_space<vmem>>, vector<1x1x56x32xf32>
    %206 = vector.shape_cast %205 : vector<1x1x56x32xf32> to vector<56x32xf32>
    %c5_258 = arith.constant 5 : index
    %c0_259 = arith.constant 0 : index
    %c0_260 = arith.constant 0 : index
    %207 = vector.load %arg2[%c5_258, %c0_259, %c0_260] : memref<9x32x64xf32, #tpu.memory_space<vmem>>, vector<1x32x64xf32>
    %208 = vector.shape_cast %207 : vector<1x32x64xf32> to vector<32x64xf32>
    %cst_261 = arith.constant dense<0.000000e+00> : vector<56x64xf32>
    %209 = tpu.matmul %206, %208, %cst_261 {dimension_numbers = #tpu.dot_dimension_numbers<[1], [0], [0], [1], [0, 0, 1, 1], [], []>} : vector<56x32xf32>, vector<32x64xf32>, vector<56x64xf32> -> vector<56x64xf32>
    %210 = arith.addf %204, %209 : vector<56x64xf32>
    %c0_262 = arith.constant 0 : index
    %c3_263 = arith.constant 3 : index
    %c8_264 = arith.constant 8 : index
    %c0_265 = arith.constant 0 : index
    %211 = vector.load %arg1[%c0_262, %c3_263, %c8_264, %c0_265] : memref<1x4x72x32xf32, #tpu.memory_space<vmem>>, vector<1x1x56x32xf32>
    %212 = vector.shape_cast %211 : vector<1x1x56x32xf32> to vector<56x32xf32>
    %c6_266 = arith.constant 6 : index
    %c0_267 = arith.constant 0 : index
    %c0_268 = arith.constant 0 : index
    %213 = vector.load %arg2[%c6_266, %c0_267, %c0_268] : memref<9x32x64xf32, #tpu.memory_space<vmem>>, vector<1x32x64xf32>
    %214 = vector.shape_cast %213 : vector<1x32x64xf32> to vector<32x64xf32>
    %cst_269 = arith.constant dense<0.000000e+00> : vector<56x64xf32>
    %215 = tpu.matmul %212, %214, %cst_269 {dimension_numbers = #tpu.dot_dimension_numbers<[1], [0], [0], [1], [0, 0, 1, 1], [], []>} : vector<56x32xf32>, vector<32x64xf32>, vector<56x64xf32> -> vector<56x64xf32>
    %216 = arith.addf %210, %215 : vector<56x64xf32>
    %c0_270 = arith.constant 0 : index
    %c2_271 = arith.constant 2 : index
    %c9_272 = arith.constant 9 : index
    %c0_273 = arith.constant 0 : index
    %217 = vector.load %arg1[%c0_270, %c2_271, %c9_272, %c0_273] : memref<1x4x72x32xf32, #tpu.memory_space<vmem>>, vector<1x1x56x32xf32>
    %218 = vector.shape_cast %217 : vector<1x1x56x32xf32> to vector<56x32xf32>
    %c7_274 = arith.constant 7 : index
    %c0_275 = arith.constant 0 : index
    %c0_276 = arith.constant 0 : index
    %219 = vector.load %arg2[%c7_274, %c0_275, %c0_276] : memref<9x32x64xf32, #tpu.memory_space<vmem>>, vector<1x32x64xf32>
    %220 = vector.shape_cast %219 : vector<1x32x64xf32> to vector<32x64xf32>
    %cst_277 = arith.constant dense<0.000000e+00> : vector<56x64xf32>
    %221 = tpu.matmul %218, %220, %cst_277 {dimension_numbers = #tpu.dot_dimension_numbers<[1], [0], [0], [1], [0, 0, 1, 1], [], []>} : vector<56x32xf32>, vector<32x64xf32>, vector<56x64xf32> -> vector<56x64xf32>
    %222 = arith.addf %216, %221 : vector<56x64xf32>
    %c0_278 = arith.constant 0 : index
    %c3_279 = arith.constant 3 : index
    %c9_280 = arith.constant 9 : index
    %c0_281 = arith.constant 0 : index
    %223 = vector.load %arg1[%c0_278, %c3_279, %c9_280, %c0_281] : memref<1x4x72x32xf32, #tpu.memory_space<vmem>>, vector<1x1x56x32xf32>
    %224 = vector.shape_cast %223 : vector<1x1x56x32xf32> to vector<56x32xf32>
    %c8_282 = arith.constant 8 : index
    %c0_283 = arith.constant 0 : index
    %c0_284 = arith.constant 0 : index
    %225 = vector.load %arg2[%c8_282, %c0_283, %c0_284] : memref<9x32x64xf32, #tpu.memory_space<vmem>>, vector<1x32x64xf32>
    %226 = vector.shape_cast %225 : vector<1x32x64xf32> to vector<32x64xf32>
    %cst_285 = arith.constant dense<0.000000e+00> : vector<56x64xf32>
    %227 = tpu.matmul %224, %226, %cst_285 {dimension_numbers = #tpu.dot_dimension_numbers<[1], [0], [0], [1], [0, 0, 1, 1], [], []>} : vector<56x32xf32>, vector<32x64xf32>, vector<56x64xf32> -> vector<56x64xf32>
    %228 = arith.addf %222, %227 : vector<56x64xf32>
    %c0_286 = arith.constant 0 : index
    %c0_287 = arith.constant 0 : index
    %229 = vector.load %arg3[%c0_286, %c0_287] : memref<1x64xf32, #tpu.memory_space<vmem>>, vector<1x64xf32>
    %230 = vector.broadcast %229 : vector<1x64xf32> to vector<56x64xf32>
    %231 = arith.addf %228, %230 : vector<56x64xf32>
    %cst_288 = arith.constant 0.000000e+00 : f32
    %232 = vector.broadcast %cst_288 : f32 to vector<56x64xf32>
    %233 = arith.maximumf %231, %232 : vector<56x64xf32>
    %234 = arith.maximumf %175, %233 : vector<56x64xf32>
    %c0_289 = arith.constant 0 : index
    %c0_290 = arith.constant 0 : index
    %c0_291 = arith.constant 0 : index
    %235 = vector.load %arg4[%c0_289, %c0_290, %c0_291] : memref<1x56x64xf32, #tpu.memory_space<vmem>>, vector<1x56x64xf32>
    %236 = vector.shape_cast %235 : vector<1x56x64xf32> to vector<56x64xf32>
    %237 = vector.shape_cast %234 : vector<56x64xf32> to vector<1x56x64xf32>
    tpu.vector_store %arg4[%c0_289, %c0_290, %c0_291], %237 {strides = array<i32>} : memref<1x56x64xf32, #tpu.memory_space<vmem>>, vector<1x56x64xf32>,
    return
  }
  func.func @transform_0(%arg0: i32) -> (i32, i32, i32, i32) {
    %c0_i32 = arith.constant 0 : i32
    %c0_i32_0 = arith.constant 0 : i32
    %c0_i32_1 = arith.constant 0 : i32
    %c0_i32_2 = arith.constant 0 : i32
    return %arg0, %c0_i32, %c0_i32_0, %c0_i32_1 : i32, i32, i32, i32
  }
  func.func @transform_1(%arg0: i32) -> (i32, i32, i32) {
    %c0_i32 = arith.constant 0 : i32
    %c0_i32_0 = arith.constant 0 : i32
    %c0_i32_1 = arith.constant 0 : i32
    %c0_i32_2 = arith.constant 0 : i32
    return %c0_i32, %c0_i32_0, %c0_i32_1 : i32, i32, i32
  }
  func.func @transform_2(%arg0: i32) -> (i32, i32) {
    %c0_i32 = arith.constant 0 : i32
    %c0_i32_0 = arith.constant 0 : i32
    %c0_i32_1 = arith.constant 0 : i32
    return %c0_i32, %c0_i32_0 : i32, i32
  }
  func.func @transform_3(%arg0: i32) -> (i32, i32, i32) {
    %c0_i32 = arith.constant 0 : i32
    %c0_i32_0 = arith.constant 0 : i32
    %c0_i32_1 = arith.constant 0 : i32
    return %arg0, %c0_i32, %c0_i32_0 : i32, i32, i32
  }
}

module attributes {stable_mosaic.version = 11 : i64} {
  func.func @_fc_kernel(%arg0: i32, %arg1: memref<2x3136xf32, #tpu.memory_space<vmem>>, %arg2: memref<3136x128xf32, #tpu.memory_space<vmem>>, %arg3: memref<1x128xf32, #tpu.memory_space<vmem>>, %arg4: memref<2x128xf32, #tpu.memory_space<vmem>>) attributes {dimension_semantics = [#tpu.dimension_semantics<arbitrary>], iteration_bounds = array<i64: 1>, scalar_prefetch = 0 : i64, scratch_operands = 0 : i64, tpu.core_type = #tpu.core_type<tc>, window_params = [{pipeline_mode = #tpu.pipeline_mode<synchronous>, transform_indices = @transform_0, window_bounds = array<i64: 2, 3136>}, {pipeline_mode = #tpu.pipeline_mode<synchronous>, transform_indices = @transform_1, window_bounds = array<i64: 3136, 128>}, {pipeline_mode = #tpu.pipeline_mode<synchronous>, transform_indices = @transform_2, window_bounds = array<i64: 1, 128>}, {pipeline_mode = #tpu.pipeline_mode<synchronous>, transform_indices = @transform_3, window_bounds = array<i64: 2, 128>}]} {
    %c0 = arith.constant 0 : index
    %c0_0 = arith.constant 0 : index
    %0 = vector.load %arg1[%c0, %c0_0] : memref<2x3136xf32, #tpu.memory_space<vmem>>, vector<2x3136xf32>
    %c0_1 = arith.constant 0 : index
    %c0_2 = arith.constant 0 : index
    %1 = vector.load %arg2[%c0_1, %c0_2] : memref<3136x128xf32, #tpu.memory_space<vmem>>, vector<3136x128xf32>
    %cst = arith.constant dense<0.000000e+00> : vector<2x128xf32>
    %2 = tpu.matmul %0, %1, %cst {dimension_numbers = #tpu.dot_dimension_numbers<[1], [0], [0], [1], [0, 0, 1, 1], [], []>} : vector<2x3136xf32>, vector<3136x128xf32>, vector<2x128xf32> -> vector<2x128xf32>
    %c0_3 = arith.constant 0 : index
    %c0_4 = arith.constant 0 : index
    %3 = vector.load %arg3[%c0_3, %c0_4] : memref<1x128xf32, #tpu.memory_space<vmem>>, vector<1x128xf32>
    %4 = vector.broadcast %3 : vector<1x128xf32> to vector<2x128xf32>
    %5 = arith.addf %2, %4 : vector<2x128xf32>
    %c0_5 = arith.constant 0 : index
    %c0_6 = arith.constant 0 : index
    %6 = vector.load %arg4[%c0_5, %c0_6] : memref<2x128xf32, #tpu.memory_space<vmem>>, vector<2x128xf32>
    tpu.vector_store %arg4[%c0_5, %c0_6], %5 {strides = array<i32>} : memref<2x128xf32, #tpu.memory_space<vmem>>, vector<2x128xf32>,
    return
  }
  func.func @transform_0(%arg0: i32) -> (i32, i32) {
    %c0_i32 = arith.constant 0 : i32
    %c0_i32_0 = arith.constant 0 : i32
    %c0_i32_1 = arith.constant 0 : i32
    return %c0_i32, %c0_i32_0 : i32, i32
  }
  func.func @transform_1(%arg0: i32) -> (i32, i32) {
    %c0_i32 = arith.constant 0 : i32
    %c0_i32_0 = arith.constant 0 : i32
    %c0_i32_1 = arith.constant 0 : i32
    return %c0_i32, %c0_i32_0 : i32, i32
  }
  func.func @transform_2(%arg0: i32) -> (i32, i32) {
    %c0_i32 = arith.constant 0 : i32
    %c0_i32_0 = arith.constant 0 : i32
    %c0_i32_1 = arith.constant 0 : i32
    return %c0_i32, %c0_i32_0 : i32, i32
  }
  func.func @transform_3(%arg0: i32) -> (i32, i32) {
    %c0_i32 = arith.constant 0 : i32
    %c0_i32_0 = arith.constant 0 : i32
    %c0_i32_1 = arith.constant 0 : i32
    return %c0_i32, %c0_i32_0 : i32, i32
  }
}

</mosaic_0001>

<llo_original>
// kernel: net_forward.3
$region0: #{net_forward.3}
  #allocation0 [shape = 'u32[]', space=smem, size = 0x4, offset = 0x4, fixed_abs, tag = 'smem constant byte address 0x4 - core index']
  #allocation1 [shape = 'u32[144,128]{1,0:T(1,128)}', space=vmem, size = 0x12000, scoped, tag = 'internal scratch']
  %s0 = inlined_call_operand.vmem [shape: f32[2,4,233,1], index: 0, kind: input, shape index: {}]
  %s1 = inlined_call_operand.vmem [shape: f32[9,1,32], index: 1, kind: input, shape index: {}]
  %s2 = inlined_call_operand.vmem [shape: f32[1,32], index: 2, kind: input, shape index: {}]
  %s3 = inlined_call_operand.vmem [shape: f32[2,210,32], index: 3, kind: output, shape index: {}]
  %s4 = sld [smem:[#allocation0]]
  $region45: #{net_forward.3} parent=0
    _
  %s6 = ssub.s32 1, %s4
  %s7 = scalar_select 0, %s6, %s4
  loop: start=0, step=1, limit=4
  $region2: #{net_forward.3} parent=0 // loop_pre_header
    _
  $region3: #{net_forward.3} parent=0 // loop_header
    %s9 = sphi 0, %s13
    %p10 = scmp.ge.s32.totalorder %s9, 4
    %s19 = sphi 0, %s21
    %s22 = sphi 0, %s19
    %s23 = sphi 0, %s22
    %s39 = sphi 0, %s23
    %s43 = sphi 0, %s43
    %s45 = sphi 0, %s43
    %s46 = sphi 0, %s45
    %s60 = sphi 0, %s46
    %s64 = sphi 0, %s64
    %s66 = sphi 0, %s64
    %s67 = sphi 0, %s66
    %s81 = sphi 0, %s67
    %s87 = sphi 0, %s89
    %s90 = sphi 0, %s87
    %s91 = sphi 0, %s90
    %s107 = sphi 0, %s91
  $region4: #{net_forward.3} parent=0 // loop_header_branch
    %12 = sbr.rel (%p10) target = $region8
  $region5: #{net_forward.3} parent=0 // loop_body
    %s14 = ssub.s32 %s9, 1
    %s15 = ssub.s32 %s9, 2
    %s16 = sadd.s32 %s9, 1
    %s17 = ssub.s32 %s9, %s16
    %p18 = scmp.eq.s32.totalorder %s17, 0
    %s20 = sadd.s32 %s19, 1
    %s21 = scalar_select %p18, %s19, %s20
    %p24 = pneg %p18
    %p25 = scmp.eq.s32.totalorder %s9, 1
    %p26 = por %p24, %p25
    %p27 = scmp.ne.s32.totalorder %s19, %s22
    %p28 = scmp.eq.s32.totalorder %s9, 0
    %p29 = por %p27, %p28
    %p30 = scmp.ne.s32.totalorder %s19, %s22
    %p31 = scmp.eq.s32.totalorder %s14, 1
    %p32 = por %p30, %p31
    %p33 = scmp.ne.s32.totalorder %s22, %s23
    %p34 = scmp.eq.s32.totalorder %s14, 0
    %p35 = por %p33, %p34
    %p36 = scmp.ne.s32.totalorder %s22, %s23
    %p37 = scmp.eq.s32.totalorder %s15, 1
    %p38 = por %p36, %p37
    %p40 = scmp.ne.s32.totalorder %s23, %s39
    %p41 = scmp.eq.s32.totalorder %s15, 0
    %p42 = por %p40, %p41
    %s44 = sadd.s32 %s43, 1
    %p47 = scmp.eq.s32.totalorder %s9, 1
    %p48 = scmp.ne.s32.totalorder %s43, %s45
    %p49 = scmp.eq.s32.totalorder %s9, 0
    %p50 = por %p48, %p49
    %p51 = scmp.ne.s32.totalorder %s43, %s45
    %p52 = scmp.eq.s32.totalorder %s14, 1
    %p53 = por %p51, %p52
    %p54 = scmp.ne.s32.totalorder %s45, %s46
    %p55 = scmp.eq.s32.totalorder %s14, 0
    %p56 = por %p54, %p55
    %p57 = scmp.ne.s32.totalorder %s45, %s46
    %p58 = scmp.eq.s32.totalorder %s15, 1
    %p59 = por %p57, %p58
    %p61 = scmp.ne.s32.totalorder %s46, %s60
    %p62 = scmp.eq.s32.totalorder %s15, 0
    %p63 = por %p61, %p62
    %s65 = sadd.s32 %s64, 1
    %p68 = scmp.eq.s32.totalorder %s9, 1
    %p69 = scmp.ne.s32.totalorder %s64, %s66
    %p70 = scmp.eq.s32.totalorder %s9, 0
    %p71 = por %p69, %p70
    %p72 = scmp.ne.s32.totalorder %s64, %s66
    %p73 = scmp.eq.s32.totalorder %s14, 1
    %p74 = por %p72, %p73
    %p75 = scmp.ne.s32.totalorder %s66, %s67
    %p76 = scmp.eq.s32.totalorder %s14, 0
    %p77 = por %p75, %p76
    %p78 = scmp.ne.s32.totalorder %s66, %s67
    %p79 = scmp.eq.s32.totalorder %s15, 1
    %p80 = por %p78, %p79
    %p82 = scmp.ne.s32.totalorder %s67, %s81
    %p83 = scmp.eq.s32.totalorder %s15, 0
    %p84 = por %p82, %p83
    %s85 = ssub.s32 %s9, %s16
    %p86 = scmp.eq.s32.totalorder %s85, 0
    %s88 = sadd.s32 %s87, 1
    %s89 = scalar_select %p86, %s87, %s88
    %p92 = pneg %p86
    %p93 = scmp.eq.s32.totalorder %s9, 1
    %p94 = por %p92, %p93
    %p95 = scmp.ne.s32.totalorder %s87, %s90
    %p96 = scmp.eq.s32.totalorder %s9, 0
    %p97 = por %p95, %p96
    %p98 = scmp.ne.s32.totalorder %s87, %s90
    %p99 = scmp.eq.s32.totalorder %s14, 1
    %p100 = por %p98, %p99
    %p101 = scmp.ne.s32.totalorder %s90, %s91
    %p102 = scmp.eq.s32.totalorder %s14, 0
    %p103 = por %p101, %p102
    %p104 = scmp.ne.s32.totalorder %s90, %s91
    %p105 = scmp.eq.s32.totalorder %s15, 1
    %p106 = por %p104, %p105
    %p108 = scmp.ne.s32.totalorder %s91, %s107
    %p109 = scmp.eq.s32.totalorder %s15, 0
    %p110 = por %p108, %p109
    %p111 = scmp.le.s32.totalorder 1, %s9
    %p112 = scmp.lt.s32.totalorder %s9, 3
    %p113 = pnand %p111, %p112
    %p114 = pneg %p113
    // Predicated region
    $region9: #{net_forward.3} parent=5 // pred_check
      _
    $region10: #{net_forward.3} parent=5 // pred_check_branch
      %116 = sbr.rel (%p113) target = $region12
    $region11: #{net_forward.3} parent=5 // pred_region
      %s117 = ssub.s32 %s9, 1
      // Predicated region
      $region13: #{net_forward.3} parent=11 // pred_check
        %p118 = pneg %p56
      $region14: #{net_forward.3} parent=11 // pred_check_branch
        %120 = sbr.rel (%p118) target = $region16
      $region15: #{net_forward.3} parent=11 // pred_region
        _
      $region16: #{net_forward.3} parent=11 // pred_fallthru
        _
      // Predicated region
      $region17: #{net_forward.3} parent=11 // pred_check
        %p121 = pneg %p77
      $region18: #{net_forward.3} parent=11 // pred_check_branch
        %123 = sbr.rel (%p121) target = $region20
      $region19: #{net_forward.3} parent=11 // pred_region
        _
      $region20: #{net_forward.3} parent=11 // pred_fallthru
        _
    $region12: #{net_forward.3} parent=5 // pred_fallthru
      _
    %p124 = scmp.lt.s32.totalorder %s9, 2
    // Predicated region
    $region21: #{net_forward.3} parent=5 // pred_check
      %p125 = pneg %p124
    $region22: #{net_forward.3} parent=5 // pred_check_branch
      %127 = sbr.rel (%p125) target = $region24
    $region23: #{net_forward.3} parent=5 // pred_region
      // Predicated region
      $region25: #{net_forward.3} parent=23 // pred_check
        %p128 = pneg %p29
      $region26: #{net_forward.3} parent=23 // pred_check_branch
        %130 = sbr.rel (%p128) target = $region28
      $region27: #{net_forward.3} parent=23 // pred_region
        %p131 = scmp.lt.s32.totalorder %s9, 1
        %s132 = scalar_select %p131, %s9, 1
        %s133 = smul.addr %s132, 120
        %s134 = smul.addr %s133, 8
        %s135 = scalar_lea.vmem %s0, %s134
      $region28: #{net_forward.3} parent=23 // pred_fallthru
        _
    $region24: #{net_forward.3} parent=5 // pred_fallthru
      _
    %p136 = scmp.le.s32.totalorder 1, %s9
    %p137 = scmp.lt.s32.totalorder %s9, 3
    %p138 = pnand %p136, %p137
    %p139 = pneg %p138
    // Predicated region
    $region29: #{net_forward.3} parent=5 // pred_check
      _
    $region30: #{net_forward.3} parent=5 // pred_check_branch
      %141 = sbr.rel (%p138) target = $region32
    $region31: #{net_forward.3} parent=5 // pred_region
      %s142 = ssub.s32 %s9, 1
      %p143 = scmp.lt.s32.totalorder %s14, 1
      %s144 = scalar_select %p143, %s14, 1
      %s145 = smul.addr %s144, 120
      %s146 = smul.addr %s145, 8
      %s147 = scalar_lea.vmem %s0, %s146
      %p148 = pneg %p35
      %p149 = pneg %p32
      %p150 = pneg %p56
      %p151 = pneg %p53
      %p152 = pneg %p77
      %p153 = pneg %p74
      %p154 = pneg %p103
      %p155 = pneg %p100
      %p156 = scmp.lt.s32.totalorder %s14, 1
      %s157 = scalar_select %p156, %s14, 1
      %s158 = smul.addr %s157, 27
      %s159 = smul.addr %s158, 8
      %s160 = scalar_lea.vmem %s3, %s159
      %p161 = scmp.lt.s32.totalorder %s14, 1
      %s162 = scalar_select %p161, %s14, 1
      %s163 = smul.addr %s162, 120
      %s164 = smul.addr %s163, 8
      %s165 = scalar_lea.vmem %s0, %s164
      %p166 = scmp.lt.s32.totalorder %s14, 1
      %s167 = scalar_select %p166, %s14, 1
      %s168 = smul.addr %s167, 27
      %s169 = smul.addr %s168, 8
      %s170 = scalar_lea.vmem %s3, %s169
      %v171 = vld [vmem:[%s165] sm:$0xff]
      %v172 = vld [vmem:[%s165 + $0x8] sm:$0xff]
      %v173 = vld [vmem:[%s165 + $0x10] sm:$0xff]
      %v174 = vld [vmem:[%s165 + $0x18] sm:$0xff]
      %v175 = vld [vmem:[%s165 + $0x20] sm:$0xff]
      %v176 = vld [vmem:[%s165 + $0x28] sm:$0xff]
      %v177 = vld [vmem:[%s165 + $0x30] sm:$0xff]
      %v178 = vld [vmem:[%s165 + $0x38] sm:$0xff]
      %v179 = vld [vmem:[%s165 + $0x40] sm:$0xff]
      %v180 = vld [vmem:[%s165 + $0x48] sm:$0xff]
      %v181 = vld [vmem:[%s165 + $0x50] sm:$0xff]
      %v182 = vld [vmem:[%s165 + $0x58] sm:$0xff]
      %v183 = vld [vmem:[%s165 + $0x60] sm:$0xff]
      %v184 = vld [vmem:[%s165 + $0x68] sm:$0xff]
      %v185 = vld [vmem:[%s165 + $0x70] sm:$0xff]
      %v186 = vld [vmem:[%s165 + $0x78] sm:$0xff]
      %v187 = vld [vmem:[%s165 + $0x80] sm:$0xff]
      %v188 = vld [vmem:[%s165 + $0x88] sm:$0xff]
      %v189 = vld [vmem:[%s165 + $0x90] sm:$0xff]
      %v190 = vld [vmem:[%s165 + $0x98] sm:$0xff]
      %v191 = vld [vmem:[%s165 + $0xa0] sm:$0xff]
      %v192 = vld [vmem:[%s165 + $0xa8] sm:$0xff]
      %v193 = vld [vmem:[%s165 + $0xb0] sm:$0xff]
      %v194 = vld [vmem:[%s165 + $0xb8] sm:$0xff]
      %v195 = vld [vmem:[%s165 + $0xc0] sm:$0xff]
      %v196 = vld [vmem:[%s165 + $0xc8] sm:$0xff]
      %v197 = vld [vmem:[%s165 + $0xd0] sm:$0x3]
      %v198 = vld [vmem:[%s1] sm:$0x1]
      %200 = vset.pattern.permute.xlu0 0
      %201 = vperm.xlu0 %200, %v171
      %v202 = vpop.permute.xlu0 %201
      %205 = vset.pattern.permute.xlu0 0
      %206 = vperm.xlu0 %205, %v172
      %v207 = vpop.permute.xlu0 %206
      %210 = vset.pattern.permute.xlu0 0
      %211 = vperm.xlu0 %210, %v173
      %v212 = vpop.permute.xlu0 %211
      %215 = vset.pattern.permute.xlu0 0
      %216 = vperm.xlu0 %215, %v174
      %v217 = vpop.permute.xlu0 %216
      %220 = vset.pattern.permute.xlu0 0
      %221 = vperm.xlu0 %220, %v175
      %v222 = vpop.permute.xlu0 %221
      %225 = vset.pattern.permute.xlu0 0
      %226 = vperm.xlu0 %225, %v176
      %v227 = vpop.permute.xlu0 %226
      %230 = vset.pattern.permute.xlu0 0
      %231 = vperm.xlu0 %230, %v177
      %v232 = vpop.permute.xlu0 %231
      %235 = vset.pattern.permute.xlu0 0
      %236 = vperm.xlu0 %235, %v178
      %v237 = vpop.permute.xlu0 %236
      %240 = vset.pattern.permute.xlu0 0
      %241 = vperm.xlu0 %240, %v179
      %v242 = vpop.permute.xlu0 %241
      %245 = vset.pattern.permute.xlu0 0
      %246 = vperm.xlu0 %245, %v180
      %v247 = vpop.permute.xlu0 %246
      %250 = vset.pattern.permute.xlu0 0
      %251 = vperm.xlu0 %250, %v181
      %v252 = vpop.permute.xlu0 %251
      %255 = vset.pattern.permute.xlu0 0
      %256 = vperm.xlu0 %255, %v182
      %v257 = vpop.permute.xlu0 %256
      %260 = vset.pattern.permute.xlu0 0
      %261 = vperm.xlu0 %260, %v183
      %v262 = vpop.permute.xlu0 %261
      %265 = vset.pattern.permute.xlu0 0
      %266 = vperm.xlu0 %265, %v184
      %v267 = vpop.permute.xlu0 %266
      %270 = vset.pattern.permute.xlu0 0
      %271 = vperm.xlu0 %270, %v185
      %v272 = vpop.permute.xlu0 %271
      %275 = vset.pattern.permute.xlu0 0
      %276 = vperm.xlu0 %275, %v186
      %v277 = vpop.permute.xlu0 %276
      %280 = vset.pattern.permute.xlu0 0
      %281 = vperm.xlu0 %280, %v187
      %v282 = vpop.permute.xlu0 %281
      %285 = vset.pattern.permute.xlu0 0
      %286 = vperm.xlu0 %285, %v188
      %v287 = vpop.permute.xlu0 %286
      %290 = vset.pattern.permute.xlu0 0
      %291 = vperm.xlu0 %290, %v189
      %v292 = vpop.permute.xlu0 %291
      %295 = vset.pattern.permute.xlu0 0
      %296 = vperm.xlu0 %295, %v190
      %v297 = vpop.permute.xlu0 %296
      %300 = vset.pattern.permute.xlu0 0
      %301 = vperm.xlu0 %300, %v191
      %v302 = vpop.permute.xlu0 %301
      %305 = vset.pattern.permute.xlu0 0
      %306 = vperm.xlu0 %305, %v192
      %v307 = vpop.permute.xlu0 %306
      %310 = vset.pattern.permute.xlu0 0
      %311 = vperm.xlu0 %310, %v193
      %v312 = vpop.permute.xlu0 %311
      %315 = vset.pattern.permute.xlu0 0
      %316 = vperm.xlu0 %315, %v194
      %v317 = vpop.permute.xlu0 %316
      %320 = vset.pattern.permute.xlu0 0
      %321 = vperm.xlu0 %320, %v195
      %v322 = vpop.permute.xlu0 %321
      %325 = vset.pattern.permute.xlu0 0
      %326 = vperm.xlu0 %325, %v196
      %v327 = vpop.permute.xlu0 %326
      %330 = vset.pattern.permute.xlu0 0
      %331 = vperm.xlu0 %330, %v197
      %v332 = vpop.permute.xlu0 %331
      %v335 = vlaneseq
      %v336 = vshrl.u32 %v335, 7
      %v337 = vsub.s32 0, %v336
      %v338 = vrot.slane %v198, %v337
      %v340 = vmul.f32 %v202, %v338
      %v341 = vmul.f32 %v207, %v338
      %v342 = vmul.f32 %v212, %v338
      %v343 = vmul.f32 %v217, %v338
      %v344 = vmul.f32 %v222, %v338
      %v345 = vmul.f32 %v227, %v338
      %v346 = vmul.f32 %v232, %v338
      %v347 = vmul.f32 %v237, %v338
      %v348 = vmul.f32 %v242, %v338
      %v349 = vmul.f32 %v247, %v338
      %v350 = vmul.f32 %v252, %v338
      %v351 = vmul.f32 %v257, %v338
      %v352 = vmul.f32 %v262, %v338
      %v353 = vmul.f32 %v267, %v338
      %v354 = vmul.f32 %v272, %v338
      %v355 = vmul.f32 %v277, %v338
      %v356 = vmul.f32 %v282, %v338
      %v357 = vmul.f32 %v287, %v338
      %v358 = vmul.f32 %v292, %v338
      %v359 = vmul.f32 %v297, %v338
      %v360 = vmul.f32 %v302, %v338
      %v361 = vmul.f32 %v307, %v338
      %v362 = vmul.f32 %v312, %v338
      %v363 = vmul.f32 %v317, %v338
      %v364 = vmul.f32 %v322, %v338
      %v365 = vmul.f32 %v327, %v338
      %v366 = vmul.f32 %v332, %v338
      %s367 = scalar_lea.vmem %s165, 240
      %v368 = vld [vmem:[%s367] sm:$0xff]
      %v369 = vld [vmem:[%s367 + $0x8] sm:$0xff]
      %v370 = vld [vmem:[%s367 + $0x10] sm:$0xff]
      %v371 = vld [vmem:[%s367 + $0x18] sm:$0xff]
      %v372 = vld [vmem:[%s367 + $0x20] sm:$0xff]
      %v373 = vld [vmem:[%s367 + $0x28] sm:$0xff]
      %v374 = vld [vmem:[%s367 + $0x30] sm:$0xff]
      %v375 = vld [vmem:[%s367 + $0x38] sm:$0xff]
      %v376 = vld [vmem:[%s367 + $0x40] sm:$0xff]
      %v377 = vld [vmem:[%s367 + $0x48] sm:$0xff]
      %v378 = vld [vmem:[%s367 + $0x50] sm:$0xff]
      %v379 = vld [vmem:[%s367 + $0x58] sm:$0xff]
      %v380 = vld [vmem:[%s367 + $0x60] sm:$0xff]
      %v381 = vld [vmem:[%s367 + $0x68] sm:$0xff]
      %v382 = vld [vmem:[%s367 + $0x70] sm:$0xff]
      %v383 = vld [vmem:[%s367 + $0x78] sm:$0xff]
      %v384 = vld [vmem:[%s367 + $0x80] sm:$0xff]
      %v385 = vld [vmem:[%s367 + $0x88] sm:$0xff]
      %v386 = vld [vmem:[%s367 + $0x90] sm:$0xff]
      %v387 = vld [vmem:[%s367 + $0x98] sm:$0xff]
      %v388 = vld [vmem:[%s367 + $0xa0] sm:$0xff]
      %v389 = vld [vmem:[%s367 + $0xa8] sm:$0xff]
      %v390 = vld [vmem:[%s367 + $0xb0] sm:$0xff]
      %v391 = vld [vmem:[%s367 + $0xb8] sm:$0xff]
      %v392 = vld [vmem:[%s367 + $0xc0] sm:$0xff]
      %v393 = vld [vmem:[%s367 + $0xc8] sm:$0xff]
      %v394 = vld [vmem:[%s367 + $0xd0] sm:$0x3]
      %s395 = scalar_lea.vmem %s1, 1
      %v396 = vld [vmem:[%s395] sm:$0x1]
      %398 = vset.pattern.permute.xlu0 0
      %399 = vperm.xlu0 %398, %v368
      %v400 = vpop.permute.xlu0 %399
      %403 = vset.pattern.permute.xlu0 0
      %404 = vperm.xlu0 %403, %v369
      %v405 = vpop.permute.xlu0 %404
      %408 = vset.pattern.permute.xlu0 0
      %409 = vperm.xlu0 %408, %v370
      %v410 = vpop.permute.xlu0 %409
      %413 = vset.pattern.permute.xlu0 0
      %414 = vperm.xlu0 %413, %v371
      %v415 = vpop.permute.xlu0 %414
      %418 = vset.pattern.permute.xlu0 0
      %419 = vperm.xlu0 %418, %v372
      %v420 = vpop.permute.xlu0 %419
      %423 = vset.pattern.permute.xlu0 0
      %424 = vperm.xlu0 %423, %v373
      %v425 = vpop.permute.xlu0 %424
      %428 = vset.pattern.permute.xlu0 0
      %429 = vperm.xlu0 %428, %v374
      %v430 = vpop.permute.xlu0 %429
      %433 = vset.pattern.permute.xlu0 0
      %434 = vperm.xlu0 %433, %v375
      %v435 = vpop.permute.xlu0 %434
      %438 = vset.pattern.permute.xlu0 0
      %439 = vperm.xlu0 %438, %v376
      %v440 = vpop.permute.xlu0 %439
      %443 = vset.pattern.permute.xlu0 0
      %444 = vperm.xlu0 %443, %v377
      %v445 = vpop.permute.xlu0 %444
      %448 = vset.pattern.permute.xlu0 0
      %449 = vperm.xlu0 %448, %v378
      %v450 = vpop.permute.xlu0 %449
      %453 = vset.pattern.permute.xlu0 0
      %454 = vperm.xlu0 %453, %v379
      %v455 = vpop.permute.xlu0 %454
      %458 = vset.pattern.permute.xlu0 0
      %459 = vperm.xlu0 %458, %v380
      %v460 = vpop.permute.xlu0 %459
      %463 = vset.pattern.permute.xlu0 0
      %464 = vperm.xlu0 %463, %v381
      %v465 = vpop.permute.xlu0 %464
      %468 = vset.pattern.permute.xlu0 0
      %469 = vperm.xlu0 %468, %v382
      %v470 = vpop.permute.xlu0 %469
      %473 = vset.pattern.permute.xlu0 0
      %474 = vperm.xlu0 %473, %v383
      %v475 = vpop.permute.xlu0 %474
      %478 = vset.pattern.permute.xlu0 0
      %479 = vperm.xlu0 %478, %v384
      %v480 = vpop.permute.xlu0 %479
      %483 = vset.pattern.permute.xlu0 0
      %484 = vperm.xlu0 %483, %v385
      %v485 = vpop.permute.xlu0 %484
      %488 = vset.pattern.permute.xlu0 0
      %489 = vperm.xlu0 %488, %v386
      %v490 = vpop.permute.xlu0 %489
      %493 = vset.pattern.permute.xlu0 0
      %494 = vperm.xlu0 %493, %v387
      %v495 = vpop.permute.xlu0 %494
      %498 = vset.pattern.permute.xlu0 0
      %499 = vperm.xlu0 %498, %v388
      %v500 = vpop.permute.xlu0 %499
      %503 = vset.pattern.permute.xlu0 0
      %504 = vperm.xlu0 %503, %v389
      %v505 = vpop.permute.xlu0 %504
      %508 = vset.pattern.permute.xlu0 0
      %509 = vperm.xlu0 %508, %v390
      %v510 = vpop.permute.xlu0 %509
      %513 = vset.pattern.permute.xlu0 0
      %514 = vperm.xlu0 %513, %v391
      %v515 = vpop.permute.xlu0 %514
      %518 = vset.pattern.permute.xlu0 0
      %519 = vperm.xlu0 %518, %v392
      %v520 = vpop.permute.xlu0 %519
      %523 = vset.pattern.permute.xlu0 0
      %524 = vperm.xlu0 %523, %v393
      %v525 = vpop.permute.xlu0 %524
      %528 = vset.pattern.permute.xlu0 0
      %529 = vperm.xlu0 %528, %v394
      %v530 = vpop.permute.xlu0 %529
      %v533 = vlaneseq
      %v534 = vshrl.u32 %v533, 7
      %v535 = vsub.s32 0, %v534
      %v536 = vrot.slane %v396, %v535
      %v538 = vmul.f32 %v400, %v536
      %v539 = vmul.f32 %v405, %v536
      %v540 = vmul.f32 %v410, %v536
      %v541 = vmul.f32 %v415, %v536
      %v542 = vmul.f32 %v420, %v536
      %v543 = vmul.f32 %v425, %v536
      %v544 = vmul.f32 %v430, %v536
      %v545 = vmul.f32 %v435, %v536
      %v546 = vmul.f32 %v440, %v536
      %v547 = vmul.f32 %v445, %v536
      %v548 = vmul.f32 %v450, %v536
      %v549 = vmul.f32 %v455, %v536
      %v550 = vmul.f32 %v460, %v536
      %v551 = vmul.f32 %v465, %v536
      %v552 = vmul.f32 %v470, %v536
      %v553 = vmul.f32 %v475, %v536
      %v554 = vmul.f32 %v480, %v536
      %v555 = vmul.f32 %v485, %v536
      %v556 = vmul.f32 %v490, %v536
      %v557 = vmul.f32 %v495, %v536
      %v558 = vmul.f32 %v500, %v536
      %v559 = vmul.f32 %v505, %v536
      %v560 = vmul.f32 %v510, %v536
      %v561 = vmul.f32 %v515, %v536
      %v562 = vmul.f32 %v520, %v536
      %v563 = vmul.f32 %v525, %v536
      %v564 = vmul.f32 %v530, %v536
      %v565 = vadd.f32 %v340, %v538
      %v566 = vadd.f32 %v341, %v539
      %v567 = vadd.f32 %v342, %v540
      %v568 = vadd.f32 %v343, %v541
      %v569 = vadd.f32 %v344, %v542
      %v570 = vadd.f32 %v345, %v543
      %v571 = vadd.f32 %v346, %v544
      %v572 = vadd.f32 %v347, %v545
      %v573 = vadd.f32 %v348, %v546
      %v574 = vadd.f32 %v349, %v547
      %v575 = vadd.f32 %v350, %v548
      %v576 = vadd.f32 %v351, %v549
      %v577 = vadd.f32 %v352, %v550
      %v578 = vadd.f32 %v353, %v551
      %v579 = vadd.f32 %v354, %v552
      %v580 = vadd.f32 %v355, %v553
      %v581 = vadd.f32 %v356, %v554
      %v582 = vadd.f32 %v357, %v555
      %v583 = vadd.f32 %v358, %v556
      %v584 = vadd.f32 %v359, %v557
      %v585 = vadd.f32 %v360, %v558
      %v586 = vadd.f32 %v361, %v559
      %v587 = vadd.f32 %v362, %v560
      %v588 = vadd.f32 %v363, %v561
      %v589 = vadd.f32 %v364, %v562
      %v590 = vadd.f32 %v365, %v563
      %v591 = vadd.f32 %v366, %v564
      %v592 = vld [vmem:[%s165 + $0x1] sm:$0xff]
      %v593 = vld [vmem:[%s165 + $0x9] sm:$0xff]
      %v594 = vld [vmem:[%s165 + $0x11] sm:$0xff]
      %v595 = vld [vmem:[%s165 + $0x19] sm:$0xff]
      %v596 = vld [vmem:[%s165 + $0x21] sm:$0xff]
      %v597 = vld [vmem:[%s165 + $0x29] sm:$0xff]
      %v598 = vld [vmem:[%s165 + $0x31] sm:$0xff]
      %v599 = vld [vmem:[%s165 + $0x39] sm:$0xff]
      %v600 = vld [vmem:[%s165 + $0x41] sm:$0xff]
      %v601 = vld [vmem:[%s165 + $0x49] sm:$0xff]
      %v602 = vld [vmem:[%s165 + $0x51] sm:$0xff]
      %v603 = vld [vmem:[%s165 + $0x59] sm:$0xff]
      %v604 = vld [vmem:[%s165 + $0x61] sm:$0xff]
      %v605 = vld [vmem:[%s165 + $0x69] sm:$0xff]
      %v606 = vld [vmem:[%s165 + $0x71] sm:$0xff]
      %v607 = vld [vmem:[%s165 + $0x79] sm:$0xff]
      %v608 = vld [vmem:[%s165 + $0x81] sm:$0xff]
      %v609 = vld [vmem:[%s165 + $0x89] sm:$0xff]
      %v610 = vld [vmem:[%s165 + $0x91] sm:$0xff]
      %v611 = vld [vmem:[%s165 + $0x99] sm:$0xff]
      %v612 = vld [vmem:[%s165 + $0xa1] sm:$0xff]
      %v613 = vld [vmem:[%s165 + $0xa9] sm:$0xff]
      %v614 = vld [vmem:[%s165 + $0xb1] sm:$0xff]
      %v615 = vld [vmem:[%s165 + $0xb9] sm:$0xff]
      %v616 = vld [vmem:[%s165 + $0xc1] sm:$0xff]
      %v617 = vld [vmem:[%s165 + $0xc9] sm:$0xff]
      %v618 = vld [vmem:[%s165 + $0xd1] sm:$0x3]
      %s619 = scalar_lea.vmem %s1, 2
      %v620 = vld [vmem:[%s619] sm:$0x1]
      %622 = vset.pattern.permute.xlu0 0
      %623 = vperm.xlu0 %622, %v592
      %v624 = vpop.permute.xlu0 %623
      %627 = vset.pattern.permute.xlu0 0
      %628 = vperm.xlu0 %627, %v593
      %v629 = vpop.permute.xlu0 %628
      %632 = vset.pattern.permute.xlu0 0
      %633 = vperm.xlu0 %632, %v594
      %v634 = vpop.permute.xlu0 %633
      %637 = vset.pattern.permute.xlu0 0
      %638 = vperm.xlu0 %637, %v595
      %v639 = vpop.permute.xlu0 %638
      %642 = vset.pattern.permute.xlu0 0
      %643 = vperm.xlu0 %642, %v596
      %v644 = vpop.permute.xlu0 %643
      %647 = vset.pattern.permute.xlu0 0
      %648 = vperm.xlu0 %647, %v597
      %v649 = vpop.permute.xlu0 %648
      %652 = vset.pattern.permute.xlu0 0
      %653 = vperm.xlu0 %652, %v598
      %v654 = vpop.permute.xlu0 %653
      %657 = vset.pattern.permute.xlu0 0
      %658 = vperm.xlu0 %657, %v599
      %v659 = vpop.permute.xlu0 %658
      %662 = vset.pattern.permute.xlu0 0
      %663 = vperm.xlu0 %662, %v600
      %v664 = vpop.permute.xlu0 %663
      %667 = vset.pattern.permute.xlu0 0
      %668 = vperm.xlu0 %667, %v601
      %v669 = vpop.permute.xlu0 %668
      %672 = vset.pattern.permute.xlu0 0
      %673 = vperm.xlu0 %672, %v602
      %v674 = vpop.permute.xlu0 %673
      %677 = vset.pattern.permute.xlu0 0
      %678 = vperm.xlu0 %677, %v603
      %v679 = vpop.permute.xlu0 %678
      %682 = vset.pattern.permute.xlu0 0
      %683 = vperm.xlu0 %682, %v604
      %v684 = vpop.permute.xlu0 %683
      %687 = vset.pattern.permute.xlu0 0
      %688 = vperm.xlu0 %687, %v605
      %v689 = vpop.permute.xlu0 %688
      %692 = vset.pattern.permute.xlu0 0
      %693 = vperm.xlu0 %692, %v606
      %v694 = vpop.permute.xlu0 %693
      %697 = vset.pattern.permute.xlu0 0
      %698 = vperm.xlu0 %697, %v607
      %v699 = vpop.permute.xlu0 %698
      %702 = vset.pattern.permute.xlu0 0
      %703 = vperm.xlu0 %702, %v608
      %v704 = vpop.permute.xlu0 %703
      %707 = vset.pattern.permute.xlu0 0
      %708 = vperm.xlu0 %707, %v609
      %v709 = vpop.permute.xlu0 %708
      %712 = vset.pattern.permute.xlu0 0
      %713 = vperm.xlu0 %712, %v610
      %v714 = vpop.permute.xlu0 %713
      %717 = vset.pattern.permute.xlu0 0
      %718 = vperm.xlu0 %717, %v611
      %v719 = vpop.permute.xlu0 %718
      %722 = vset.pattern.permute.xlu0 0
      %723 = vperm.xlu0 %722, %v612
      %v724 = vpop.permute.xlu0 %723
      %727 = vset.pattern.permute.xlu0 0
      %728 = vperm.xlu0 %727, %v613
      %v729 = vpop.permute.xlu0 %728
      %732 = vset.pattern.permute.xlu0 0
      %733 = vperm.xlu0 %732, %v614
      %v734 = vpop.permute.xlu0 %733
      %737 = vset.pattern.permute.xlu0 0
      %738 = vperm.xlu0 %737, %v615
      %v739 = vpop.permute.xlu0 %738
      %742 = vset.pattern.permute.xlu0 0
      %743 = vperm.xlu0 %742, %v616
      %v744 = vpop.permute.xlu0 %743
      %747 = vset.pattern.permute.xlu0 0
      %748 = vperm.xlu0 %747, %v617
      %v749 = vpop.permute.xlu0 %748
      %752 = vset.pattern.permute.xlu0 0
      %753 = vperm.xlu0 %752, %v618
      %v754 = vpop.permute.xlu0 %753
      %v757 = vlaneseq
      %v758 = vshrl.u32 %v757, 7
      %v759 = vsub.s32 0, %v758
      %v760 = vrot.slane %v620, %v759
      %v762 = vmul.f32 %v624, %v760
      %v763 = vmul.f32 %v629, %v760
      %v764 = vmul.f32 %v634, %v760
      %v765 = vmul.f32 %v639, %v760
      %v766 = vmul.f32 %v644, %v760
      %v767 = vmul.f32 %v649, %v760
      %v768 = vmul.f32 %v654, %v760
      %v769 = vmul.f32 %v659, %v760
      %v770 = vmul.f32 %v664, %v760
      %v771 = vmul.f32 %v669, %v760
      %v772 = vmul.f32 %v674, %v760
      %v773 = vmul.f32 %v679, %v760
      %v774 = vmul.f32 %v684, %v760
      %v775 = vmul.f32 %v689, %v760
      %v776 = vmul.f32 %v694, %v760
      %v777 = vmul.f32 %v699, %v760
      %v778 = vmul.f32 %v704, %v760
      %v779 = vmul.f32 %v709, %v760
      %v780 = vmul.f32 %v714, %v760
      %v781 = vmul.f32 %v719, %v760
      %v782 = vmul.f32 %v724, %v760
      %v783 = vmul.f32 %v729, %v760
      %v784 = vmul.f32 %v734, %v760
      %v785 = vmul.f32 %v739, %v760
      %v786 = vmul.f32 %v744, %v760
      %v787 = vmul.f32 %v749, %v760
      %v788 = vmul.f32 %v754, %v760
      %v789 = vadd.f32 %v565, %v762
      %v790 = vadd.f32 %v566, %v763
      %v791 = vadd.f32 %v567, %v764
      %v792 = vadd.f32 %v568, %v765
      %v793 = vadd.f32 %v569, %v766
      %v794 = vadd.f32 %v570, %v767
      %v795 = vadd.f32 %v571, %v768
      %v796 = vadd.f32 %v572, %v769
      %v797 = vadd.f32 %v573, %v770
      %v798 = vadd.f32 %v574, %v771
      %v799 = vadd.f32 %v575, %v772
      %v800 = vadd.f32 %v576, %v773
      %v801 = vadd.f32 %v577, %v774
      %v802 = vadd.f32 %v578, %v775
      %v803 = vadd.f32 %v579, %v776
      %v804 = vadd.f32 %v580, %v777
      %v805 = vadd.f32 %v581, %v778
      %v806 = vadd.f32 %v582, %v779
      %v807 = vadd.f32 %v583, %v780
      %v808 = vadd.f32 %v584, %v781
      %v809 = vadd.f32 %v585, %v782
      %v810 = vadd.f32 %v586, %v783
      %v811 = vadd.f32 %v587, %v784
      %v812 = vadd.f32 %v588, %v785
      %v813 = vadd.f32 %v589, %v786
      %v814 = vadd.f32 %v590, %v787
      %v815 = vadd.f32 %v591, %v788
      %s816 = scalar_lea.vmem %s165, 480
      %v817 = vld [vmem:[%s816] sm:$0xff]
      %v818 = vld [vmem:[%s816 + $0x8] sm:$0xff]
      %v819 = vld [vmem:[%s816 + $0x10] sm:$0xff]
      %v820 = vld [vmem:[%s816 + $0x18] sm:$0xff]
      %v821 = vld [vmem:[%s816 + $0x20] sm:$0xff]
      %v822 = vld [vmem:[%s816 + $0x28] sm:$0xff]
      %v823 = vld [vmem:[%s816 + $0x30] sm:$0xff]
      %v824 = vld [vmem:[%s816 + $0x38] sm:$0xff]
      %v825 = vld [vmem:[%s816 + $0x40] sm:$0xff]
      %v826 = vld [vmem:[%s816 + $0x48] sm:$0xff]
      %v827 = vld [vmem:[%s816 + $0x50] sm:$0xff]
      %v828 = vld [vmem:[%s816 + $0x58] sm:$0xff]
      %v829 = vld [vmem:[%s816 + $0x60] sm:$0xff]
      %v830 = vld [vmem:[%s816 + $0x68] sm:$0xff]
      %v831 = vld [vmem:[%s816 + $0x70] sm:$0xff]
      %v832 = vld [vmem:[%s816 + $0x78] sm:$0xff]
      %v833 = vld [vmem:[%s816 + $0x80] sm:$0xff]
      %v834 = vld [vmem:[%s816 + $0x88] sm:$0xff]
      %v835 = vld [vmem:[%s816 + $0x90] sm:$0xff]
      %v836 = vld [vmem:[%s816 + $0x98] sm:$0xff]
      %v837 = vld [vmem:[%s816 + $0xa0] sm:$0xff]
      %v838 = vld [vmem:[%s816 + $0xa8] sm:$0xff]
      %v839 = vld [vmem:[%s816 + $0xb0] sm:$0xff]
      %v840 = vld [vmem:[%s816 + $0xb8] sm:$0xff]
      %v841 = vld [vmem:[%s816 + $0xc0] sm:$0xff]
      %v842 = vld [vmem:[%s816 + $0xc8] sm:$0xff]
      %v843 = vld [vmem:[%s816 + $0xd0] sm:$0x3]
      %s844 = scalar_lea.vmem %s1, 3
      %v845 = vld [vmem:[%s844] sm:$0x1]
      %847 = vset.pattern.permute.xlu0 0
      %848 = vperm.xlu0 %847, %v817
      %v849 = vpop.permute.xlu0 %848
      %852 = vset.pattern.permute.xlu0 0
      %853 = vperm.xlu0 %852, %v818
      %v854 = vpop.permute.xlu0 %853
      %857 = vset.pattern.permute.xlu0 0
      %858 = vperm.xlu0 %857, %v819
      %v859 = vpop.permute.xlu0 %858
      %862 = vset.pattern.permute.xlu0 0
      %863 = vperm.xlu0 %862, %v820
      %v864 = vpop.permute.xlu0 %863
      %867 = vset.pattern.permute.xlu0 0
      %868 = vperm.xlu0 %867, %v821
      %v869 = vpop.permute.xlu0 %868
      %872 = vset.pattern.permute.xlu0 0
      %873 = vperm.xlu0 %872, %v822
      %v874 = vpop.permute.xlu0 %873
      %877 = vset.pattern.permute.xlu0 0
      %878 = vperm.xlu0 %877, %v823
      %v879 = vpop.permute.xlu0 %878
      %882 = vset.pattern.permute.xlu0 0
      %883 = vperm.xlu0 %882, %v824
      %v884 = vpop.permute.xlu0 %883
      %887 = vset.pattern.permute.xlu0 0
      %888 = vperm.xlu0 %887, %v825
      %v889 = vpop.permute.xlu0 %888
      %892 = vset.pattern.permute.xlu0 0
      %893 = vperm.xlu0 %892, %v826
      %v894 = vpop.permute.xlu0 %893
      %897 = vset.pattern.permute.xlu0 0
      %898 = vperm.xlu0 %897, %v827
      %v899 = vpop.permute.xlu0 %898
      %902 = vset.pattern.permute.xlu0 0
      %903 = vperm.xlu0 %902, %v828
      %v904 = vpop.permute.xlu0 %903
      %907 = vset.pattern.permute.xlu0 0
      %908 = vperm.xlu0 %907, %v829
      %v909 = vpop.permute.xlu0 %908
      %912 = vset.pattern.permute.xlu0 0
      %913 = vperm.xlu0 %912, %v830
      %v914 = vpop.permute.xlu0 %913
      %917 = vset.pattern.permute.xlu0 0
      %918 = vperm.xlu0 %917, %v831
      %v919 = vpop.permute.xlu0 %918
      %922 = vset.pattern.permute.xlu0 0
      %923 = vperm.xlu0 %922, %v832
      %v924 = vpop.permute.xlu0 %923
      %927 = vset.pattern.permute.xlu0 0
      %928 = vperm.xlu0 %927, %v833
      %v929 = vpop.permute.xlu0 %928
      %932 = vset.pattern.permute.xlu0 0
      %933 = vperm.xlu0 %932, %v834
      %v934 = vpop.permute.xlu0 %933
      %937 = vset.pattern.permute.xlu0 0
      %938 = vperm.xlu0 %937, %v835
      %v939 = vpop.permute.xlu0 %938
      %942 = vset.pattern.permute.xlu0 0
      %943 = vperm.xlu0 %942, %v836
      %v944 = vpop.permute.xlu0 %943
      %947 = vset.pattern.permute.xlu0 0
      %948 = vperm.xlu0 %947, %v837
      %v949 = vpop.permute.xlu0 %948
      %952 = vset.pattern.permute.xlu0 0
      %953 = vperm.xlu0 %952, %v838
      %v954 = vpop.permute.xlu0 %953
      %957 = vset.pattern.permute.xlu0 0
      %958 = vperm.xlu0 %957, %v839
      %v959 = vpop.permute.xlu0 %958
      %962 = vset.pattern.permute.xlu0 0
      %963 = vperm.xlu0 %962, %v840
      %v964 = vpop.permute.xlu0 %963
      %967 = vset.pattern.permute.xlu0 0
      %968 = vperm.xlu0 %967, %v841
      %v969 = vpop.permute.xlu0 %968
      %972 = vset.pattern.permute.xlu0 0
      %973 = vperm.xlu0 %972, %v842
      %v974 = vpop.permute.xlu0 %973
      %977 = vset.pattern.permute.xlu0 0
      %978 = vperm.xlu0 %977, %v843
      %v979 = vpop.permute.xlu0 %978
      %v982 = vlaneseq
      %v983 = vshrl.u32 %v982, 7
      %v984 = vsub.s32 0, %v983
      %v985 = vrot.slane %v845, %v984
      %v987 = vmul.f32 %v849, %v985
      %v988 = vmul.f32 %v854, %v985
      %v989 = vmul.f32 %v859, %v985
      %v990 = vmul.f32 %v864, %v985
      %v991 = vmul.f32 %v869, %v985
      %v992 = vmul.f32 %v874, %v985
      %v993 = vmul.f32 %v879, %v985
      %v994 = vmul.f32 %v884, %v985
      %v995 = vmul.f32 %v889, %v985
      %v996 = vmul.f32 %v894, %v985
      %v997 = vmul.f32 %v899, %v985
      %v998 = vmul.f32 %v904, %v985
      %v999 = vmul.f32 %v909, %v985
      %v1000 = vmul.f32 %v914, %v985
      %v1001 = vmul.f32 %v919, %v985
      %v1002 = vmul.f32 %v924, %v985
      %v1003 = vmul.f32 %v929, %v985
      %v1004 = vmul.f32 %v934, %v985
      %v1005 = vmul.f32 %v939, %v985
      %v1006 = vmul.f32 %v944, %v985
      %v1007 = vmul.f32 %v949, %v985
      %v1008 = vmul.f32 %v954, %v985
      %v1009 = vmul.f32 %v959, %v985
      %v1010 = vmul.f32 %v964, %v985
      %v1011 = vmul.f32 %v969, %v985
      %v1012 = vmul.f32 %v974, %v985
      %v1013 = vmul.f32 %v979, %v985
      %v1014 = vadd.f32 %v789, %v987
      %v1015 = vadd.f32 %v790, %v988
      %v1016 = vadd.f32 %v791, %v989
      %v1017 = vadd.f32 %v792, %v990
      %v1018 = vadd.f32 %v793, %v991
      %v1019 = vadd.f32 %v794, %v992
      %v1020 = vadd.f32 %v795, %v993
      %v1021 = vadd.f32 %v796, %v994
      %v1022 = vadd.f32 %v797, %v995
      %v1023 = vadd.f32 %v798, %v996
      %v1024 = vadd.f32 %v799, %v997
      %v1025 = vadd.f32 %v800, %v998
      %v1026 = vadd.f32 %v801, %v999
      %v1027 = vadd.f32 %v802, %v1000
      %v1028 = vadd.f32 %v803, %v1001
      %v1029 = vadd.f32 %v804, %v1002
      %v1030 = vadd.f32 %v805, %v1003
      %v1031 = vadd.f32 %v806, %v1004
      %v1032 = vadd.f32 %v807, %v1005
      %v1033 = vadd.f32 %v808, %v1006
      %v1034 = vadd.f32 %v809, %v1007
      %v1035 = vadd.f32 %v810, %v1008
      %v1036 = vadd.f32 %v811, %v1009
      %v1037 = vadd.f32 %v812, %v1010
      %v1038 = vadd.f32 %v813, %v1011
      %v1039 = vadd.f32 %v814, %v1012
      %v1040 = vadd.f32 %v815, %v1013
      %s1041 = scalar_lea.vmem %s165, 720
      %v1042 = vld [vmem:[%s1041] sm:$0xff]
      %v1043 = vld [vmem:[%s1041 + $0x8] sm:$0xff]
      %v1044 = vld [vmem:[%s1041 + $0x10] sm:$0xff]
      %v1045 = vld [vmem:[%s1041 + $0x18] sm:$0xff]
      %v1046 = vld [vmem:[%s1041 + $0x20] sm:$0xff]
      %v1047 = vld [vmem:[%s1041 + $0x28] sm:$0xff]
      %v1048 = vld [vmem:[%s1041 + $0x30] sm:$0xff]
      %v1049 = vld [vmem:[%s1041 + $0x38] sm:$0xff]
      %v1050 = vld [vmem:[%s1041 + $0x40] sm:$0xff]
      %v1051 = vld [vmem:[%s1041 + $0x48] sm:$0xff]
      %v1052 = vld [vmem:[%s1041 + $0x50] sm:$0xff]
      %v1053 = vld [vmem:[%s1041 + $0x58] sm:$0xff]
      %v1054 = vld [vmem:[%s1041 + $0x60] sm:$0xff]
      %v1055 = vld [vmem:[%s1041 + $0x68] sm:$0xff]
      %v1056 = vld [vmem:[%s1041 + $0x70] sm:$0xff]
      %v1057 = vld [vmem:[%s1041 + $0x78] sm:$0xff]
      %v1058 = vld [vmem:[%s1041 + $0x80] sm:$0xff]
      %v1059 = vld [vmem:[%s1041 + $0x88] sm:$0xff]
      %v1060 = vld [vmem:[%s1041 + $0x90] sm:$0xff]
      %v1061 = vld [vmem:[%s1041 + $0x98] sm:$0xff]
      %v1062 = vld [vmem:[%s1041 + $0xa0] sm:$0xff]
      %v1063 = vld [vmem:[%s1041 + $0xa8] sm:$0xff]
      %v1064 = vld [vmem:[%s1041 + $0xb0] sm:$0xff]
      %v1065 = vld [vmem:[%s1041 + $0xb8] sm:$0xff]
      %v1066 = vld [vmem:[%s1041 + $0xc0] sm:$0xff]
      %v1067 = vld [vmem:[%s1041 + $0xc8] sm:$0xff]
      %v1068 = vld [vmem:[%s1041 + $0xd0] sm:$0x3]
      %s1069 = scalar_lea.vmem %s1, 4
      %v1070 = vld [vmem:[%s1069] sm:$0x1]
      %1072 = vset.pattern.permute.xlu0 0
      %1073 = vperm.xlu0 %1072, %v1042
      %v1074 = vpop.permute.xlu0 %1073
      %1077 = vset.pattern.permute.xlu0 0
      %1078 = vperm.xlu0 %1077, %v1043
      %v1079 = vpop.permute.xlu0 %1078
      %1082 = vset.pattern.permute.xlu0 0
      %1083 = vperm.xlu0 %1082, %v1044
      %v1084 = vpop.permute.xlu0 %1083
      %1087 = vset.pattern.permute.xlu0 0
      %1088 = vperm.xlu0 %1087, %v1045
      %v1089 = vpop.permute.xlu0 %1088
      %1092 = vset.pattern.permute.xlu0 0
      %1093 = vperm.xlu0 %1092, %v1046
      %v1094 = vpop.permute.xlu0 %1093
      %1097 = vset.pattern.permute.xlu0 0
      %1098 = vperm.xlu0 %1097, %v1047
      %v1099 = vpop.permute.xlu0 %1098
      %1102 = vset.pattern.permute.xlu0 0
      %1103 = vperm.xlu0 %1102, %v1048
      %v1104 = vpop.permute.xlu0 %1103
      %1107 = vset.pattern.permute.xlu0 0
      %1108 = vperm.xlu0 %1107, %v1049
      %v1109 = vpop.permute.xlu0 %1108
      %1112 = vset.pattern.permute.xlu0 0
      %1113 = vperm.xlu0 %1112, %v1050
      %v1114 = vpop.permute.xlu0 %1113
      %1117 = vset.pattern.permute.xlu0 0
      %1118 = vperm.xlu0 %1117, %v1051
      %v1119 = vpop.permute.xlu0 %1118
      %1122 = vset.pattern.permute.xlu0 0
      %1123 = vperm.xlu0 %1122, %v1052
      %v1124 = vpop.permute.xlu0 %1123
      %1127 = vset.pattern.permute.xlu0 0
      %1128 = vperm.xlu0 %1127, %v1053
      %v1129 = vpop.permute.xlu0 %1128
      %1132 = vset.pattern.permute.xlu0 0
      %1133 = vperm.xlu0 %1132, %v1054
      %v1134 = vpop.permute.xlu0 %1133
      %1137 = vset.pattern.permute.xlu0 0
      %1138 = vperm.xlu0 %1137, %v1055
      %v1139 = vpop.permute.xlu0 %1138
      %1142 = vset.pattern.permute.xlu0 0
      %1143 = vperm.xlu0 %1142, %v1056
      %v1144 = vpop.permute.xlu0 %1143
      %1147 = vset.pattern.permute.xlu0 0
      %1148 = vperm.xlu0 %1147, %v1057
      %v1149 = vpop.permute.xlu0 %1148
      %1152 = vset.pattern.permute.xlu0 0
      %1153 = vperm.xlu0 %1152, %v1058
      %v1154 = vpop.permute.xlu0 %1153
      %1157 = vset.pattern.permute.xlu0 0
      %1158 = vperm.xlu0 %1157, %v1059
      %v1159 = vpop.permute.xlu0 %1158
      %1162 = vset.pattern.permute.xlu0 0
      %1163 = vperm.xlu0 %1162, %v1060
      %v1164 = vpop.permute.xlu0 %1163
      %1167 = vset.pattern.permute.xlu0 0
      %1168 = vperm.xlu0 %1167, %v1061
      %v1169 = vpop.permute.xlu0 %1168
      %1172 = vset.pattern.permute.xlu0 0
      %1173 = vperm.xlu0 %1172, %v1062
      %v1174 = vpop.permute.xlu0 %1173
      %1177 = vset.pattern.permute.xlu0 0
      %1178 = vperm.xlu0 %1177, %v1063
      %v1179 = vpop.permute.xlu0 %1178
      %1182 = vset.pattern.permute.xlu0 0
      %1183 = vperm.xlu0 %1182, %v1064
      %v1184 = vpop.permute.xlu0 %1183
      %1187 = vset.pattern.permute.xlu0 0
      %1188 = vperm.xlu0 %1187, %v1065
      %v1189 = vpop.permute.xlu0 %1188
      %1192 = vset.pattern.permute.xlu0 0
      %1193 = vperm.xlu0 %1192, %v1066
      %v1194 = vpop.permute.xlu0 %1193
      %1197 = vset.pattern.permute.xlu0 0
      %1198 = vperm.xlu0 %1197, %v1067
      %v1199 = vpop.permute.xlu0 %1198
      %1202 = vset.pattern.permute.xlu0 0
      %1203 = vperm.xlu0 %1202, %v1068
      %v1204 = vpop.permute.xlu0 %1203
      %v1207 = vlaneseq
      %v1208 = vshrl.u32 %v1207, 7
      %v1209 = vsub.s32 0, %v1208
      %v1210 = vrot.slane %v1070, %v1209
      %v1212 = vmul.f32 %v1074, %v1210
      %v1213 = vmul.f32 %v1079, %v1210
      %v1214 = vmul.f32 %v1084, %v1210
      %v1215 = vmul.f32 %v1089, %v1210
      %v1216 = vmul.f32 %v1094, %v1210
      %v1217 = vmul.f32 %v1099, %v1210
      %v1218 = vmul.f32 %v1104, %v1210
      %v1219 = vmul.f32 %v1109, %v1210
      %v1220 = vmul.f32 %v1114, %v1210
      %v1221 = vmul.f32 %v1119, %v1210
      %v1222 = vmul.f32 %v1124, %v1210
      %v1223 = vmul.f32 %v1129, %v1210
      %v1224 = vmul.f32 %v1134, %v1210
      %v1225 = vmul.f32 %v1139, %v1210
      %v1226 = vmul.f32 %v1144, %v1210
      %v1227 = vmul.f32 %v1149, %v1210
      %v1228 = vmul.f32 %v1154, %v1210
      %v1229 = vmul.f32 %v1159, %v1210
      %v1230 = vmul.f32 %v1164, %v1210
      %v1231 = vmul.f32 %v1169, %v1210
      %v1232 = vmul.f32 %v1174, %v1210
      %v1233 = vmul.f32 %v1179, %v1210
      %v1234 = vmul.f32 %v1184, %v1210
      %v1235 = vmul.f32 %v1189, %v1210
      %v1236 = vmul.f32 %v1194, %v1210
      %v1237 = vmul.f32 %v1199, %v1210
      %v1238 = vmul.f32 %v1204, %v1210
      %v1239 = vadd.f32 %v1014, %v1212
      %v1240 = vadd.f32 %v1015, %v1213
      %v1241 = vadd.f32 %v1016, %v1214
      %v1242 = vadd.f32 %v1017, %v1215
      %v1243 = vadd.f32 %v1018, %v1216
      %v1244 = vadd.f32 %v1019, %v1217
      %v1245 = vadd.f32 %v1020, %v1218
      %v1246 = vadd.f32 %v1021, %v1219
      %v1247 = vadd.f32 %v1022, %v1220
      %v1248 = vadd.f32 %v1023, %v1221
      %v1249 = vadd.f32 %v1024, %v1222
      %v1250 = vadd.f32 %v1025, %v1223
      %v1251 = vadd.f32 %v1026, %v1224
      %v1252 = vadd.f32 %v1027, %v1225
      %v1253 = vadd.f32 %v1028, %v1226
      %v1254 = vadd.f32 %v1029, %v1227
      %v1255 = vadd.f32 %v1030, %v1228
      %v1256 = vadd.f32 %v1031, %v1229
      %v1257 = vadd.f32 %v1032, %v1230
      %v1258 = vadd.f32 %v1033, %v1231
      %v1259 = vadd.f32 %v1034, %v1232
      %v1260 = vadd.f32 %v1035, %v1233
      %v1261 = vadd.f32 %v1036, %v1234
      %v1262 = vadd.f32 %v1037, %v1235
      %v1263 = vadd.f32 %v1038, %v1236
      %v1264 = vadd.f32 %v1039, %v1237
      %v1265 = vadd.f32 %v1040, %v1238
      %v1266 = vld [vmem:[%s816 + $0x1] sm:$0xff]
      %v1267 = vld [vmem:[%s816 + $0x9] sm:$0xff]
      %v1268 = vld [vmem:[%s816 + $0x11] sm:$0xff]
      %v1269 = vld [vmem:[%s816 + $0x19] sm:$0xff]
      %v1270 = vld [vmem:[%s816 + $0x21] sm:$0xff]
      %v1271 = vld [vmem:[%s816 + $0x29] sm:$0xff]
      %v1272 = vld [vmem:[%s816 + $0x31] sm:$0xff]
      %v1273 = vld [vmem:[%s816 + $0x39] sm:$0xff]
      %v1274 = vld [vmem:[%s816 + $0x41] sm:$0xff]
      %v1275 = vld [vmem:[%s816 + $0x49] sm:$0xff]
      %v1276 = vld [vmem:[%s816 + $0x51] sm:$0xff]
      %v1277 = vld [vmem:[%s816 + $0x59] sm:$0xff]
      %v1278 = vld [vmem:[%s816 + $0x61] sm:$0xff]
      %v1279 = vld [vmem:[%s816 + $0x69] sm:$0xff]
      %v1280 = vld [vmem:[%s816 + $0x71] sm:$0xff]
      %v1281 = vld [vmem:[%s816 + $0x79] sm:$0xff]
      %v1282 = vld [vmem:[%s816 + $0x81] sm:$0xff]
      %v1283 = vld [vmem:[%s816 + $0x89] sm:$0xff]
      %v1284 = vld [vmem:[%s816 + $0x91] sm:$0xff]
      %v1285 = vld [vmem:[%s816 + $0x99] sm:$0xff]
      %v1286 = vld [vmem:[%s816 + $0xa1] sm:$0xff]
      %v1287 = vld [vmem:[%s816 + $0xa9] sm:$0xff]
      %v1288 = vld [vmem:[%s816 + $0xb1] sm:$0xff]
      %v1289 = vld [vmem:[%s816 + $0xb9] sm:$0xff]
      %v1290 = vld [vmem:[%s816 + $0xc1] sm:$0xff]
      %v1291 = vld [vmem:[%s816 + $0xc9] sm:$0xff]
      %v1292 = vld [vmem:[%s816 + $0xd1] sm:$0x3]
      %s1293 = scalar_lea.vmem %s1, 5
      %v1294 = vld [vmem:[%s1293] sm:$0x1]
      %1296 = vset.pattern.permute.xlu0 0
      %1297 = vperm.xlu0 %1296, %v1266
      %v1298 = vpop.permute.xlu0 %1297
      %1301 = vset.pattern.permute.xlu0 0
      %1302 = vperm.xlu0 %1301, %v1267
      %v1303 = vpop.permute.xlu0 %1302
      %1306 = vset.pattern.permute.xlu0 0
      %1307 = vperm.xlu0 %1306, %v1268
      %v1308 = vpop.permute.xlu0 %1307
      %1311 = vset.pattern.permute.xlu0 0
      %1312 = vperm.xlu0 %1311, %v1269
      %v1313 = vpop.permute.xlu0 %1312
      %1316 = vset.pattern.permute.xlu0 0
      %1317 = vperm.xlu0 %1316, %v1270
      %v1318 = vpop.permute.xlu0 %1317
      %1321 = vset.pattern.permute.xlu0 0
      %1322 = vperm.xlu0 %1321, %v1271
      %v1323 = vpop.permute.xlu0 %1322
      %1326 = vset.pattern.permute.xlu0 0
      %1327 = vperm.xlu0 %1326, %v1272
      %v1328 = vpop.permute.xlu0 %1327
      %1331 = vset.pattern.permute.xlu0 0
      %1332 = vperm.xlu0 %1331, %v1273
      %v1333 = vpop.permute.xlu0 %1332
      %1336 = vset.pattern.permute.xlu0 0
      %1337 = vperm.xlu0 %1336, %v1274
      %v1338 = vpop.permute.xlu0 %1337
      %1341 = vset.pattern.permute.xlu0 0
      %1342 = vperm.xlu0 %1341, %v1275
      %v1343 = vpop.permute.xlu0 %1342
      %1346 = vset.pattern.permute.xlu0 0
      %1347 = vperm.xlu0 %1346, %v1276
      %v1348 = vpop.permute.xlu0 %1347
      %1351 = vset.pattern.permute.xlu0 0
      %1352 = vperm.xlu0 %1351, %v1277
      %v1353 = vpop.permute.xlu0 %1352
      %1356 = vset.pattern.permute.xlu0 0
      %1357 = vperm.xlu0 %1356, %v1278
      %v1358 = vpop.permute.xlu0 %1357
      %1361 = vset.pattern.permute.xlu0 0
      %1362 = vperm.xlu0 %1361, %v1279
      %v1363 = vpop.permute.xlu0 %1362
      %1366 = vset.pattern.permute.xlu0 0
      %1367 = vperm.xlu0 %1366, %v1280
      %v1368 = vpop.permute.xlu0 %1367
      %1371 = vset.pattern.permute.xlu0 0
      %1372 = vperm.xlu0 %1371, %v1281
      %v1373 = vpop.permute.xlu0 %1372
      %1376 = vset.pattern.permute.xlu0 0
      %1377 = vperm.xlu0 %1376, %v1282
      %v1378 = vpop.permute.xlu0 %1377
      %1381 = vset.pattern.permute.xlu0 0
      %1382 = vperm.xlu0 %1381, %v1283
      %v1383 = vpop.permute.xlu0 %1382
      %1386 = vset.pattern.permute.xlu0 0
      %1387 = vperm.xlu0 %1386, %v1284
      %v1388 = vpop.permute.xlu0 %1387
      %1391 = vset.pattern.permute.xlu0 0
      %1392 = vperm.xlu0 %1391, %v1285
      %v1393 = vpop.permute.xlu0 %1392
      %1396 = vset.pattern.permute.xlu0 0
      %1397 = vperm.xlu0 %1396, %v1286
      %v1398 = vpop.permute.xlu0 %1397
      %1401 = vset.pattern.permute.xlu0 0
      %1402 = vperm.xlu0 %1401, %v1287
      %v1403 = vpop.permute.xlu0 %1402
      %1406 = vset.pattern.permute.xlu0 0
      %1407 = vperm.xlu0 %1406, %v1288
      %v1408 = vpop.permute.xlu0 %1407
      %1411 = vset.pattern.permute.xlu0 0
      %1412 = vperm.xlu0 %1411, %v1289
      %v1413 = vpop.permute.xlu0 %1412
      %1416 = vset.pattern.permute.xlu0 0
      %1417 = vperm.xlu0 %1416, %v1290
      %v1418 = vpop.permute.xlu0 %1417
      %1421 = vset.pattern.permute.xlu0 0
      %1422 = vperm.xlu0 %1421, %v1291
      %v1423 = vpop.permute.xlu0 %1422
      %1426 = vset.pattern.permute.xlu0 0
      %1427 = vperm.xlu0 %1426, %v1292
      %v1428 = vpop.permute.xlu0 %1427
      %v1431 = vlaneseq
      %v1432 = vshrl.u32 %v1431, 7
      %v1433 = vsub.s32 0, %v1432
      %v1434 = vrot.slane %v1294, %v1433
      %v1436 = vmul.f32 %v1298, %v1434
      %v1437 = vmul.f32 %v1303, %v1434
      %v1438 = vmul.f32 %v1308, %v1434
      %v1439 = vmul.f32 %v1313, %v1434
      %v1440 = vmul.f32 %v1318, %v1434
      %v1441 = vmul.f32 %v1323, %v1434
      %v1442 = vmul.f32 %v1328, %v1434
      %v1443 = vmul.f32 %v1333, %v1434
      %v1444 = vmul.f32 %v1338, %v1434
      %v1445 = vmul.f32 %v1343, %v1434
      %v1446 = vmul.f32 %v1348, %v1434
      %v1447 = vmul.f32 %v1353, %v1434
      %v1448 = vmul.f32 %v1358, %v1434
      %v1449 = vmul.f32 %v1363, %v1434
      %v1450 = vmul.f32 %v1368, %v1434
      %v1451 = vmul.f32 %v1373, %v1434
      %v1452 = vmul.f32 %v1378, %v1434
      %v1453 = vmul.f32 %v1383, %v1434
      %v1454 = vmul.f32 %v1388, %v1434
      %v1455 = vmul.f32 %v1393, %v1434
      %v1456 = vmul.f32 %v1398, %v1434
      %v1457 = vmul.f32 %v1403, %v1434
      %v1458 = vmul.f32 %v1408, %v1434
      %v1459 = vmul.f32 %v1413, %v1434
      %v1460 = vmul.f32 %v1418, %v1434
      %v1461 = vmul.f32 %v1423, %v1434
      %v1462 = vmul.f32 %v1428, %v1434
      %v1463 = vadd.f32 %v1239, %v1436
      %v1464 = vadd.f32 %v1240, %v1437
      %v1465 = vadd.f32 %v1241, %v1438
      %v1466 = vadd.f32 %v1242, %v1439
      %v1467 = vadd.f32 %v1243, %v1440
      %v1468 = vadd.f32 %v1244, %v1441
      %v1469 = vadd.f32 %v1245, %v1442
      %v1470 = vadd.f32 %v1246, %v1443
      %v1471 = vadd.f32 %v1247, %v1444
      %v1472 = vadd.f32 %v1248, %v1445
      %v1473 = vadd.f32 %v1249, %v1446
      %v1474 = vadd.f32 %v1250, %v1447
      %v1475 = vadd.f32 %v1251, %v1448
      %v1476 = vadd.f32 %v1252, %v1449
      %v1477 = vadd.f32 %v1253, %v1450
      %v1478 = vadd.f32 %v1254, %v1451
      %v1479 = vadd.f32 %v1255, %v1452
      %v1480 = vadd.f32 %v1256, %v1453
      %v1481 = vadd.f32 %v1257, %v1454
      %v1482 = vadd.f32 %v1258, %v1455
      %v1483 = vadd.f32 %v1259, %v1456
      %v1484 = vadd.f32 %v1260, %v1457
      %v1485 = vadd.f32 %v1261, %v1458
      %v1486 = vadd.f32 %v1262, %v1459
      %v1487 = vadd.f32 %v1263, %v1460
      %v1488 = vadd.f32 %v1264, %v1461
      %v1489 = vadd.f32 %v1265, %v1462
      %v1490 = vld [vmem:[%s165 + $0xf] sm:$0xff]
      %v1491 = vld [vmem:[%s165 + $0x17] sm:$0xff]
      %v1492 = vld [vmem:[%s165 + $0x1f] sm:$0xff]
      %v1493 = vld [vmem:[%s165 + $0x27] sm:$0xff]
      %v1494 = vld [vmem:[%s165 + $0x2f] sm:$0xff]
      %v1495 = vld [vmem:[%s165 + $0x37] sm:$0xff]
      %v1496 = vld [vmem:[%s165 + $0x3f] sm:$0xff]
      %v1497 = vld [vmem:[%s165 + $0x47] sm:$0xff]
      %v1498 = vld [vmem:[%s165 + $0x4f] sm:$0xff]
      %v1499 = vld [vmem:[%s165 + $0x57] sm:$0xff]
      %v1500 = vld [vmem:[%s165 + $0x5f] sm:$0xff]
      %v1501 = vld [vmem:[%s165 + $0x67] sm:$0xff]
      %v1502 = vld [vmem:[%s165 + $0x6f] sm:$0xff]
      %v1503 = vld [vmem:[%s165 + $0x77] sm:$0xff]
      %v1504 = vld [vmem:[%s165 + $0x7f] sm:$0xff]
      %v1505 = vld [vmem:[%s165 + $0x87] sm:$0xff]
      %v1506 = vld [vmem:[%s165 + $0x8f] sm:$0xff]
      %v1507 = vld [vmem:[%s165 + $0x97] sm:$0xff]
      %v1508 = vld [vmem:[%s165 + $0x9f] sm:$0xff]
      %v1509 = vld [vmem:[%s165 + $0xa7] sm:$0xff]
      %v1510 = vld [vmem:[%s165 + $0xaf] sm:$0xff]
      %v1511 = vld [vmem:[%s165 + $0xb7] sm:$0xff]
      %v1512 = vld [vmem:[%s165 + $0xbf] sm:$0xff]
      %v1513 = vld [vmem:[%s165 + $0xc7] sm:$0xff]
      %v1514 = vld [vmem:[%s165 + $0xcf] sm:$0xff]
      %v1515 = vld [vmem:[%s165 + $0xd7] sm:$0xff]
      %v1516 = vld [vmem:[%s165 + $0xdf] sm:$0x3]
      %s1517 = scalar_lea.vmem %s1, 6
      %v1518 = vld [vmem:[%s1517] sm:$0x1]
      %1520 = vset.pattern.permute.xlu0 0
      %1521 = vperm.xlu0 %1520, %v1490
      %v1522 = vpop.permute.xlu0 %1521
      %1525 = vset.pattern.permute.xlu0 0
      %1526 = vperm.xlu0 %1525, %v1491
      %v1527 = vpop.permute.xlu0 %1526
      %1530 = vset.pattern.permute.xlu0 0
      %1531 = vperm.xlu0 %1530, %v1492
      %v1532 = vpop.permute.xlu0 %1531
      %1535 = vset.pattern.permute.xlu0 0
      %1536 = vperm.xlu0 %1535, %v1493
      %v1537 = vpop.permute.xlu0 %1536
      %1540 = vset.pattern.permute.xlu0 0
      %1541 = vperm.xlu0 %1540, %v1494
      %v1542 = vpop.permute.xlu0 %1541
      %1545 = vset.pattern.permute.xlu0 0
      %1546 = vperm.xlu0 %1545, %v1495
      %v1547 = vpop.permute.xlu0 %1546
      %1550 = vset.pattern.permute.xlu0 0
      %1551 = vperm.xlu0 %1550, %v1496
      %v1552 = vpop.permute.xlu0 %1551
      %1555 = vset.pattern.permute.xlu0 0
      %1556 = vperm.xlu0 %1555, %v1497
      %v1557 = vpop.permute.xlu0 %1556
      %1560 = vset.pattern.permute.xlu0 0
      %1561 = vperm.xlu0 %1560, %v1498
      %v1562 = vpop.permute.xlu0 %1561
      %1565 = vset.pattern.permute.xlu0 0
      %1566 = vperm.xlu0 %1565, %v1499
      %v1567 = vpop.permute.xlu0 %1566
      %1570 = vset.pattern.permute.xlu0 0
      %1571 = vperm.xlu0 %1570, %v1500
      %v1572 = vpop.permute.xlu0 %1571
      %1575 = vset.pattern.permute.xlu0 0
      %1576 = vperm.xlu0 %1575, %v1501
      %v1577 = vpop.permute.xlu0 %1576
      %1580 = vset.pattern.permute.xlu0 0
      %1581 = vperm.xlu0 %1580, %v1502
      %v1582 = vpop.permute.xlu0 %1581
      %1585 = vset.pattern.permute.xlu0 0
      %1586 = vperm.xlu0 %1585, %v1503
      %v1587 = vpop.permute.xlu0 %1586
      %1590 = vset.pattern.permute.xlu0 0
      %1591 = vperm.xlu0 %1590, %v1504
      %v1592 = vpop.permute.xlu0 %1591
      %1595 = vset.pattern.permute.xlu0 0
      %1596 = vperm.xlu0 %1595, %v1505
      %v1597 = vpop.permute.xlu0 %1596
      %1600 = vset.pattern.permute.xlu0 0
      %1601 = vperm.xlu0 %1600, %v1506
      %v1602 = vpop.permute.xlu0 %1601
      %1605 = vset.pattern.permute.xlu0 0
      %1606 = vperm.xlu0 %1605, %v1507
      %v1607 = vpop.permute.xlu0 %1606
      %1610 = vset.pattern.permute.xlu0 0
      %1611 = vperm.xlu0 %1610, %v1508
      %v1612 = vpop.permute.xlu0 %1611
      %1615 = vset.pattern.permute.xlu0 0
      %1616 = vperm.xlu0 %1615, %v1509
      %v1617 = vpop.permute.xlu0 %1616
      %1620 = vset.pattern.permute.xlu0 0
      %1621 = vperm.xlu0 %1620, %v1510
      %v1622 = vpop.permute.xlu0 %1621
      %1625 = vset.pattern.permute.xlu0 0
      %1626 = vperm.xlu0 %1625, %v1511
      %v1627 = vpop.permute.xlu0 %1626
      %1630 = vset.pattern.permute.xlu0 0
      %1631 = vperm.xlu0 %1630, %v1512
      %v1632 = vpop.permute.xlu0 %1631
      %1635 = vset.pattern.permute.xlu0 0
      %1636 = vperm.xlu0 %1635, %v1513
      %v1637 = vpop.permute.xlu0 %1636
      %1640 = vset.pattern.permute.xlu0 0
      %1641 = vperm.xlu0 %1640, %v1514
      %v1642 = vpop.permute.xlu0 %1641
      %1645 = vset.pattern.permute.xlu0 0
      %1646 = vperm.xlu0 %1645, %v1515
      %v1647 = vpop.permute.xlu0 %1646
      %1650 = vset.pattern.permute.xlu0 0
      %1651 = vperm.xlu0 %1650, %v1516
      %v1652 = vpop.permute.xlu0 %1651
      %v1655 = vlaneseq
      %v1656 = vshrl.u32 %v1655, 7
      %v1657 = vsub.s32 0, %v1656
      %v1658 = vrot.slane %v1518, %v1657
      %v1660 = vmul.f32 %v1522, %v1658
      %v1661 = vmul.f32 %v1527, %v1658
      %v1662 = vmul.f32 %v1532, %v1658
      %v1663 = vmul.f32 %v1537, %v1658
      %v1664 = vmul.f32 %v1542, %v1658
      %v1665 = vmul.f32 %v1547, %v1658
      %v1666 = vmul.f32 %v1552, %v1658
      %v1667 = vmul.f32 %v1557, %v1658
      %v1668 = vmul.f32 %v1562, %v1658
      %v1669 = vmul.f32 %v1567, %v1658
      %v1670 = vmul.f32 %v1572, %v1658
      %v1671 = vmul.f32 %v1577, %v1658
      %v1672 = vmul.f32 %v1582, %v1658
      %v1673 = vmul.f32 %v1587, %v1658
      %v1674 = vmul.f32 %v1592, %v1658
      %v1675 = vmul.f32 %v1597, %v1658
      %v1676 = vmul.f32 %v1602, %v1658
      %v1677 = vmul.f32 %v1607, %v1658
      %v1678 = vmul.f32 %v1612, %v1658
      %v1679 = vmul.f32 %v1617, %v1658
      %v1680 = vmul.f32 %v1622, %v1658
      %v1681 = vmul.f32 %v1627, %v1658
      %v1682 = vmul.f32 %v1632, %v1658
      %v1683 = vmul.f32 %v1637, %v1658
      %v1684 = vmul.f32 %v1642, %v1658
      %v1685 = vmul.f32 %v1647, %v1658
      %v1686 = vmul.f32 %v1652, %v1658
      %v1687 = vadd.f32 %v1463, %v1660
      %v1688 = vadd.f32 %v1464, %v1661
      %v1689 = vadd.f32 %v1465, %v1662
      %v1690 = vadd.f32 %v1466, %v1663
      %v1691 = vadd.f32 %v1467, %v1664
      %v1692 = vadd.f32 %v1468, %v1665
      %v1693 = vadd.f32 %v1469, %v1666
      %v1694 = vadd.f32 %v1470, %v1667
      %v1695 = vadd.f32 %v1471, %v1668
      %v1696 = vadd.f32 %v1472, %v1669
      %v1697 = vadd.f32 %v1473, %v1670
      %v1698 = vadd.f32 %v1474, %v1671
      %v1699 = vadd.f32 %v1475, %v1672
      %v1700 = vadd.f32 %v1476, %v1673
      %v1701 = vadd.f32 %v1477, %v1674
      %v1702 = vadd.f32 %v1478, %v1675
      %v1703 = vadd.f32 %v1479, %v1676
      %v1704 = vadd.f32 %v1480, %v1677
      %v1705 = vadd.f32 %v1481, %v1678
      %v1706 = vadd.f32 %v1482, %v1679
      %v1707 = vadd.f32 %v1483, %v1680
      %v1708 = vadd.f32 %v1484, %v1681
      %v1709 = vadd.f32 %v1485, %v1682
      %v1710 = vadd.f32 %v1486, %v1683
      %v1711 = vadd.f32 %v1487, %v1684
      %v1712 = vadd.f32 %v1488, %v1685
      %v1713 = vadd.f32 %v1489, %v1686
      %v1714 = vld [vmem:[%s367 + $0xf] sm:$0xff]
      %v1715 = vld [vmem:[%s367 + $0x17] sm:$0xff]
      %v1716 = vld [vmem:[%s367 + $0x1f] sm:$0xff]
      %v1717 = vld [vmem:[%s367 + $0x27] sm:$0xff]
      %v1718 = vld [vmem:[%s367 + $0x2f] sm:$0xff]
      %v1719 = vld [vmem:[%s367 + $0x37] sm:$0xff]
      %v1720 = vld [vmem:[%s367 + $0x3f] sm:$0xff]
      %v1721 = vld [vmem:[%s367 + $0x47] sm:$0xff]
      %v1722 = vld [vmem:[%s367 + $0x4f] sm:$0xff]
      %v1723 = vld [vmem:[%s367 + $0x57] sm:$0xff]
      %v1724 = vld [vmem:[%s367 + $0x5f] sm:$0xff]
      %v1725 = vld [vmem:[%s367 + $0x67] sm:$0xff]
      %v1726 = vld [vmem:[%s367 + $0x6f] sm:$0xff]
      %v1727 = vld [vmem:[%s367 + $0x77] sm:$0xff]
      %v1728 = vld [vmem:[%s367 + $0x7f] sm:$0xff]
      %v1729 = vld [vmem:[%s367 + $0x87] sm:$0xff]
      %v1730 = vld [vmem:[%s367 + $0x8f] sm:$0xff]
      %v1731 = vld [vmem:[%s367 + $0x97] sm:$0xff]
      %v1732 = vld [vmem:[%s367 + $0x9f] sm:$0xff]
      %v1733 = vld [vmem:[%s367 + $0xa7] sm:$0xff]
      %v1734 = vld [vmem:[%s367 + $0xaf] sm:$0xff]
      %v1735 = vld [vmem:[%s367 + $0xb7] sm:$0xff]
      %v1736 = vld [vmem:[%s367 + $0xbf] sm:$0xff]
      %v1737 = vld [vmem:[%s367 + $0xc7] sm:$0xff]
      %v1738 = vld [vmem:[%s367 + $0xcf] sm:$0xff]
      %v1739 = vld [vmem:[%s367 + $0xd7] sm:$0xff]
      %v1740 = vld [vmem:[%s367 + $0xdf] sm:$0x3]
      %s1741 = scalar_lea.vmem %s1, 7
      %v1742 = vld [vmem:[%s1741] sm:$0x1]
      %1744 = vset.pattern.permute.xlu0 0
      %1745 = vperm.xlu0 %1744, %v1714
      %v1746 = vpop.permute.xlu0 %1745
      %1749 = vset.pattern.permute.xlu0 0
      %1750 = vperm.xlu0 %1749, %v1715
      %v1751 = vpop.permute.xlu0 %1750
      %1754 = vset.pattern.permute.xlu0 0
      %1755 = vperm.xlu0 %1754, %v1716
      %v1756 = vpop.permute.xlu0 %1755
      %1759 = vset.pattern.permute.xlu0 0
      %1760 = vperm.xlu0 %1759, %v1717
      %v1761 = vpop.permute.xlu0 %1760
      %1764 = vset.pattern.permute.xlu0 0
      %1765 = vperm.xlu0 %1764, %v1718
      %v1766 = vpop.permute.xlu0 %1765
      %1769 = vset.pattern.permute.xlu0 0
      %1770 = vperm.xlu0 %1769, %v1719
      %v1771 = vpop.permute.xlu0 %1770
      %1774 = vset.pattern.permute.xlu0 0
      %1775 = vperm.xlu0 %1774, %v1720
      %v1776 = vpop.permute.xlu0 %1775
      %1779 = vset.pattern.permute.xlu0 0
      %1780 = vperm.xlu0 %1779, %v1721
      %v1781 = vpop.permute.xlu0 %1780
      %1784 = vset.pattern.permute.xlu0 0
      %1785 = vperm.xlu0 %1784, %v1722
      %v1786 = vpop.permute.xlu0 %1785
      %1789 = vset.pattern.permute.xlu0 0
      %1790 = vperm.xlu0 %1789, %v1723
      %v1791 = vpop.permute.xlu0 %1790
      %1794 = vset.pattern.permute.xlu0 0
      %1795 = vperm.xlu0 %1794, %v1724
      %v1796 = vpop.permute.xlu0 %1795
      %1799 = vset.pattern.permute.xlu0 0
      %1800 = vperm.xlu0 %1799, %v1725
      %v1801 = vpop.permute.xlu0 %1800
      %1804 = vset.pattern.permute.xlu0 0
      %1805 = vperm.xlu0 %1804, %v1726
      %v1806 = vpop.permute.xlu0 %1805
      %1809 = vset.pattern.permute.xlu0 0
      %1810 = vperm.xlu0 %1809, %v1727
      %v1811 = vpop.permute.xlu0 %1810
      %1814 = vset.pattern.permute.xlu0 0
      %1815 = vperm.xlu0 %1814, %v1728
      %v1816 = vpop.permute.xlu0 %1815
      %1819 = vset.pattern.permute.xlu0 0
      %1820 = vperm.xlu0 %1819, %v1729
      %v1821 = vpop.permute.xlu0 %1820
      %1824 = vset.pattern.permute.xlu0 0
      %1825 = vperm.xlu0 %1824, %v1730
      %v1826 = vpop.permute.xlu0 %1825
      %1829 = vset.pattern.permute.xlu0 0
      %1830 = vperm.xlu0 %1829, %v1731
      %v1831 = vpop.permute.xlu0 %1830
      %1834 = vset.pattern.permute.xlu0 0
      %1835 = vperm.xlu0 %1834, %v1732
      %v1836 = vpop.permute.xlu0 %1835
      %1839 = vset.pattern.permute.xlu0 0
      %1840 = vperm.xlu0 %1839, %v1733
      %v1841 = vpop.permute.xlu0 %1840
      %1844 = vset.pattern.permute.xlu0 0
      %1845 = vperm.xlu0 %1844, %v1734
      %v1846 = vpop.permute.xlu0 %1845
      %1849 = vset.pattern.permute.xlu0 0
      %1850 = vperm.xlu0 %1849, %v1735
      %v1851 = vpop.permute.xlu0 %1850
      %1854 = vset.pattern.permute.xlu0 0
      %1855 = vperm.xlu0 %1854, %v1736
      %v1856 = vpop.permute.xlu0 %1855
      %1859 = vset.pattern.permute.xlu0 0
      %1860 = vperm.xlu0 %1859, %v1737
      %v1861 = vpop.permute.xlu0 %1860
      %1864 = vset.pattern.permute.xlu0 0
      %1865 = vperm.xlu0 %1864, %v1738
      %v1866 = vpop.permute.xlu0 %1865
      %1869 = vset.pattern.permute.xlu0 0
      %1870 = vperm.xlu0 %1869, %v1739
      %v1871 = vpop.permute.xlu0 %1870
      %1874 = vset.pattern.permute.xlu0 0
      %1875 = vperm.xlu0 %1874, %v1740
      %v1876 = vpop.permute.xlu0 %1875
      %v1879 = vlaneseq
      %v1880 = vshrl.u32 %v1879, 7
      %v1881 = vsub.s32 0, %v1880
      %v1882 = vrot.slane %v1742, %v1881
      %v1884 = vmul.f32 %v1746, %v1882
      %v1885 = vmul.f32 %v1751, %v1882
      %v1886 = vmul.f32 %v1756, %v1882
      %v1887 = vmul.f32 %v1761, %v1882
      %v1888 = vmul.f32 %v1766, %v1882
      %v1889 = vmul.f32 %v1771, %v1882
      %v1890 = vmul.f32 %v1776, %v1882
      %v1891 = vmul.f32 %v1781, %v1882
      %v1892 = vmul.f32 %v1786, %v1882
      %v1893 = vmul.f32 %v1791, %v1882
      %v1894 = vmul.f32 %v1796, %v1882
      %v1895 = vmul.f32 %v1801, %v1882
      %v1896 = vmul.f32 %v1806, %v1882
      %v1897 = vmul.f32 %v1811, %v1882
      %v1898 = vmul.f32 %v1816, %v1882
      %v1899 = vmul.f32 %v1821, %v1882
      %v1900 = vmul.f32 %v1826, %v1882
      %v1901 = vmul.f32 %v1831, %v1882
      %v1902 = vmul.f32 %v1836, %v1882
      %v1903 = vmul.f32 %v1841, %v1882
      %v1904 = vmul.f32 %v1846, %v1882
      %v1905 = vmul.f32 %v1851, %v1882
      %v1906 = vmul.f32 %v1856, %v1882
      %v1907 = vmul.f32 %v1861, %v1882
      %v1908 = vmul.f32 %v1866, %v1882
      %v1909 = vmul.f32 %v1871, %v1882
      %v1910 = vmul.f32 %v1876, %v1882
      %v1911 = vadd.f32 %v1687, %v1884
      %v1912 = vadd.f32 %v1688, %v1885
      %v1913 = vadd.f32 %v1689, %v1886
      %v1914 = vadd.f32 %v1690, %v1887
      %v1915 = vadd.f32 %v1691, %v1888
      %v1916 = vadd.f32 %v1692, %v1889
      %v1917 = vadd.f32 %v1693, %v1890
      %v1918 = vadd.f32 %v1694, %v1891
      %v1919 = vadd.f32 %v1695, %v1892
      %v1920 = vadd.f32 %v1696, %v1893
      %v1921 = vadd.f32 %v1697, %v1894
      %v1922 = vadd.f32 %v1698, %v1895
      %v1923 = vadd.f32 %v1699, %v1896
      %v1924 = vadd.f32 %v1700, %v1897
      %v1925 = vadd.f32 %v1701, %v1898
      %v1926 = vadd.f32 %v1702, %v1899
      %v1927 = vadd.f32 %v1703, %v1900
      %v1928 = vadd.f32 %v1704, %v1901
      %v1929 = vadd.f32 %v1705, %v1902
      %v1930 = vadd.f32 %v1706, %v1903
      %v1931 = vadd.f32 %v1707, %v1904
      %v1932 = vadd.f32 %v1708, %v1905
      %v1933 = vadd.f32 %v1709, %v1906
      %v1934 = vadd.f32 %v1710, %v1907
      %v1935 = vadd.f32 %v1711, %v1908
      %v1936 = vadd.f32 %v1712, %v1909
      %v1937 = vadd.f32 %v1713, %v1910
      %v1938 = vld [vmem:[%s165 + $0x10] sm:$0xff]
      %v1939 = vld [vmem:[%s165 + $0x18] sm:$0xff]
      %v1940 = vld [vmem:[%s165 + $0x20] sm:$0xff]
      %v1941 = vld [vmem:[%s165 + $0x28] sm:$0xff]
      %v1942 = vld [vmem:[%s165 + $0x30] sm:$0xff]
      %v1943 = vld [vmem:[%s165 + $0x38] sm:$0xff]
      %v1944 = vld [vmem:[%s165 + $0x40] sm:$0xff]
      %v1945 = vld [vmem:[%s165 + $0x48] sm:$0xff]
      %v1946 = vld [vmem:[%s165 + $0x50] sm:$0xff]
      %v1947 = vld [vmem:[%s165 + $0x58] sm:$0xff]
      %v1948 = vld [vmem:[%s165 + $0x60] sm:$0xff]
      %v1949 = vld [vmem:[%s165 + $0x68] sm:$0xff]
      %v1950 = vld [vmem:[%s165 + $0x70] sm:$0xff]
      %v1951 = vld [vmem:[%s165 + $0x78] sm:$0xff]
      %v1952 = vld [vmem:[%s165 + $0x80] sm:$0xff]
      %v1953 = vld [vmem:[%s165 + $0x88] sm:$0xff]
      %v1954 = vld [vmem:[%s165 + $0x90] sm:$0xff]
      %v1955 = vld [vmem:[%s165 + $0x98] sm:$0xff]
      %v1956 = vld [vmem:[%s165 + $0xa0] sm:$0xff]
      %v1957 = vld [vmem:[%s165 + $0xa8] sm:$0xff]
      %v1958 = vld [vmem:[%s165 + $0xb0] sm:$0xff]
      %v1959 = vld [vmem:[%s165 + $0xb8] sm:$0xff]
      %v1960 = vld [vmem:[%s165 + $0xc0] sm:$0xff]
      %v1961 = vld [vmem:[%s165 + $0xc8] sm:$0xff]
      %v1962 = vld [vmem:[%s165 + $0xd0] sm:$0xff]
      %v1963 = vld [vmem:[%s165 + $0xd8] sm:$0xff]
      %v1964 = vld [vmem:[%s165 + $0xe0] sm:$0x3]
      %s1965 = scalar_lea.vmem %s1, 8
      %v1966 = vld [vmem:[%s1965] sm:$0x1]
      %1968 = vset.pattern.permute.xlu0 0
      %1969 = vperm.xlu0 %1968, %v1938
      %v1970 = vpop.permute.xlu0 %1969
      %1973 = vset.pattern.permute.xlu0 0
      %1974 = vperm.xlu0 %1973, %v1939
      %v1975 = vpop.permute.xlu0 %1974
      %1978 = vset.pattern.permute.xlu0 0
      %1979 = vperm.xlu0 %1978, %v1940
      %v1980 = vpop.permute.xlu0 %1979
      %1983 = vset.pattern.permute.xlu0 0
      %1984 = vperm.xlu0 %1983, %v1941
      %v1985 = vpop.permute.xlu0 %1984
      %1988 = vset.pattern.permute.xlu0 0
      %1989 = vperm.xlu0 %1988, %v1942
      %v1990 = vpop.permute.xlu0 %1989
      %1993 = vset.pattern.permute.xlu0 0
      %1994 = vperm.xlu0 %1993, %v1943
      %v1995 = vpop.permute.xlu0 %1994
      %1998 = vset.pattern.permute.xlu0 0
      %1999 = vperm.xlu0 %1998, %v1944
      %v2000 = vpop.permute.xlu0 %1999
      %2003 = vset.pattern.permute.xlu0 0
      %2004 = vperm.xlu0 %2003, %v1945
      %v2005 = vpop.permute.xlu0 %2004
      %2008 = vset.pattern.permute.xlu0 0
      %2009 = vperm.xlu0 %2008, %v1946
      %v2010 = vpop.permute.xlu0 %2009
      %2013 = vset.pattern.permute.xlu0 0
      %2014 = vperm.xlu0 %2013, %v1947
      %v2015 = vpop.permute.xlu0 %2014
      %2018 = vset.pattern.permute.xlu0 0
      %2019 = vperm.xlu0 %2018, %v1948
      %v2020 = vpop.permute.xlu0 %2019
      %2023 = vset.pattern.permute.xlu0 0
      %2024 = vperm.xlu0 %2023, %v1949
      %v2025 = vpop.permute.xlu0 %2024
      %2028 = vset.pattern.permute.xlu0 0
      %2029 = vperm.xlu0 %2028, %v1950
      %v2030 = vpop.permute.xlu0 %2029
      %2033 = vset.pattern.permute.xlu0 0
      %2034 = vperm.xlu0 %2033, %v1951
      %v2035 = vpop.permute.xlu0 %2034
      %2038 = vset.pattern.permute.xlu0 0
      %2039 = vperm.xlu0 %2038, %v1952
      %v2040 = vpop.permute.xlu0 %2039
      %2043 = vset.pattern.permute.xlu0 0
      %2044 = vperm.xlu0 %2043, %v1953
      %v2045 = vpop.permute.xlu0 %2044
      %2048 = vset.pattern.permute.xlu0 0
      %2049 = vperm.xlu0 %2048, %v1954
      %v2050 = vpop.permute.xlu0 %2049
      %2053 = vset.pattern.permute.xlu0 0
      %2054 = vperm.xlu0 %2053, %v1955
      %v2055 = vpop.permute.xlu0 %2054
      %2058 = vset.pattern.permute.xlu0 0
      %2059 = vperm.xlu0 %2058, %v1956
      %v2060 = vpop.permute.xlu0 %2059
      %2063 = vset.pattern.permute.xlu0 0
      %2064 = vperm.xlu0 %2063, %v1957
      %v2065 = vpop.permute.xlu0 %2064
      %2068 = vset.pattern.permute.xlu0 0
      %2069 = vperm.xlu0 %2068, %v1958
      %v2070 = vpop.permute.xlu0 %2069
      %2073 = vset.pattern.permute.xlu0 0
      %2074 = vperm.xlu0 %2073, %v1959
      %v2075 = vpop.permute.xlu0 %2074
      %2078 = vset.pattern.permute.xlu0 0
      %2079 = vperm.xlu0 %2078, %v1960
      %v2080 = vpop.permute.xlu0 %2079
      %2083 = vset.pattern.permute.xlu0 0
      %2084 = vperm.xlu0 %2083, %v1961
      %v2085 = vpop.permute.xlu0 %2084
      %2088 = vset.pattern.permute.xlu0 0
      %2089 = vperm.xlu0 %2088, %v1962
      %v2090 = vpop.permute.xlu0 %2089
      %2093 = vset.pattern.permute.xlu0 0
      %2094 = vperm.xlu0 %2093, %v1963
      %v2095 = vpop.permute.xlu0 %2094
      %2098 = vset.pattern.permute.xlu0 0
      %2099 = vperm.xlu0 %2098, %v1964
      %v2100 = vpop.permute.xlu0 %2099
      %v2103 = vlaneseq
      %v2104 = vshrl.u32 %v2103, 7
      %v2105 = vsub.s32 0, %v2104
      %v2106 = vrot.slane %v1966, %v2105
      %v2108 = vmul.f32 %v1970, %v2106
      %v2109 = vmul.f32 %v1975, %v2106
      %v2110 = vmul.f32 %v1980, %v2106
      %v2111 = vmul.f32 %v1985, %v2106
      %v2112 = vmul.f32 %v1990, %v2106
      %v2113 = vmul.f32 %v1995, %v2106
      %v2114 = vmul.f32 %v2000, %v2106
      %v2115 = vmul.f32 %v2005, %v2106
      %v2116 = vmul.f32 %v2010, %v2106
      %v2117 = vmul.f32 %v2015, %v2106
      %v2118 = vmul.f32 %v2020, %v2106
      %v2119 = vmul.f32 %v2025, %v2106
      %v2120 = vmul.f32 %v2030, %v2106
      %v2121 = vmul.f32 %v2035, %v2106
      %v2122 = vmul.f32 %v2040, %v2106
      %v2123 = vmul.f32 %v2045, %v2106
      %v2124 = vmul.f32 %v2050, %v2106
      %v2125 = vmul.f32 %v2055, %v2106
      %v2126 = vmul.f32 %v2060, %v2106
      %v2127 = vmul.f32 %v2065, %v2106
      %v2128 = vmul.f32 %v2070, %v2106
      %v2129 = vmul.f32 %v2075, %v2106
      %v2130 = vmul.f32 %v2080, %v2106
      %v2131 = vmul.f32 %v2085, %v2106
      %v2132 = vmul.f32 %v2090, %v2106
      %v2133 = vmul.f32 %v2095, %v2106
      %v2134 = vmul.f32 %v2100, %v2106
      %v2135 = vadd.f32 %v1911, %v2108
      %v2136 = vadd.f32 %v1912, %v2109
      %v2137 = vadd.f32 %v1913, %v2110
      %v2138 = vadd.f32 %v1914, %v2111
      %v2139 = vadd.f32 %v1915, %v2112
      %v2140 = vadd.f32 %v1916, %v2113
      %v2141 = vadd.f32 %v1917, %v2114
      %v2142 = vadd.f32 %v1918, %v2115
      %v2143 = vadd.f32 %v1919, %v2116
      %v2144 = vadd.f32 %v1920, %v2117
      %v2145 = vadd.f32 %v1921, %v2118
      %v2146 = vadd.f32 %v1922, %v2119
      %v2147 = vadd.f32 %v1923, %v2120
      %v2148 = vadd.f32 %v1924, %v2121
      %v2149 = vadd.f32 %v1925, %v2122
      %v2150 = vadd.f32 %v1926, %v2123
      %v2151 = vadd.f32 %v1927, %v2124
      %v2152 = vadd.f32 %v1928, %v2125
      %v2153 = vadd.f32 %v1929, %v2126
      %v2154 = vadd.f32 %v1930, %v2127
      %v2155 = vadd.f32 %v1931, %v2128
      %v2156 = vadd.f32 %v1932, %v2129
      %v2157 = vadd.f32 %v1933, %v2130
      %v2158 = vadd.f32 %v1934, %v2131
      %v2159 = vadd.f32 %v1935, %v2132
      %v2160 = vadd.f32 %v1936, %v2133
      %v2161 = vadd.f32 %v1937, %v2134
      %v2162 = vld [vmem:[%s2] sm:$0x1]
      %v2164 = vlaneseq
      %v2165 = vshrl.u32 %v2164, 7
      %v2166 = vsub.s32 0, %v2165
      %v2167 = vrot.slane %v2162, %v2166
      %v2169 = vadd.f32 %v2135, %v2167
      %v2170 = vadd.f32 %v2136, %v2167
      %v2171 = vadd.f32 %v2137, %v2167
      %v2172 = vadd.f32 %v2138, %v2167
      %v2173 = vadd.f32 %v2139, %v2167
      %v2174 = vadd.f32 %v2140, %v2167
      %v2175 = vadd.f32 %v2141, %v2167
      %v2176 = vadd.f32 %v2142, %v2167
      %v2177 = vadd.f32 %v2143, %v2167
      %v2178 = vadd.f32 %v2144, %v2167
      %v2179 = vadd.f32 %v2145, %v2167
      %v2180 = vadd.f32 %v2146, %v2167
      %v2181 = vadd.f32 %v2147, %v2167
      %v2182 = vadd.f32 %v2148, %v2167
      %v2183 = vadd.f32 %v2149, %v2167
      %v2184 = vadd.f32 %v2150, %v2167
      %v2185 = vadd.f32 %v2151, %v2167
      %v2186 = vadd.f32 %v2152, %v2167
      %v2187 = vadd.f32 %v2153, %v2167
      %v2188 = vadd.f32 %v2154, %v2167
      %v2189 = vadd.f32 %v2155, %v2167
      %v2190 = vadd.f32 %v2156, %v2167
      %v2191 = vadd.f32 %v2157, %v2167
      %v2192 = vadd.f32 %v2158, %v2167
      %v2193 = vadd.f32 %v2159, %v2167
      %v2194 = vadd.f32 %v2160, %v2167
      %v2195 = vadd.f32 %v2161, %v2167
      %v2196 = vmax.f32 %v2169, 0.0
      %v2197 = vmax.f32 %v2170, 0.0
      %v2198 = vmax.f32 %v2171, 0.0
      %v2199 = vmax.f32 %v2172, 0.0
      %v2200 = vmax.f32 %v2173, 0.0
      %v2201 = vmax.f32 %v2174, 0.0
      %v2202 = vmax.f32 %v2175, 0.0
      %v2203 = vmax.f32 %v2176, 0.0
      %v2204 = vmax.f32 %v2177, 0.0
      %v2205 = vmax.f32 %v2178, 0.0
      %v2206 = vmax.f32 %v2179, 0.0
      %v2207 = vmax.f32 %v2180, 0.0
      %v2208 = vmax.f32 %v2181, 0.0
      %v2209 = vmax.f32 %v2182, 0.0
      %v2210 = vmax.f32 %v2183, 0.0
      %v2211 = vmax.f32 %v2184, 0.0
      %v2212 = vmax.f32 %v2185, 0.0
      %v2213 = vmax.f32 %v2186, 0.0
      %v2214 = vmax.f32 %v2187, 0.0
      %v2215 = vmax.f32 %v2188, 0.0
      %v2216 = vmax.f32 %v2189, 0.0
      %v2217 = vmax.f32 %v2190, 0.0
      %v2218 = vmax.f32 %v2191, 0.0
      %v2219 = vmax.f32 %v2192, 0.0
      %v2220 = vmax.f32 %v2193, 0.0
      %v2221 = vmax.f32 %v2194, 0.0
      %v2222 = vmax.f32 %v2195, 0.0
      %v2223 = vmul.f32 %v400, %v338
      %v2224 = vmul.f32 %v405, %v338
      %v2225 = vmul.f32 %v410, %v338
      %v2226 = vmul.f32 %v415, %v338
      %v2227 = vmul.f32 %v420, %v338
      %v2228 = vmul.f32 %v425, %v338
      %v2229 = vmul.f32 %v430, %v338
      %v2230 = vmul.f32 %v435, %v338
      %v2231 = vmul.f32 %v440, %v338
      %v2232 = vmul.f32 %v445, %v338
      %v2233 = vmul.f32 %v450, %v338
      %v2234 = vmul.f32 %v455, %v338
      %v2235 = vmul.f32 %v460, %v338
      %v2236 = vmul.f32 %v465, %v338
      %v2237 = vmul.f32 %v470, %v338
      %v2238 = vmul.f32 %v475, %v338
      %v2239 = vmul.f32 %v480, %v338
      %v2240 = vmul.f32 %v485, %v338
      %v2241 = vmul.f32 %v490, %v338
      %v2242 = vmul.f32 %v495, %v338
      %v2243 = vmul.f32 %v500, %v338
      %v2244 = vmul.f32 %v505, %v338
      %v2245 = vmul.f32 %v510, %v338
      %v2246 = vmul.f32 %v515, %v338
      %v2247 = vmul.f32 %v520, %v338
      %v2248 = vmul.f32 %v525, %v338
      %v2249 = vmul.f32 %v530, %v338
      %v2250 = vmul.f32 %v624, %v536
      %v2251 = vmul.f32 %v629, %v536
      %v2252 = vmul.f32 %v634, %v536
      %v2253 = vmul.f32 %v639, %v536
      %v2254 = vmul.f32 %v644, %v536
      %v2255 = vmul.f32 %v649, %v536
      %v2256 = vmul.f32 %v654, %v536
      %v2257 = vmul.f32 %v659, %v536
      %v2258 = vmul.f32 %v664, %v536
      %v2259 = vmul.f32 %v669, %v536
      %v2260 = vmul.f32 %v674, %v536
      %v2261 = vmul.f32 %v679, %v536
      %v2262 = vmul.f32 %v684, %v536
      %v2263 = vmul.f32 %v689, %v536
      %v2264 = vmul.f32 %v694, %v536
      %v2265 = vmul.f32 %v699, %v536
      %v2266 = vmul.f32 %v704, %v536
      %v2267 = vmul.f32 %v709, %v536
      %v2268 = vmul.f32 %v714, %v536
      %v2269 = vmul.f32 %v719, %v536
      %v2270 = vmul.f32 %v724, %v536
      %v2271 = vmul.f32 %v729, %v536
      %v2272 = vmul.f32 %v734, %v536
      %v2273 = vmul.f32 %v739, %v536
      %v2274 = vmul.f32 %v744, %v536
      %v2275 = vmul.f32 %v749, %v536
      %v2276 = vmul.f32 %v754, %v536
      %v2277 = vadd.f32 %v2223, %v2250
      %v2278 = vadd.f32 %v2224, %v2251
      %v2279 = vadd.f32 %v2225, %v2252
      %v2280 = vadd.f32 %v2226, %v2253
      %v2281 = vadd.f32 %v2227, %v2254
      %v2282 = vadd.f32 %v2228, %v2255
      %v2283 = vadd.f32 %v2229, %v2256
      %v2284 = vadd.f32 %v2230, %v2257
      %v2285 = vadd.f32 %v2231, %v2258
      %v2286 = vadd.f32 %v2232, %v2259
      %v2287 = vadd.f32 %v2233, %v2260
      %v2288 = vadd.f32 %v2234, %v2261
      %v2289 = vadd.f32 %v2235, %v2262
      %v2290 = vadd.f32 %v2236, %v2263
      %v2291 = vadd.f32 %v2237, %v2264
      %v2292 = vadd.f32 %v2238, %v2265
      %v2293 = vadd.f32 %v2239, %v2266
      %v2294 = vadd.f32 %v2240, %v2267
      %v2295 = vadd.f32 %v2241, %v2268
      %v2296 = vadd.f32 %v2242, %v2269
      %v2297 = vadd.f32 %v2243, %v2270
      %v2298 = vadd.f32 %v2244, %v2271
      %v2299 = vadd.f32 %v2245, %v2272
      %v2300 = vadd.f32 %v2246, %v2273
      %v2301 = vadd.f32 %v2247, %v2274
      %v2302 = vadd.f32 %v2248, %v2275
      %v2303 = vadd.f32 %v2249, %v2276
      %v2304 = vld [vmem:[%s367 + $0x1] sm:$0xff]
      %v2305 = vld [vmem:[%s367 + $0x9] sm:$0xff]
      %v2306 = vld [vmem:[%s367 + $0x11] sm:$0xff]
      %v2307 = vld [vmem:[%s367 + $0x19] sm:$0xff]
      %v2308 = vld [vmem:[%s367 + $0x21] sm:$0xff]
      %v2309 = vld [vmem:[%s367 + $0x29] sm:$0xff]
      %v2310 = vld [vmem:[%s367 + $0x31] sm:$0xff]
      %v2311 = vld [vmem:[%s367 + $0x39] sm:$0xff]
      %v2312 = vld [vmem:[%s367 + $0x41] sm:$0xff]
      %v2313 = vld [vmem:[%s367 + $0x49] sm:$0xff]
      %v2314 = vld [vmem:[%s367 + $0x51] sm:$0xff]
      %v2315 = vld [vmem:[%s367 + $0x59] sm:$0xff]
      %v2316 = vld [vmem:[%s367 + $0x61] sm:$0xff]
      %v2317 = vld [vmem:[%s367 + $0x69] sm:$0xff]
      %v2318 = vld [vmem:[%s367 + $0x71] sm:$0xff]
      %v2319 = vld [vmem:[%s367 + $0x79] sm:$0xff]
      %v2320 = vld [vmem:[%s367 + $0x81] sm:$0xff]
      %v2321 = vld [vmem:[%s367 + $0x89] sm:$0xff]
      %v2322 = vld [vmem:[%s367 + $0x91] sm:$0xff]
      %v2323 = vld [vmem:[%s367 + $0x99] sm:$0xff]
      %v2324 = vld [vmem:[%s367 + $0xa1] sm:$0xff]
      %v2325 = vld [vmem:[%s367 + $0xa9] sm:$0xff]
      %v2326 = vld [vmem:[%s367 + $0xb1] sm:$0xff]
      %v2327 = vld [vmem:[%s367 + $0xb9] sm:$0xff]
      %v2328 = vld [vmem:[%s367 + $0xc1] sm:$0xff]
      %v2329 = vld [vmem:[%s367 + $0xc9] sm:$0xff]
      %v2330 = vld [vmem:[%s367 + $0xd1] sm:$0x3]
      %2332 = vset.pattern.permute.xlu0 0
      %2333 = vperm.xlu0 %2332, %v2304
      %v2334 = vpop.permute.xlu0 %2333
      %2337 = vset.pattern.permute.xlu0 0
      %2338 = vperm.xlu0 %2337, %v2305
      %v2339 = vpop.permute.xlu0 %2338
      %2342 = vset.pattern.permute.xlu0 0
      %2343 = vperm.xlu0 %2342, %v2306
      %v2344 = vpop.permute.xlu0 %2343
      %2347 = vset.pattern.permute.xlu0 0
      %2348 = vperm.xlu0 %2347, %v2307
      %v2349 = vpop.permute.xlu0 %2348
      %2352 = vset.pattern.permute.xlu0 0
      %2353 = vperm.xlu0 %2352, %v2308
      %v2354 = vpop.permute.xlu0 %2353
      %2357 = vset.pattern.permute.xlu0 0
      %2358 = vperm.xlu0 %2357, %v2309
      %v2359 = vpop.permute.xlu0 %2358
      %2362 = vset.pattern.permute.xlu0 0
      %2363 = vperm.xlu0 %2362, %v2310
      %v2364 = vpop.permute.xlu0 %2363
      %2367 = vset.pattern.permute.xlu0 0
      %2368 = vperm.xlu0 %2367, %v2311
      %v2369 = vpop.permute.xlu0 %2368
      %2372 = vset.pattern.permute.xlu0 0
      %2373 = vperm.xlu0 %2372, %v2312
      %v2374 = vpop.permute.xlu0 %2373
      %2377 = vset.pattern.permute.xlu0 0
      %2378 = vperm.xlu0 %2377, %v2313
      %v2379 = vpop.permute.xlu0 %2378
      %2382 = vset.pattern.permute.xlu0 0
      %2383 = vperm.xlu0 %2382, %v2314
      %v2384 = vpop.permute.xlu0 %2383
      %2387 = vset.pattern.permute.xlu0 0
      %2388 = vperm.xlu0 %2387, %v2315
      %v2389 = vpop.permute.xlu0 %2388
      %2392 = vset.pattern.permute.xlu0 0
      %2393 = vperm.xlu0 %2392, %v2316
      %v2394 = vpop.permute.xlu0 %2393
      %2397 = vset.pattern.permute.xlu0 0
      %2398 = vperm.xlu0 %2397, %v2317
      %v2399 = vpop.permute.xlu0 %2398
      %2402 = vset.pattern.permute.xlu0 0
      %2403 = vperm.xlu0 %2402, %v2318
      %v2404 = vpop.permute.xlu0 %2403
      %2407 = vset.pattern.permute.xlu0 0
      %2408 = vperm.xlu0 %2407, %v2319
      %v2409 = vpop.permute.xlu0 %2408
      %2412 = vset.pattern.permute.xlu0 0
      %2413 = vperm.xlu0 %2412, %v2320
      %v2414 = vpop.permute.xlu0 %2413
      %2417 = vset.pattern.permute.xlu0 0
      %2418 = vperm.xlu0 %2417, %v2321
      %v2419 = vpop.permute.xlu0 %2418
      %2422 = vset.pattern.permute.xlu0 0
      %2423 = vperm.xlu0 %2422, %v2322
      %v2424 = vpop.permute.xlu0 %2423
      %2427 = vset.pattern.permute.xlu0 0
      %2428 = vperm.xlu0 %2427, %v2323
      %v2429 = vpop.permute.xlu0 %2428
      %2432 = vset.pattern.permute.xlu0 0
      %2433 = vperm.xlu0 %2432, %v2324
      %v2434 = vpop.permute.xlu0 %2433
      %2437 = vset.pattern.permute.xlu0 0
      %2438 = vperm.xlu0 %2437, %v2325
      %v2439 = vpop.permute.xlu0 %2438
      %2442 = vset.pattern.permute.xlu0 0
      %2443 = vperm.xlu0 %2442, %v2326
      %v2444 = vpop.permute.xlu0 %2443
      %2447 = vset.pattern.permute.xlu0 0
      %2448 = vperm.xlu0 %2447, %v2327
      %v2449 = vpop.permute.xlu0 %2448
      %2452 = vset.pattern.permute.xlu0 0
      %2453 = vperm.xlu0 %2452, %v2328
      %v2454 = vpop.permute.xlu0 %2453
      %2457 = vset.pattern.permute.xlu0 0
      %2458 = vperm.xlu0 %2457, %v2329
      %v2459 = vpop.permute.xlu0 %2458
      %2462 = vset.pattern.permute.xlu0 0
      %2463 = vperm.xlu0 %2462, %v2330
      %v2464 = vpop.permute.xlu0 %2463
      %v2466 = vmul.f32 %v2334, %v760
      %v2467 = vmul.f32 %v2339, %v760
      %v2468 = vmul.f32 %v2344, %v760
      %v2469 = vmul.f32 %v2349, %v760
      %v2470 = vmul.f32 %v2354, %v760
      %v2471 = vmul.f32 %v2359, %v760
      %v2472 = vmul.f32 %v2364, %v760
      %v2473 = vmul.f32 %v2369, %v760
      %v2474 = vmul.f32 %v2374, %v760
      %v2475 = vmul.f32 %v2379, %v760
      %v2476 = vmul.f32 %v2384, %v760
      %v2477 = vmul.f32 %v2389, %v760
      %v2478 = vmul.f32 %v2394, %v760
      %v2479 = vmul.f32 %v2399, %v760
      %v2480 = vmul.f32 %v2404, %v760
      %v2481 = vmul.f32 %v2409, %v760
      %v2482 = vmul.f32 %v2414, %v760
      %v2483 = vmul.f32 %v2419, %v760
      %v2484 = vmul.f32 %v2424, %v760
      %v2485 = vmul.f32 %v2429, %v760
      %v2486 = vmul.f32 %v2434, %v760
      %v2487 = vmul.f32 %v2439, %v760
      %v2488 = vmul.f32 %v2444, %v760
      %v2489 = vmul.f32 %v2449, %v760
      %v2490 = vmul.f32 %v2454, %v760
      %v2491 = vmul.f32 %v2459, %v760
      %v2492 = vmul.f32 %v2464, %v760
      %v2493 = vadd.f32 %v2277, %v2466
      %v2494 = vadd.f32 %v2278, %v2467
      %v2495 = vadd.f32 %v2279, %v2468
      %v2496 = vadd.f32 %v2280, %v2469
      %v2497 = vadd.f32 %v2281, %v2470
      %v2498 = vadd.f32 %v2282, %v2471
      %v2499 = vadd.f32 %v2283, %v2472
      %v2500 = vadd.f32 %v2284, %v2473
      %v2501 = vadd.f32 %v2285, %v2474
      %v2502 = vadd.f32 %v2286, %v2475
      %v2503 = vadd.f32 %v2287, %v2476
      %v2504 = vadd.f32 %v2288, %v2477
      %v2505 = vadd.f32 %v2289, %v2478
      %v2506 = vadd.f32 %v2290, %v2479
      %v2507 = vadd.f32 %v2291, %v2480
      %v2508 = vadd.f32 %v2292, %v2481
      %v2509 = vadd.f32 %v2293, %v2482
      %v2510 = vadd.f32 %v2294, %v2483
      %v2511 = vadd.f32 %v2295, %v2484
      %v2512 = vadd.f32 %v2296, %v2485
      %v2513 = vadd.f32 %v2297, %v2486
      %v2514 = vadd.f32 %v2298, %v2487
      %v2515 = vadd.f32 %v2299, %v2488
      %v2516 = vadd.f32 %v2300, %v2489
      %v2517 = vadd.f32 %v2301, %v2490
      %v2518 = vadd.f32 %v2302, %v2491
      %v2519 = vadd.f32 %v2303, %v2492
      %v2520 = vmul.f32 %v1074, %v985
      %v2521 = vmul.f32 %v1079, %v985
      %v2522 = vmul.f32 %v1084, %v985
      %v2523 = vmul.f32 %v1089, %v985
      %v2524 = vmul.f32 %v1094, %v985
      %v2525 = vmul.f32 %v1099, %v985
      %v2526 = vmul.f32 %v1104, %v985
      %v2527 = vmul.f32 %v1109, %v985
      %v2528 = vmul.f32 %v1114, %v985
      %v2529 = vmul.f32 %v1119, %v985
      %v2530 = vmul.f32 %v1124, %v985
      %v2531 = vmul.f32 %v1129, %v985
      %v2532 = vmul.f32 %v1134, %v985
      %v2533 = vmul.f32 %v1139, %v985
      %v2534 = vmul.f32 %v1144, %v985
      %v2535 = vmul.f32 %v1149, %v985
      %v2536 = vmul.f32 %v1154, %v985
      %v2537 = vmul.f32 %v1159, %v985
      %v2538 = vmul.f32 %v1164, %v985
      %v2539 = vmul.f32 %v1169, %v985
      %v2540 = vmul.f32 %v1174, %v985
      %v2541 = vmul.f32 %v1179, %v985
      %v2542 = vmul.f32 %v1184, %v985
      %v2543 = vmul.f32 %v1189, %v985
      %v2544 = vmul.f32 %v1194, %v985
      %v2545 = vmul.f32 %v1199, %v985
      %v2546 = vmul.f32 %v1204, %v985
      %v2547 = vadd.f32 %v2493, %v2520
      %v2548 = vadd.f32 %v2494, %v2521
      %v2549 = vadd.f32 %v2495, %v2522
      %v2550 = vadd.f32 %v2496, %v2523
      %v2551 = vadd.f32 %v2497, %v2524
      %v2552 = vadd.f32 %v2498, %v2525
      %v2553 = vadd.f32 %v2499, %v2526
      %v2554 = vadd.f32 %v2500, %v2527
      %v2555 = vadd.f32 %v2501, %v2528
      %v2556 = vadd.f32 %v2502, %v2529
      %v2557 = vadd.f32 %v2503, %v2530
      %v2558 = vadd.f32 %v2504, %v2531
      %v2559 = vadd.f32 %v2505, %v2532
      %v2560 = vadd.f32 %v2506, %v2533
      %v2561 = vadd.f32 %v2507, %v2534
      %v2562 = vadd.f32 %v2508, %v2535
      %v2563 = vadd.f32 %v2509, %v2536
      %v2564 = vadd.f32 %v2510, %v2537
      %v2565 = vadd.f32 %v2511, %v2538
      %v2566 = vadd.f32 %v2512, %v2539
      %v2567 = vadd.f32 %v2513, %v2540
      %v2568 = vadd.f32 %v2514, %v2541
      %v2569 = vadd.f32 %v2515, %v2542
      %v2570 = vadd.f32 %v2516, %v2543
      %v2571 = vadd.f32 %v2517, %v2544
      %v2572 = vadd.f32 %v2518, %v2545
      %v2573 = vadd.f32 %v2519, %v2546
      %v2574 = vmul.f32 %v1298, %v1210
      %v2575 = vmul.f32 %v1303, %v1210
      %v2576 = vmul.f32 %v1308, %v1210
      %v2577 = vmul.f32 %v1313, %v1210
      %v2578 = vmul.f32 %v1318, %v1210
      %v2579 = vmul.f32 %v1323, %v1210
      %v2580 = vmul.f32 %v1328, %v1210
      %v2581 = vmul.f32 %v1333, %v1210
      %v2582 = vmul.f32 %v1338, %v1210
      %v2583 = vmul.f32 %v1343, %v1210
      %v2584 = vmul.f32 %v1348, %v1210
      %v2585 = vmul.f32 %v1353, %v1210
      %v2586 = vmul.f32 %v1358, %v1210
      %v2587 = vmul.f32 %v1363, %v1210
      %v2588 = vmul.f32 %v1368, %v1210
      %v2589 = vmul.f32 %v1373, %v1210
      %v2590 = vmul.f32 %v1378, %v1210
      %v2591 = vmul.f32 %v1383, %v1210
      %v2592 = vmul.f32 %v1388, %v1210
      %v2593 = vmul.f32 %v1393, %v1210
      %v2594 = vmul.f32 %v1398, %v1210
      %v2595 = vmul.f32 %v1403, %v1210
      %v2596 = vmul.f32 %v1408, %v1210
      %v2597 = vmul.f32 %v1413, %v1210
      %v2598 = vmul.f32 %v1418, %v1210
      %v2599 = vmul.f32 %v1423, %v1210
      %v2600 = vmul.f32 %v1428, %v1210
      %v2601 = vadd.f32 %v2547, %v2574
      %v2602 = vadd.f32 %v2548, %v2575
      %v2603 = vadd.f32 %v2549, %v2576
      %v2604 = vadd.f32 %v2550, %v2577
      %v2605 = vadd.f32 %v2551, %v2578
      %v2606 = vadd.f32 %v2552, %v2579
      %v2607 = vadd.f32 %v2553, %v2580
      %v2608 = vadd.f32 %v2554, %v2581
      %v2609 = vadd.f32 %v2555, %v2582
      %v2610 = vadd.f32 %v2556, %v2583
      %v2611 = vadd.f32 %v2557, %v2584
      %v2612 = vadd.f32 %v2558, %v2585
      %v2613 = vadd.f32 %v2559, %v2586
      %v2614 = vadd.f32 %v2560, %v2587
      %v2615 = vadd.f32 %v2561, %v2588
      %v2616 = vadd.f32 %v2562, %v2589
      %v2617 = vadd.f32 %v2563, %v2590
      %v2618 = vadd.f32 %v2564, %v2591
      %v2619 = vadd.f32 %v2565, %v2592
      %v2620 = vadd.f32 %v2566, %v2593
      %v2621 = vadd.f32 %v2567, %v2594
      %v2622 = vadd.f32 %v2568, %v2595
      %v2623 = vadd.f32 %v2569, %v2596
      %v2624 = vadd.f32 %v2570, %v2597
      %v2625 = vadd.f32 %v2571, %v2598
      %v2626 = vadd.f32 %v2572, %v2599
      %v2627 = vadd.f32 %v2573, %v2600
      %v2628 = vld [vmem:[%s1041 + $0x1] sm:$0xff]
      %v2629 = vld [vmem:[%s1041 + $0x9] sm:$0xff]
      %v2630 = vld [vmem:[%s1041 + $0x11] sm:$0xff]
      %v2631 = vld [vmem:[%s1041 + $0x19] sm:$0xff]
      %v2632 = vld [vmem:[%s1041 + $0x21] sm:$0xff]
      %v2633 = vld [vmem:[%s1041 + $0x29] sm:$0xff]
      %v2634 = vld [vmem:[%s1041 + $0x31] sm:$0xff]
      %v2635 = vld [vmem:[%s1041 + $0x39] sm:$0xff]
      %v2636 = vld [vmem:[%s1041 + $0x41] sm:$0xff]
      %v2637 = vld [vmem:[%s1041 + $0x49] sm:$0xff]
      %v2638 = vld [vmem:[%s1041 + $0x51] sm:$0xff]
      %v2639 = vld [vmem:[%s1041 + $0x59] sm:$0xff]
      %v2640 = vld [vmem:[%s1041 + $0x61] sm:$0xff]
      %v2641 = vld [vmem:[%s1041 + $0x69] sm:$0xff]
      %v2642 = vld [vmem:[%s1041 + $0x71] sm:$0xff]
      %v2643 = vld [vmem:[%s1041 + $0x79] sm:$0xff]
      %v2644 = vld [vmem:[%s1041 + $0x81] sm:$0xff]
      %v2645 = vld [vmem:[%s1041 + $0x89] sm:$0xff]
      %v2646 = vld [vmem:[%s1041 + $0x91] sm:$0xff]
      %v2647 = vld [vmem:[%s1041 + $0x99] sm:$0xff]
      %v2648 = vld [vmem:[%s1041 + $0xa1] sm:$0xff]
      %v2649 = vld [vmem:[%s1041 + $0xa9] sm:$0xff]
      %v2650 = vld [vmem:[%s1041 + $0xb1] sm:$0xff]
      %v2651 = vld [vmem:[%s1041 + $0xb9] sm:$0xff]
      %v2652 = vld [vmem:[%s1041 + $0xc1] sm:$0xff]
      %v2653 = vld [vmem:[%s1041 + $0xc9] sm:$0xff]
      %v2654 = vld [vmem:[%s1041 + $0xd1] sm:$0x3]
      %2656 = vset.pattern.permute.xlu0 0
      %2657 = vperm.xlu0 %2656, %v2628
      %v2658 = vpop.permute.xlu0 %2657
      %2661 = vset.pattern.permute.xlu0 0
      %2662 = vperm.xlu0 %2661, %v2629
      %v2663 = vpop.permute.xlu0 %2662
      %2666 = vset.pattern.permute.xlu0 0
      %2667 = vperm.xlu0 %2666, %v2630
      %v2668 = vpop.permute.xlu0 %2667
      %2671 = vset.pattern.permute.xlu0 0
      %2672 = vperm.xlu0 %2671, %v2631
      %v2673 = vpop.permute.xlu0 %2672
      %2676 = vset.pattern.permute.xlu0 0
      %2677 = vperm.xlu0 %2676, %v2632
      %v2678 = vpop.permute.xlu0 %2677
      %2681 = vset.pattern.permute.xlu0 0
      %2682 = vperm.xlu0 %2681, %v2633
      %v2683 = vpop.permute.xlu0 %2682
      %2686 = vset.pattern.permute.xlu0 0
      %2687 = vperm.xlu0 %2686, %v2634
      %v2688 = vpop.permute.xlu0 %2687
      %2691 = vset.pattern.permute.xlu0 0
      %2692 = vperm.xlu0 %2691, %v2635
      %v2693 = vpop.permute.xlu0 %2692
      %2696 = vset.pattern.permute.xlu0 0
      %2697 = vperm.xlu0 %2696, %v2636
      %v2698 = vpop.permute.xlu0 %2697
      %2701 = vset.pattern.permute.xlu0 0
      %2702 = vperm.xlu0 %2701, %v2637
      %v2703 = vpop.permute.xlu0 %2702
      %2706 = vset.pattern.permute.xlu0 0
      %2707 = vperm.xlu0 %2706, %v2638
      %v2708 = vpop.permute.xlu0 %2707
      %2711 = vset.pattern.permute.xlu0 0
      %2712 = vperm.xlu0 %2711, %v2639
      %v2713 = vpop.permute.xlu0 %2712
      %2716 = vset.pattern.permute.xlu0 0
      %2717 = vperm.xlu0 %2716, %v2640
      %v2718 = vpop.permute.xlu0 %2717
      %2721 = vset.pattern.permute.xlu0 0
      %2722 = vperm.xlu0 %2721, %v2641
      %v2723 = vpop.permute.xlu0 %2722
      %2726 = vset.pattern.permute.xlu0 0
      %2727 = vperm.xlu0 %2726, %v2642
      %v2728 = vpop.permute.xlu0 %2727
      %2731 = vset.pattern.permute.xlu0 0
      %2732 = vperm.xlu0 %2731, %v2643
      %v2733 = vpop.permute.xlu0 %2732
      %2736 = vset.pattern.permute.xlu0 0
      %2737 = vperm.xlu0 %2736, %v2644
      %v2738 = vpop.permute.xlu0 %2737
      %2741 = vset.pattern.permute.xlu0 0
      %2742 = vperm.xlu0 %2741, %v2645
      %v2743 = vpop.permute.xlu0 %2742
      %2746 = vset.pattern.permute.xlu0 0
      %2747 = vperm.xlu0 %2746, %v2646
      %v2748 = vpop.permute.xlu0 %2747
      %2751 = vset.pattern.permute.xlu0 0
      %2752 = vperm.xlu0 %2751, %v2647
      %v2753 = vpop.permute.xlu0 %2752
      %2756 = vset.pattern.permute.xlu0 0
      %2757 = vperm.xlu0 %2756, %v2648
      %v2758 = vpop.permute.xlu0 %2757
      %2761 = vset.pattern.permute.xlu0 0
      %2762 = vperm.xlu0 %2761, %v2649
      %v2763 = vpop.permute.xlu0 %2762
      %2766 = vset.pattern.permute.xlu0 0
      %2767 = vperm.xlu0 %2766, %v2650
      %v2768 = vpop.permute.xlu0 %2767
      %2771 = vset.pattern.permute.xlu0 0
      %2772 = vperm.xlu0 %2771, %v2651
      %v2773 = vpop.permute.xlu0 %2772
      %2776 = vset.pattern.permute.xlu0 0
      %2777 = vperm.xlu0 %2776, %v2652
      %v2778 = vpop.permute.xlu0 %2777
      %2781 = vset.pattern.permute.xlu0 0
      %2782 = vperm.xlu0 %2781, %v2653
      %v2783 = vpop.permute.xlu0 %2782
      %2786 = vset.pattern.permute.xlu0 0
      %2787 = vperm.xlu0 %2786, %v2654
      %v2788 = vpop.permute.xlu0 %2787
      %v2790 = vmul.f32 %v2658, %v1434
      %v2791 = vmul.f32 %v2663, %v1434
      %v2792 = vmul.f32 %v2668, %v1434
      %v2793 = vmul.f32 %v2673, %v1434
      %v2794 = vmul.f32 %v2678, %v1434
      %v2795 = vmul.f32 %v2683, %v1434
      %v2796 = vmul.f32 %v2688, %v1434
      %v2797 = vmul.f32 %v2693, %v1434
      %v2798 = vmul.f32 %v2698, %v1434
      %v2799 = vmul.f32 %v2703, %v1434
      %v2800 = vmul.f32 %v2708, %v1434
      %v2801 = vmul.f32 %v2713, %v1434
      %v2802 = vmul.f32 %v2718, %v1434
      %v2803 = vmul.f32 %v2723, %v1434
      %v2804 = vmul.f32 %v2728, %v1434
      %v2805 = vmul.f32 %v2733, %v1434
      %v2806 = vmul.f32 %v2738, %v1434
      %v2807 = vmul.f32 %v2743, %v1434
      %v2808 = vmul.f32 %v2748, %v1434
      %v2809 = vmul.f32 %v2753, %v1434
      %v2810 = vmul.f32 %v2758, %v1434
      %v2811 = vmul.f32 %v2763, %v1434
      %v2812 = vmul.f32 %v2768, %v1434
      %v2813 = vmul.f32 %v2773, %v1434
      %v2814 = vmul.f32 %v2778, %v1434
      %v2815 = vmul.f32 %v2783, %v1434
      %v2816 = vmul.f32 %v2788, %v1434
      %v2817 = vadd.f32 %v2601, %v2790
      %v2818 = vadd.f32 %v2602, %v2791
      %v2819 = vadd.f32 %v2603, %v2792
      %v2820 = vadd.f32 %v2604, %v2793
      %v2821 = vadd.f32 %v2605, %v2794
      %v2822 = vadd.f32 %v2606, %v2795
      %v2823 = vadd.f32 %v2607, %v2796
      %v2824 = vadd.f32 %v2608, %v2797
      %v2825 = vadd.f32 %v2609, %v2798
      %v2826 = vadd.f32 %v2610, %v2799
      %v2827 = vadd.f32 %v2611, %v2800
      %v2828 = vadd.f32 %v2612, %v2801
      %v2829 = vadd.f32 %v2613, %v2802
      %v2830 = vadd.f32 %v2614, %v2803
      %v2831 = vadd.f32 %v2615, %v2804
      %v2832 = vadd.f32 %v2616, %v2805
      %v2833 = vadd.f32 %v2617, %v2806
      %v2834 = vadd.f32 %v2618, %v2807
      %v2835 = vadd.f32 %v2619, %v2808
      %v2836 = vadd.f32 %v2620, %v2809
      %v2837 = vadd.f32 %v2621, %v2810
      %v2838 = vadd.f32 %v2622, %v2811
      %v2839 = vadd.f32 %v2623, %v2812
      %v2840 = vadd.f32 %v2624, %v2813
      %v2841 = vadd.f32 %v2625, %v2814
      %v2842 = vadd.f32 %v2626, %v2815
      %v2843 = vadd.f32 %v2627, %v2816
      %v2844 = vmul.f32 %v1746, %v1658
      %v2845 = vmul.f32 %v1751, %v1658
      %v2846 = vmul.f32 %v1756, %v1658
      %v2847 = vmul.f32 %v1761, %v1658
      %v2848 = vmul.f32 %v1766, %v1658
      %v2849 = vmul.f32 %v1771, %v1658
      %v2850 = vmul.f32 %v1776, %v1658
      %v2851 = vmul.f32 %v1781, %v1658
      %v2852 = vmul.f32 %v1786, %v1658
      %v2853 = vmul.f32 %v1791, %v1658
      %v2854 = vmul.f32 %v1796, %v1658
      %v2855 = vmul.f32 %v1801, %v1658
      %v2856 = vmul.f32 %v1806, %v1658
      %v2857 = vmul.f32 %v1811, %v1658
      %v2858 = vmul.f32 %v1816, %v1658
      %v2859 = vmul.f32 %v1821, %v1658
      %v2860 = vmul.f32 %v1826, %v1658
      %v2861 = vmul.f32 %v1831, %v1658
      %v2862 = vmul.f32 %v1836, %v1658
      %v2863 = vmul.f32 %v1841, %v1658
      %v2864 = vmul.f32 %v1846, %v1658
      %v2865 = vmul.f32 %v1851, %v1658
      %v2866 = vmul.f32 %v1856, %v1658
      %v2867 = vmul.f32 %v1861, %v1658
      %v2868 = vmul.f32 %v1866, %v1658
      %v2869 = vmul.f32 %v1871, %v1658
      %v2870 = vmul.f32 %v1876, %v1658
      %v2871 = vadd.f32 %v2817, %v2844
      %v2872 = vadd.f32 %v2818, %v2845
      %v2873 = vadd.f32 %v2819, %v2846
      %v2874 = vadd.f32 %v2820, %v2847
      %v2875 = vadd.f32 %v2821, %v2848
      %v2876 = vadd.f32 %v2822, %v2849
      %v2877 = vadd.f32 %v2823, %v2850
      %v2878 = vadd.f32 %v2824, %v2851
      %v2879 = vadd.f32 %v2825, %v2852
      %v2880 = vadd.f32 %v2826, %v2853
      %v2881 = vadd.f32 %v2827, %v2854
      %v2882 = vadd.f32 %v2828, %v2855
      %v2883 = vadd.f32 %v2829, %v2856
      %v2884 = vadd.f32 %v2830, %v2857
      %v2885 = vadd.f32 %v2831, %v2858
      %v2886 = vadd.f32 %v2832, %v2859
      %v2887 = vadd.f32 %v2833, %v2860
      %v2888 = vadd.f32 %v2834, %v2861
      %v2889 = vadd.f32 %v2835, %v2862
      %v2890 = vadd.f32 %v2836, %v2863
      %v2891 = vadd.f32 %v2837, %v2864
      %v2892 = vadd.f32 %v2838, %v2865
      %v2893 = vadd.f32 %v2839, %v2866
      %v2894 = vadd.f32 %v2840, %v2867
      %v2895 = vadd.f32 %v2841, %v2868
      %v2896 = vadd.f32 %v2842, %v2869
      %v2897 = vadd.f32 %v2843, %v2870
      %v2898 = vmul.f32 %v1970, %v1882
      %v2899 = vmul.f32 %v1975, %v1882
      %v2900 = vmul.f32 %v1980, %v1882
      %v2901 = vmul.f32 %v1985, %v1882
      %v2902 = vmul.f32 %v1990, %v1882
      %v2903 = vmul.f32 %v1995, %v1882
      %v2904 = vmul.f32 %v2000, %v1882
      %v2905 = vmul.f32 %v2005, %v1882
      %v2906 = vmul.f32 %v2010, %v1882
      %v2907 = vmul.f32 %v2015, %v1882
      %v2908 = vmul.f32 %v2020, %v1882
      %v2909 = vmul.f32 %v2025, %v1882
      %v2910 = vmul.f32 %v2030, %v1882
      %v2911 = vmul.f32 %v2035, %v1882
      %v2912 = vmul.f32 %v2040, %v1882
      %v2913 = vmul.f32 %v2045, %v1882
      %v2914 = vmul.f32 %v2050, %v1882
      %v2915 = vmul.f32 %v2055, %v1882
      %v2916 = vmul.f32 %v2060, %v1882
      %v2917 = vmul.f32 %v2065, %v1882
      %v2918 = vmul.f32 %v2070, %v1882
      %v2919 = vmul.f32 %v2075, %v1882
      %v2920 = vmul.f32 %v2080, %v1882
      %v2921 = vmul.f32 %v2085, %v1882
      %v2922 = vmul.f32 %v2090, %v1882
      %v2923 = vmul.f32 %v2095, %v1882
      %v2924 = vmul.f32 %v2100, %v1882
      %v2925 = vadd.f32 %v2871, %v2898
      %v2926 = vadd.f32 %v2872, %v2899
      %v2927 = vadd.f32 %v2873, %v2900
      %v2928 = vadd.f32 %v2874, %v2901
      %v2929 = vadd.f32 %v2875, %v2902
      %v2930 = vadd.f32 %v2876, %v2903
      %v2931 = vadd.f32 %v2877, %v2904
      %v2932 = vadd.f32 %v2878, %v2905
      %v2933 = vadd.f32 %v2879, %v2906
      %v2934 = vadd.f32 %v2880, %v2907
      %v2935 = vadd.f32 %v2881, %v2908
      %v2936 = vadd.f32 %v2882, %v2909
      %v2937 = vadd.f32 %v2883, %v2910
      %v2938 = vadd.f32 %v2884, %v2911
      %v2939 = vadd.f32 %v2885, %v2912
      %v2940 = vadd.f32 %v2886, %v2913
      %v2941 = vadd.f32 %v2887, %v2914
      %v2942 = vadd.f32 %v2888, %v2915
      %v2943 = vadd.f32 %v2889, %v2916
      %v2944 = vadd.f32 %v2890, %v2917
      %v2945 = vadd.f32 %v2891, %v2918
      %v2946 = vadd.f32 %v2892, %v2919
      %v2947 = vadd.f32 %v2893, %v2920
      %v2948 = vadd.f32 %v2894, %v2921
      %v2949 = vadd.f32 %v2895, %v2922
      %v2950 = vadd.f32 %v2896, %v2923
      %v2951 = vadd.f32 %v2897, %v2924
      %v2952 = vld [vmem:[%s367 + $0x10] sm:$0xff]
      %v2953 = vld [vmem:[%s367 + $0x18] sm:$0xff]
      %v2954 = vld [vmem:[%s367 + $0x20] sm:$0xff]
      %v2955 = vld [vmem:[%s367 + $0x28] sm:$0xff]
      %v2956 = vld [vmem:[%s367 + $0x30] sm:$0xff]
      %v2957 = vld [vmem:[%s367 + $0x38] sm:$0xff]
      %v2958 = vld [vmem:[%s367 + $0x40] sm:$0xff]
      %v2959 = vld [vmem:[%s367 + $0x48] sm:$0xff]
      %v2960 = vld [vmem:[%s367 + $0x50] sm:$0xff]
      %v2961 = vld [vmem:[%s367 + $0x58] sm:$0xff]
      %v2962 = vld [vmem:[%s367 + $0x60] sm:$0xff]
      %v2963 = vld [vmem:[%s367 + $0x68] sm:$0xff]
      %v2964 = vld [vmem:[%s367 + $0x70] sm:$0xff]
      %v2965 = vld [vmem:[%s367 + $0x78] sm:$0xff]
      %v2966 = vld [vmem:[%s367 + $0x80] sm:$0xff]
      %v2967 = vld [vmem:[%s367 + $0x88] sm:$0xff]
      %v2968 = vld [vmem:[%s367 + $0x90] sm:$0xff]
      %v2969 = vld [vmem:[%s367 + $0x98] sm:$0xff]
      %v2970 = vld [vmem:[%s367 + $0xa0] sm:$0xff]
      %v2971 = vld [vmem:[%s367 + $0xa8] sm:$0xff]
      %v2972 = vld [vmem:[%s367 + $0xb0] sm:$0xff]
      %v2973 = vld [vmem:[%s367 + $0xb8] sm:$0xff]
      %v2974 = vld [vmem:[%s367 + $0xc0] sm:$0xff]
      %v2975 = vld [vmem:[%s367 + $0xc8] sm:$0xff]
      %v2976 = vld [vmem:[%s367 + $0xd0] sm:$0xff]
      %v2977 = vld [vmem:[%s367 + $0xd8] sm:$0xff]
      %v2978 = vld [vmem:[%s367 + $0xe0] sm:$0x3]
      %2980 = vset.pattern.permute.xlu0 0
      %2981 = vperm.xlu0 %2980, %v2952
      %v2982 = vpop.permute.xlu0 %2981
      %2985 = vset.pattern.permute.xlu0 0
      %2986 = vperm.xlu0 %2985, %v2953
      %v2987 = vpop.permute.xlu0 %2986
      %2990 = vset.pattern.permute.xlu0 0
      %2991 = vperm.xlu0 %2990, %v2954
      %v2992 = vpop.permute.xlu0 %2991
      %2995 = vset.pattern.permute.xlu0 0
      %2996 = vperm.xlu0 %2995, %v2955
      %v2997 = vpop.permute.xlu0 %2996
      %3000 = vset.pattern.permute.xlu0 0
      %3001 = vperm.xlu0 %3000, %v2956
      %v3002 = vpop.permute.xlu0 %3001
      %3005 = vset.pattern.permute.xlu0 0
      %3006 = vperm.xlu0 %3005, %v2957
      %v3007 = vpop.permute.xlu0 %3006
      %3010 = vset.pattern.permute.xlu0 0
      %3011 = vperm.xlu0 %3010, %v2958
      %v3012 = vpop.permute.xlu0 %3011
      %3015 = vset.pattern.permute.xlu0 0
      %3016 = vperm.xlu0 %3015, %v2959
      %v3017 = vpop.permute.xlu0 %3016
      %3020 = vset.pattern.permute.xlu0 0
      %3021 = vperm.xlu0 %3020, %v2960
      %v3022 = vpop.permute.xlu0 %3021
      %3025 = vset.pattern.permute.xlu0 0
      %3026 = vperm.xlu0 %3025, %v2961
      %v3027 = vpop.permute.xlu0 %3026
      %3030 = vset.pattern.permute.xlu0 0
      %3031 = vperm.xlu0 %3030, %v2962
      %v3032 = vpop.permute.xlu0 %3031
      %3035 = vset.pattern.permute.xlu0 0
      %3036 = vperm.xlu0 %3035, %v2963
      %v3037 = vpop.permute.xlu0 %3036
      %3040 = vset.pattern.permute.xlu0 0
      %3041 = vperm.xlu0 %3040, %v2964
      %v3042 = vpop.permute.xlu0 %3041
      %3045 = vset.pattern.permute.xlu0 0
      %3046 = vperm.xlu0 %3045, %v2965
      %v3047 = vpop.permute.xlu0 %3046
      %3050 = vset.pattern.permute.xlu0 0
      %3051 = vperm.xlu0 %3050, %v2966
      %v3052 = vpop.permute.xlu0 %3051
      %3055 = vset.pattern.permute.xlu0 0
      %3056 = vperm.xlu0 %3055, %v2967
      %v3057 = vpop.permute.xlu0 %3056
      %3060 = vset.pattern.permute.xlu0 0
      %3061 = vperm.xlu0 %3060, %v2968
      %v3062 = vpop.permute.xlu0 %3061
      %3065 = vset.pattern.permute.xlu0 0
      %3066 = vperm.xlu0 %3065, %v2969
      %v3067 = vpop.permute.xlu0 %3066
      %3070 = vset.pattern.permute.xlu0 0
      %3071 = vperm.xlu0 %3070, %v2970
      %v3072 = vpop.permute.xlu0 %3071
      %3075 = vset.pattern.permute.xlu0 0
      %3076 = vperm.xlu0 %3075, %v2971
      %v3077 = vpop.permute.xlu0 %3076
      %3080 = vset.pattern.permute.xlu0 0
      %3081 = vperm.xlu0 %3080, %v2972
      %v3082 = vpop.permute.xlu0 %3081
      %3085 = vset.pattern.permute.xlu0 0
      %3086 = vperm.xlu0 %3085, %v2973
      %v3087 = vpop.permute.xlu0 %3086
      %3090 = vset.pattern.permute.xlu0 0
      %3091 = vperm.xlu0 %3090, %v2974
      %v3092 = vpop.permute.xlu0 %3091
      %3095 = vset.pattern.permute.xlu0 0
      %3096 = vperm.xlu0 %3095, %v2975
      %v3097 = vpop.permute.xlu0 %3096
      %3100 = vset.pattern.permute.xlu0 0
      %3101 = vperm.xlu0 %3100, %v2976
      %v3102 = vpop.permute.xlu0 %3101
      %3105 = vset.pattern.permute.xlu0 0
      %3106 = vperm.xlu0 %3105, %v2977
      %v3107 = vpop.permute.xlu0 %3106
      %3110 = vset.pattern.permute.xlu0 0
      %3111 = vperm.xlu0 %3110, %v2978
      %v3112 = vpop.permute.xlu0 %3111
      %v3114 = vmul.f32 %v2982, %v2106
      %v3115 = vmul.f32 %v2987, %v2106
      %v3116 = vmul.f32 %v2992, %v2106
      %v3117 = vmul.f32 %v2997, %v2106
      %v3118 = vmul.f32 %v3002, %v2106
      %v3119 = vmul.f32 %v3007, %v2106
      %v3120 = vmul.f32 %v3012, %v2106
      %v3121 = vmul.f32 %v3017, %v2106
      %v3122 = vmul.f32 %v3022, %v2106
      %v3123 = vmul.f32 %v3027, %v2106
      %v3124 = vmul.f32 %v3032, %v2106
      %v3125 = vmul.f32 %v3037, %v2106
      %v3126 = vmul.f32 %v3042, %v2106
      %v3127 = vmul.f32 %v3047, %v2106
      %v3128 = vmul.f32 %v3052, %v2106
      %v3129 = vmul.f32 %v3057, %v2106
      %v3130 = vmul.f32 %v3062, %v2106
      %v3131 = vmul.f32 %v3067, %v2106
      %v3132 = vmul.f32 %v3072, %v2106
      %v3133 = vmul.f32 %v3077, %v2106
      %v3134 = vmul.f32 %v3082, %v2106
      %v3135 = vmul.f32 %v3087, %v2106
      %v3136 = vmul.f32 %v3092, %v2106
      %v3137 = vmul.f32 %v3097, %v2106
      %v3138 = vmul.f32 %v3102, %v2106
      %v3139 = vmul.f32 %v3107, %v2106
      %v3140 = vmul.f32 %v3112, %v2106
      %v3141 = vadd.f32 %v2925, %v3114
      %v3142 = vadd.f32 %v2926, %v3115
      %v3143 = vadd.f32 %v2927, %v3116
      %v3144 = vadd.f32 %v2928, %v3117
      %v3145 = vadd.f32 %v2929, %v3118
      %v3146 = vadd.f32 %v2930, %v3119
      %v3147 = vadd.f32 %v2931, %v3120
      %v3148 = vadd.f32 %v2932, %v3121
      %v3149 = vadd.f32 %v2933, %v3122
      %v3150 = vadd.f32 %v2934, %v3123
      %v3151 = vadd.f32 %v2935, %v3124
      %v3152 = vadd.f32 %v2936, %v3125
      %v3153 = vadd.f32 %v2937, %v3126
      %v3154 = vadd.f32 %v2938, %v3127
      %v3155 = vadd.f32 %v2939, %v3128
      %v3156 = vadd.f32 %v2940, %v3129
      %v3157 = vadd.f32 %v2941, %v3130
      %v3158 = vadd.f32 %v2942, %v3131
      %v3159 = vadd.f32 %v2943, %v3132
      %v3160 = vadd.f32 %v2944, %v3133
      %v3161 = vadd.f32 %v2945, %v3134
      %v3162 = vadd.f32 %v2946, %v3135
      %v3163 = vadd.f32 %v2947, %v3136
      %v3164 = vadd.f32 %v2948, %v3137
      %v3165 = vadd.f32 %v2949, %v3138
      %v3166 = vadd.f32 %v2950, %v3139
      %v3167 = vadd.f32 %v2951, %v3140
      %v3168 = vadd.f32 %v3141, %v2167
      %v3169 = vadd.f32 %v3142, %v2167
      %v3170 = vadd.f32 %v3143, %v2167
      %v3171 = vadd.f32 %v3144, %v2167
      %v3172 = vadd.f32 %v3145, %v2167
      %v3173 = vadd.f32 %v3146, %v2167
      %v3174 = vadd.f32 %v3147, %v2167
      %v3175 = vadd.f32 %v3148, %v2167
      %v3176 = vadd.f32 %v3149, %v2167
      %v3177 = vadd.f32 %v3150, %v2167
      %v3178 = vadd.f32 %v3151, %v2167
      %v3179 = vadd.f32 %v3152, %v2167
      %v3180 = vadd.f32 %v3153, %v2167
      %v3181 = vadd.f32 %v3154, %v2167
      %v3182 = vadd.f32 %v3155, %v2167
      %v3183 = vadd.f32 %v3156, %v2167
      %v3184 = vadd.f32 %v3157, %v2167
      %v3185 = vadd.f32 %v3158, %v2167
      %v3186 = vadd.f32 %v3159, %v2167
      %v3187 = vadd.f32 %v3160, %v2167
      %v3188 = vadd.f32 %v3161, %v2167
      %v3189 = vadd.f32 %v3162, %v2167
      %v3190 = vadd.f32 %v3163, %v2167
      %v3191 = vadd.f32 %v3164, %v2167
      %v3192 = vadd.f32 %v3165, %v2167
      %v3193 = vadd.f32 %v3166, %v2167
      %v3194 = vadd.f32 %v3167, %v2167
      %v3195 = vmax.f32 %v3168, 0.0
      %v3196 = vmax.f32 %v3169, 0.0
      %v3197 = vmax.f32 %v3170, 0.0
      %v3198 = vmax.f32 %v3171, 0.0
      %v3199 = vmax.f32 %v3172, 0.0
      %v3200 = vmax.f32 %v3173, 0.0
      %v3201 = vmax.f32 %v3174, 0.0
      %v3202 = vmax.f32 %v3175, 0.0
      %v3203 = vmax.f32 %v3176, 0.0
      %v3204 = vmax.f32 %v3177, 0.0
      %v3205 = vmax.f32 %v3178, 0.0
      %v3206 = vmax.f32 %v3179, 0.0
      %v3207 = vmax.f32 %v3180, 0.0
      %v3208 = vmax.f32 %v3181, 0.0
      %v3209 = vmax.f32 %v3182, 0.0
      %v3210 = vmax.f32 %v3183, 0.0
      %v3211 = vmax.f32 %v3184, 0.0
      %v3212 = vmax.f32 %v3185, 0.0
      %v3213 = vmax.f32 %v3186, 0.0
      %v3214 = vmax.f32 %v3187, 0.0
      %v3215 = vmax.f32 %v3188, 0.0
      %v3216 = vmax.f32 %v3189, 0.0
      %v3217 = vmax.f32 %v3190, 0.0
      %v3218 = vmax.f32 %v3191, 0.0
      %v3219 = vmax.f32 %v3192, 0.0
      %v3220 = vmax.f32 %v3193, 0.0
      %v3221 = vmax.f32 %v3194, 0.0
      %v3222 = vmax.f32 %v2196, %v3195
      %v3223 = vmax.f32 %v2197, %v3196
      %v3224 = vmax.f32 %v2198, %v3197
      %v3225 = vmax.f32 %v2199, %v3198
      %v3226 = vmax.f32 %v2200, %v3199
      %v3227 = vmax.f32 %v2201, %v3200
      %v3228 = vmax.f32 %v2202, %v3201
      %v3229 = vmax.f32 %v2203, %v3202
      %v3230 = vmax.f32 %v2204, %v3203
      %v3231 = vmax.f32 %v2205, %v3204
      %v3232 = vmax.f32 %v2206, %v3205
      %v3233 = vmax.f32 %v2207, %v3206
      %v3234 = vmax.f32 %v2208, %v3207
      %v3235 = vmax.f32 %v2209, %v3208
      %v3236 = vmax.f32 %v2210, %v3209
      %v3237 = vmax.f32 %v2211, %v3210
      %v3238 = vmax.f32 %v2212, %v3211
      %v3239 = vmax.f32 %v2213, %v3212
      %v3240 = vmax.f32 %v2214, %v3213
      %v3241 = vmax.f32 %v2215, %v3214
      %v3242 = vmax.f32 %v2216, %v3215
      %v3243 = vmax.f32 %v2217, %v3216
      %v3244 = vmax.f32 %v2218, %v3217
      %v3245 = vmax.f32 %v2219, %v3218
      %v3246 = vmax.f32 %v2220, %v3219
      %v3247 = vmax.f32 %v2221, %v3220
      %v3248 = vmax.f32 %v2222, %v3221
      %v3249 = vmul.f32 %v849, %v338
      %v3250 = vmul.f32 %v854, %v338
      %v3251 = vmul.f32 %v859, %v338
      %v3252 = vmul.f32 %v864, %v338
      %v3253 = vmul.f32 %v869, %v338
      %v3254 = vmul.f32 %v874, %v338
      %v3255 = vmul.f32 %v879, %v338
      %v3256 = vmul.f32 %v884, %v338
      %v3257 = vmul.f32 %v889, %v338
      %v3258 = vmul.f32 %v894, %v338
      %v3259 = vmul.f32 %v899, %v338
      %v3260 = vmul.f32 %v904, %v338
      %v3261 = vmul.f32 %v909, %v338
      %v3262 = vmul.f32 %v914, %v338
      %v3263 = vmul.f32 %v919, %v338
      %v3264 = vmul.f32 %v924, %v338
      %v3265 = vmul.f32 %v929, %v338
      %v3266 = vmul.f32 %v934, %v338
      %v3267 = vmul.f32 %v939, %v338
      %v3268 = vmul.f32 %v944, %v338
      %v3269 = vmul.f32 %v949, %v338
      %v3270 = vmul.f32 %v954, %v338
      %v3271 = vmul.f32 %v959, %v338
      %v3272 = vmul.f32 %v964, %v338
      %v3273 = vmul.f32 %v969, %v338
      %v3274 = vmul.f32 %v974, %v338
      %v3275 = vmul.f32 %v979, %v338
      %v3276 = vmul.f32 %v1074, %v536
      %v3277 = vmul.f32 %v1079, %v536
      %v3278 = vmul.f32 %v1084, %v536
      %v3279 = vmul.f32 %v1089, %v536
      %v3280 = vmul.f32 %v1094, %v536
      %v3281 = vmul.f32 %v1099, %v536
      %v3282 = vmul.f32 %v1104, %v536
      %v3283 = vmul.f32 %v1109, %v536
      %v3284 = vmul.f32 %v1114, %v536
      %v3285 = vmul.f32 %v1119, %v536
      %v3286 = vmul.f32 %v1124, %v536
      %v3287 = vmul.f32 %v1129, %v536
      %v3288 = vmul.f32 %v1134, %v536
      %v3289 = vmul.f32 %v1139, %v536
      %v3290 = vmul.f32 %v1144, %v536
      %v3291 = vmul.f32 %v1149, %v536
      %v3292 = vmul.f32 %v1154, %v536
      %v3293 = vmul.f32 %v1159, %v536
      %v3294 = vmul.f32 %v1164, %v536
      %v3295 = vmul.f32 %v1169, %v536
      %v3296 = vmul.f32 %v1174, %v536
      %v3297 = vmul.f32 %v1179, %v536
      %v3298 = vmul.f32 %v1184, %v536
      %v3299 = vmul.f32 %v1189, %v536
      %v3300 = vmul.f32 %v1194, %v536
      %v3301 = vmul.f32 %v1199, %v536
      %v3302 = vmul.f32 %v1204, %v536
      %v3303 = vadd.f32 %v3249, %v3276
      %v3304 = vadd.f32 %v3250, %v3277
      %v3305 = vadd.f32 %v3251, %v3278
      %v3306 = vadd.f32 %v3252, %v3279
      %v3307 = vadd.f32 %v3253, %v3280
      %v3308 = vadd.f32 %v3254, %v3281
      %v3309 = vadd.f32 %v3255, %v3282
      %v3310 = vadd.f32 %v3256, %v3283
      %v3311 = vadd.f32 %v3257, %v3284
      %v3312 = vadd.f32 %v3258, %v3285
      %v3313 = vadd.f32 %v3259, %v3286
      %v3314 = vadd.f32 %v3260, %v3287
      %v3315 = vadd.f32 %v3261, %v3288
      %v3316 = vadd.f32 %v3262, %v3289
      %v3317 = vadd.f32 %v3263, %v3290
      %v3318 = vadd.f32 %v3264, %v3291
      %v3319 = vadd.f32 %v3265, %v3292
      %v3320 = vadd.f32 %v3266, %v3293
      %v3321 = vadd.f32 %v3267, %v3294
      %v3322 = vadd.f32 %v3268, %v3295
      %v3323 = vadd.f32 %v3269, %v3296
      %v3324 = vadd.f32 %v3270, %v3297
      %v3325 = vadd.f32 %v3271, %v3298
      %v3326 = vadd.f32 %v3272, %v3299
      %v3327 = vadd.f32 %v3273, %v3300
      %v3328 = vadd.f32 %v3274, %v3301
      %v3329 = vadd.f32 %v3275, %v3302
      %v3330 = vmul.f32 %v1298, %v760
      %v3331 = vmul.f32 %v1303, %v760
      %v3332 = vmul.f32 %v1308, %v760
      %v3333 = vmul.f32 %v1313, %v760
      %v3334 = vmul.f32 %v1318, %v760
      %v3335 = vmul.f32 %v1323, %v760
      %v3336 = vmul.f32 %v1328, %v760
      %v3337 = vmul.f32 %v1333, %v760
      %v3338 = vmul.f32 %v1338, %v760
      %v3339 = vmul.f32 %v1343, %v760
      %v3340 = vmul.f32 %v1348, %v760
      %v3341 = vmul.f32 %v1353, %v760
      %v3342 = vmul.f32 %v1358, %v760
      %v3343 = vmul.f32 %v1363, %v760
      %v3344 = vmul.f32 %v1368, %v760
      %v3345 = vmul.f32 %v1373, %v760
      %v3346 = vmul.f32 %v1378, %v760
      %v3347 = vmul.f32 %v1383, %v760
      %v3348 = vmul.f32 %v1388, %v760
      %v3349 = vmul.f32 %v1393, %v760
      %v3350 = vmul.f32 %v1398, %v760
      %v3351 = vmul.f32 %v1403, %v760
      %v3352 = vmul.f32 %v1408, %v760
      %v3353 = vmul.f32 %v1413, %v760
      %v3354 = vmul.f32 %v1418, %v760
      %v3355 = vmul.f32 %v1423, %v760
      %v3356 = vmul.f32 %v1428, %v760
      %v3357 = vadd.f32 %v3303, %v3330
      %v3358 = vadd.f32 %v3304, %v3331
      %v3359 = vadd.f32 %v3305, %v3332
      %v3360 = vadd.f32 %v3306, %v3333
      %v3361 = vadd.f32 %v3307, %v3334
      %v3362 = vadd.f32 %v3308, %v3335
      %v3363 = vadd.f32 %v3309, %v3336
      %v3364 = vadd.f32 %v3310, %v3337
      %v3365 = vadd.f32 %v3311, %v3338
      %v3366 = vadd.f32 %v3312, %v3339
      %v3367 = vadd.f32 %v3313, %v3340
      %v3368 = vadd.f32 %v3314, %v3341
      %v3369 = vadd.f32 %v3315, %v3342
      %v3370 = vadd.f32 %v3316, %v3343
      %v3371 = vadd.f32 %v3317, %v3344
      %v3372 = vadd.f32 %v3318, %v3345
      %v3373 = vadd.f32 %v3319, %v3346
      %v3374 = vadd.f32 %v3320, %v3347
      %v3375 = vadd.f32 %v3321, %v3348
      %v3376 = vadd.f32 %v3322, %v3349
      %v3377 = vadd.f32 %v3323, %v3350
      %v3378 = vadd.f32 %v3324, %v3351
      %v3379 = vadd.f32 %v3325, %v3352
      %v3380 = vadd.f32 %v3326, %v3353
      %v3381 = vadd.f32 %v3327, %v3354
      %v3382 = vadd.f32 %v3328, %v3355
      %v3383 = vadd.f32 %v3329, %v3356
      %v3384 = vmul.f32 %v1522, %v985
      %v3385 = vmul.f32 %v1527, %v985
      %v3386 = vmul.f32 %v1532, %v985
      %v3387 = vmul.f32 %v1537, %v985
      %v3388 = vmul.f32 %v1542, %v985
      %v3389 = vmul.f32 %v1547, %v985
      %v3390 = vmul.f32 %v1552, %v985
      %v3391 = vmul.f32 %v1557, %v985
      %v3392 = vmul.f32 %v1562, %v985
      %v3393 = vmul.f32 %v1567, %v985
      %v3394 = vmul.f32 %v1572, %v985
      %v3395 = vmul.f32 %v1577, %v985
      %v3396 = vmul.f32 %v1582, %v985
      %v3397 = vmul.f32 %v1587, %v985
      %v3398 = vmul.f32 %v1592, %v985
      %v3399 = vmul.f32 %v1597, %v985
      %v3400 = vmul.f32 %v1602, %v985
      %v3401 = vmul.f32 %v1607, %v985
      %v3402 = vmul.f32 %v1612, %v985
      %v3403 = vmul.f32 %v1617, %v985
      %v3404 = vmul.f32 %v1622, %v985
      %v3405 = vmul.f32 %v1627, %v985
      %v3406 = vmul.f32 %v1632, %v985
      %v3407 = vmul.f32 %v1637, %v985
      %v3408 = vmul.f32 %v1642, %v985
      %v3409 = vmul.f32 %v1647, %v985
      %v3410 = vmul.f32 %v1652, %v985
      %v3411 = vadd.f32 %v3357, %v3384
      %v3412 = vadd.f32 %v3358, %v3385
      %v3413 = vadd.f32 %v3359, %v3386
      %v3414 = vadd.f32 %v3360, %v3387
      %v3415 = vadd.f32 %v3361, %v3388
      %v3416 = vadd.f32 %v3362, %v3389
      %v3417 = vadd.f32 %v3363, %v3390
      %v3418 = vadd.f32 %v3364, %v3391
      %v3419 = vadd.f32 %v3365, %v3392
      %v3420 = vadd.f32 %v3366, %v3393
      %v3421 = vadd.f32 %v3367, %v3394
      %v3422 = vadd.f32 %v3368, %v3395
      %v3423 = vadd.f32 %v3369, %v3396
      %v3424 = vadd.f32 %v3370, %v3397
      %v3425 = vadd.f32 %v3371, %v3398
      %v3426 = vadd.f32 %v3372, %v3399
      %v3427 = vadd.f32 %v3373, %v3400
      %v3428 = vadd.f32 %v3374, %v3401
      %v3429 = vadd.f32 %v3375, %v3402
      %v3430 = vadd.f32 %v3376, %v3403
      %v3431 = vadd.f32 %v3377, %v3404
      %v3432 = vadd.f32 %v3378, %v3405
      %v3433 = vadd.f32 %v3379, %v3406
      %v3434 = vadd.f32 %v3380, %v3407
      %v3435 = vadd.f32 %v3381, %v3408
      %v3436 = vadd.f32 %v3382, %v3409
      %v3437 = vadd.f32 %v3383, %v3410
      %v3438 = vmul.f32 %v1746, %v1210
      %v3439 = vmul.f32 %v1751, %v1210
      %v3440 = vmul.f32 %v1756, %v1210
      %v3441 = vmul.f32 %v1761, %v1210
      %v3442 = vmul.f32 %v1766, %v1210
      %v3443 = vmul.f32 %v1771, %v1210
      %v3444 = vmul.f32 %v1776, %v1210
      %v3445 = vmul.f32 %v1781, %v1210
      %v3446 = vmul.f32 %v1786, %v1210
      %v3447 = vmul.f32 %v1791, %v1210
      %v3448 = vmul.f32 %v1796, %v1210
      %v3449 = vmul.f32 %v1801, %v1210
      %v3450 = vmul.f32 %v1806, %v1210
      %v3451 = vmul.f32 %v1811, %v1210
      %v3452 = vmul.f32 %v1816, %v1210
      %v3453 = vmul.f32 %v1821, %v1210
      %v3454 = vmul.f32 %v1826, %v1210
      %v3455 = vmul.f32 %v1831, %v1210
      %v3456 = vmul.f32 %v1836, %v1210
      %v3457 = vmul.f32 %v1841, %v1210
      %v3458 = vmul.f32 %v1846, %v1210
      %v3459 = vmul.f32 %v1851, %v1210
      %v3460 = vmul.f32 %v1856, %v1210
      %v3461 = vmul.f32 %v1861, %v1210
      %v3462 = vmul.f32 %v1866, %v1210
      %v3463 = vmul.f32 %v1871, %v1210
      %v3464 = vmul.f32 %v1876, %v1210
      %v3465 = vadd.f32 %v3411, %v3438
      %v3466 = vadd.f32 %v3412, %v3439
      %v3467 = vadd.f32 %v3413, %v3440
      %v3468 = vadd.f32 %v3414, %v3441
      %v3469 = vadd.f32 %v3415, %v3442
      %v3470 = vadd.f32 %v3416, %v3443
      %v3471 = vadd.f32 %v3417, %v3444
      %v3472 = vadd.f32 %v3418, %v3445
      %v3473 = vadd.f32 %v3419, %v3446
      %v3474 = vadd.f32 %v3420, %v3447
      %v3475 = vadd.f32 %v3421, %v3448
      %v3476 = vadd.f32 %v3422, %v3449
      %v3477 = vadd.f32 %v3423, %v3450
      %v3478 = vadd.f32 %v3424, %v3451
      %v3479 = vadd.f32 %v3425, %v3452
      %v3480 = vadd.f32 %v3426, %v3453
      %v3481 = vadd.f32 %v3427, %v3454
      %v3482 = vadd.f32 %v3428, %v3455
      %v3483 = vadd.f32 %v3429, %v3456
      %v3484 = vadd.f32 %v3430, %v3457
      %v3485 = vadd.f32 %v3431, %v3458
      %v3486 = vadd.f32 %v3432, %v3459
      %v3487 = vadd.f32 %v3433, %v3460
      %v3488 = vadd.f32 %v3434, %v3461
      %v3489 = vadd.f32 %v3435, %v3462
      %v3490 = vadd.f32 %v3436, %v3463
      %v3491 = vadd.f32 %v3437, %v3464
      %v3492 = vmul.f32 %v1970, %v1434
      %v3493 = vmul.f32 %v1975, %v1434
      %v3494 = vmul.f32 %v1980, %v1434
      %v3495 = vmul.f32 %v1985, %v1434
      %v3496 = vmul.f32 %v1990, %v1434
      %v3497 = vmul.f32 %v1995, %v1434
      %v3498 = vmul.f32 %v2000, %v1434
      %v3499 = vmul.f32 %v2005, %v1434
      %v3500 = vmul.f32 %v2010, %v1434
      %v3501 = vmul.f32 %v2015, %v1434
      %v3502 = vmul.f32 %v2020, %v1434
      %v3503 = vmul.f32 %v2025, %v1434
      %v3504 = vmul.f32 %v2030, %v1434
      %v3505 = vmul.f32 %v2035, %v1434
      %v3506 = vmul.f32 %v2040, %v1434
      %v3507 = vmul.f32 %v2045, %v1434
      %v3508 = vmul.f32 %v2050, %v1434
      %v3509 = vmul.f32 %v2055, %v1434
      %v3510 = vmul.f32 %v2060, %v1434
      %v3511 = vmul.f32 %v2065, %v1434
      %v3512 = vmul.f32 %v2070, %v1434
      %v3513 = vmul.f32 %v2075, %v1434
      %v3514 = vmul.f32 %v2080, %v1434
      %v3515 = vmul.f32 %v2085, %v1434
      %v3516 = vmul.f32 %v2090, %v1434
      %v3517 = vmul.f32 %v2095, %v1434
      %v3518 = vmul.f32 %v2100, %v1434
      %v3519 = vadd.f32 %v3465, %v3492
      %v3520 = vadd.f32 %v3466, %v3493
      %v3521 = vadd.f32 %v3467, %v3494
      %v3522 = vadd.f32 %v3468, %v3495
      %v3523 = vadd.f32 %v3469, %v3496
      %v3524 = vadd.f32 %v3470, %v3497
      %v3525 = vadd.f32 %v3471, %v3498
      %v3526 = vadd.f32 %v3472, %v3499
      %v3527 = vadd.f32 %v3473, %v3500
      %v3528 = vadd.f32 %v3474, %v3501
      %v3529 = vadd.f32 %v3475, %v3502
      %v3530 = vadd.f32 %v3476, %v3503
      %v3531 = vadd.f32 %v3477, %v3504
      %v3532 = vadd.f32 %v3478, %v3505
      %v3533 = vadd.f32 %v3479, %v3506
      %v3534 = vadd.f32 %v3480, %v3507
      %v3535 = vadd.f32 %v3481, %v3508
      %v3536 = vadd.f32 %v3482, %v3509
      %v3537 = vadd.f32 %v3483, %v3510
      %v3538 = vadd.f32 %v3484, %v3511
      %v3539 = vadd.f32 %v3485, %v3512
      %v3540 = vadd.f32 %v3486, %v3513
      %v3541 = vadd.f32 %v3487, %v3514
      %v3542 = vadd.f32 %v3488, %v3515
      %v3543 = vadd.f32 %v3489, %v3516
      %v3544 = vadd.f32 %v3490, %v3517
      %v3545 = vadd.f32 %v3491, %v3518
      %v3546 = vld [vmem:[%s816 + $0xf] sm:$0xff]
      %v3547 = vld [vmem:[%s816 + $0x17] sm:$0xff]
      %v3548 = vld [vmem:[%s816 + $0x1f] sm:$0xff]
      %v3549 = vld [vmem:[%s816 + $0x27] sm:$0xff]
      %v3550 = vld [vmem:[%s816 + $0x2f] sm:$0xff]
      %v3551 = vld [vmem:[%s816 + $0x37] sm:$0xff]
      %v3552 = vld [vmem:[%s816 + $0x3f] sm:$0xff]
      %v3553 = vld [vmem:[%s816 + $0x47] sm:$0xff]
      %v3554 = vld [vmem:[%s816 + $0x4f] sm:$0xff]
      %v3555 = vld [vmem:[%s816 + $0x57] sm:$0xff]
      %v3556 = vld [vmem:[%s816 + $0x5f] sm:$0xff]
      %v3557 = vld [vmem:[%s816 + $0x67] sm:$0xff]
      %v3558 = vld [vmem:[%s816 + $0x6f] sm:$0xff]
      %v3559 = vld [vmem:[%s816 + $0x77] sm:$0xff]
      %v3560 = vld [vmem:[%s816 + $0x7f] sm:$0xff]
      %v3561 = vld [vmem:[%s816 + $0x87] sm:$0xff]
      %v3562 = vld [vmem:[%s816 + $0x8f] sm:$0xff]
      %v3563 = vld [vmem:[%s816 + $0x97] sm:$0xff]
      %v3564 = vld [vmem:[%s816 + $0x9f] sm:$0xff]
      %v3565 = vld [vmem:[%s816 + $0xa7] sm:$0xff]
      %v3566 = vld [vmem:[%s816 + $0xaf] sm:$0xff]
      %v3567 = vld [vmem:[%s816 + $0xb7] sm:$0xff]
      %v3568 = vld [vmem:[%s816 + $0xbf] sm:$0xff]
      %v3569 = vld [vmem:[%s816 + $0xc7] sm:$0xff]
      %v3570 = vld [vmem:[%s816 + $0xcf] sm:$0xff]
      %v3571 = vld [vmem:[%s816 + $0xd7] sm:$0xff]
      %v3572 = vld [vmem:[%s816 + $0xdf] sm:$0x3]
      %3574 = vset.pattern.permute.xlu0 0
      %3575 = vperm.xlu0 %3574, %v3546
      %v3576 = vpop.permute.xlu0 %3575
      %3579 = vset.pattern.permute.xlu0 0
      %3580 = vperm.xlu0 %3579, %v3547
      %v3581 = vpop.permute.xlu0 %3580
      %3584 = vset.pattern.permute.xlu0 0
      %3585 = vperm.xlu0 %3584, %v3548
      %v3586 = vpop.permute.xlu0 %3585
      %3589 = vset.pattern.permute.xlu0 0
      %3590 = vperm.xlu0 %3589, %v3549
      %v3591 = vpop.permute.xlu0 %3590
      %3594 = vset.pattern.permute.xlu0 0
      %3595 = vperm.xlu0 %3594, %v3550
      %v3596 = vpop.permute.xlu0 %3595
      %3599 = vset.pattern.permute.xlu0 0
      %3600 = vperm.xlu0 %3599, %v3551
      %v3601 = vpop.permute.xlu0 %3600
      %3604 = vset.pattern.permute.xlu0 0
      %3605 = vperm.xlu0 %3604, %v3552
      %v3606 = vpop.permute.xlu0 %3605
      %3609 = vset.pattern.permute.xlu0 0
      %3610 = vperm.xlu0 %3609, %v3553
      %v3611 = vpop.permute.xlu0 %3610
      %3614 = vset.pattern.permute.xlu0 0
      %3615 = vperm.xlu0 %3614, %v3554
      %v3616 = vpop.permute.xlu0 %3615
      %3619 = vset.pattern.permute.xlu0 0
      %3620 = vperm.xlu0 %3619, %v3555
      %v3621 = vpop.permute.xlu0 %3620
      %3624 = vset.pattern.permute.xlu0 0
      %3625 = vperm.xlu0 %3624, %v3556
      %v3626 = vpop.permute.xlu0 %3625
      %3629 = vset.pattern.permute.xlu0 0
      %3630 = vperm.xlu0 %3629, %v3557
      %v3631 = vpop.permute.xlu0 %3630
      %3634 = vset.pattern.permute.xlu0 0
      %3635 = vperm.xlu0 %3634, %v3558
      %v3636 = vpop.permute.xlu0 %3635
      %3639 = vset.pattern.permute.xlu0 0
      %3640 = vperm.xlu0 %3639, %v3559
      %v3641 = vpop.permute.xlu0 %3640
      %3644 = vset.pattern.permute.xlu0 0
      %3645 = vperm.xlu0 %3644, %v3560
      %v3646 = vpop.permute.xlu0 %3645
      %3649 = vset.pattern.permute.xlu0 0
      %3650 = vperm.xlu0 %3649, %v3561
      %v3651 = vpop.permute.xlu0 %3650
      %3654 = vset.pattern.permute.xlu0 0
      %3655 = vperm.xlu0 %3654, %v3562
      %v3656 = vpop.permute.xlu0 %3655
      %3659 = vset.pattern.permute.xlu0 0
      %3660 = vperm.xlu0 %3659, %v3563
      %v3661 = vpop.permute.xlu0 %3660
      %3664 = vset.pattern.permute.xlu0 0
      %3665 = vperm.xlu0 %3664, %v3564
      %v3666 = vpop.permute.xlu0 %3665
      %3669 = vset.pattern.permute.xlu0 0
      %3670 = vperm.xlu0 %3669, %v3565
      %v3671 = vpop.permute.xlu0 %3670
      %3674 = vset.pattern.permute.xlu0 0
      %3675 = vperm.xlu0 %3674, %v3566
      %v3676 = vpop.permute.xlu0 %3675
      %3679 = vset.pattern.permute.xlu0 0
      %3680 = vperm.xlu0 %3679, %v3567
      %v3681 = vpop.permute.xlu0 %3680
      %3684 = vset.pattern.permute.xlu0 0
      %3685 = vperm.xlu0 %3684, %v3568
      %v3686 = vpop.permute.xlu0 %3685
      %3689 = vset.pattern.permute.xlu0 0
      %3690 = vperm.xlu0 %3689, %v3569
      %v3691 = vpop.permute.xlu0 %3690
      %3694 = vset.pattern.permute.xlu0 0
      %3695 = vperm.xlu0 %3694, %v3570
      %v3696 = vpop.permute.xlu0 %3695
      %3699 = vset.pattern.permute.xlu0 0
      %3700 = vperm.xlu0 %3699, %v3571
      %v3701 = vpop.permute.xlu0 %3700
      %3704 = vset.pattern.permute.xlu0 0
      %3705 = vperm.xlu0 %3704, %v3572
      %v3706 = vpop.permute.xlu0 %3705
      %v3708 = vmul.f32 %v3576, %v1658
      %v3709 = vmul.f32 %v3581, %v1658
      %v3710 = vmul.f32 %v3586, %v1658
      %v3711 = vmul.f32 %v3591, %v1658
      %v3712 = vmul.f32 %v3596, %v1658
      %v3713 = vmul.f32 %v3601, %v1658
      %v3714 = vmul.f32 %v3606, %v1658
      %v3715 = vmul.f32 %v3611, %v1658
      %v3716 = vmul.f32 %v3616, %v1658
      %v3717 = vmul.f32 %v3621, %v1658
      %v3718 = vmul.f32 %v3626, %v1658
      %v3719 = vmul.f32 %v3631, %v1658
      %v3720 = vmul.f32 %v3636, %v1658
      %v3721 = vmul.f32 %v3641, %v1658
      %v3722 = vmul.f32 %v3646, %v1658
      %v3723 = vmul.f32 %v3651, %v1658
      %v3724 = vmul.f32 %v3656, %v1658
      %v3725 = vmul.f32 %v3661, %v1658
      %v3726 = vmul.f32 %v3666, %v1658
      %v3727 = vmul.f32 %v3671, %v1658
      %v3728 = vmul.f32 %v3676, %v1658
      %v3729 = vmul.f32 %v3681, %v1658
      %v3730 = vmul.f32 %v3686, %v1658
      %v3731 = vmul.f32 %v3691, %v1658
      %v3732 = vmul.f32 %v3696, %v1658
      %v3733 = vmul.f32 %v3701, %v1658
      %v3734 = vmul.f32 %v3706, %v1658
      %v3735 = vadd.f32 %v3519, %v3708
      %v3736 = vadd.f32 %v3520, %v3709
      %v3737 = vadd.f32 %v3521, %v3710
      %v3738 = vadd.f32 %v3522, %v3711
      %v3739 = vadd.f32 %v3523, %v3712
      %v3740 = vadd.f32 %v3524, %v3713
      %v3741 = vadd.f32 %v3525, %v3714
      %v3742 = vadd.f32 %v3526, %v3715
      %v3743 = vadd.f32 %v3527, %v3716
      %v3744 = vadd.f32 %v3528, %v3717
      %v3745 = vadd.f32 %v3529, %v3718
      %v3746 = vadd.f32 %v3530, %v3719
      %v3747 = vadd.f32 %v3531, %v3720
      %v3748 = vadd.f32 %v3532, %v3721
      %v3749 = vadd.f32 %v3533, %v3722
      %v3750 = vadd.f32 %v3534, %v3723
      %v3751 = vadd.f32 %v3535, %v3724
      %v3752 = vadd.f32 %v3536, %v3725
      %v3753 = vadd.f32 %v3537, %v3726
      %v3754 = vadd.f32 %v3538, %v3727
      %v3755 = vadd.f32 %v3539, %v3728
      %v3756 = vadd.f32 %v3540, %v3729
      %v3757 = vadd.f32 %v3541, %v3730
      %v3758 = vadd.f32 %v3542, %v3731
      %v3759 = vadd.f32 %v3543, %v3732
      %v3760 = vadd.f32 %v3544, %v3733
      %v3761 = vadd.f32 %v3545, %v3734
      %v3762 = vld [vmem:[%s1041 + $0xf] sm:$0xff]
      %v3763 = vld [vmem:[%s1041 + $0x17] sm:$0xff]
      %v3764 = vld [vmem:[%s1041 + $0x1f] sm:$0xff]
      %v3765 = vld [vmem:[%s1041 + $0x27] sm:$0xff]
      %v3766 = vld [vmem:[%s1041 + $0x2f] sm:$0xff]
      %v3767 = vld [vmem:[%s1041 + $0x37] sm:$0xff]
      %v3768 = vld [vmem:[%s1041 + $0x3f] sm:$0xff]
      %v3769 = vld [vmem:[%s1041 + $0x47] sm:$0xff]
      %v3770 = vld [vmem:[%s1041 + $0x4f] sm:$0xff]
      %v3771 = vld [vmem:[%s1041 + $0x57] sm:$0xff]
      %v3772 = vld [vmem:[%s1041 + $0x5f] sm:$0xff]
      %v3773 = vld [vmem:[%s1041 + $0x67] sm:$0xff]
      %v3774 = vld [vmem:[%s1041 + $0x6f] sm:$0xff]
      %v3775 = vld [vmem:[%s1041 + $0x77] sm:$0xff]
      %v3776 = vld [vmem:[%s1041 + $0x7f] sm:$0xff]
      %v3777 = vld [vmem:[%s1041 + $0x87] sm:$0xff]
      %v3778 = vld [vmem:[%s1041 + $0x8f] sm:$0xff]
      %v3779 = vld [vmem:[%s1041 + $0x97] sm:$0xff]
      %v3780 = vld [vmem:[%s1041 + $0x9f] sm:$0xff]
      %v3781 = vld [vmem:[%s1041 + $0xa7] sm:$0xff]
      %v3782 = vld [vmem:[%s1041 + $0xaf] sm:$0xff]
      %v3783 = vld [vmem:[%s1041 + $0xb7] sm:$0xff]
      %v3784 = vld [vmem:[%s1041 + $0xbf] sm:$0xff]
      %v3785 = vld [vmem:[%s1041 + $0xc7] sm:$0xff]
      %v3786 = vld [vmem:[%s1041 + $0xcf] sm:$0xff]
      %v3787 = vld [vmem:[%s1041 + $0xd7] sm:$0xff]
      %v3788 = vld [vmem:[%s1041 + $0xdf] sm:$0x3]
      %3790 = vset.pattern.permute.xlu0 0
      %3791 = vperm.xlu0 %3790, %v3762
      %v3792 = vpop.permute.xlu0 %3791
      %3795 = vset.pattern.permute.xlu0 0
      %3796 = vperm.xlu0 %3795, %v3763
      %v3797 = vpop.permute.xlu0 %3796
      %3800 = vset.pattern.permute.xlu0 0
      %3801 = vperm.xlu0 %3800, %v3764
      %v3802 = vpop.permute.xlu0 %3801
      %3805 = vset.pattern.permute.xlu0 0
      %3806 = vperm.xlu0 %3805, %v3765
      %v3807 = vpop.permute.xlu0 %3806
      %3810 = vset.pattern.permute.xlu0 0
      %3811 = vperm.xlu0 %3810, %v3766
      %v3812 = vpop.permute.xlu0 %3811
      %3815 = vset.pattern.permute.xlu0 0
      %3816 = vperm.xlu0 %3815, %v3767
      %v3817 = vpop.permute.xlu0 %3816
      %3820 = vset.pattern.permute.xlu0 0
      %3821 = vperm.xlu0 %3820, %v3768
      %v3822 = vpop.permute.xlu0 %3821
      %3825 = vset.pattern.permute.xlu0 0
      %3826 = vperm.xlu0 %3825, %v3769
      %v3827 = vpop.permute.xlu0 %3826
      %3830 = vset.pattern.permute.xlu0 0
      %3831 = vperm.xlu0 %3830, %v3770
      %v3832 = vpop.permute.xlu0 %3831
      %3835 = vset.pattern.permute.xlu0 0
      %3836 = vperm.xlu0 %3835, %v3771
      %v3837 = vpop.permute.xlu0 %3836
      %3840 = vset.pattern.permute.xlu0 0
      %3841 = vperm.xlu0 %3840, %v3772
      %v3842 = vpop.permute.xlu0 %3841
      %3845 = vset.pattern.permute.xlu0 0
      %3846 = vperm.xlu0 %3845, %v3773
      %v3847 = vpop.permute.xlu0 %3846
      %3850 = vset.pattern.permute.xlu0 0
      %3851 = vperm.xlu0 %3850, %v3774
      %v3852 = vpop.permute.xlu0 %3851
      %3855 = vset.pattern.permute.xlu0 0
      %3856 = vperm.xlu0 %3855, %v3775
      %v3857 = vpop.permute.xlu0 %3856
      %3860 = vset.pattern.permute.xlu0 0
      %3861 = vperm.xlu0 %3860, %v3776
      %v3862 = vpop.permute.xlu0 %3861
      %3865 = vset.pattern.permute.xlu0 0
      %3866 = vperm.xlu0 %3865, %v3777
      %v3867 = vpop.permute.xlu0 %3866
      %3870 = vset.pattern.permute.xlu0 0
      %3871 = vperm.xlu0 %3870, %v3778
      %v3872 = vpop.permute.xlu0 %3871
      %3875 = vset.pattern.permute.xlu0 0
      %3876 = vperm.xlu0 %3875, %v3779
      %v3877 = vpop.permute.xlu0 %3876
      %3880 = vset.pattern.permute.xlu0 0
      %3881 = vperm.xlu0 %3880, %v3780
      %v3882 = vpop.permute.xlu0 %3881
      %3885 = vset.pattern.permute.xlu0 0
      %3886 = vperm.xlu0 %3885, %v3781
      %v3887 = vpop.permute.xlu0 %3886
      %3890 = vset.pattern.permute.xlu0 0
      %3891 = vperm.xlu0 %3890, %v3782
      %v3892 = vpop.permute.xlu0 %3891
      %3895 = vset.pattern.permute.xlu0 0
      %3896 = vperm.xlu0 %3895, %v3783
      %v3897 = vpop.permute.xlu0 %3896
      %3900 = vset.pattern.permute.xlu0 0
      %3901 = vperm.xlu0 %3900, %v3784
      %v3902 = vpop.permute.xlu0 %3901
      %3905 = vset.pattern.permute.xlu0 0
      %3906 = vperm.xlu0 %3905, %v3785
      %v3907 = vpop.permute.xlu0 %3906
      %3910 = vset.pattern.permute.xlu0 0
      %3911 = vperm.xlu0 %3910, %v3786
      %v3912 = vpop.permute.xlu0 %3911
      %3915 = vset.pattern.permute.xlu0 0
      %3916 = vperm.xlu0 %3915, %v3787
      %v3917 = vpop.permute.xlu0 %3916
      %3920 = vset.pattern.permute.xlu0 0
      %3921 = vperm.xlu0 %3920, %v3788
      %v3922 = vpop.permute.xlu0 %3921
      %v3924 = vmul.f32 %v3792, %v1882
      %v3925 = vmul.f32 %v3797, %v1882
      %v3926 = vmul.f32 %v3802, %v1882
      %v3927 = vmul.f32 %v3807, %v1882
      %v3928 = vmul.f32 %v3812, %v1882
      %v3929 = vmul.f32 %v3817, %v1882
      %v3930 = vmul.f32 %v3822, %v1882
      %v3931 = vmul.f32 %v3827, %v1882
      %v3932 = vmul.f32 %v3832, %v1882
      %v3933 = vmul.f32 %v3837, %v1882
      %v3934 = vmul.f32 %v3842, %v1882
      %v3935 = vmul.f32 %v3847, %v1882
      %v3936 = vmul.f32 %v3852, %v1882
      %v3937 = vmul.f32 %v3857, %v1882
      %v3938 = vmul.f32 %v3862, %v1882
      %v3939 = vmul.f32 %v3867, %v1882
      %v3940 = vmul.f32 %v3872, %v1882
      %v3941 = vmul.f32 %v3877, %v1882
      %v3942 = vmul.f32 %v3882, %v1882
      %v3943 = vmul.f32 %v3887, %v1882
      %v3944 = vmul.f32 %v3892, %v1882
      %v3945 = vmul.f32 %v3897, %v1882
      %v3946 = vmul.f32 %v3902, %v1882
      %v3947 = vmul.f32 %v3907, %v1882
      %v3948 = vmul.f32 %v3912, %v1882
      %v3949 = vmul.f32 %v3917, %v1882
      %v3950 = vmul.f32 %v3922, %v1882
      %v3951 = vadd.f32 %v3735, %v3924
      %v3952 = vadd.f32 %v3736, %v3925
      %v3953 = vadd.f32 %v3737, %v3926
      %v3954 = vadd.f32 %v3738, %v3927
      %v3955 = vadd.f32 %v3739, %v3928
      %v3956 = vadd.f32 %v3740, %v3929
      %v3957 = vadd.f32 %v3741, %v3930
      %v3958 = vadd.f32 %v3742, %v3931
      %v3959 = vadd.f32 %v3743, %v3932
      %v3960 = vadd.f32 %v3744, %v3933
      %v3961 = vadd.f32 %v3745, %v3934
      %v3962 = vadd.f32 %v3746, %v3935
      %v3963 = vadd.f32 %v3747, %v3936
      %v3964 = vadd.f32 %v3748, %v3937
      %v3965 = vadd.f32 %v3749, %v3938
      %v3966 = vadd.f32 %v3750, %v3939
      %v3967 = vadd.f32 %v3751, %v3940
      %v3968 = vadd.f32 %v3752, %v3941
      %v3969 = vadd.f32 %v3753, %v3942
      %v3970 = vadd.f32 %v3754, %v3943
      %v3971 = vadd.f32 %v3755, %v3944
      %v3972 = vadd.f32 %v3756, %v3945
      %v3973 = vadd.f32 %v3757, %v3946
      %v3974 = vadd.f32 %v3758, %v3947
      %v3975 = vadd.f32 %v3759, %v3948
      %v3976 = vadd.f32 %v3760, %v3949
      %v3977 = vadd.f32 %v3761, %v3950
      %v3978 = vld [vmem:[%s816 + $0x10] sm:$0xff]
      %v3979 = vld [vmem:[%s816 + $0x18] sm:$0xff]
      %v3980 = vld [vmem:[%s816 + $0x20] sm:$0xff]
      %v3981 = vld [vmem:[%s816 + $0x28] sm:$0xff]
      %v3982 = vld [vmem:[%s816 + $0x30] sm:$0xff]
      %v3983 = vld [vmem:[%s816 + $0x38] sm:$0xff]
      %v3984 = vld [vmem:[%s816 + $0x40] sm:$0xff]
      %v3985 = vld [vmem:[%s816 + $0x48] sm:$0xff]
      %v3986 = vld [vmem:[%s816 + $0x50] sm:$0xff]
      %v3987 = vld [vmem:[%s816 + $0x58] sm:$0xff]
      %v3988 = vld [vmem:[%s816 + $0x60] sm:$0xff]
      %v3989 = vld [vmem:[%s816 + $0x68] sm:$0xff]
      %v3990 = vld [vmem:[%s816 + $0x70] sm:$0xff]
      %v3991 = vld [vmem:[%s816 + $0x78] sm:$0xff]
      %v3992 = vld [vmem:[%s816 + $0x80] sm:$0xff]
      %v3993 = vld [vmem:[%s816 + $0x88] sm:$0xff]
      %v3994 = vld [vmem:[%s816 + $0x90] sm:$0xff]
      %v3995 = vld [vmem:[%s816 + $0x98] sm:$0xff]
      %v3996 = vld [vmem:[%s816 + $0xa0] sm:$0xff]
      %v3997 = vld [vmem:[%s816 + $0xa8] sm:$0xff]
      %v3998 = vld [vmem:[%s816 + $0xb0] sm:$0xff]
      %v3999 = vld [vmem:[%s816 + $0xb8] sm:$0xff]
      %v4000 = vld [vmem:[%s816 + $0xc0] sm:$0xff]
      %v4001 = vld [vmem:[%s816 + $0xc8] sm:$0xff]
      %v4002 = vld [vmem:[%s816 + $0xd0] sm:$0xff]
      %v4003 = vld [vmem:[%s816 + $0xd8] sm:$0xff]
      %v4004 = vld [vmem:[%s816 + $0xe0] sm:$0x3]
      %4006 = vset.pattern.permute.xlu0 0
      %4007 = vperm.xlu0 %4006, %v3978
      %v4008 = vpop.permute.xlu0 %4007
      %4011 = vset.pattern.permute.xlu0 0
      %4012 = vperm.xlu0 %4011, %v3979
      %v4013 = vpop.permute.xlu0 %4012
      %4016 = vset.pattern.permute.xlu0 0
      %4017 = vperm.xlu0 %4016, %v3980
      %v4018 = vpop.permute.xlu0 %4017
      %4021 = vset.pattern.permute.xlu0 0
      %4022 = vperm.xlu0 %4021, %v3981
      %v4023 = vpop.permute.xlu0 %4022
      %4026 = vset.pattern.permute.xlu0 0
      %4027 = vperm.xlu0 %4026, %v3982
      %v4028 = vpop.permute.xlu0 %4027
      %4031 = vset.pattern.permute.xlu0 0
      %4032 = vperm.xlu0 %4031, %v3983
      %v4033 = vpop.permute.xlu0 %4032
      %4036 = vset.pattern.permute.xlu0 0
      %4037 = vperm.xlu0 %4036, %v3984
      %v4038 = vpop.permute.xlu0 %4037
      %4041 = vset.pattern.permute.xlu0 0
      %4042 = vperm.xlu0 %4041, %v3985
      %v4043 = vpop.permute.xlu0 %4042
      %4046 = vset.pattern.permute.xlu0 0
      %4047 = vperm.xlu0 %4046, %v3986
      %v4048 = vpop.permute.xlu0 %4047
      %4051 = vset.pattern.permute.xlu0 0
      %4052 = vperm.xlu0 %4051, %v3987
      %v4053 = vpop.permute.xlu0 %4052
      %4056 = vset.pattern.permute.xlu0 0
      %4057 = vperm.xlu0 %4056, %v3988
      %v4058 = vpop.permute.xlu0 %4057
      %4061 = vset.pattern.permute.xlu0 0
      %4062 = vperm.xlu0 %4061, %v3989
      %v4063 = vpop.permute.xlu0 %4062
      %4066 = vset.pattern.permute.xlu0 0
      %4067 = vperm.xlu0 %4066, %v3990
      %v4068 = vpop.permute.xlu0 %4067
      %4071 = vset.pattern.permute.xlu0 0
      %4072 = vperm.xlu0 %4071, %v3991
      %v4073 = vpop.permute.xlu0 %4072
      %4076 = vset.pattern.permute.xlu0 0
      %4077 = vperm.xlu0 %4076, %v3992
      %v4078 = vpop.permute.xlu0 %4077
      %4081 = vset.pattern.permute.xlu0 0
      %4082 = vperm.xlu0 %4081, %v3993
      %v4083 = vpop.permute.xlu0 %4082
      %4086 = vset.pattern.permute.xlu0 0
      %4087 = vperm.xlu0 %4086, %v3994
      %v4088 = vpop.permute.xlu0 %4087
      %4091 = vset.pattern.permute.xlu0 0
      %4092 = vperm.xlu0 %4091, %v3995
      %v4093 = vpop.permute.xlu0 %4092
      %4096 = vset.pattern.permute.xlu0 0
      %4097 = vperm.xlu0 %4096, %v3996
      %v4098 = vpop.permute.xlu0 %4097
      %4101 = vset.pattern.permute.xlu0 0
      %4102 = vperm.xlu0 %4101, %v3997
      %v4103 = vpop.permute.xlu0 %4102
      %4106 = vset.pattern.permute.xlu0 0
      %4107 = vperm.xlu0 %4106, %v3998
      %v4108 = vpop.permute.xlu0 %4107
      %4111 = vset.pattern.permute.xlu0 0
      %4112 = vperm.xlu0 %4111, %v3999
      %v4113 = vpop.permute.xlu0 %4112
      %4116 = vset.pattern.permute.xlu0 0
      %4117 = vperm.xlu0 %4116, %v4000
      %v4118 = vpop.permute.xlu0 %4117
      %4121 = vset.pattern.permute.xlu0 0
      %4122 = vperm.xlu0 %4121, %v4001
      %v4123 = vpop.permute.xlu0 %4122
      %4126 = vset.pattern.permute.xlu0 0
      %4127 = vperm.xlu0 %4126, %v4002
      %v4128 = vpop.permute.xlu0 %4127
      %4131 = vset.pattern.permute.xlu0 0
      %4132 = vperm.xlu0 %4131, %v4003
      %v4133 = vpop.permute.xlu0 %4132
      %4136 = vset.pattern.permute.xlu0 0
      %4137 = vperm.xlu0 %4136, %v4004
      %v4138 = vpop.permute.xlu0 %4137
      %v4140 = vmul.f32 %v4008, %v2106
      %v4141 = vmul.f32 %v4013, %v2106
      %v4142 = vmul.f32 %v4018, %v2106
      %v4143 = vmul.f32 %v4023, %v2106
      %v4144 = vmul.f32 %v4028, %v2106
      %v4145 = vmul.f32 %v4033, %v2106
      %v4146 = vmul.f32 %v4038, %v2106
      %v4147 = vmul.f32 %v4043, %v2106
      %v4148 = vmul.f32 %v4048, %v2106
      %v4149 = vmul.f32 %v4053, %v2106
      %v4150 = vmul.f32 %v4058, %v2106
      %v4151 = vmul.f32 %v4063, %v2106
      %v4152 = vmul.f32 %v4068, %v2106
      %v4153 = vmul.f32 %v4073, %v2106
      %v4154 = vmul.f32 %v4078, %v2106
      %v4155 = vmul.f32 %v4083, %v2106
      %v4156 = vmul.f32 %v4088, %v2106
      %v4157 = vmul.f32 %v4093, %v2106
      %v4158 = vmul.f32 %v4098, %v2106
      %v4159 = vmul.f32 %v4103, %v2106
      %v4160 = vmul.f32 %v4108, %v2106
      %v4161 = vmul.f32 %v4113, %v2106
      %v4162 = vmul.f32 %v4118, %v2106
      %v4163 = vmul.f32 %v4123, %v2106
      %v4164 = vmul.f32 %v4128, %v2106
      %v4165 = vmul.f32 %v4133, %v2106
      %v4166 = vmul.f32 %v4138, %v2106
      %v4167 = vadd.f32 %v3951, %v4140
      %v4168 = vadd.f32 %v3952, %v4141
      %v4169 = vadd.f32 %v3953, %v4142
      %v4170 = vadd.f32 %v3954, %v4143
      %v4171 = vadd.f32 %v3955, %v4144
      %v4172 = vadd.f32 %v3956, %v4145
      %v4173 = vadd.f32 %v3957, %v4146
      %v4174 = vadd.f32 %v3958, %v4147
      %v4175 = vadd.f32 %v3959, %v4148
      %v4176 = vadd.f32 %v3960, %v4149
      %v4177 = vadd.f32 %v3961, %v4150
      %v4178 = vadd.f32 %v3962, %v4151
      %v4179 = vadd.f32 %v3963, %v4152
      %v4180 = vadd.f32 %v3964, %v4153
      %v4181 = vadd.f32 %v3965, %v4154
      %v4182 = vadd.f32 %v3966, %v4155
      %v4183 = vadd.f32 %v3967, %v4156
      %v4184 = vadd.f32 %v3968, %v4157
      %v4185 = vadd.f32 %v3969, %v4158
      %v4186 = vadd.f32 %v3970, %v4159
      %v4187 = vadd.f32 %v3971, %v4160
      %v4188 = vadd.f32 %v3972, %v4161
      %v4189 = vadd.f32 %v3973, %v4162
      %v4190 = vadd.f32 %v3974, %v4163
      %v4191 = vadd.f32 %v3975, %v4164
      %v4192 = vadd.f32 %v3976, %v4165
      %v4193 = vadd.f32 %v3977, %v4166
      %v4194 = vadd.f32 %v4167, %v2167
      %v4195 = vadd.f32 %v4168, %v2167
      %v4196 = vadd.f32 %v4169, %v2167
      %v4197 = vadd.f32 %v4170, %v2167
      %v4198 = vadd.f32 %v4171, %v2167
      %v4199 = vadd.f32 %v4172, %v2167
      %v4200 = vadd.f32 %v4173, %v2167
      %v4201 = vadd.f32 %v4174, %v2167
      %v4202 = vadd.f32 %v4175, %v2167
      %v4203 = vadd.f32 %v4176, %v2167
      %v4204 = vadd.f32 %v4177, %v2167
      %v4205 = vadd.f32 %v4178, %v2167
      %v4206 = vadd.f32 %v4179, %v2167
      %v4207 = vadd.f32 %v4180, %v2167
      %v4208 = vadd.f32 %v4181, %v2167
      %v4209 = vadd.f32 %v4182, %v2167
      %v4210 = vadd.f32 %v4183, %v2167
      %v4211 = vadd.f32 %v4184, %v2167
      %v4212 = vadd.f32 %v4185, %v2167
      %v4213 = vadd.f32 %v4186, %v2167
      %v4214 = vadd.f32 %v4187, %v2167
      %v4215 = vadd.f32 %v4188, %v2167
      %v4216 = vadd.f32 %v4189, %v2167
      %v4217 = vadd.f32 %v4190, %v2167
      %v4218 = vadd.f32 %v4191, %v2167
      %v4219 = vadd.f32 %v4192, %v2167
      %v4220 = vadd.f32 %v4193, %v2167
      %v4221 = vmax.f32 %v4194, 0.0
      %v4222 = vmax.f32 %v4195, 0.0
      %v4223 = vmax.f32 %v4196, 0.0
      %v4224 = vmax.f32 %v4197, 0.0
      %v4225 = vmax.f32 %v4198, 0.0
      %v4226 = vmax.f32 %v4199, 0.0
      %v4227 = vmax.f32 %v4200, 0.0
      %v4228 = vmax.f32 %v4201, 0.0
      %v4229 = vmax.f32 %v4202, 0.0
      %v4230 = vmax.f32 %v4203, 0.0
      %v4231 = vmax.f32 %v4204, 0.0
      %v4232 = vmax.f32 %v4205, 0.0
      %v4233 = vmax.f32 %v4206, 0.0
      %v4234 = vmax.f32 %v4207, 0.0
      %v4235 = vmax.f32 %v4208, 0.0
      %v4236 = vmax.f32 %v4209, 0.0
      %v4237 = vmax.f32 %v4210, 0.0
      %v4238 = vmax.f32 %v4211, 0.0
      %v4239 = vmax.f32 %v4212, 0.0
      %v4240 = vmax.f32 %v4213, 0.0
      %v4241 = vmax.f32 %v4214, 0.0
      %v4242 = vmax.f32 %v4215, 0.0
      %v4243 = vmax.f32 %v4216, 0.0
      %v4244 = vmax.f32 %v4217, 0.0
      %v4245 = vmax.f32 %v4218, 0.0
      %v4246 = vmax.f32 %v4219, 0.0
      %v4247 = vmax.f32 %v4220, 0.0
      %v4248 = vmax.f32 %v3222, %v4221
      %v4249 = vmax.f32 %v3223, %v4222
      %v4250 = vmax.f32 %v3224, %v4223
      %v4251 = vmax.f32 %v3225, %v4224
      %v4252 = vmax.f32 %v3226, %v4225
      %v4253 = vmax.f32 %v3227, %v4226
      %v4254 = vmax.f32 %v3228, %v4227
      %v4255 = vmax.f32 %v3229, %v4228
      %v4256 = vmax.f32 %v3230, %v4229
      %v4257 = vmax.f32 %v3231, %v4230
      %v4258 = vmax.f32 %v3232, %v4231
      %v4259 = vmax.f32 %v3233, %v4232
      %v4260 = vmax.f32 %v3234, %v4233
      %v4261 = vmax.f32 %v3235, %v4234
      %v4262 = vmax.f32 %v3236, %v4235
      %v4263 = vmax.f32 %v3237, %v4236
      %v4264 = vmax.f32 %v3238, %v4237
      %v4265 = vmax.f32 %v3239, %v4238
      %v4266 = vmax.f32 %v3240, %v4239
      %v4267 = vmax.f32 %v3241, %v4240
      %v4268 = vmax.f32 %v3242, %v4241
      %v4269 = vmax.f32 %v3243, %v4242
      %v4270 = vmax.f32 %v3244, %v4243
      %v4271 = vmax.f32 %v3245, %v4244
      %v4272 = vmax.f32 %v3246, %v4245
      %v4273 = vmax.f32 %v3247, %v4246
      %v4274 = vmax.f32 %v3248, %v4247
      %v4275 = vmul.f32 %v1074, %v338
      %v4276 = vmul.f32 %v1079, %v338
      %v4277 = vmul.f32 %v1084, %v338
      %v4278 = vmul.f32 %v1089, %v338
      %v4279 = vmul.f32 %v1094, %v338
      %v4280 = vmul.f32 %v1099, %v338
      %v4281 = vmul.f32 %v1104, %v338
      %v4282 = vmul.f32 %v1109, %v338
      %v4283 = vmul.f32 %v1114, %v338
      %v4284 = vmul.f32 %v1119, %v338
      %v4285 = vmul.f32 %v1124, %v338
      %v4286 = vmul.f32 %v1129, %v338
      %v4287 = vmul.f32 %v1134, %v338
      %v4288 = vmul.f32 %v1139, %v338
      %v4289 = vmul.f32 %v1144, %v338
      %v4290 = vmul.f32 %v1149, %v338
      %v4291 = vmul.f32 %v1154, %v338
      %v4292 = vmul.f32 %v1159, %v338
      %v4293 = vmul.f32 %v1164, %v338
      %v4294 = vmul.f32 %v1169, %v338
      %v4295 = vmul.f32 %v1174, %v338
      %v4296 = vmul.f32 %v1179, %v338
      %v4297 = vmul.f32 %v1184, %v338
      %v4298 = vmul.f32 %v1189, %v338
      %v4299 = vmul.f32 %v1194, %v338
      %v4300 = vmul.f32 %v1199, %v338
      %v4301 = vmul.f32 %v1204, %v338
      %v4302 = vmul.f32 %v1298, %v536
      %v4303 = vmul.f32 %v1303, %v536
      %v4304 = vmul.f32 %v1308, %v536
      %v4305 = vmul.f32 %v1313, %v536
      %v4306 = vmul.f32 %v1318, %v536
      %v4307 = vmul.f32 %v1323, %v536
      %v4308 = vmul.f32 %v1328, %v536
      %v4309 = vmul.f32 %v1333, %v536
      %v4310 = vmul.f32 %v1338, %v536
      %v4311 = vmul.f32 %v1343, %v536
      %v4312 = vmul.f32 %v1348, %v536
      %v4313 = vmul.f32 %v1353, %v536
      %v4314 = vmul.f32 %v1358, %v536
      %v4315 = vmul.f32 %v1363, %v536
      %v4316 = vmul.f32 %v1368, %v536
      %v4317 = vmul.f32 %v1373, %v536
      %v4318 = vmul.f32 %v1378, %v536
      %v4319 = vmul.f32 %v1383, %v536
      %v4320 = vmul.f32 %v1388, %v536
      %v4321 = vmul.f32 %v1393, %v536
      %v4322 = vmul.f32 %v1398, %v536
      %v4323 = vmul.f32 %v1403, %v536
      %v4324 = vmul.f32 %v1408, %v536
      %v4325 = vmul.f32 %v1413, %v536
      %v4326 = vmul.f32 %v1418, %v536
      %v4327 = vmul.f32 %v1423, %v536
      %v4328 = vmul.f32 %v1428, %v536
      %v4329 = vadd.f32 %v4275, %v4302
      %v4330 = vadd.f32 %v4276, %v4303
      %v4331 = vadd.f32 %v4277, %v4304
      %v4332 = vadd.f32 %v4278, %v4305
      %v4333 = vadd.f32 %v4279, %v4306
      %v4334 = vadd.f32 %v4280, %v4307
      %v4335 = vadd.f32 %v4281, %v4308
      %v4336 = vadd.f32 %v4282, %v4309
      %v4337 = vadd.f32 %v4283, %v4310
      %v4338 = vadd.f32 %v4284, %v4311
      %v4339 = vadd.f32 %v4285, %v4312
      %v4340 = vadd.f32 %v4286, %v4313
      %v4341 = vadd.f32 %v4287, %v4314
      %v4342 = vadd.f32 %v4288, %v4315
      %v4343 = vadd.f32 %v4289, %v4316
      %v4344 = vadd.f32 %v4290, %v4317
      %v4345 = vadd.f32 %v4291, %v4318
      %v4346 = vadd.f32 %v4292, %v4319
      %v4347 = vadd.f32 %v4293, %v4320
      %v4348 = vadd.f32 %v4294, %v4321
      %v4349 = vadd.f32 %v4295, %v4322
      %v4350 = vadd.f32 %v4296, %v4323
      %v4351 = vadd.f32 %v4297, %v4324
      %v4352 = vadd.f32 %v4298, %v4325
      %v4353 = vadd.f32 %v4299, %v4326
      %v4354 = vadd.f32 %v4300, %v4327
      %v4355 = vadd.f32 %v4301, %v4328
      %v4356 = vmul.f32 %v2658, %v760
      %v4357 = vmul.f32 %v2663, %v760
      %v4358 = vmul.f32 %v2668, %v760
      %v4359 = vmul.f32 %v2673, %v760
      %v4360 = vmul.f32 %v2678, %v760
      %v4361 = vmul.f32 %v2683, %v760
      %v4362 = vmul.f32 %v2688, %v760
      %v4363 = vmul.f32 %v2693, %v760
      %v4364 = vmul.f32 %v2698, %v760
      %v4365 = vmul.f32 %v2703, %v760
      %v4366 = vmul.f32 %v2708, %v760
      %v4367 = vmul.f32 %v2713, %v760
      %v4368 = vmul.f32 %v2718, %v760
      %v4369 = vmul.f32 %v2723, %v760
      %v4370 = vmul.f32 %v2728, %v760
      %v4371 = vmul.f32 %v2733, %v760
      %v4372 = vmul.f32 %v2738, %v760
      %v4373 = vmul.f32 %v2743, %v760
      %v4374 = vmul.f32 %v2748, %v760
      %v4375 = vmul.f32 %v2753, %v760
      %v4376 = vmul.f32 %v2758, %v760
      %v4377 = vmul.f32 %v2763, %v760
      %v4378 = vmul.f32 %v2768, %v760
      %v4379 = vmul.f32 %v2773, %v760
      %v4380 = vmul.f32 %v2778, %v760
      %v4381 = vmul.f32 %v2783, %v760
      %v4382 = vmul.f32 %v2788, %v760
      %v4383 = vadd.f32 %v4329, %v4356
      %v4384 = vadd.f32 %v4330, %v4357
      %v4385 = vadd.f32 %v4331, %v4358
      %v4386 = vadd.f32 %v4332, %v4359
      %v4387 = vadd.f32 %v4333, %v4360
      %v4388 = vadd.f32 %v4334, %v4361
      %v4389 = vadd.f32 %v4335, %v4362
      %v4390 = vadd.f32 %v4336, %v4363
      %v4391 = vadd.f32 %v4337, %v4364
      %v4392 = vadd.f32 %v4338, %v4365
      %v4393 = vadd.f32 %v4339, %v4366
      %v4394 = vadd.f32 %v4340, %v4367
      %v4395 = vadd.f32 %v4341, %v4368
      %v4396 = vadd.f32 %v4342, %v4369
      %v4397 = vadd.f32 %v4343, %v4370
      %v4398 = vadd.f32 %v4344, %v4371
      %v4399 = vadd.f32 %v4345, %v4372
      %v4400 = vadd.f32 %v4346, %v4373
      %v4401 = vadd.f32 %v4347, %v4374
      %v4402 = vadd.f32 %v4348, %v4375
      %v4403 = vadd.f32 %v4349, %v4376
      %v4404 = vadd.f32 %v4350, %v4377
      %v4405 = vadd.f32 %v4351, %v4378
      %v4406 = vadd.f32 %v4352, %v4379
      %v4407 = vadd.f32 %v4353, %v4380
      %v4408 = vadd.f32 %v4354, %v4381
      %v4409 = vadd.f32 %v4355, %v4382
      %v4410 = vmul.f32 %v1746, %v985
      %v4411 = vmul.f32 %v1751, %v985
      %v4412 = vmul.f32 %v1756, %v985
      %v4413 = vmul.f32 %v1761, %v985
      %v4414 = vmul.f32 %v1766, %v985
      %v4415 = vmul.f32 %v1771, %v985
      %v4416 = vmul.f32 %v1776, %v985
      %v4417 = vmul.f32 %v1781, %v985
      %v4418 = vmul.f32 %v1786, %v985
      %v4419 = vmul.f32 %v1791, %v985
      %v4420 = vmul.f32 %v1796, %v985
      %v4421 = vmul.f32 %v1801, %v985
      %v4422 = vmul.f32 %v1806, %v985
      %v4423 = vmul.f32 %v1811, %v985
      %v4424 = vmul.f32 %v1816, %v985
      %v4425 = vmul.f32 %v1821, %v985
      %v4426 = vmul.f32 %v1826, %v985
      %v4427 = vmul.f32 %v1831, %v985
      %v4428 = vmul.f32 %v1836, %v985
      %v4429 = vmul.f32 %v1841, %v985
      %v4430 = vmul.f32 %v1846, %v985
      %v4431 = vmul.f32 %v1851, %v985
      %v4432 = vmul.f32 %v1856, %v985
      %v4433 = vmul.f32 %v1861, %v985
      %v4434 = vmul.f32 %v1866, %v985
      %v4435 = vmul.f32 %v1871, %v985
      %v4436 = vmul.f32 %v1876, %v985
      %v4437 = vadd.f32 %v4383, %v4410
      %v4438 = vadd.f32 %v4384, %v4411
      %v4439 = vadd.f32 %v4385, %v4412
      %v4440 = vadd.f32 %v4386, %v4413
      %v4441 = vadd.f32 %v4387, %v4414
      %v4442 = vadd.f32 %v4388, %v4415
      %v4443 = vadd.f32 %v4389, %v4416
      %v4444 = vadd.f32 %v4390, %v4417
      %v4445 = vadd.f32 %v4391, %v4418
      %v4446 = vadd.f32 %v4392, %v4419
      %v4447 = vadd.f32 %v4393, %v4420
      %v4448 = vadd.f32 %v4394, %v4421
      %v4449 = vadd.f32 %v4395, %v4422
      %v4450 = vadd.f32 %v4396, %v4423
      %v4451 = vadd.f32 %v4397, %v4424
      %v4452 = vadd.f32 %v4398, %v4425
      %v4453 = vadd.f32 %v4399, %v4426
      %v4454 = vadd.f32 %v4400, %v4427
      %v4455 = vadd.f32 %v4401, %v4428
      %v4456 = vadd.f32 %v4402, %v4429
      %v4457 = vadd.f32 %v4403, %v4430
      %v4458 = vadd.f32 %v4404, %v4431
      %v4459 = vadd.f32 %v4405, %v4432
      %v4460 = vadd.f32 %v4406, %v4433
      %v4461 = vadd.f32 %v4407, %v4434
      %v4462 = vadd.f32 %v4408, %v4435
      %v4463 = vadd.f32 %v4409, %v4436
      %v4464 = vmul.f32 %v1970, %v1210
      %v4465 = vmul.f32 %v1975, %v1210
      %v4466 = vmul.f32 %v1980, %v1210
      %v4467 = vmul.f32 %v1985, %v1210
      %v4468 = vmul.f32 %v1990, %v1210
      %v4469 = vmul.f32 %v1995, %v1210
      %v4470 = vmul.f32 %v2000, %v1210
      %v4471 = vmul.f32 %v2005, %v1210
      %v4472 = vmul.f32 %v2010, %v1210
      %v4473 = vmul.f32 %v2015, %v1210
      %v4474 = vmul.f32 %v2020, %v1210
      %v4475 = vmul.f32 %v2025, %v1210
      %v4476 = vmul.f32 %v2030, %v1210
      %v4477 = vmul.f32 %v2035, %v1210
      %v4478 = vmul.f32 %v2040, %v1210
      %v4479 = vmul.f32 %v2045, %v1210
      %v4480 = vmul.f32 %v2050, %v1210
      %v4481 = vmul.f32 %v2055, %v1210
      %v4482 = vmul.f32 %v2060, %v1210
      %v4483 = vmul.f32 %v2065, %v1210
      %v4484 = vmul.f32 %v2070, %v1210
      %v4485 = vmul.f32 %v2075, %v1210
      %v4486 = vmul.f32 %v2080, %v1210
      %v4487 = vmul.f32 %v2085, %v1210
      %v4488 = vmul.f32 %v2090, %v1210
      %v4489 = vmul.f32 %v2095, %v1210
      %v4490 = vmul.f32 %v2100, %v1210
      %v4491 = vadd.f32 %v4437, %v4464
      %v4492 = vadd.f32 %v4438, %v4465
      %v4493 = vadd.f32 %v4439, %v4466
      %v4494 = vadd.f32 %v4440, %v4467
      %v4495 = vadd.f32 %v4441, %v4468
      %v4496 = vadd.f32 %v4442, %v4469
      %v4497 = vadd.f32 %v4443, %v4470
      %v4498 = vadd.f32 %v4444, %v4471
      %v4499 = vadd.f32 %v4445, %v4472
      %v4500 = vadd.f32 %v4446, %v4473
      %v4501 = vadd.f32 %v4447, %v4474
      %v4502 = vadd.f32 %v4448, %v4475
      %v4503 = vadd.f32 %v4449, %v4476
      %v4504 = vadd.f32 %v4450, %v4477
      %v4505 = vadd.f32 %v4451, %v4478
      %v4506 = vadd.f32 %v4452, %v4479
      %v4507 = vadd.f32 %v4453, %v4480
      %v4508 = vadd.f32 %v4454, %v4481
      %v4509 = vadd.f32 %v4455, %v4482
      %v4510 = vadd.f32 %v4456, %v4483
      %v4511 = vadd.f32 %v4457, %v4484
      %v4512 = vadd.f32 %v4458, %v4485
      %v4513 = vadd.f32 %v4459, %v4486
      %v4514 = vadd.f32 %v4460, %v4487
      %v4515 = vadd.f32 %v4461, %v4488
      %v4516 = vadd.f32 %v4462, %v4489
      %v4517 = vadd.f32 %v4463, %v4490
      %v4518 = vmul.f32 %v2982, %v1434
      %v4519 = vmul.f32 %v2987, %v1434
      %v4520 = vmul.f32 %v2992, %v1434
      %v4521 = vmul.f32 %v2997, %v1434
      %v4522 = vmul.f32 %v3002, %v1434
      %v4523 = vmul.f32 %v3007, %v1434
      %v4524 = vmul.f32 %v3012, %v1434
      %v4525 = vmul.f32 %v3017, %v1434
      %v4526 = vmul.f32 %v3022, %v1434
      %v4527 = vmul.f32 %v3027, %v1434
      %v4528 = vmul.f32 %v3032, %v1434
      %v4529 = vmul.f32 %v3037, %v1434
      %v4530 = vmul.f32 %v3042, %v1434
      %v4531 = vmul.f32 %v3047, %v1434
      %v4532 = vmul.f32 %v3052, %v1434
      %v4533 = vmul.f32 %v3057, %v1434
      %v4534 = vmul.f32 %v3062, %v1434
      %v4535 = vmul.f32 %v3067, %v1434
      %v4536 = vmul.f32 %v3072, %v1434
      %v4537 = vmul.f32 %v3077, %v1434
      %v4538 = vmul.f32 %v3082, %v1434
      %v4539 = vmul.f32 %v3087, %v1434
      %v4540 = vmul.f32 %v3092, %v1434
      %v4541 = vmul.f32 %v3097, %v1434
      %v4542 = vmul.f32 %v3102, %v1434
      %v4543 = vmul.f32 %v3107, %v1434
      %v4544 = vmul.f32 %v3112, %v1434
      %v4545 = vadd.f32 %v4491, %v4518
      %v4546 = vadd.f32 %v4492, %v4519
      %v4547 = vadd.f32 %v4493, %v4520
      %v4548 = vadd.f32 %v4494, %v4521
      %v4549 = vadd.f32 %v4495, %v4522
      %v4550 = vadd.f32 %v4496, %v4523
      %v4551 = vadd.f32 %v4497, %v4524
      %v4552 = vadd.f32 %v4498, %v4525
      %v4553 = vadd.f32 %v4499, %v4526
      %v4554 = vadd.f32 %v4500, %v4527
      %v4555 = vadd.f32 %v4501, %v4528
      %v4556 = vadd.f32 %v4502, %v4529
      %v4557 = vadd.f32 %v4503, %v4530
      %v4558 = vadd.f32 %v4504, %v4531
      %v4559 = vadd.f32 %v4505, %v4532
      %v4560 = vadd.f32 %v4506, %v4533
      %v4561 = vadd.f32 %v4507, %v4534
      %v4562 = vadd.f32 %v4508, %v4535
      %v4563 = vadd.f32 %v4509, %v4536
      %v4564 = vadd.f32 %v4510, %v4537
      %v4565 = vadd.f32 %v4511, %v4538
      %v4566 = vadd.f32 %v4512, %v4539
      %v4567 = vadd.f32 %v4513, %v4540
      %v4568 = vadd.f32 %v4514, %v4541
      %v4569 = vadd.f32 %v4515, %v4542
      %v4570 = vadd.f32 %v4516, %v4543
      %v4571 = vadd.f32 %v4517, %v4544
      %v4572 = vmul.f32 %v3792, %v1658
      %v4573 = vmul.f32 %v3797, %v1658
      %v4574 = vmul.f32 %v3802, %v1658
      %v4575 = vmul.f32 %v3807, %v1658
      %v4576 = vmul.f32 %v3812, %v1658
      %v4577 = vmul.f32 %v3817, %v1658
      %v4578 = vmul.f32 %v3822, %v1658
      %v4579 = vmul.f32 %v3827, %v1658
      %v4580 = vmul.f32 %v3832, %v1658
      %v4581 = vmul.f32 %v3837, %v1658
      %v4582 = vmul.f32 %v3842, %v1658
      %v4583 = vmul.f32 %v3847, %v1658
      %v4584 = vmul.f32 %v3852, %v1658
      %v4585 = vmul.f32 %v3857, %v1658
      %v4586 = vmul.f32 %v3862, %v1658
      %v4587 = vmul.f32 %v3867, %v1658
      %v4588 = vmul.f32 %v3872, %v1658
      %v4589 = vmul.f32 %v3877, %v1658
      %v4590 = vmul.f32 %v3882, %v1658
      %v4591 = vmul.f32 %v3887, %v1658
      %v4592 = vmul.f32 %v3892, %v1658
      %v4593 = vmul.f32 %v3897, %v1658
      %v4594 = vmul.f32 %v3902, %v1658
      %v4595 = vmul.f32 %v3907, %v1658
      %v4596 = vmul.f32 %v3912, %v1658
      %v4597 = vmul.f32 %v3917, %v1658
      %v4598 = vmul.f32 %v3922, %v1658
      %v4599 = vadd.f32 %v4545, %v4572
      %v4600 = vadd.f32 %v4546, %v4573
      %v4601 = vadd.f32 %v4547, %v4574
      %v4602 = vadd.f32 %v4548, %v4575
      %v4603 = vadd.f32 %v4549, %v4576
      %v4604 = vadd.f32 %v4550, %v4577
      %v4605 = vadd.f32 %v4551, %v4578
      %v4606 = vadd.f32 %v4552, %v4579
      %v4607 = vadd.f32 %v4553, %v4580
      %v4608 = vadd.f32 %v4554, %v4581
      %v4609 = vadd.f32 %v4555, %v4582
      %v4610 = vadd.f32 %v4556, %v4583
      %v4611 = vadd.f32 %v4557, %v4584
      %v4612 = vadd.f32 %v4558, %v4585
      %v4613 = vadd.f32 %v4559, %v4586
      %v4614 = vadd.f32 %v4560, %v4587
      %v4615 = vadd.f32 %v4561, %v4588
      %v4616 = vadd.f32 %v4562, %v4589
      %v4617 = vadd.f32 %v4563, %v4590
      %v4618 = vadd.f32 %v4564, %v4591
      %v4619 = vadd.f32 %v4565, %v4592
      %v4620 = vadd.f32 %v4566, %v4593
      %v4621 = vadd.f32 %v4567, %v4594
      %v4622 = vadd.f32 %v4568, %v4595
      %v4623 = vadd.f32 %v4569, %v4596
      %v4624 = vadd.f32 %v4570, %v4597
      %v4625 = vadd.f32 %v4571, %v4598
      %v4626 = vmul.f32 %v4008, %v1882
      %v4627 = vmul.f32 %v4013, %v1882
      %v4628 = vmul.f32 %v4018, %v1882
      %v4629 = vmul.f32 %v4023, %v1882
      %v4630 = vmul.f32 %v4028, %v1882
      %v4631 = vmul.f32 %v4033, %v1882
      %v4632 = vmul.f32 %v4038, %v1882
      %v4633 = vmul.f32 %v4043, %v1882
      %v4634 = vmul.f32 %v4048, %v1882
      %v4635 = vmul.f32 %v4053, %v1882
      %v4636 = vmul.f32 %v4058, %v1882
      %v4637 = vmul.f32 %v4063, %v1882
      %v4638 = vmul.f32 %v4068, %v1882
      %v4639 = vmul.f32 %v4073, %v1882
      %v4640 = vmul.f32 %v4078, %v1882
      %v4641 = vmul.f32 %v4083, %v1882
      %v4642 = vmul.f32 %v4088, %v1882
      %v4643 = vmul.f32 %v4093, %v1882
      %v4644 = vmul.f32 %v4098, %v1882
      %v4645 = vmul.f32 %v4103, %v1882
      %v4646 = vmul.f32 %v4108, %v1882
      %v4647 = vmul.f32 %v4113, %v1882
      %v4648 = vmul.f32 %v4118, %v1882
      %v4649 = vmul.f32 %v4123, %v1882
      %v4650 = vmul.f32 %v4128, %v1882
      %v4651 = vmul.f32 %v4133, %v1882
      %v4652 = vmul.f32 %v4138, %v1882
      %v4653 = vadd.f32 %v4599, %v4626
      %v4654 = vadd.f32 %v4600, %v4627
      %v4655 = vadd.f32 %v4601, %v4628
      %v4656 = vadd.f32 %v4602, %v4629
      %v4657 = vadd.f32 %v4603, %v4630
      %v4658 = vadd.f32 %v4604, %v4631
      %v4659 = vadd.f32 %v4605, %v4632
      %v4660 = vadd.f32 %v4606, %v4633
      %v4661 = vadd.f32 %v4607, %v4634
      %v4662 = vadd.f32 %v4608, %v4635
      %v4663 = vadd.f32 %v4609, %v4636
      %v4664 = vadd.f32 %v4610, %v4637
      %v4665 = vadd.f32 %v4611, %v4638
      %v4666 = vadd.f32 %v4612, %v4639
      %v4667 = vadd.f32 %v4613, %v4640
      %v4668 = vadd.f32 %v4614, %v4641
      %v4669 = vadd.f32 %v4615, %v4642
      %v4670 = vadd.f32 %v4616, %v4643
      %v4671 = vadd.f32 %v4617, %v4644
      %v4672 = vadd.f32 %v4618, %v4645
      %v4673 = vadd.f32 %v4619, %v4646
      %v4674 = vadd.f32 %v4620, %v4647
      %v4675 = vadd.f32 %v4621, %v4648
      %v4676 = vadd.f32 %v4622, %v4649
      %v4677 = vadd.f32 %v4623, %v4650
      %v4678 = vadd.f32 %v4624, %v4651
      %v4679 = vadd.f32 %v4625, %v4652
      %v4680 = vld [vmem:[%s1041 + $0x10] sm:$0xff]
      %v4681 = vld [vmem:[%s1041 + $0x18] sm:$0xff]
      %v4682 = vld [vmem:[%s1041 + $0x20] sm:$0xff]
      %v4683 = vld [vmem:[%s1041 + $0x28] sm:$0xff]
      %v4684 = vld [vmem:[%s1041 + $0x30] sm:$0xff]
      %v4685 = vld [vmem:[%s1041 + $0x38] sm:$0xff]
      %v4686 = vld [vmem:[%s1041 + $0x40] sm:$0xff]
      %v4687 = vld [vmem:[%s1041 + $0x48] sm:$0xff]
      %v4688 = vld [vmem:[%s1041 + $0x50] sm:$0xff]
      %v4689 = vld [vmem:[%s1041 + $0x58] sm:$0xff]
      %v4690 = vld [vmem:[%s1041 + $0x60] sm:$0xff]
      %v4691 = vld [vmem:[%s1041 + $0x68] sm:$0xff]
      %v4692 = vld [vmem:[%s1041 + $0x70] sm:$0xff]
      %v4693 = vld [vmem:[%s1041 + $0x78] sm:$0xff]
      %v4694 = vld [vmem:[%s1041 + $0x80] sm:$0xff]
      %v4695 = vld [vmem:[%s1041 + $0x88] sm:$0xff]
      %v4696 = vld [vmem:[%s1041 + $0x90] sm:$0xff]
      %v4697 = vld [vmem:[%s1041 + $0x98] sm:$0xff]
      %v4698 = vld [vmem:[%s1041 + $0xa0] sm:$0xff]
      %v4699 = vld [vmem:[%s1041 + $0xa8] sm:$0xff]
      %v4700 = vld [vmem:[%s1041 + $0xb0] sm:$0xff]
      %v4701 = vld [vmem:[%s1041 + $0xb8] sm:$0xff]
      %v4702 = vld [vmem:[%s1041 + $0xc0] sm:$0xff]
      %v4703 = vld [vmem:[%s1041 + $0xc8] sm:$0xff]
      %v4704 = vld [vmem:[%s1041 + $0xd0] sm:$0xff]
      %v4705 = vld [vmem:[%s1041 + $0xd8] sm:$0xff]
      %v4706 = vld [vmem:[%s1041 + $0xe0] sm:$0x3]
      %4708 = vset.pattern.permute.xlu0 0
      %4709 = vperm.xlu0 %4708, %v4680
      %v4710 = vpop.permute.xlu0 %4709
      %4713 = vset.pattern.permute.xlu0 0
      %4714 = vperm.xlu0 %4713, %v4681
      %v4715 = vpop.permute.xlu0 %4714
      %4718 = vset.pattern.permute.xlu0 0
      %4719 = vperm.xlu0 %4718, %v4682
      %v4720 = vpop.permute.xlu0 %4719
      %4723 = vset.pattern.permute.xlu0 0
      %4724 = vperm.xlu0 %4723, %v4683
      %v4725 = vpop.permute.xlu0 %4724
      %4728 = vset.pattern.permute.xlu0 0
      %4729 = vperm.xlu0 %4728, %v4684
      %v4730 = vpop.permute.xlu0 %4729
      %4733 = vset.pattern.permute.xlu0 0
      %4734 = vperm.xlu0 %4733, %v4685
      %v4735 = vpop.permute.xlu0 %4734
      %4738 = vset.pattern.permute.xlu0 0
      %4739 = vperm.xlu0 %4738, %v4686
      %v4740 = vpop.permute.xlu0 %4739
      %4743 = vset.pattern.permute.xlu0 0
      %4744 = vperm.xlu0 %4743, %v4687
      %v4745 = vpop.permute.xlu0 %4744
      %4748 = vset.pattern.permute.xlu0 0
      %4749 = vperm.xlu0 %4748, %v4688
      %v4750 = vpop.permute.xlu0 %4749
      %4753 = vset.pattern.permute.xlu0 0
      %4754 = vperm.xlu0 %4753, %v4689
      %v4755 = vpop.permute.xlu0 %4754
      %4758 = vset.pattern.permute.xlu0 0
      %4759 = vperm.xlu0 %4758, %v4690
      %v4760 = vpop.permute.xlu0 %4759
      %4763 = vset.pattern.permute.xlu0 0
      %4764 = vperm.xlu0 %4763, %v4691
      %v4765 = vpop.permute.xlu0 %4764
      %4768 = vset.pattern.permute.xlu0 0
      %4769 = vperm.xlu0 %4768, %v4692
      %v4770 = vpop.permute.xlu0 %4769
      %4773 = vset.pattern.permute.xlu0 0
      %4774 = vperm.xlu0 %4773, %v4693
      %v4775 = vpop.permute.xlu0 %4774
      %4778 = vset.pattern.permute.xlu0 0
      %4779 = vperm.xlu0 %4778, %v4694
      %v4780 = vpop.permute.xlu0 %4779
      %4783 = vset.pattern.permute.xlu0 0
      %4784 = vperm.xlu0 %4783, %v4695
      %v4785 = vpop.permute.xlu0 %4784
      %4788 = vset.pattern.permute.xlu0 0
      %4789 = vperm.xlu0 %4788, %v4696
      %v4790 = vpop.permute.xlu0 %4789
      %4793 = vset.pattern.permute.xlu0 0
      %4794 = vperm.xlu0 %4793, %v4697
      %v4795 = vpop.permute.xlu0 %4794
      %4798 = vset.pattern.permute.xlu0 0
      %4799 = vperm.xlu0 %4798, %v4698
      %v4800 = vpop.permute.xlu0 %4799
      %4803 = vset.pattern.permute.xlu0 0
      %4804 = vperm.xlu0 %4803, %v4699
      %v4805 = vpop.permute.xlu0 %4804
      %4808 = vset.pattern.permute.xlu0 0
      %4809 = vperm.xlu0 %4808, %v4700
      %v4810 = vpop.permute.xlu0 %4809
      %4813 = vset.pattern.permute.xlu0 0
      %4814 = vperm.xlu0 %4813, %v4701
      %v4815 = vpop.permute.xlu0 %4814
      %4818 = vset.pattern.permute.xlu0 0
      %4819 = vperm.xlu0 %4818, %v4702
      %v4820 = vpop.permute.xlu0 %4819
      %4823 = vset.pattern.permute.xlu0 0
      %4824 = vperm.xlu0 %4823, %v4703
      %v4825 = vpop.permute.xlu0 %4824
      %4828 = vset.pattern.permute.xlu0 0
      %4829 = vperm.xlu0 %4828, %v4704
      %v4830 = vpop.permute.xlu0 %4829
      %4833 = vset.pattern.permute.xlu0 0
      %4834 = vperm.xlu0 %4833, %v4705
      %v4835 = vpop.permute.xlu0 %4834
      %4838 = vset.pattern.permute.xlu0 0
      %4839 = vperm.xlu0 %4838, %v4706
      %v4840 = vpop.permute.xlu0 %4839
      %v4842 = vmul.f32 %v4710, %v2106
      %v4843 = vmul.f32 %v4715, %v2106
      %v4844 = vmul.f32 %v4720, %v2106
      %v4845 = vmul.f32 %v4725, %v2106
      %v4846 = vmul.f32 %v4730, %v2106
      %v4847 = vmul.f32 %v4735, %v2106
      %v4848 = vmul.f32 %v4740, %v2106
      %v4849 = vmul.f32 %v4745, %v2106
      %v4850 = vmul.f32 %v4750, %v2106
      %v4851 = vmul.f32 %v4755, %v2106
      %v4852 = vmul.f32 %v4760, %v2106
      %v4853 = vmul.f32 %v4765, %v2106
      %v4854 = vmul.f32 %v4770, %v2106
      %v4855 = vmul.f32 %v4775, %v2106
      %v4856 = vmul.f32 %v4780, %v2106
      %v4857 = vmul.f32 %v4785, %v2106
      %v4858 = vmul.f32 %v4790, %v2106
      %v4859 = vmul.f32 %v4795, %v2106
      %v4860 = vmul.f32 %v4800, %v2106
      %v4861 = vmul.f32 %v4805, %v2106
      %v4862 = vmul.f32 %v4810, %v2106
      %v4863 = vmul.f32 %v4815, %v2106
      %v4864 = vmul.f32 %v4820, %v2106
      %v4865 = vmul.f32 %v4825, %v2106
      %v4866 = vmul.f32 %v4830, %v2106
      %v4867 = vmul.f32 %v4835, %v2106
      %v4868 = vmul.f32 %v4840, %v2106
      %v4869 = vadd.f32 %v4653, %v4842
      %v4870 = vadd.f32 %v4654, %v4843
      %v4871 = vadd.f32 %v4655, %v4844
      %v4872 = vadd.f32 %v4656, %v4845
      %v4873 = vadd.f32 %v4657, %v4846
      %v4874 = vadd.f32 %v4658, %v4847
      %v4875 = vadd.f32 %v4659, %v4848
      %v4876 = vadd.f32 %v4660, %v4849
      %v4877 = vadd.f32 %v4661, %v4850
      %v4878 = vadd.f32 %v4662, %v4851
      %v4879 = vadd.f32 %v4663, %v4852
      %v4880 = vadd.f32 %v4664, %v4853
      %v4881 = vadd.f32 %v4665, %v4854
      %v4882 = vadd.f32 %v4666, %v4855
      %v4883 = vadd.f32 %v4667, %v4856
      %v4884 = vadd.f32 %v4668, %v4857
      %v4885 = vadd.f32 %v4669, %v4858
      %v4886 = vadd.f32 %v4670, %v4859
      %v4887 = vadd.f32 %v4671, %v4860
      %v4888 = vadd.f32 %v4672, %v4861
      %v4889 = vadd.f32 %v4673, %v4862
      %v4890 = vadd.f32 %v4674, %v4863
      %v4891 = vadd.f32 %v4675, %v4864
      %v4892 = vadd.f32 %v4676, %v4865
      %v4893 = vadd.f32 %v4677, %v4866
      %v4894 = vadd.f32 %v4678, %v4867
      %v4895 = vadd.f32 %v4679, %v4868
      %v4896 = vadd.f32 %v4869, %v2167
      %v4897 = vadd.f32 %v4870, %v2167
      %v4898 = vadd.f32 %v4871, %v2167
      %v4899 = vadd.f32 %v4872, %v2167
      %v4900 = vadd.f32 %v4873, %v2167
      %v4901 = vadd.f32 %v4874, %v2167
      %v4902 = vadd.f32 %v4875, %v2167
      %v4903 = vadd.f32 %v4876, %v2167
      %v4904 = vadd.f32 %v4877, %v2167
      %v4905 = vadd.f32 %v4878, %v2167
      %v4906 = vadd.f32 %v4879, %v2167
      %v4907 = vadd.f32 %v4880, %v2167
      %v4908 = vadd.f32 %v4881, %v2167
      %v4909 = vadd.f32 %v4882, %v2167
      %v4910 = vadd.f32 %v4883, %v2167
      %v4911 = vadd.f32 %v4884, %v2167
      %v4912 = vadd.f32 %v4885, %v2167
      %v4913 = vadd.f32 %v4886, %v2167
      %v4914 = vadd.f32 %v4887, %v2167
      %v4915 = vadd.f32 %v4888, %v2167
      %v4916 = vadd.f32 %v4889, %v2167
      %v4917 = vadd.f32 %v4890, %v2167
      %v4918 = vadd.f32 %v4891, %v2167
      %v4919 = vadd.f32 %v4892, %v2167
      %v4920 = vadd.f32 %v4893, %v2167
      %v4921 = vadd.f32 %v4894, %v2167
      %v4922 = vadd.f32 %v4895, %v2167
      %v4923 = vmax.f32 %v4896, 0.0
      %v4924 = vmax.f32 %v4897, 0.0
      %v4925 = vmax.f32 %v4898, 0.0
      %v4926 = vmax.f32 %v4899, 0.0
      %v4927 = vmax.f32 %v4900, 0.0
      %v4928 = vmax.f32 %v4901, 0.0
      %v4929 = vmax.f32 %v4902, 0.0
      %v4930 = vmax.f32 %v4903, 0.0
      %v4931 = vmax.f32 %v4904, 0.0
      %v4932 = vmax.f32 %v4905, 0.0
      %v4933 = vmax.f32 %v4906, 0.0
      %v4934 = vmax.f32 %v4907, 0.0
      %v4935 = vmax.f32 %v4908, 0.0
      %v4936 = vmax.f32 %v4909, 0.0
      %v4937 = vmax.f32 %v4910, 0.0
      %v4938 = vmax.f32 %v4911, 0.0
      %v4939 = vmax.f32 %v4912, 0.0
      %v4940 = vmax.f32 %v4913, 0.0
      %v4941 = vmax.f32 %v4914, 0.0
      %v4942 = vmax.f32 %v4915, 0.0
      %v4943 = vmax.f32 %v4916, 0.0
      %v4944 = vmax.f32 %v4917, 0.0
      %v4945 = vmax.f32 %v4918, 0.0
      %v4946 = vmax.f32 %v4919, 0.0
      %v4947 = vmax.f32 %v4920, 0.0
      %v4948 = vmax.f32 %v4921, 0.0
      %v4949 = vmax.f32 %v4922, 0.0
      %v4950 = vmax.f32 %v4248, %v4923
      %v4951 = vmax.f32 %v4249, %v4924
      %v4952 = vmax.f32 %v4250, %v4925
      %v4953 = vmax.f32 %v4251, %v4926
      %v4954 = vmax.f32 %v4252, %v4927
      %v4955 = vmax.f32 %v4253, %v4928
      %v4956 = vmax.f32 %v4254, %v4929
      %v4957 = vmax.f32 %v4255, %v4930
      %v4958 = vmax.f32 %v4256, %v4931
      %v4959 = vmax.f32 %v4257, %v4932
      %v4960 = vmax.f32 %v4258, %v4933
      %v4961 = vmax.f32 %v4259, %v4934
      %v4962 = vmax.f32 %v4260, %v4935
      %v4963 = vmax.f32 %v4261, %v4936
      %v4964 = vmax.f32 %v4262, %v4937
      %v4965 = vmax.f32 %v4263, %v4938
      %v4966 = vmax.f32 %v4264, %v4939
      %v4967 = vmax.f32 %v4265, %v4940
      %v4968 = vmax.f32 %v4266, %v4941
      %v4969 = vmax.f32 %v4267, %v4942
      %v4970 = vmax.f32 %v4268, %v4943
      %v4971 = vmax.f32 %v4269, %v4944
      %v4972 = vmax.f32 %v4270, %v4945
      %v4973 = vmax.f32 %v4271, %v4946
      %v4974 = vmax.f32 %v4272, %v4947
      %v4975 = vmax.f32 %v4273, %v4948
      %v4976 = vmax.f32 %v4274, %v4949
      %vm4977 = vcmask 261120
      %4978 = vst.msk [vmem:[%s170] sm:$0xff] %vm4977, %v4950
      %4979 = vst.msk [vmem:[%s170 + $0x8] sm:$0xff] %vm4977, %v4951
      %4980 = vst.msk [vmem:[%s170 + $0x10] sm:$0xff] %vm4977, %v4952
      %4981 = vst.msk [vmem:[%s170 + $0x18] sm:$0xff] %vm4977, %v4953
      %4982 = vst.msk [vmem:[%s170 + $0x20] sm:$0xff] %vm4977, %v4954
      %4983 = vst.msk [vmem:[%s170 + $0x28] sm:$0xff] %vm4977, %v4955
      %4984 = vst.msk [vmem:[%s170 + $0x30] sm:$0xff] %vm4977, %v4956
      %4985 = vst.msk [vmem:[%s170 + $0x38] sm:$0xff] %vm4977, %v4957
      %4986 = vst.msk [vmem:[%s170 + $0x40] sm:$0xff] %vm4977, %v4958
      %4987 = vst.msk [vmem:[%s170 + $0x48] sm:$0xff] %vm4977, %v4959
      %4988 = vst.msk [vmem:[%s170 + $0x50] sm:$0xff] %vm4977, %v4960
      %4989 = vst.msk [vmem:[%s170 + $0x58] sm:$0xff] %vm4977, %v4961
      %4990 = vst.msk [vmem:[%s170 + $0x60] sm:$0xff] %vm4977, %v4962
      %4991 = vst.msk [vmem:[%s170 + $0x68] sm:$0xff] %vm4977, %v4963
      %4992 = vst.msk [vmem:[%s170 + $0x70] sm:$0xff] %vm4977, %v4964
      %4993 = vst.msk [vmem:[%s170 + $0x78] sm:$0xff] %vm4977, %v4965
      %4994 = vst.msk [vmem:[%s170 + $0x80] sm:$0xff] %vm4977, %v4966
      %4995 = vst.msk [vmem:[%s170 + $0x88] sm:$0xff] %vm4977, %v4967
      %4996 = vst.msk [vmem:[%s170 + $0x90] sm:$0xff] %vm4977, %v4968
      %4997 = vst.msk [vmem:[%s170 + $0x98] sm:$0xff] %vm4977, %v4969
      %4998 = vst.msk [vmem:[%s170 + $0xa0] sm:$0xff] %vm4977, %v4970
      %4999 = vst.msk [vmem:[%s170 + $0xa8] sm:$0xff] %vm4977, %v4971
      %5000 = vst.msk [vmem:[%s170 + $0xb0] sm:$0xff] %vm4977, %v4972
      %5001 = vst.msk [vmem:[%s170 + $0xb8] sm:$0xff] %vm4977, %v4973
      %5002 = vst.msk [vmem:[%s170 + $0xc0] sm:$0xff] %vm4977, %v4974
      %5003 = vst.msk [vmem:[%s170 + $0xc8] sm:$0xff] %vm4977, %v4975
      %vm5004 = vcmask 254976
      %5005 = vst.msk [vmem:[%s170 + $0xd0] sm:$0x3] %vm5004, %v4976
      %p5006 = scmp.lt.s32.totalorder %s14, 1
      %s5007 = scalar_select %p5006, %s14, 1
      %s5008 = smul.addr %s5007, 27
      %s5009 = smul.addr %s5008, 8
      %s5010 = scalar_lea.vmem %s3, %s5009
      // Predicated region
      $region33: #{net_forward.3} parent=31 // pred_check
        %p5011 = pneg %p100
      $region34: #{net_forward.3} parent=31 // pred_check_branch
        %5013 = sbr.rel (%p5011) target = $region36
      $region35: #{net_forward.3} parent=31 // pred_region
        _
      $region36: #{net_forward.3} parent=31 // pred_fallthru
        _
    $region32: #{net_forward.3} parent=5 // pred_fallthru
      _
    %p5014 = scmp.le.s32.totalorder 2, %s9
    // Predicated region
    $region37: #{net_forward.3} parent=5 // pred_check
      %p5015 = pneg %p5014
    $region38: #{net_forward.3} parent=5 // pred_check_branch
      %5017 = sbr.rel (%p5015) target = $region40
    $region39: #{net_forward.3} parent=5 // pred_region
      %s5018 = ssub.s32 %s9, 2
      // Predicated region
      $region41: #{net_forward.3} parent=39 // pred_check
        %p5019 = pneg %p106
      $region42: #{net_forward.3} parent=39 // pred_check_branch
        %5021 = sbr.rel (%p5019) target = $region44
      $region43: #{net_forward.3} parent=39 // pred_region
        %p5022 = scmp.lt.s32.totalorder %s15, 1
        %s5023 = scalar_select %p5022, %s15, 1
        %s5024 = smul.addr %s5023, 27
        %s5025 = smul.addr %s5024, 8
        %s5026 = scalar_lea.vmem %s3, %s5025
      $region44: #{net_forward.3} parent=39 // pred_fallthru
        _
    $region40: #{net_forward.3} parent=5 // pred_fallthru
      _
  $region6: #{net_forward.3} parent=0 // loop_footer
    %s13 = sadd.s32 1, %s9
  $region7: #{net_forward.3} parent=0 // loop_footer_branch
    %8 = sbr.rel target = $region3
  $region8: #{net_forward.3} parent=0 // loop_exit
    _

// kernel: net_forward.4
$region0: #{net_forward.4}
  #allocation0 [shape = 'u32[]', space=smem, size = 0x4, offset = 0x4, fixed_abs, tag = 'smem constant byte address 0x4 - core index']
  #allocation1 [shape = 'u32[144,128]{1,0:T(1,128)}', space=vmem, size = 0x12000, scoped, tag = 'internal scratch']
  %s0 = inlined_call_operand.vmem [shape: f32[2,4,72,32], index: 0, kind: input, shape index: {}]
  %s1 = inlined_call_operand.vmem [shape: f32[9,32,64], index: 1, kind: input, shape index: {}]
  %s2 = inlined_call_operand.vmem [shape: f32[1,64], index: 2, kind: input, shape index: {}]
  %s3 = inlined_call_operand.vmem [shape: f32[2,56,64], index: 3, kind: output, shape index: {}]
  %s4 = sld [smem:[#allocation0]]
  $region45: #{net_forward.4} parent=0
    _
  %s6 = ssub.s32 1, %s4
  %s7 = scalar_select 0, %s6, %s4
  loop: start=0, step=1, limit=4
  $region2: #{net_forward.4} parent=0 // loop_pre_header
    _
  $region3: #{net_forward.4} parent=0 // loop_header
    %s9 = sphi 0, %s13
    %p10 = scmp.ge.s32.totalorder %s9, 4
    %s19 = sphi 0, %s21
    %s22 = sphi 0, %s19
    %s23 = sphi 0, %s22
    %s39 = sphi 0, %s23
    %s43 = sphi 0, %s43
    %s45 = sphi 0, %s43
    %s46 = sphi 0, %s45
    %s60 = sphi 0, %s46
    %s64 = sphi 0, %s64
    %s66 = sphi 0, %s64
    %s67 = sphi 0, %s66
    %s81 = sphi 0, %s67
    %s87 = sphi 0, %s89
    %s90 = sphi 0, %s87
    %s91 = sphi 0, %s90
    %s107 = sphi 0, %s91
  $region4: #{net_forward.4} parent=0 // loop_header_branch
    %12 = sbr.rel (%p10) target = $region8
  $region5: #{net_forward.4} parent=0 // loop_body
    %s14 = ssub.s32 %s9, 1
    %s15 = ssub.s32 %s9, 2
    %s16 = sadd.s32 %s9, 1
    %s17 = ssub.s32 %s9, %s16
    %p18 = scmp.eq.s32.totalorder %s17, 0
    %s20 = sadd.s32 %s19, 1
    %s21 = scalar_select %p18, %s19, %s20
    %p24 = pneg %p18
    %p25 = scmp.eq.s32.totalorder %s9, 1
    %p26 = por %p24, %p25
    %p27 = scmp.ne.s32.totalorder %s19, %s22
    %p28 = scmp.eq.s32.totalorder %s9, 0
    %p29 = por %p27, %p28
    %p30 = scmp.ne.s32.totalorder %s19, %s22
    %p31 = scmp.eq.s32.totalorder %s14, 1
    %p32 = por %p30, %p31
    %p33 = scmp.ne.s32.totalorder %s22, %s23
    %p34 = scmp.eq.s32.totalorder %s14, 0
    %p35 = por %p33, %p34
    %p36 = scmp.ne.s32.totalorder %s22, %s23
    %p37 = scmp.eq.s32.totalorder %s15, 1
    %p38 = por %p36, %p37
    %p40 = scmp.ne.s32.totalorder %s23, %s39
    %p41 = scmp.eq.s32.totalorder %s15, 0
    %p42 = por %p40, %p41
    %s44 = sadd.s32 %s43, 1
    %p47 = scmp.eq.s32.totalorder %s9, 1
    %p48 = scmp.ne.s32.totalorder %s43, %s45
    %p49 = scmp.eq.s32.totalorder %s9, 0
    %p50 = por %p48, %p49
    %p51 = scmp.ne.s32.totalorder %s43, %s45
    %p52 = scmp.eq.s32.totalorder %s14, 1
    %p53 = por %p51, %p52
    %p54 = scmp.ne.s32.totalorder %s45, %s46
    %p55 = scmp.eq.s32.totalorder %s14, 0
    %p56 = por %p54, %p55
    %p57 = scmp.ne.s32.totalorder %s45, %s46
    %p58 = scmp.eq.s32.totalorder %s15, 1
    %p59 = por %p57, %p58
    %p61 = scmp.ne.s32.totalorder %s46, %s60
    %p62 = scmp.eq.s32.totalorder %s15, 0
    %p63 = por %p61, %p62
    %s65 = sadd.s32 %s64, 1
    %p68 = scmp.eq.s32.totalorder %s9, 1
    %p69 = scmp.ne.s32.totalorder %s64, %s66
    %p70 = scmp.eq.s32.totalorder %s9, 0
    %p71 = por %p69, %p70
    %p72 = scmp.ne.s32.totalorder %s64, %s66
    %p73 = scmp.eq.s32.totalorder %s14, 1
    %p74 = por %p72, %p73
    %p75 = scmp.ne.s32.totalorder %s66, %s67
    %p76 = scmp.eq.s32.totalorder %s14, 0
    %p77 = por %p75, %p76
    %p78 = scmp.ne.s32.totalorder %s66, %s67
    %p79 = scmp.eq.s32.totalorder %s15, 1
    %p80 = por %p78, %p79
    %p82 = scmp.ne.s32.totalorder %s67, %s81
    %p83 = scmp.eq.s32.totalorder %s15, 0
    %p84 = por %p82, %p83
    %s85 = ssub.s32 %s9, %s16
    %p86 = scmp.eq.s32.totalorder %s85, 0
    %s88 = sadd.s32 %s87, 1
    %s89 = scalar_select %p86, %s87, %s88
    %p92 = pneg %p86
    %p93 = scmp.eq.s32.totalorder %s9, 1
    %p94 = por %p92, %p93
    %p95 = scmp.ne.s32.totalorder %s87, %s90
    %p96 = scmp.eq.s32.totalorder %s9, 0
    %p97 = por %p95, %p96
    %p98 = scmp.ne.s32.totalorder %s87, %s90
    %p99 = scmp.eq.s32.totalorder %s14, 1
    %p100 = por %p98, %p99
    %p101 = scmp.ne.s32.totalorder %s90, %s91
    %p102 = scmp.eq.s32.totalorder %s14, 0
    %p103 = por %p101, %p102
    %p104 = scmp.ne.s32.totalorder %s90, %s91
    %p105 = scmp.eq.s32.totalorder %s15, 1
    %p106 = por %p104, %p105
    %p108 = scmp.ne.s32.totalorder %s91, %s107
    %p109 = scmp.eq.s32.totalorder %s15, 0
    %p110 = por %p108, %p109
    %p111 = scmp.le.s32.totalorder 1, %s9
    %p112 = scmp.lt.s32.totalorder %s9, 3
    %p113 = pnand %p111, %p112
    %p114 = pneg %p113
    // Predicated region
    $region9: #{net_forward.4} parent=5 // pred_check
      _
    $region10: #{net_forward.4} parent=5 // pred_check_branch
      %116 = sbr.rel (%p113) target = $region12
    $region11: #{net_forward.4} parent=5 // pred_region
      %s117 = ssub.s32 %s9, 1
      // Predicated region
      $region13: #{net_forward.4} parent=11 // pred_check
        %p118 = pneg %p56
      $region14: #{net_forward.4} parent=11 // pred_check_branch
        %120 = sbr.rel (%p118) target = $region16
      $region15: #{net_forward.4} parent=11 // pred_region
        _
      $region16: #{net_forward.4} parent=11 // pred_fallthru
        _
      // Predicated region
      $region17: #{net_forward.4} parent=11 // pred_check
        %p121 = pneg %p77
      $region18: #{net_forward.4} parent=11 // pred_check_branch
        %123 = sbr.rel (%p121) target = $region20
      $region19: #{net_forward.4} parent=11 // pred_region
        _
      $region20: #{net_forward.4} parent=11 // pred_fallthru
        _
    $region12: #{net_forward.4} parent=5 // pred_fallthru
      _
    %p124 = scmp.lt.s32.totalorder %s9, 2
    // Predicated region
    $region21: #{net_forward.4} parent=5 // pred_check
      %p125 = pneg %p124
    $region22: #{net_forward.4} parent=5 // pred_check_branch
      %127 = sbr.rel (%p125) target = $region24
    $region23: #{net_forward.4} parent=5 // pred_region
      // Predicated region
      $region25: #{net_forward.4} parent=23 // pred_check
        %p128 = pneg %p29
      $region26: #{net_forward.4} parent=23 // pred_check_branch
        %130 = sbr.rel (%p128) target = $region28
      $region27: #{net_forward.4} parent=23 // pred_region
        %p131 = scmp.lt.s32.totalorder %s9, 1
        %s132 = scalar_select %p131, %s9, 1
        %s133 = smul.addr %s132, 36
        %s134 = smul.addr %s133, 8
        %s135 = scalar_lea.vmem %s0, %s134
      $region28: #{net_forward.4} parent=23 // pred_fallthru
        _
    $region24: #{net_forward.4} parent=5 // pred_fallthru
      _
    %p136 = scmp.le.s32.totalorder 1, %s9
    %p137 = scmp.lt.s32.totalorder %s9, 3
    %p138 = pnand %p136, %p137
    %p139 = pneg %p138
    // Predicated region
    $region29: #{net_forward.4} parent=5 // pred_check
      _
    $region30: #{net_forward.4} parent=5 // pred_check_branch
      %141 = sbr.rel (%p138) target = $region32
    $region31: #{net_forward.4} parent=5 // pred_region
      %s142 = ssub.s32 %s9, 1
      %p143 = scmp.lt.s32.totalorder %s14, 1
      %s144 = scalar_select %p143, %s14, 1
      %s145 = smul.addr %s144, 36
      %s146 = smul.addr %s145, 8
      %s147 = scalar_lea.vmem %s0, %s146
      %p148 = pneg %p35
      %p149 = pneg %p32
      %p150 = pneg %p56
      %p151 = pneg %p53
      %p152 = pneg %p77
      %p153 = pneg %p74
      %p154 = pneg %p103
      %p155 = pneg %p100
      %p156 = scmp.lt.s32.totalorder %s14, 1
      %s157 = scalar_select %p156, %s14, 1
      %s158 = smul.addr %s157, 7
      %s159 = smul.addr %s158, 8
      %s160 = scalar_lea.vmem %s3, %s159
      %p161 = scmp.lt.s32.totalorder %s14, 1
      %s162 = scalar_select %p161, %s14, 1
      %s163 = smul.addr %s162, 36
      %s164 = smul.addr %s163, 8
      %s165 = scalar_lea.vmem %s0, %s164
      %p166 = scmp.lt.s32.totalorder %s14, 1
      %s167 = scalar_select %p166, %s14, 1
      %s168 = smul.addr %s167, 7
      %s169 = smul.addr %s168, 8
      %s170 = scalar_lea.vmem %s3, %s169
      %v171 = vld [vmem:[%s165] sm:$0xff]
      %v172 = vld [vmem:[%s165 + $0x8] sm:$0xff]
      %v173 = vld [vmem:[%s165 + $0x10] sm:$0xff]
      %v174 = vld [vmem:[%s165 + $0x18] sm:$0xff]
      %v175 = vld [vmem:[%s165 + $0x20] sm:$0xff]
      %v176 = vld [vmem:[%s165 + $0x28] sm:$0xff]
      %v177 = vld [vmem:[%s165 + $0x30] sm:$0xff]
      %v178 = vld [vmem:[%s1] sm:$0xff]
      %v179 = vld [vmem:[%s1 + $0x8] sm:$0xff]
      %v180 = vld [vmem:[%s1 + $0x10] sm:$0xff]
      %v181 = vld [vmem:[%s1 + $0x18] sm:$0xff]
      %s182 = scalar_lea.vmem %s165, 72
      %v183 = vld [vmem:[%s182] sm:$0xff]
      %v184 = vld [vmem:[%s182 + $0x8] sm:$0xff]
      %v185 = vld [vmem:[%s182 + $0x10] sm:$0xff]
      %v186 = vld [vmem:[%s182 + $0x18] sm:$0xff]
      %v187 = vld [vmem:[%s182 + $0x20] sm:$0xff]
      %v188 = vld [vmem:[%s182 + $0x28] sm:$0xff]
      %v189 = vld [vmem:[%s182 + $0x30] sm:$0xff]
      %s190 = scalar_lea.vmem %s1, 32
      %v191 = vld [vmem:[%s190] sm:$0xff]
      %v192 = vld [vmem:[%s190 + $0x8] sm:$0xff]
      %v193 = vld [vmem:[%s190 + $0x10] sm:$0xff]
      %v194 = vld [vmem:[%s190 + $0x18] sm:$0xff]
      %vm195 = vcmask 261120
      %v197 = vsel %vm195, %v183, 0
      %v200 = vsel %vm195, %v184, 0
      %v203 = vsel %vm195, %v185, 0
      %v206 = vsel %vm195, %v186, 0
      %v209 = vsel %vm195, %v187, 0
      %v212 = vsel %vm195, %v188, 0
      %v215 = vsel %vm195, %v189, 0
      %217 = vmatprep.subr.mxu0 0.0
      %218 = vmatpush1.msra.mxu0 %v191
      %219 = vmatprep.subr.mxu0 0.0
      %220 = vmatpush1.msra.mxu0 %v192
      %221 = vmatprep.subr.mxu0 0.0
      %222 = vmatpush1.msra.mxu0 %v193
      %223 = vmatprep.subr.mxu0 0.0
      %224 = vmatpush1.msra.mxu0 %v194
      %225 = vmatprep.subr.mxu0 0.0
      %226 = vmatpush1.msra.mxu0 0.0
      %227 = vmatprep.subr.mxu0 0.0
      %228 = vmatpush1.msra.mxu0 0.0
      %229 = vmatprep.subr.mxu0 0.0
      %230 = vmatpush1.msra.mxu0 0.0
      %231 = vmatprep.subr.mxu0 0.0
      %232 = vmatpush1.msra.mxu0 0.0
      %233 = vmatprep.subr.mxu0 0.0
      %234 = vmatpush1.msra.mxu0 0.0
      %235 = vmatprep.subr.mxu0 0.0
      %236 = vmatpush1.msra.mxu0 0.0
      %237 = vmatprep.subr.mxu0 0.0
      %238 = vmatpush1.msra.mxu0 0.0
      %239 = vmatprep.subr.mxu0 0.0
      %240 = vmatpush1.msra.mxu0 0.0
      %241 = vmatprep.subr.mxu0 0.0
      %242 = vmatpush1.msra.mxu0 0.0
      %243 = vmatprep.subr.mxu0 0.0
      %244 = vmatpush1.msra.mxu0 0.0
      %245 = vmatprep.subr.mxu0 0.0
      %246 = vmatpush1.msra.mxu0 0.0
      %247 = vmatprep.subr.mxu0 0.0
      %248 = vmatpush1.msra.mxu0 0.0
      %249 = vmatprep.subr.mxu0 0.0
      %250 = vmatpush1.msra.mxu0 0.0
      %251 = vmatprep.subr.mxu0 0.0
      %252 = vmatpush1.msra.mxu0 0.0
      %253 = vmatprep.subr.mxu0 0.0
      %254 = vmatpush1.msra.mxu0 0.0
      %255 = vmatprep.subr.mxu0 0.0
      %256 = vmatpush1.msra.mxu0 0.0
      %257 = vmatprep.subr.mxu0 0.0
      %258 = vmatpush1.msra.mxu0 0.0
      %259 = vmatprep.subr.mxu0 0.0
      %260 = vmatpush1.msra.mxu0 0.0
      %261 = vmatprep.subr.mxu0 0.0
      %262 = vmatpush1.msra.mxu0 0.0
      %263 = vmatprep.subr.mxu0 0.0
      %264 = vmatpush1.msra.mxu0 0.0
      %265 = vmatprep.subr.mxu0 0.0
      %266 = vmatpush1.msra.mxu0 0.0
      %267 = vmatprep.subr.mxu0 0.0
      %268 = vmatpush1.msra.mxu0 0.0
      %269 = vmatprep.subr.mxu0 0.0
      %270 = vmatpush1.msra.mxu0 0.0
      %271 = vmatprep.subr.mxu0 0.0
      %272 = vmatpush1.msra.mxu0 0.0
      %273 = vmatprep.subr.mxu0 0.0
      %274 = vmatpush1.msra.mxu0 0.0
      %275 = vmatprep.subr.mxu0 0.0
      %276 = vmatpush1.msra.mxu0 0.0
      %277 = vmatprep.subr.mxu0 0.0
      %278 = vmatpush1.msra.mxu0 0.0
      %279 = vmatprep.subr.mxu0 0.0
      %280 = vmatpush1.msra.mxu0 0.0
      %281 = vmatprep.mubr.f32.mxu0 0.0
      %282 = vmatmul.mubr.f32.gmra.mrb[0].mxu0 %v197
      %v283 = vpop.f32.mrb[0].mxu0
      %v284 = vadd.f32 0.0, %v283
      %v285 = vpop.f32.mrb[0].mxu0
      %286 = vmatprep.mubr.f32.mxu0 0.0
      %287 = vmatmul.mubr.f32.gmra.mrb[0].mxu0 %v200
      %v288 = vpop.f32.mrb[0].mxu0
      %v289 = vadd.f32 0.0, %v288
      %v290 = vpop.f32.mrb[0].mxu0
      %291 = vmatprep.mubr.f32.mxu0 0.0
      %292 = vmatmul.mubr.f32.gmra.mrb[0].mxu0 %v203
      %v293 = vpop.f32.mrb[0].mxu0
      %v294 = vadd.f32 0.0, %v293
      %v295 = vpop.f32.mrb[0].mxu0
      %296 = vmatprep.mubr.f32.mxu0 0.0
      %297 = vmatmul.mubr.f32.gmra.mrb[0].mxu0 %v206
      %v298 = vpop.f32.mrb[0].mxu0
      %v299 = vadd.f32 0.0, %v298
      %v300 = vpop.f32.mrb[0].mxu0
      %301 = vmatprep.mubr.f32.mxu0 0.0
      %302 = vmatmul.mubr.f32.gmra.mrb[0].mxu0 %v209
      %v303 = vpop.f32.mrb[0].mxu0
      %v304 = vadd.f32 0.0, %v303
      %v305 = vpop.f32.mrb[0].mxu0
      %306 = vmatprep.mubr.f32.mxu0 0.0
      %307 = vmatmul.mubr.f32.gmra.mrb[0].mxu0 %v212
      %v308 = vpop.f32.mrb[0].mxu0
      %v309 = vadd.f32 0.0, %v308
      %v310 = vpop.f32.mrb[0].mxu0
      %311 = vmatprep.mubr.f32.mxu0 0.0
      %312 = vmatmul.mubr.f32.gmra.mrb[0].mxu0 %v215
      %v313 = vpop.f32.mrb[0].mxu0
      %v314 = vadd.f32 0.0, %v313
      %v315 = vpop.f32.mrb[0].mxu0
      %316 = vdwg.mxu0
      %v318 = vsel %vm195, %v171, 0
      %v321 = vsel %vm195, %v172, 0
      %v324 = vsel %vm195, %v173, 0
      %v327 = vsel %vm195, %v174, 0
      %v330 = vsel %vm195, %v175, 0
      %v333 = vsel %vm195, %v176, 0
      %v336 = vsel %vm195, %v177, 0
      %338 = vmatprep.subr.mxu0 0.0
      %339 = vmatpush1.msra.mxu0 %v178
      %340 = vmatprep.subr.mxu0 0.0
      %341 = vmatpush1.msra.mxu0 %v179
      %342 = vmatprep.subr.mxu0 0.0
      %343 = vmatpush1.msra.mxu0 %v180
      %344 = vmatprep.subr.mxu0 0.0
      %345 = vmatpush1.msra.mxu0 %v181
      %346 = vmatprep.subr.mxu0 0.0
      %347 = vmatpush1.msra.mxu0 0.0
      %348 = vmatprep.subr.mxu0 0.0
      %349 = vmatpush1.msra.mxu0 0.0
      %350 = vmatprep.subr.mxu0 0.0
      %351 = vmatpush1.msra.mxu0 0.0
      %352 = vmatprep.subr.mxu0 0.0
      %353 = vmatpush1.msra.mxu0 0.0
      %354 = vmatprep.subr.mxu0 0.0
      %355 = vmatpush1.msra.mxu0 0.0
      %356 = vmatprep.subr.mxu0 0.0
      %357 = vmatpush1.msra.mxu0 0.0
      %358 = vmatprep.subr.mxu0 0.0
      %359 = vmatpush1.msra.mxu0 0.0
      %360 = vmatprep.subr.mxu0 0.0
      %361 = vmatpush1.msra.mxu0 0.0
      %362 = vmatprep.subr.mxu0 0.0
      %363 = vmatpush1.msra.mxu0 0.0
      %364 = vmatprep.subr.mxu0 0.0
      %365 = vmatpush1.msra.mxu0 0.0
      %366 = vmatprep.subr.mxu0 0.0
      %367 = vmatpush1.msra.mxu0 0.0
      %368 = vmatprep.subr.mxu0 0.0
      %369 = vmatpush1.msra.mxu0 0.0
      %370 = vmatprep.subr.mxu0 0.0
      %371 = vmatpush1.msra.mxu0 0.0
      %372 = vmatprep.subr.mxu0 0.0
      %373 = vmatpush1.msra.mxu0 0.0
      %374 = vmatprep.subr.mxu0 0.0
      %375 = vmatpush1.msra.mxu0 0.0
      %376 = vmatprep.subr.mxu0 0.0
      %377 = vmatpush1.msra.mxu0 0.0
      %378 = vmatprep.subr.mxu0 0.0
      %379 = vmatpush1.msra.mxu0 0.0
      %380 = vmatprep.subr.mxu0 0.0
      %381 = vmatpush1.msra.mxu0 0.0
      %382 = vmatprep.subr.mxu0 0.0
      %383 = vmatpush1.msra.mxu0 0.0
      %384 = vmatprep.subr.mxu0 0.0
      %385 = vmatpush1.msra.mxu0 0.0
      %386 = vmatprep.subr.mxu0 0.0
      %387 = vmatpush1.msra.mxu0 0.0
      %388 = vmatprep.subr.mxu0 0.0
      %389 = vmatpush1.msra.mxu0 0.0
      %390 = vmatprep.subr.mxu0 0.0
      %391 = vmatpush1.msra.mxu0 0.0
      %392 = vmatprep.subr.mxu0 0.0
      %393 = vmatpush1.msra.mxu0 0.0
      %394 = vmatprep.subr.mxu0 0.0
      %395 = vmatpush1.msra.mxu0 0.0
      %396 = vmatprep.subr.mxu0 0.0
      %397 = vmatpush1.msra.mxu0 0.0
      %398 = vmatprep.subr.mxu0 0.0
      %399 = vmatpush1.msra.mxu0 0.0
      %400 = vmatprep.subr.mxu0 0.0
      %401 = vmatpush1.msra.mxu0 0.0
      %402 = vmatprep.mubr.f32.mxu0 0.0
      %403 = vmatmul.mubr.f32.gmra.mrb[0].mxu0 %v318
      %v404 = vpop.f32.mrb[0].mxu0
      %v405 = vadd.f32 %v284, %v404
      %v406 = vpop.f32.mrb[0].mxu0
      %407 = vmatprep.mubr.f32.mxu0 0.0
      %408 = vmatmul.mubr.f32.gmra.mrb[0].mxu0 %v321
      %v409 = vpop.f32.mrb[0].mxu0
      %v410 = vadd.f32 %v289, %v409
      %v411 = vpop.f32.mrb[0].mxu0
      %412 = vmatprep.mubr.f32.mxu0 0.0
      %413 = vmatmul.mubr.f32.gmra.mrb[0].mxu0 %v324
      %v414 = vpop.f32.mrb[0].mxu0
      %v415 = vadd.f32 %v294, %v414
      %v416 = vpop.f32.mrb[0].mxu0
      %417 = vmatprep.mubr.f32.mxu0 0.0
      %418 = vmatmul.mubr.f32.gmra.mrb[0].mxu0 %v327
      %v419 = vpop.f32.mrb[0].mxu0
      %v420 = vadd.f32 %v299, %v419
      %v421 = vpop.f32.mrb[0].mxu0
      %422 = vmatprep.mubr.f32.mxu0 0.0
      %423 = vmatmul.mubr.f32.gmra.mrb[0].mxu0 %v330
      %v424 = vpop.f32.mrb[0].mxu0
      %v425 = vadd.f32 %v304, %v424
      %v426 = vpop.f32.mrb[0].mxu0
      %427 = vmatprep.mubr.f32.mxu0 0.0
      %428 = vmatmul.mubr.f32.gmra.mrb[0].mxu0 %v333
      %v429 = vpop.f32.mrb[0].mxu0
      %v430 = vadd.f32 %v309, %v429
      %v431 = vpop.f32.mrb[0].mxu0
      %432 = vmatprep.mubr.f32.mxu0 0.0
      %433 = vmatmul.mubr.f32.gmra.mrb[0].mxu0 %v336
      %v434 = vpop.f32.mrb[0].mxu0
      %v435 = vadd.f32 %v314, %v434
      %v436 = vpop.f32.mrb[0].mxu0
      %437 = vdwg.mxu0
      %v438 = vld [vmem:[%s165 + $0x1] sm:$0xff]
      %v439 = vld [vmem:[%s165 + $0x9] sm:$0xff]
      %v440 = vld [vmem:[%s165 + $0x11] sm:$0xff]
      %v441 = vld [vmem:[%s165 + $0x19] sm:$0xff]
      %v442 = vld [vmem:[%s165 + $0x21] sm:$0xff]
      %v443 = vld [vmem:[%s165 + $0x29] sm:$0xff]
      %v444 = vld [vmem:[%s165 + $0x31] sm:$0xff]
      %s445 = scalar_lea.vmem %s1, 64
      %v446 = vld [vmem:[%s445] sm:$0xff]
      %v447 = vld [vmem:[%s445 + $0x8] sm:$0xff]
      %v448 = vld [vmem:[%s445 + $0x10] sm:$0xff]
      %v449 = vld [vmem:[%s445 + $0x18] sm:$0xff]
      %v451 = vsel %vm195, %v438, 0
      %v454 = vsel %vm195, %v439, 0
      %v457 = vsel %vm195, %v440, 0
      %v460 = vsel %vm195, %v441, 0
      %v463 = vsel %vm195, %v442, 0
      %v466 = vsel %vm195, %v443, 0
      %v469 = vsel %vm195, %v444, 0
      %471 = vmatprep.subr.mxu0 0.0
      %472 = vmatpush1.msra.mxu0 %v446
      %473 = vmatprep.subr.mxu0 0.0
      %474 = vmatpush1.msra.mxu0 %v447
      %475 = vmatprep.subr.mxu0 0.0
      %476 = vmatpush1.msra.mxu0 %v448
      %477 = vmatprep.subr.mxu0 0.0
      %478 = vmatpush1.msra.mxu0 %v449
      %479 = vmatprep.subr.mxu0 0.0
      %480 = vmatpush1.msra.mxu0 0.0
      %481 = vmatprep.subr.mxu0 0.0
      %482 = vmatpush1.msra.mxu0 0.0
      %483 = vmatprep.subr.mxu0 0.0
      %484 = vmatpush1.msra.mxu0 0.0
      %485 = vmatprep.subr.mxu0 0.0
      %486 = vmatpush1.msra.mxu0 0.0
      %487 = vmatprep.subr.mxu0 0.0
      %488 = vmatpush1.msra.mxu0 0.0
      %489 = vmatprep.subr.mxu0 0.0
      %490 = vmatpush1.msra.mxu0 0.0
      %491 = vmatprep.subr.mxu0 0.0
      %492 = vmatpush1.msra.mxu0 0.0
      %493 = vmatprep.subr.mxu0 0.0
      %494 = vmatpush1.msra.mxu0 0.0
      %495 = vmatprep.subr.mxu0 0.0
      %496 = vmatpush1.msra.mxu0 0.0
      %497 = vmatprep.subr.mxu0 0.0
      %498 = vmatpush1.msra.mxu0 0.0
      %499 = vmatprep.subr.mxu0 0.0
      %500 = vmatpush1.msra.mxu0 0.0
      %501 = vmatprep.subr.mxu0 0.0
      %502 = vmatpush1.msra.mxu0 0.0
      %503 = vmatprep.subr.mxu0 0.0
      %504 = vmatpush1.msra.mxu0 0.0
      %505 = vmatprep.subr.mxu0 0.0
      %506 = vmatpush1.msra.mxu0 0.0
      %507 = vmatprep.subr.mxu0 0.0
      %508 = vmatpush1.msra.mxu0 0.0
      %509 = vmatprep.subr.mxu0 0.0
      %510 = vmatpush1.msra.mxu0 0.0
      %511 = vmatprep.subr.mxu0 0.0
      %512 = vmatpush1.msra.mxu0 0.0
      %513 = vmatprep.subr.mxu0 0.0
      %514 = vmatpush1.msra.mxu0 0.0
      %515 = vmatprep.subr.mxu0 0.0
      %516 = vmatpush1.msra.mxu0 0.0
      %517 = vmatprep.subr.mxu0 0.0
      %518 = vmatpush1.msra.mxu0 0.0
      %519 = vmatprep.subr.mxu0 0.0
      %520 = vmatpush1.msra.mxu0 0.0
      %521 = vmatprep.subr.mxu0 0.0
      %522 = vmatpush1.msra.mxu0 0.0
      %523 = vmatprep.subr.mxu0 0.0
      %524 = vmatpush1.msra.mxu0 0.0
      %525 = vmatprep.subr.mxu0 0.0
      %526 = vmatpush1.msra.mxu0 0.0
      %527 = vmatprep.subr.mxu0 0.0
      %528 = vmatpush1.msra.mxu0 0.0
      %529 = vmatprep.subr.mxu0 0.0
      %530 = vmatpush1.msra.mxu0 0.0
      %531 = vmatprep.subr.mxu0 0.0
      %532 = vmatpush1.msra.mxu0 0.0
      %533 = vmatprep.subr.mxu0 0.0
      %534 = vmatpush1.msra.mxu0 0.0
      %535 = vmatprep.mubr.f32.mxu0 0.0
      %536 = vmatmul.mubr.f32.gmra.mrb[0].mxu0 %v451
      %v537 = vpop.f32.mrb[0].mxu0
      %v538 = vadd.f32 0.0, %v537
      %v539 = vpop.f32.mrb[0].mxu0
      %540 = vmatprep.mubr.f32.mxu0 0.0
      %541 = vmatmul.mubr.f32.gmra.mrb[0].mxu0 %v454
      %v542 = vpop.f32.mrb[0].mxu0
      %v543 = vadd.f32 0.0, %v542
      %v544 = vpop.f32.mrb[0].mxu0
      %545 = vmatprep.mubr.f32.mxu0 0.0
      %546 = vmatmul.mubr.f32.gmra.mrb[0].mxu0 %v457
      %v547 = vpop.f32.mrb[0].mxu0
      %v548 = vadd.f32 0.0, %v547
      %v549 = vpop.f32.mrb[0].mxu0
      %550 = vmatprep.mubr.f32.mxu0 0.0
      %551 = vmatmul.mubr.f32.gmra.mrb[0].mxu0 %v460
      %v552 = vpop.f32.mrb[0].mxu0
      %v553 = vadd.f32 0.0, %v552
      %v554 = vpop.f32.mrb[0].mxu0
      %555 = vmatprep.mubr.f32.mxu0 0.0
      %556 = vmatmul.mubr.f32.gmra.mrb[0].mxu0 %v463
      %v557 = vpop.f32.mrb[0].mxu0
      %v558 = vadd.f32 0.0, %v557
      %v559 = vpop.f32.mrb[0].mxu0
      %560 = vmatprep.mubr.f32.mxu0 0.0
      %561 = vmatmul.mubr.f32.gmra.mrb[0].mxu0 %v466
      %v562 = vpop.f32.mrb[0].mxu0
      %v563 = vadd.f32 0.0, %v562
      %v564 = vpop.f32.mrb[0].mxu0
      %565 = vmatprep.mubr.f32.mxu0 0.0
      %566 = vmatmul.mubr.f32.gmra.mrb[0].mxu0 %v469
      %v567 = vpop.f32.mrb[0].mxu0
      %v568 = vadd.f32 0.0, %v567
      %v569 = vpop.f32.mrb[0].mxu0
      %570 = vdwg.mxu0
      %v571 = vadd.f32 %v405, %v538
      %v572 = vadd.f32 %v410, %v543
      %v573 = vadd.f32 %v415, %v548
      %v574 = vadd.f32 %v420, %v553
      %v575 = vadd.f32 %v425, %v558
      %v576 = vadd.f32 %v430, %v563
      %v577 = vadd.f32 %v435, %v568
      %s578 = scalar_lea.vmem %s165, 144
      %v579 = vld [vmem:[%s578] sm:$0xff]
      %v580 = vld [vmem:[%s578 + $0x8] sm:$0xff]
      %v581 = vld [vmem:[%s578 + $0x10] sm:$0xff]
      %v582 = vld [vmem:[%s578 + $0x18] sm:$0xff]
      %v583 = vld [vmem:[%s578 + $0x20] sm:$0xff]
      %v584 = vld [vmem:[%s578 + $0x28] sm:$0xff]
      %v585 = vld [vmem:[%s578 + $0x30] sm:$0xff]
      %s586 = scalar_lea.vmem %s1, 96
      %v587 = vld [vmem:[%s586] sm:$0xff]
      %v588 = vld [vmem:[%s586 + $0x8] sm:$0xff]
      %v589 = vld [vmem:[%s586 + $0x10] sm:$0xff]
      %v590 = vld [vmem:[%s586 + $0x18] sm:$0xff]
      %v592 = vsel %vm195, %v579, 0
      %v595 = vsel %vm195, %v580, 0
      %v598 = vsel %vm195, %v581, 0
      %v601 = vsel %vm195, %v582, 0
      %v604 = vsel %vm195, %v583, 0
      %v607 = vsel %vm195, %v584, 0
      %v610 = vsel %vm195, %v585, 0
      %612 = vmatprep.subr.mxu0 0.0
      %613 = vmatpush1.msra.mxu0 %v587
      %614 = vmatprep.subr.mxu0 0.0
      %615 = vmatpush1.msra.mxu0 %v588
      %616 = vmatprep.subr.mxu0 0.0
      %617 = vmatpush1.msra.mxu0 %v589
      %618 = vmatprep.subr.mxu0 0.0
      %619 = vmatpush1.msra.mxu0 %v590
      %620 = vmatprep.subr.mxu0 0.0
      %621 = vmatpush1.msra.mxu0 0.0
      %622 = vmatprep.subr.mxu0 0.0
      %623 = vmatpush1.msra.mxu0 0.0
      %624 = vmatprep.subr.mxu0 0.0
      %625 = vmatpush1.msra.mxu0 0.0
      %626 = vmatprep.subr.mxu0 0.0
      %627 = vmatpush1.msra.mxu0 0.0
      %628 = vmatprep.subr.mxu0 0.0
      %629 = vmatpush1.msra.mxu0 0.0
      %630 = vmatprep.subr.mxu0 0.0
      %631 = vmatpush1.msra.mxu0 0.0
      %632 = vmatprep.subr.mxu0 0.0
      %633 = vmatpush1.msra.mxu0 0.0
      %634 = vmatprep.subr.mxu0 0.0
      %635 = vmatpush1.msra.mxu0 0.0
      %636 = vmatprep.subr.mxu0 0.0
      %637 = vmatpush1.msra.mxu0 0.0
      %638 = vmatprep.subr.mxu0 0.0
      %639 = vmatpush1.msra.mxu0 0.0
      %640 = vmatprep.subr.mxu0 0.0
      %641 = vmatpush1.msra.mxu0 0.0
      %642 = vmatprep.subr.mxu0 0.0
      %643 = vmatpush1.msra.mxu0 0.0
      %644 = vmatprep.subr.mxu0 0.0
      %645 = vmatpush1.msra.mxu0 0.0
      %646 = vmatprep.subr.mxu0 0.0
      %647 = vmatpush1.msra.mxu0 0.0
      %648 = vmatprep.subr.mxu0 0.0
      %649 = vmatpush1.msra.mxu0 0.0
      %650 = vmatprep.subr.mxu0 0.0
      %651 = vmatpush1.msra.mxu0 0.0
      %652 = vmatprep.subr.mxu0 0.0
      %653 = vmatpush1.msra.mxu0 0.0
      %654 = vmatprep.subr.mxu0 0.0
      %655 = vmatpush1.msra.mxu0 0.0
      %656 = vmatprep.subr.mxu0 0.0
      %657 = vmatpush1.msra.mxu0 0.0
      %658 = vmatprep.subr.mxu0 0.0
      %659 = vmatpush1.msra.mxu0 0.0
      %660 = vmatprep.subr.mxu0 0.0
      %661 = vmatpush1.msra.mxu0 0.0
      %662 = vmatprep.subr.mxu0 0.0
      %663 = vmatpush1.msra.mxu0 0.0
      %664 = vmatprep.subr.mxu0 0.0
      %665 = vmatpush1.msra.mxu0 0.0
      %666 = vmatprep.subr.mxu0 0.0
      %667 = vmatpush1.msra.mxu0 0.0
      %668 = vmatprep.subr.mxu0 0.0
      %669 = vmatpush1.msra.mxu0 0.0
      %670 = vmatprep.subr.mxu0 0.0
      %671 = vmatpush1.msra.mxu0 0.0
      %672 = vmatprep.subr.mxu0 0.0
      %673 = vmatpush1.msra.mxu0 0.0
      %674 = vmatprep.subr.mxu0 0.0
      %675 = vmatpush1.msra.mxu0 0.0
      %676 = vmatprep.mubr.f32.mxu0 0.0
      %677 = vmatmul.mubr.f32.gmra.mrb[0].mxu0 %v592
      %v678 = vpop.f32.mrb[0].mxu0
      %v679 = vadd.f32 0.0, %v678
      %v680 = vpop.f32.mrb[0].mxu0
      %681 = vmatprep.mubr.f32.mxu0 0.0
      %682 = vmatmul.mubr.f32.gmra.mrb[0].mxu0 %v595
      %v683 = vpop.f32.mrb[0].mxu0
      %v684 = vadd.f32 0.0, %v683
      %v685 = vpop.f32.mrb[0].mxu0
      %686 = vmatprep.mubr.f32.mxu0 0.0
      %687 = vmatmul.mubr.f32.gmra.mrb[0].mxu0 %v598
      %v688 = vpop.f32.mrb[0].mxu0
      %v689 = vadd.f32 0.0, %v688
      %v690 = vpop.f32.mrb[0].mxu0
      %691 = vmatprep.mubr.f32.mxu0 0.0
      %692 = vmatmul.mubr.f32.gmra.mrb[0].mxu0 %v601
      %v693 = vpop.f32.mrb[0].mxu0
      %v694 = vadd.f32 0.0, %v693
      %v695 = vpop.f32.mrb[0].mxu0
      %696 = vmatprep.mubr.f32.mxu0 0.0
      %697 = vmatmul.mubr.f32.gmra.mrb[0].mxu0 %v604
      %v698 = vpop.f32.mrb[0].mxu0
      %v699 = vadd.f32 0.0, %v698
      %v700 = vpop.f32.mrb[0].mxu0
      %701 = vmatprep.mubr.f32.mxu0 0.0
      %702 = vmatmul.mubr.f32.gmra.mrb[0].mxu0 %v607
      %v703 = vpop.f32.mrb[0].mxu0
      %v704 = vadd.f32 0.0, %v703
      %v705 = vpop.f32.mrb[0].mxu0
      %706 = vmatprep.mubr.f32.mxu0 0.0
      %707 = vmatmul.mubr.f32.gmra.mrb[0].mxu0 %v610
      %v708 = vpop.f32.mrb[0].mxu0
      %v709 = vadd.f32 0.0, %v708
      %v710 = vpop.f32.mrb[0].mxu0
      %711 = vdwg.mxu0
      %v712 = vadd.f32 %v571, %v679
      %v713 = vadd.f32 %v572, %v684
      %v714 = vadd.f32 %v573, %v689
      %v715 = vadd.f32 %v574, %v694
      %v716 = vadd.f32 %v575, %v699
      %v717 = vadd.f32 %v576, %v704
      %v718 = vadd.f32 %v577, %v709
      %s719 = scalar_lea.vmem %s165, 216
      %v720 = vld [vmem:[%s719] sm:$0xff]
      %v721 = vld [vmem:[%s719 + $0x8] sm:$0xff]
      %v722 = vld [vmem:[%s719 + $0x10] sm:$0xff]
      %v723 = vld [vmem:[%s719 + $0x18] sm:$0xff]
      %v724 = vld [vmem:[%s719 + $0x20] sm:$0xff]
      %v725 = vld [vmem:[%s719 + $0x28] sm:$0xff]
      %v726 = vld [vmem:[%s719 + $0x30] sm:$0xff]
      %s727 = scalar_lea.vmem %s1, 128
      %v728 = vld [vmem:[%s727] sm:$0xff]
      %v729 = vld [vmem:[%s727 + $0x8] sm:$0xff]
      %v730 = vld [vmem:[%s727 + $0x10] sm:$0xff]
      %v731 = vld [vmem:[%s727 + $0x18] sm:$0xff]
      %v733 = vsel %vm195, %v720, 0
      %v736 = vsel %vm195, %v721, 0
      %v739 = vsel %vm195, %v722, 0
      %v742 = vsel %vm195, %v723, 0
      %v745 = vsel %vm195, %v724, 0
      %v748 = vsel %vm195, %v725, 0
      %v751 = vsel %vm195, %v726, 0
      %753 = vmatprep.subr.mxu0 0.0
      %754 = vmatpush1.msra.mxu0 %v728
      %755 = vmatprep.subr.mxu0 0.0
      %756 = vmatpush1.msra.mxu0 %v729
      %757 = vmatprep.subr.mxu0 0.0
      %758 = vmatpush1.msra.mxu0 %v730
      %759 = vmatprep.subr.mxu0 0.0
      %760 = vmatpush1.msra.mxu0 %v731
      %761 = vmatprep.subr.mxu0 0.0
      %762 = vmatpush1.msra.mxu0 0.0
      %763 = vmatprep.subr.mxu0 0.0
      %764 = vmatpush1.msra.mxu0 0.0
      %765 = vmatprep.subr.mxu0 0.0
      %766 = vmatpush1.msra.mxu0 0.0
      %767 = vmatprep.subr.mxu0 0.0
      %768 = vmatpush1.msra.mxu0 0.0
      %769 = vmatprep.subr.mxu0 0.0
      %770 = vmatpush1.msra.mxu0 0.0
      %771 = vmatprep.subr.mxu0 0.0
      %772 = vmatpush1.msra.mxu0 0.0
      %773 = vmatprep.subr.mxu0 0.0
      %774 = vmatpush1.msra.mxu0 0.0
      %775 = vmatprep.subr.mxu0 0.0
      %776 = vmatpush1.msra.mxu0 0.0
      %777 = vmatprep.subr.mxu0 0.0
      %778 = vmatpush1.msra.mxu0 0.0
      %779 = vmatprep.subr.mxu0 0.0
      %780 = vmatpush1.msra.mxu0 0.0
      %781 = vmatprep.subr.mxu0 0.0
      %782 = vmatpush1.msra.mxu0 0.0
      %783 = vmatprep.subr.mxu0 0.0
      %784 = vmatpush1.msra.mxu0 0.0
      %785 = vmatprep.subr.mxu0 0.0
      %786 = vmatpush1.msra.mxu0 0.0
      %787 = vmatprep.subr.mxu0 0.0
      %788 = vmatpush1.msra.mxu0 0.0
      %789 = vmatprep.subr.mxu0 0.0
      %790 = vmatpush1.msra.mxu0 0.0
      %791 = vmatprep.subr.mxu0 0.0
      %792 = vmatpush1.msra.mxu0 0.0
      %793 = vmatprep.subr.mxu0 0.0
      %794 = vmatpush1.msra.mxu0 0.0
      %795 = vmatprep.subr.mxu0 0.0
      %796 = vmatpush1.msra.mxu0 0.0
      %797 = vmatprep.subr.mxu0 0.0
      %798 = vmatpush1.msra.mxu0 0.0
      %799 = vmatprep.subr.mxu0 0.0
      %800 = vmatpush1.msra.mxu0 0.0
      %801 = vmatprep.subr.mxu0 0.0
      %802 = vmatpush1.msra.mxu0 0.0
      %803 = vmatprep.subr.mxu0 0.0
      %804 = vmatpush1.msra.mxu0 0.0
      %805 = vmatprep.subr.mxu0 0.0
      %806 = vmatpush1.msra.mxu0 0.0
      %807 = vmatprep.subr.mxu0 0.0
      %808 = vmatpush1.msra.mxu0 0.0
      %809 = vmatprep.subr.mxu0 0.0
      %810 = vmatpush1.msra.mxu0 0.0
      %811 = vmatprep.subr.mxu0 0.0
      %812 = vmatpush1.msra.mxu0 0.0
      %813 = vmatprep.subr.mxu0 0.0
      %814 = vmatpush1.msra.mxu0 0.0
      %815 = vmatprep.subr.mxu0 0.0
      %816 = vmatpush1.msra.mxu0 0.0
      %817 = vmatprep.mubr.f32.mxu0 0.0
      %818 = vmatmul.mubr.f32.gmra.mrb[0].mxu0 %v733
      %v819 = vpop.f32.mrb[0].mxu0
      %v820 = vadd.f32 0.0, %v819
      %v821 = vpop.f32.mrb[0].mxu0
      %822 = vmatprep.mubr.f32.mxu0 0.0
      %823 = vmatmul.mubr.f32.gmra.mrb[0].mxu0 %v736
      %v824 = vpop.f32.mrb[0].mxu0
      %v825 = vadd.f32 0.0, %v824
      %v826 = vpop.f32.mrb[0].mxu0
      %827 = vmatprep.mubr.f32.mxu0 0.0
      %828 = vmatmul.mubr.f32.gmra.mrb[0].mxu0 %v739
      %v829 = vpop.f32.mrb[0].mxu0
      %v830 = vadd.f32 0.0, %v829
      %v831 = vpop.f32.mrb[0].mxu0
      %832 = vmatprep.mubr.f32.mxu0 0.0
      %833 = vmatmul.mubr.f32.gmra.mrb[0].mxu0 %v742
      %v834 = vpop.f32.mrb[0].mxu0
      %v835 = vadd.f32 0.0, %v834
      %v836 = vpop.f32.mrb[0].mxu0
      %837 = vmatprep.mubr.f32.mxu0 0.0
      %838 = vmatmul.mubr.f32.gmra.mrb[0].mxu0 %v745
      %v839 = vpop.f32.mrb[0].mxu0
      %v840 = vadd.f32 0.0, %v839
      %v841 = vpop.f32.mrb[0].mxu0
      %842 = vmatprep.mubr.f32.mxu0 0.0
      %843 = vmatmul.mubr.f32.gmra.mrb[0].mxu0 %v748
      %v844 = vpop.f32.mrb[0].mxu0
      %v845 = vadd.f32 0.0, %v844
      %v846 = vpop.f32.mrb[0].mxu0
      %847 = vmatprep.mubr.f32.mxu0 0.0
      %848 = vmatmul.mubr.f32.gmra.mrb[0].mxu0 %v751
      %v849 = vpop.f32.mrb[0].mxu0
      %v850 = vadd.f32 0.0, %v849
      %v851 = vpop.f32.mrb[0].mxu0
      %852 = vdwg.mxu0
      %v853 = vadd.f32 %v712, %v820
      %v854 = vadd.f32 %v713, %v825
      %v855 = vadd.f32 %v714, %v830
      %v856 = vadd.f32 %v715, %v835
      %v857 = vadd.f32 %v716, %v840
      %v858 = vadd.f32 %v717, %v845
      %v859 = vadd.f32 %v718, %v850
      %v860 = vld [vmem:[%s578 + $0x1] sm:$0xff]
      %v861 = vld [vmem:[%s578 + $0x9] sm:$0xff]
      %v862 = vld [vmem:[%s578 + $0x11] sm:$0xff]
      %v863 = vld [vmem:[%s578 + $0x19] sm:$0xff]
      %v864 = vld [vmem:[%s578 + $0x21] sm:$0xff]
      %v865 = vld [vmem:[%s578 + $0x29] sm:$0xff]
      %v866 = vld [vmem:[%s578 + $0x31] sm:$0xff]
      %s867 = scalar_lea.vmem %s1, 160
      %v868 = vld [vmem:[%s867] sm:$0xff]
      %v869 = vld [vmem:[%s867 + $0x8] sm:$0xff]
      %v870 = vld [vmem:[%s867 + $0x10] sm:$0xff]
      %v871 = vld [vmem:[%s867 + $0x18] sm:$0xff]
      %v873 = vsel %vm195, %v860, 0
      %v876 = vsel %vm195, %v861, 0
      %v879 = vsel %vm195, %v862, 0
      %v882 = vsel %vm195, %v863, 0
      %v885 = vsel %vm195, %v864, 0
      %v888 = vsel %vm195, %v865, 0
      %v891 = vsel %vm195, %v866, 0
      %893 = vmatprep.subr.mxu0 0.0
      %894 = vmatpush1.msra.mxu0 %v868
      %895 = vmatprep.subr.mxu0 0.0
      %896 = vmatpush1.msra.mxu0 %v869
      %897 = vmatprep.subr.mxu0 0.0
      %898 = vmatpush1.msra.mxu0 %v870
      %899 = vmatprep.subr.mxu0 0.0
      %900 = vmatpush1.msra.mxu0 %v871
      %901 = vmatprep.subr.mxu0 0.0
      %902 = vmatpush1.msra.mxu0 0.0
      %903 = vmatprep.subr.mxu0 0.0
      %904 = vmatpush1.msra.mxu0 0.0
      %905 = vmatprep.subr.mxu0 0.0
      %906 = vmatpush1.msra.mxu0 0.0
      %907 = vmatprep.subr.mxu0 0.0
      %908 = vmatpush1.msra.mxu0 0.0
      %909 = vmatprep.subr.mxu0 0.0
      %910 = vmatpush1.msra.mxu0 0.0
      %911 = vmatprep.subr.mxu0 0.0
      %912 = vmatpush1.msra.mxu0 0.0
      %913 = vmatprep.subr.mxu0 0.0
      %914 = vmatpush1.msra.mxu0 0.0
      %915 = vmatprep.subr.mxu0 0.0
      %916 = vmatpush1.msra.mxu0 0.0
      %917 = vmatprep.subr.mxu0 0.0
      %918 = vmatpush1.msra.mxu0 0.0
      %919 = vmatprep.subr.mxu0 0.0
      %920 = vmatpush1.msra.mxu0 0.0
      %921 = vmatprep.subr.mxu0 0.0
      %922 = vmatpush1.msra.mxu0 0.0
      %923 = vmatprep.subr.mxu0 0.0
      %924 = vmatpush1.msra.mxu0 0.0
      %925 = vmatprep.subr.mxu0 0.0
      %926 = vmatpush1.msra.mxu0 0.0
      %927 = vmatprep.subr.mxu0 0.0
      %928 = vmatpush1.msra.mxu0 0.0
      %929 = vmatprep.subr.mxu0 0.0
      %930 = vmatpush1.msra.mxu0 0.0
      %931 = vmatprep.subr.mxu0 0.0
      %932 = vmatpush1.msra.mxu0 0.0
      %933 = vmatprep.subr.mxu0 0.0
      %934 = vmatpush1.msra.mxu0 0.0
      %935 = vmatprep.subr.mxu0 0.0
      %936 = vmatpush1.msra.mxu0 0.0
      %937 = vmatprep.subr.mxu0 0.0
      %938 = vmatpush1.msra.mxu0 0.0
      %939 = vmatprep.subr.mxu0 0.0
      %940 = vmatpush1.msra.mxu0 0.0
      %941 = vmatprep.subr.mxu0 0.0
      %942 = vmatpush1.msra.mxu0 0.0
      %943 = vmatprep.subr.mxu0 0.0
      %944 = vmatpush1.msra.mxu0 0.0
      %945 = vmatprep.subr.mxu0 0.0
      %946 = vmatpush1.msra.mxu0 0.0
      %947 = vmatprep.subr.mxu0 0.0
      %948 = vmatpush1.msra.mxu0 0.0
      %949 = vmatprep.subr.mxu0 0.0
      %950 = vmatpush1.msra.mxu0 0.0
      %951 = vmatprep.subr.mxu0 0.0
      %952 = vmatpush1.msra.mxu0 0.0
      %953 = vmatprep.subr.mxu0 0.0
      %954 = vmatpush1.msra.mxu0 0.0
      %955 = vmatprep.subr.mxu0 0.0
      %956 = vmatpush1.msra.mxu0 0.0
      %957 = vmatprep.mubr.f32.mxu0 0.0
      %958 = vmatmul.mubr.f32.gmra.mrb[0].mxu0 %v873
      %v959 = vpop.f32.mrb[0].mxu0
      %v960 = vadd.f32 0.0, %v959
      %v961 = vpop.f32.mrb[0].mxu0
      %962 = vmatprep.mubr.f32.mxu0 0.0
      %963 = vmatmul.mubr.f32.gmra.mrb[0].mxu0 %v876
      %v964 = vpop.f32.mrb[0].mxu0
      %v965 = vadd.f32 0.0, %v964
      %v966 = vpop.f32.mrb[0].mxu0
      %967 = vmatprep.mubr.f32.mxu0 0.0
      %968 = vmatmul.mubr.f32.gmra.mrb[0].mxu0 %v879
      %v969 = vpop.f32.mrb[0].mxu0
      %v970 = vadd.f32 0.0, %v969
      %v971 = vpop.f32.mrb[0].mxu0
      %972 = vmatprep.mubr.f32.mxu0 0.0
      %973 = vmatmul.mubr.f32.gmra.mrb[0].mxu0 %v882
      %v974 = vpop.f32.mrb[0].mxu0
      %v975 = vadd.f32 0.0, %v974
      %v976 = vpop.f32.mrb[0].mxu0
      %977 = vmatprep.mubr.f32.mxu0 0.0
      %978 = vmatmul.mubr.f32.gmra.mrb[0].mxu0 %v885
      %v979 = vpop.f32.mrb[0].mxu0
      %v980 = vadd.f32 0.0, %v979
      %v981 = vpop.f32.mrb[0].mxu0
      %982 = vmatprep.mubr.f32.mxu0 0.0
      %983 = vmatmul.mubr.f32.gmra.mrb[0].mxu0 %v888
      %v984 = vpop.f32.mrb[0].mxu0
      %v985 = vadd.f32 0.0, %v984
      %v986 = vpop.f32.mrb[0].mxu0
      %987 = vmatprep.mubr.f32.mxu0 0.0
      %988 = vmatmul.mubr.f32.gmra.mrb[0].mxu0 %v891
      %v989 = vpop.f32.mrb[0].mxu0
      %v990 = vadd.f32 0.0, %v989
      %v991 = vpop.f32.mrb[0].mxu0
      %992 = vdwg.mxu0
      %v993 = vadd.f32 %v853, %v960
      %v994 = vadd.f32 %v854, %v965
      %v995 = vadd.f32 %v855, %v970
      %v996 = vadd.f32 %v856, %v975
      %v997 = vadd.f32 %v857, %v980
      %v998 = vadd.f32 %v858, %v985
      %v999 = vadd.f32 %v859, %v990
      %v1000 = vld [vmem:[%s165 + $0x8] sm:$0xff]
      %v1001 = vld [vmem:[%s165 + $0x10] sm:$0xff]
      %v1002 = vld [vmem:[%s165 + $0x18] sm:$0xff]
      %v1003 = vld [vmem:[%s165 + $0x20] sm:$0xff]
      %v1004 = vld [vmem:[%s165 + $0x28] sm:$0xff]
      %v1005 = vld [vmem:[%s165 + $0x30] sm:$0xff]
      %v1006 = vld [vmem:[%s165 + $0x38] sm:$0xff]
      %s1007 = scalar_lea.vmem %s1, 192
      %v1008 = vld [vmem:[%s1007] sm:$0xff]
      %v1009 = vld [vmem:[%s1007 + $0x8] sm:$0xff]
      %v1010 = vld [vmem:[%s1007 + $0x10] sm:$0xff]
      %v1011 = vld [vmem:[%s1007 + $0x18] sm:$0xff]
      %v1013 = vsel %vm195, %v1000, 0
      %v1016 = vsel %vm195, %v1001, 0
      %v1019 = vsel %vm195, %v1002, 0
      %v1022 = vsel %vm195, %v1003, 0
      %v1025 = vsel %vm195, %v1004, 0
      %v1028 = vsel %vm195, %v1005, 0
      %v1031 = vsel %vm195, %v1006, 0
      %1033 = vmatprep.subr.mxu0 0.0
      %1034 = vmatpush1.msra.mxu0 %v1008
      %1035 = vmatprep.subr.mxu0 0.0
      %1036 = vmatpush1.msra.mxu0 %v1009
      %1037 = vmatprep.subr.mxu0 0.0
      %1038 = vmatpush1.msra.mxu0 %v1010
      %1039 = vmatprep.subr.mxu0 0.0
      %1040 = vmatpush1.msra.mxu0 %v1011
      %1041 = vmatprep.subr.mxu0 0.0
      %1042 = vmatpush1.msra.mxu0 0.0
      %1043 = vmatprep.subr.mxu0 0.0
      %1044 = vmatpush1.msra.mxu0 0.0
      %1045 = vmatprep.subr.mxu0 0.0
      %1046 = vmatpush1.msra.mxu0 0.0
      %1047 = vmatprep.subr.mxu0 0.0
      %1048 = vmatpush1.msra.mxu0 0.0
      %1049 = vmatprep.subr.mxu0 0.0
      %1050 = vmatpush1.msra.mxu0 0.0
      %1051 = vmatprep.subr.mxu0 0.0
      %1052 = vmatpush1.msra.mxu0 0.0
      %1053 = vmatprep.subr.mxu0 0.0
      %1054 = vmatpush1.msra.mxu0 0.0
      %1055 = vmatprep.subr.mxu0 0.0
      %1056 = vmatpush1.msra.mxu0 0.0
      %1057 = vmatprep.subr.mxu0 0.0
      %1058 = vmatpush1.msra.mxu0 0.0
      %1059 = vmatprep.subr.mxu0 0.0
      %1060 = vmatpush1.msra.mxu0 0.0
      %1061 = vmatprep.subr.mxu0 0.0
      %1062 = vmatpush1.msra.mxu0 0.0
      %1063 = vmatprep.subr.mxu0 0.0
      %1064 = vmatpush1.msra.mxu0 0.0
      %1065 = vmatprep.subr.mxu0 0.0
      %1066 = vmatpush1.msra.mxu0 0.0
      %1067 = vmatprep.subr.mxu0 0.0
      %1068 = vmatpush1.msra.mxu0 0.0
      %1069 = vmatprep.subr.mxu0 0.0
      %1070 = vmatpush1.msra.mxu0 0.0
      %1071 = vmatprep.subr.mxu0 0.0
      %1072 = vmatpush1.msra.mxu0 0.0
      %1073 = vmatprep.subr.mxu0 0.0
      %1074 = vmatpush1.msra.mxu0 0.0
      %1075 = vmatprep.subr.mxu0 0.0
      %1076 = vmatpush1.msra.mxu0 0.0
      %1077 = vmatprep.subr.mxu0 0.0
      %1078 = vmatpush1.msra.mxu0 0.0
      %1079 = vmatprep.subr.mxu0 0.0
      %1080 = vmatpush1.msra.mxu0 0.0
      %1081 = vmatprep.subr.mxu0 0.0
      %1082 = vmatpush1.msra.mxu0 0.0
      %1083 = vmatprep.subr.mxu0 0.0
      %1084 = vmatpush1.msra.mxu0 0.0
      %1085 = vmatprep.subr.mxu0 0.0
      %1086 = vmatpush1.msra.mxu0 0.0
      %1087 = vmatprep.subr.mxu0 0.0
      %1088 = vmatpush1.msra.mxu0 0.0
      %1089 = vmatprep.subr.mxu0 0.0
      %1090 = vmatpush1.msra.mxu0 0.0
      %1091 = vmatprep.subr.mxu0 0.0
      %1092 = vmatpush1.msra.mxu0 0.0
      %1093 = vmatprep.subr.mxu0 0.0
      %1094 = vmatpush1.msra.mxu0 0.0
      %1095 = vmatprep.subr.mxu0 0.0
      %1096 = vmatpush1.msra.mxu0 0.0
      %1097 = vmatprep.mubr.f32.mxu0 0.0
      %1098 = vmatmul.mubr.f32.gmra.mrb[0].mxu0 %v1013
      %v1099 = vpop.f32.mrb[0].mxu0
      %v1100 = vadd.f32 0.0, %v1099
      %v1101 = vpop.f32.mrb[0].mxu0
      %1102 = vmatprep.mubr.f32.mxu0 0.0
      %1103 = vmatmul.mubr.f32.gmra.mrb[0].mxu0 %v1016
      %v1104 = vpop.f32.mrb[0].mxu0
      %v1105 = vadd.f32 0.0, %v1104
      %v1106 = vpop.f32.mrb[0].mxu0
      %1107 = vmatprep.mubr.f32.mxu0 0.0
      %1108 = vmatmul.mubr.f32.gmra.mrb[0].mxu0 %v1019
      %v1109 = vpop.f32.mrb[0].mxu0
      %v1110 = vadd.f32 0.0, %v1109
      %v1111 = vpop.f32.mrb[0].mxu0
      %1112 = vmatprep.mubr.f32.mxu0 0.0
      %1113 = vmatmul.mubr.f32.gmra.mrb[0].mxu0 %v1022
      %v1114 = vpop.f32.mrb[0].mxu0
      %v1115 = vadd.f32 0.0, %v1114
      %v1116 = vpop.f32.mrb[0].mxu0
      %1117 = vmatprep.mubr.f32.mxu0 0.0
      %1118 = vmatmul.mubr.f32.gmra.mrb[0].mxu0 %v1025
      %v1119 = vpop.f32.mrb[0].mxu0
      %v1120 = vadd.f32 0.0, %v1119
      %v1121 = vpop.f32.mrb[0].mxu0
      %1122 = vmatprep.mubr.f32.mxu0 0.0
      %1123 = vmatmul.mubr.f32.gmra.mrb[0].mxu0 %v1028
      %v1124 = vpop.f32.mrb[0].mxu0
      %v1125 = vadd.f32 0.0, %v1124
      %v1126 = vpop.f32.mrb[0].mxu0
      %1127 = vmatprep.mubr.f32.mxu0 0.0
      %1128 = vmatmul.mubr.f32.gmra.mrb[0].mxu0 %v1031
      %v1129 = vpop.f32.mrb[0].mxu0
      %v1130 = vadd.f32 0.0, %v1129
      %v1131 = vpop.f32.mrb[0].mxu0
      %1132 = vdwg.mxu0
      %v1133 = vadd.f32 %v993, %v1100
      %v1134 = vadd.f32 %v994, %v1105
      %v1135 = vadd.f32 %v995, %v1110
      %v1136 = vadd.f32 %v996, %v1115
      %v1137 = vadd.f32 %v997, %v1120
      %v1138 = vadd.f32 %v998, %v1125
      %v1139 = vadd.f32 %v999, %v1130
      %v1140 = vld [vmem:[%s182 + $0x8] sm:$0xff]
      %v1141 = vld [vmem:[%s182 + $0x10] sm:$0xff]
      %v1142 = vld [vmem:[%s182 + $0x18] sm:$0xff]
      %v1143 = vld [vmem:[%s182 + $0x20] sm:$0xff]
      %v1144 = vld [vmem:[%s182 + $0x28] sm:$0xff]
      %v1145 = vld [vmem:[%s182 + $0x30] sm:$0xff]
      %v1146 = vld [vmem:[%s182 + $0x38] sm:$0xff]
      %s1147 = scalar_lea.vmem %s1, 224
      %v1148 = vld [vmem:[%s1147] sm:$0xff]
      %v1149 = vld [vmem:[%s1147 + $0x8] sm:$0xff]
      %v1150 = vld [vmem:[%s1147 + $0x10] sm:$0xff]
      %v1151 = vld [vmem:[%s1147 + $0x18] sm:$0xff]
      %v1153 = vsel %vm195, %v1140, 0
      %v1156 = vsel %vm195, %v1141, 0
      %v1159 = vsel %vm195, %v1142, 0
      %v1162 = vsel %vm195, %v1143, 0
      %v1165 = vsel %vm195, %v1144, 0
      %v1168 = vsel %vm195, %v1145, 0
      %v1171 = vsel %vm195, %v1146, 0
      %1173 = vmatprep.subr.mxu0 0.0
      %1174 = vmatpush1.msra.mxu0 %v1148
      %1175 = vmatprep.subr.mxu0 0.0
      %1176 = vmatpush1.msra.mxu0 %v1149
      %1177 = vmatprep.subr.mxu0 0.0
      %1178 = vmatpush1.msra.mxu0 %v1150
      %1179 = vmatprep.subr.mxu0 0.0
      %1180 = vmatpush1.msra.mxu0 %v1151
      %1181 = vmatprep.subr.mxu0 0.0
      %1182 = vmatpush1.msra.mxu0 0.0
      %1183 = vmatprep.subr.mxu0 0.0
      %1184 = vmatpush1.msra.mxu0 0.0
      %1185 = vmatprep.subr.mxu0 0.0
      %1186 = vmatpush1.msra.mxu0 0.0
      %1187 = vmatprep.subr.mxu0 0.0
      %1188 = vmatpush1.msra.mxu0 0.0
      %1189 = vmatprep.subr.mxu0 0.0
      %1190 = vmatpush1.msra.mxu0 0.0
      %1191 = vmatprep.subr.mxu0 0.0
      %1192 = vmatpush1.msra.mxu0 0.0
      %1193 = vmatprep.subr.mxu0 0.0
      %1194 = vmatpush1.msra.mxu0 0.0
      %1195 = vmatprep.subr.mxu0 0.0
      %1196 = vmatpush1.msra.mxu0 0.0
      %1197 = vmatprep.subr.mxu0 0.0
      %1198 = vmatpush1.msra.mxu0 0.0
      %1199 = vmatprep.subr.mxu0 0.0
      %1200 = vmatpush1.msra.mxu0 0.0
      %1201 = vmatprep.subr.mxu0 0.0
      %1202 = vmatpush1.msra.mxu0 0.0
      %1203 = vmatprep.subr.mxu0 0.0
      %1204 = vmatpush1.msra.mxu0 0.0
      %1205 = vmatprep.subr.mxu0 0.0
      %1206 = vmatpush1.msra.mxu0 0.0
      %1207 = vmatprep.subr.mxu0 0.0
      %1208 = vmatpush1.msra.mxu0 0.0
      %1209 = vmatprep.subr.mxu0 0.0
      %1210 = vmatpush1.msra.mxu0 0.0
      %1211 = vmatprep.subr.mxu0 0.0
      %1212 = vmatpush1.msra.mxu0 0.0
      %1213 = vmatprep.subr.mxu0 0.0
      %1214 = vmatpush1.msra.mxu0 0.0
      %1215 = vmatprep.subr.mxu0 0.0
      %1216 = vmatpush1.msra.mxu0 0.0
      %1217 = vmatprep.subr.mxu0 0.0
      %1218 = vmatpush1.msra.mxu0 0.0
      %1219 = vmatprep.subr.mxu0 0.0
      %1220 = vmatpush1.msra.mxu0 0.0
      %1221 = vmatprep.subr.mxu0 0.0
      %1222 = vmatpush1.msra.mxu0 0.0
      %1223 = vmatprep.subr.mxu0 0.0
      %1224 = vmatpush1.msra.mxu0 0.0
      %1225 = vmatprep.subr.mxu0 0.0
      %1226 = vmatpush1.msra.mxu0 0.0
      %1227 = vmatprep.subr.mxu0 0.0
      %1228 = vmatpush1.msra.mxu0 0.0
      %1229 = vmatprep.subr.mxu0 0.0
      %1230 = vmatpush1.msra.mxu0 0.0
      %1231 = vmatprep.subr.mxu0 0.0
      %1232 = vmatpush1.msra.mxu0 0.0
      %1233 = vmatprep.subr.mxu0 0.0
      %1234 = vmatpush1.msra.mxu0 0.0
      %1235 = vmatprep.subr.mxu0 0.0
      %1236 = vmatpush1.msra.mxu0 0.0
      %1237 = vmatprep.mubr.f32.mxu0 0.0
      %1238 = vmatmul.mubr.f32.gmra.mrb[0].mxu0 %v1153
      %v1239 = vpop.f32.mrb[0].mxu0
      %v1240 = vadd.f32 0.0, %v1239
      %v1241 = vpop.f32.mrb[0].mxu0
      %1242 = vmatprep.mubr.f32.mxu0 0.0
      %1243 = vmatmul.mubr.f32.gmra.mrb[0].mxu0 %v1156
      %v1244 = vpop.f32.mrb[0].mxu0
      %v1245 = vadd.f32 0.0, %v1244
      %v1246 = vpop.f32.mrb[0].mxu0
      %1247 = vmatprep.mubr.f32.mxu0 0.0
      %1248 = vmatmul.mubr.f32.gmra.mrb[0].mxu0 %v1159
      %v1249 = vpop.f32.mrb[0].mxu0
      %v1250 = vadd.f32 0.0, %v1249
      %v1251 = vpop.f32.mrb[0].mxu0
      %1252 = vmatprep.mubr.f32.mxu0 0.0
      %1253 = vmatmul.mubr.f32.gmra.mrb[0].mxu0 %v1162
      %v1254 = vpop.f32.mrb[0].mxu0
      %v1255 = vadd.f32 0.0, %v1254
      %v1256 = vpop.f32.mrb[0].mxu0
      %1257 = vmatprep.mubr.f32.mxu0 0.0
      %1258 = vmatmul.mubr.f32.gmra.mrb[0].mxu0 %v1165
      %v1259 = vpop.f32.mrb[0].mxu0
      %v1260 = vadd.f32 0.0, %v1259
      %v1261 = vpop.f32.mrb[0].mxu0
      %1262 = vmatprep.mubr.f32.mxu0 0.0
      %1263 = vmatmul.mubr.f32.gmra.mrb[0].mxu0 %v1168
      %v1264 = vpop.f32.mrb[0].mxu0
      %v1265 = vadd.f32 0.0, %v1264
      %v1266 = vpop.f32.mrb[0].mxu0
      %1267 = vmatprep.mubr.f32.mxu0 0.0
      %1268 = vmatmul.mubr.f32.gmra.mrb[0].mxu0 %v1171
      %v1269 = vpop.f32.mrb[0].mxu0
      %v1270 = vadd.f32 0.0, %v1269
      %v1271 = vpop.f32.mrb[0].mxu0
      %1272 = vdwg.mxu0
      %v1273 = vadd.f32 %v1133, %v1240
      %v1274 = vadd.f32 %v1134, %v1245
      %v1275 = vadd.f32 %v1135, %v1250
      %v1276 = vadd.f32 %v1136, %v1255
      %v1277 = vadd.f32 %v1137, %v1260
      %v1278 = vadd.f32 %v1138, %v1265
      %v1279 = vadd.f32 %v1139, %v1270
      %v1280 = vld [vmem:[%s165 + $0x9] sm:$0xff]
      %v1281 = vld [vmem:[%s165 + $0x11] sm:$0xff]
      %v1282 = vld [vmem:[%s165 + $0x19] sm:$0xff]
      %v1283 = vld [vmem:[%s165 + $0x21] sm:$0xff]
      %v1284 = vld [vmem:[%s165 + $0x29] sm:$0xff]
      %v1285 = vld [vmem:[%s165 + $0x31] sm:$0xff]
      %v1286 = vld [vmem:[%s165 + $0x39] sm:$0xff]
      %s1287 = scalar_lea.vmem %s1, 256
      %v1288 = vld [vmem:[%s1287] sm:$0xff]
      %v1289 = vld [vmem:[%s1287 + $0x8] sm:$0xff]
      %v1290 = vld [vmem:[%s1287 + $0x10] sm:$0xff]
      %v1291 = vld [vmem:[%s1287 + $0x18] sm:$0xff]
      %v1293 = vsel %vm195, %v1280, 0
      %v1296 = vsel %vm195, %v1281, 0
      %v1299 = vsel %vm195, %v1282, 0
      %v1302 = vsel %vm195, %v1283, 0
      %v1305 = vsel %vm195, %v1284, 0
      %v1308 = vsel %vm195, %v1285, 0
      %v1311 = vsel %vm195, %v1286, 0
      %1313 = vmatprep.subr.mxu0 0.0
      %1314 = vmatpush1.msra.mxu0 %v1288
      %1315 = vmatprep.subr.mxu0 0.0
      %1316 = vmatpush1.msra.mxu0 %v1289
      %1317 = vmatprep.subr.mxu0 0.0
      %1318 = vmatpush1.msra.mxu0 %v1290
      %1319 = vmatprep.subr.mxu0 0.0
      %1320 = vmatpush1.msra.mxu0 %v1291
      %1321 = vmatprep.subr.mxu0 0.0
      %1322 = vmatpush1.msra.mxu0 0.0
      %1323 = vmatprep.subr.mxu0 0.0
      %1324 = vmatpush1.msra.mxu0 0.0
      %1325 = vmatprep.subr.mxu0 0.0
      %1326 = vmatpush1.msra.mxu0 0.0
      %1327 = vmatprep.subr.mxu0 0.0
      %1328 = vmatpush1.msra.mxu0 0.0
      %1329 = vmatprep.subr.mxu0 0.0
      %1330 = vmatpush1.msra.mxu0 0.0
      %1331 = vmatprep.subr.mxu0 0.0
      %1332 = vmatpush1.msra.mxu0 0.0
      %1333 = vmatprep.subr.mxu0 0.0
      %1334 = vmatpush1.msra.mxu0 0.0
      %1335 = vmatprep.subr.mxu0 0.0
      %1336 = vmatpush1.msra.mxu0 0.0
      %1337 = vmatprep.subr.mxu0 0.0
      %1338 = vmatpush1.msra.mxu0 0.0
      %1339 = vmatprep.subr.mxu0 0.0
      %1340 = vmatpush1.msra.mxu0 0.0
      %1341 = vmatprep.subr.mxu0 0.0
      %1342 = vmatpush1.msra.mxu0 0.0
      %1343 = vmatprep.subr.mxu0 0.0
      %1344 = vmatpush1.msra.mxu0 0.0
      %1345 = vmatprep.subr.mxu0 0.0
      %1346 = vmatpush1.msra.mxu0 0.0
      %1347 = vmatprep.subr.mxu0 0.0
      %1348 = vmatpush1.msra.mxu0 0.0
      %1349 = vmatprep.subr.mxu0 0.0
      %1350 = vmatpush1.msra.mxu0 0.0
      %1351 = vmatprep.subr.mxu0 0.0
      %1352 = vmatpush1.msra.mxu0 0.0
      %1353 = vmatprep.subr.mxu0 0.0
      %1354 = vmatpush1.msra.mxu0 0.0
      %1355 = vmatprep.subr.mxu0 0.0
      %1356 = vmatpush1.msra.mxu0 0.0
      %1357 = vmatprep.subr.mxu0 0.0
      %1358 = vmatpush1.msra.mxu0 0.0
      %1359 = vmatprep.subr.mxu0 0.0
      %1360 = vmatpush1.msra.mxu0 0.0
      %1361 = vmatprep.subr.mxu0 0.0
      %1362 = vmatpush1.msra.mxu0 0.0
      %1363 = vmatprep.subr.mxu0 0.0
      %1364 = vmatpush1.msra.mxu0 0.0
      %1365 = vmatprep.subr.mxu0 0.0
      %1366 = vmatpush1.msra.mxu0 0.0
      %1367 = vmatprep.subr.mxu0 0.0
      %1368 = vmatpush1.msra.mxu0 0.0
      %1369 = vmatprep.subr.mxu0 0.0
      %1370 = vmatpush1.msra.mxu0 0.0
      %1371 = vmatprep.subr.mxu0 0.0
      %1372 = vmatpush1.msra.mxu0 0.0
      %1373 = vmatprep.subr.mxu0 0.0
      %1374 = vmatpush1.msra.mxu0 0.0
      %1375 = vmatprep.subr.mxu0 0.0
      %1376 = vmatpush1.msra.mxu0 0.0
      %1377 = vmatprep.mubr.f32.mxu0 0.0
      %1378 = vmatmul.mubr.f32.gmra.mrb[0].mxu0 %v1293
      %v1379 = vpop.f32.mrb[0].mxu0
      %v1380 = vadd.f32 0.0, %v1379
      %v1381 = vpop.f32.mrb[0].mxu0
      %1382 = vmatprep.mubr.f32.mxu0 0.0
      %1383 = vmatmul.mubr.f32.gmra.mrb[0].mxu0 %v1296
      %v1384 = vpop.f32.mrb[0].mxu0
      %v1385 = vadd.f32 0.0, %v1384
      %v1386 = vpop.f32.mrb[0].mxu0
      %1387 = vmatprep.mubr.f32.mxu0 0.0
      %1388 = vmatmul.mubr.f32.gmra.mrb[0].mxu0 %v1299
      %v1389 = vpop.f32.mrb[0].mxu0
      %v1390 = vadd.f32 0.0, %v1389
      %v1391 = vpop.f32.mrb[0].mxu0
      %1392 = vmatprep.mubr.f32.mxu0 0.0
      %1393 = vmatmul.mubr.f32.gmra.mrb[0].mxu0 %v1302
      %v1394 = vpop.f32.mrb[0].mxu0
      %v1395 = vadd.f32 0.0, %v1394
      %v1396 = vpop.f32.mrb[0].mxu0
      %1397 = vmatprep.mubr.f32.mxu0 0.0
      %1398 = vmatmul.mubr.f32.gmra.mrb[0].mxu0 %v1305
      %v1399 = vpop.f32.mrb[0].mxu0
      %v1400 = vadd.f32 0.0, %v1399
      %v1401 = vpop.f32.mrb[0].mxu0
      %1402 = vmatprep.mubr.f32.mxu0 0.0
      %1403 = vmatmul.mubr.f32.gmra.mrb[0].mxu0 %v1308
      %v1404 = vpop.f32.mrb[0].mxu0
      %v1405 = vadd.f32 0.0, %v1404
      %v1406 = vpop.f32.mrb[0].mxu0
      %1407 = vmatprep.mubr.f32.mxu0 0.0
      %1408 = vmatmul.mubr.f32.gmra.mrb[0].mxu0 %v1311
      %v1409 = vpop.f32.mrb[0].mxu0
      %v1410 = vadd.f32 0.0, %v1409
      %v1411 = vpop.f32.mrb[0].mxu0
      %1412 = vdwg.mxu0
      %v1413 = vadd.f32 %v1273, %v1380
      %v1414 = vadd.f32 %v1274, %v1385
      %v1415 = vadd.f32 %v1275, %v1390
      %v1416 = vadd.f32 %v1276, %v1395
      %v1417 = vadd.f32 %v1277, %v1400
      %v1418 = vadd.f32 %v1278, %v1405
      %v1419 = vadd.f32 %v1279, %v1410
      %v1420 = vld [vmem:[%s2] sm:$0x1]
      %v1422 = vlaneseq
      %v1423 = vshrl.u32 %v1422, 7
      %v1424 = vsub.s32 0, %v1423
      %v1425 = vrot.slane %v1420, %v1424
      %v1427 = vadd.f32 %v1413, %v1425
      %v1428 = vadd.f32 %v1414, %v1425
      %v1429 = vadd.f32 %v1415, %v1425
      %v1430 = vadd.f32 %v1416, %v1425
      %v1431 = vadd.f32 %v1417, %v1425
      %v1432 = vadd.f32 %v1418, %v1425
      %v1433 = vadd.f32 %v1419, %v1425
      %v1434 = vmax.f32 %v1427, 0.0
      %v1435 = vmax.f32 %v1428, 0.0
      %v1436 = vmax.f32 %v1429, 0.0
      %v1437 = vmax.f32 %v1430, 0.0
      %v1438 = vmax.f32 %v1431, 0.0
      %v1439 = vmax.f32 %v1432, 0.0
      %v1440 = vmax.f32 %v1433, 0.0
      %1441 = vmatprep.subr.mxu0 0.0
      %1442 = vmatpush1.msra.mxu0 %v191
      %1443 = vmatprep.subr.mxu0 0.0
      %1444 = vmatpush1.msra.mxu0 %v192
      %1445 = vmatprep.subr.mxu0 0.0
      %1446 = vmatpush1.msra.mxu0 %v193
      %1447 = vmatprep.subr.mxu0 0.0
      %1448 = vmatpush1.msra.mxu0 %v194
      %1449 = vmatprep.subr.mxu0 0.0
      %1450 = vmatpush1.msra.mxu0 0.0
      %1451 = vmatprep.subr.mxu0 0.0
      %1452 = vmatpush1.msra.mxu0 0.0
      %1453 = vmatprep.subr.mxu0 0.0
      %1454 = vmatpush1.msra.mxu0 0.0
      %1455 = vmatprep.subr.mxu0 0.0
      %1456 = vmatpush1.msra.mxu0 0.0
      %1457 = vmatprep.subr.mxu0 0.0
      %1458 = vmatpush1.msra.mxu0 0.0
      %1459 = vmatprep.subr.mxu0 0.0
      %1460 = vmatpush1.msra.mxu0 0.0
      %1461 = vmatprep.subr.mxu0 0.0
      %1462 = vmatpush1.msra.mxu0 0.0
      %1463 = vmatprep.subr.mxu0 0.0
      %1464 = vmatpush1.msra.mxu0 0.0
      %1465 = vmatprep.subr.mxu0 0.0
      %1466 = vmatpush1.msra.mxu0 0.0
      %1467 = vmatprep.subr.mxu0 0.0
      %1468 = vmatpush1.msra.mxu0 0.0
      %1469 = vmatprep.subr.mxu0 0.0
      %1470 = vmatpush1.msra.mxu0 0.0
      %1471 = vmatprep.subr.mxu0 0.0
      %1472 = vmatpush1.msra.mxu0 0.0
      %1473 = vmatprep.subr.mxu0 0.0
      %1474 = vmatpush1.msra.mxu0 0.0
      %1475 = vmatprep.subr.mxu0 0.0
      %1476 = vmatpush1.msra.mxu0 0.0
      %1477 = vmatprep.subr.mxu0 0.0
      %1478 = vmatpush1.msra.mxu0 0.0
      %1479 = vmatprep.subr.mxu0 0.0
      %1480 = vmatpush1.msra.mxu0 0.0
      %1481 = vmatprep.subr.mxu0 0.0
      %1482 = vmatpush1.msra.mxu0 0.0
      %1483 = vmatprep.subr.mxu0 0.0
      %1484 = vmatpush1.msra.mxu0 0.0
      %1485 = vmatprep.subr.mxu0 0.0
      %1486 = vmatpush1.msra.mxu0 0.0
      %1487 = vmatprep.subr.mxu0 0.0
      %1488 = vmatpush1.msra.mxu0 0.0
      %1489 = vmatprep.subr.mxu0 0.0
      %1490 = vmatpush1.msra.mxu0 0.0
      %1491 = vmatprep.subr.mxu0 0.0
      %1492 = vmatpush1.msra.mxu0 0.0
      %1493 = vmatprep.subr.mxu0 0.0
      %1494 = vmatpush1.msra.mxu0 0.0
      %1495 = vmatprep.subr.mxu0 0.0
      %1496 = vmatpush1.msra.mxu0 0.0
      %1497 = vmatprep.subr.mxu0 0.0
      %1498 = vmatpush1.msra.mxu0 0.0
      %1499 = vmatprep.subr.mxu0 0.0
      %1500 = vmatpush1.msra.mxu0 0.0
      %1501 = vmatprep.subr.mxu0 0.0
      %1502 = vmatpush1.msra.mxu0 0.0
      %1503 = vmatprep.subr.mxu0 0.0
      %1504 = vmatpush1.msra.mxu0 0.0
      %1505 = vmatprep.mubr.f32.mxu0 0.0
      %1506 = vmatmul.mubr.f32.gmra.mrb[0].mxu0 %v451
      %v1507 = vpop.f32.mrb[0].mxu0
      %v1508 = vadd.f32 0.0, %v1507
      %v1509 = vpop.f32.mrb[0].mxu0
      %1510 = vmatprep.mubr.f32.mxu0 0.0
      %1511 = vmatmul.mubr.f32.gmra.mrb[0].mxu0 %v454
      %v1512 = vpop.f32.mrb[0].mxu0
      %v1513 = vadd.f32 0.0, %v1512
      %v1514 = vpop.f32.mrb[0].mxu0
      %1515 = vmatprep.mubr.f32.mxu0 0.0
      %1516 = vmatmul.mubr.f32.gmra.mrb[0].mxu0 %v457
      %v1517 = vpop.f32.mrb[0].mxu0
      %v1518 = vadd.f32 0.0, %v1517
      %v1519 = vpop.f32.mrb[0].mxu0
      %1520 = vmatprep.mubr.f32.mxu0 0.0
      %1521 = vmatmul.mubr.f32.gmra.mrb[0].mxu0 %v460
      %v1522 = vpop.f32.mrb[0].mxu0
      %v1523 = vadd.f32 0.0, %v1522
      %v1524 = vpop.f32.mrb[0].mxu0
      %1525 = vmatprep.mubr.f32.mxu0 0.0
      %1526 = vmatmul.mubr.f32.gmra.mrb[0].mxu0 %v463
      %v1527 = vpop.f32.mrb[0].mxu0
      %v1528 = vadd.f32 0.0, %v1527
      %v1529 = vpop.f32.mrb[0].mxu0
      %1530 = vmatprep.mubr.f32.mxu0 0.0
      %1531 = vmatmul.mubr.f32.gmra.mrb[0].mxu0 %v466
      %v1532 = vpop.f32.mrb[0].mxu0
      %v1533 = vadd.f32 0.0, %v1532
      %v1534 = vpop.f32.mrb[0].mxu0
      %1535 = vmatprep.mubr.f32.mxu0 0.0
      %1536 = vmatmul.mubr.f32.gmra.mrb[0].mxu0 %v469
      %v1537 = vpop.f32.mrb[0].mxu0
      %v1538 = vadd.f32 0.0, %v1537
      %v1539 = vpop.f32.mrb[0].mxu0
      %1540 = vdwg.mxu0
      %1541 = vmatprep.subr.mxu0 0.0
      %1542 = vmatpush1.msra.mxu0 %v178
      %1543 = vmatprep.subr.mxu0 0.0
      %1544 = vmatpush1.msra.mxu0 %v179
      %1545 = vmatprep.subr.mxu0 0.0
      %1546 = vmatpush1.msra.mxu0 %v180
      %1547 = vmatprep.subr.mxu0 0.0
      %1548 = vmatpush1.msra.mxu0 %v181
      %1549 = vmatprep.subr.mxu0 0.0
      %1550 = vmatpush1.msra.mxu0 0.0
      %1551 = vmatprep.subr.mxu0 0.0
      %1552 = vmatpush1.msra.mxu0 0.0
      %1553 = vmatprep.subr.mxu0 0.0
      %1554 = vmatpush1.msra.mxu0 0.0
      %1555 = vmatprep.subr.mxu0 0.0
      %1556 = vmatpush1.msra.mxu0 0.0
      %1557 = vmatprep.subr.mxu0 0.0
      %1558 = vmatpush1.msra.mxu0 0.0
      %1559 = vmatprep.subr.mxu0 0.0
      %1560 = vmatpush1.msra.mxu0 0.0
      %1561 = vmatprep.subr.mxu0 0.0
      %1562 = vmatpush1.msra.mxu0 0.0
      %1563 = vmatprep.subr.mxu0 0.0
      %1564 = vmatpush1.msra.mxu0 0.0
      %1565 = vmatprep.subr.mxu0 0.0
      %1566 = vmatpush1.msra.mxu0 0.0
      %1567 = vmatprep.subr.mxu0 0.0
      %1568 = vmatpush1.msra.mxu0 0.0
      %1569 = vmatprep.subr.mxu0 0.0
      %1570 = vmatpush1.msra.mxu0 0.0
      %1571 = vmatprep.subr.mxu0 0.0
      %1572 = vmatpush1.msra.mxu0 0.0
      %1573 = vmatprep.subr.mxu0 0.0
      %1574 = vmatpush1.msra.mxu0 0.0
      %1575 = vmatprep.subr.mxu0 0.0
      %1576 = vmatpush1.msra.mxu0 0.0
      %1577 = vmatprep.subr.mxu0 0.0
      %1578 = vmatpush1.msra.mxu0 0.0
      %1579 = vmatprep.subr.mxu0 0.0
      %1580 = vmatpush1.msra.mxu0 0.0
      %1581 = vmatprep.subr.mxu0 0.0
      %1582 = vmatpush1.msra.mxu0 0.0
      %1583 = vmatprep.subr.mxu0 0.0
      %1584 = vmatpush1.msra.mxu0 0.0
      %1585 = vmatprep.subr.mxu0 0.0
      %1586 = vmatpush1.msra.mxu0 0.0
      %1587 = vmatprep.subr.mxu0 0.0
      %1588 = vmatpush1.msra.mxu0 0.0
      %1589 = vmatprep.subr.mxu0 0.0
      %1590 = vmatpush1.msra.mxu0 0.0
      %1591 = vmatprep.subr.mxu0 0.0
      %1592 = vmatpush1.msra.mxu0 0.0
      %1593 = vmatprep.subr.mxu0 0.0
      %1594 = vmatpush1.msra.mxu0 0.0
      %1595 = vmatprep.subr.mxu0 0.0
      %1596 = vmatpush1.msra.mxu0 0.0
      %1597 = vmatprep.subr.mxu0 0.0
      %1598 = vmatpush1.msra.mxu0 0.0
      %1599 = vmatprep.subr.mxu0 0.0
      %1600 = vmatpush1.msra.mxu0 0.0
      %1601 = vmatprep.subr.mxu0 0.0
      %1602 = vmatpush1.msra.mxu0 0.0
      %1603 = vmatprep.subr.mxu0 0.0
      %1604 = vmatpush1.msra.mxu0 0.0
      %1605 = vmatprep.mubr.f32.mxu0 0.0
      %1606 = vmatmul.mubr.f32.gmra.mrb[0].mxu0 %v197
      %v1607 = vpop.f32.mrb[0].mxu0
      %v1608 = vadd.f32 %v1508, %v1607
      %v1609 = vpop.f32.mrb[0].mxu0
      %1610 = vmatprep.mubr.f32.mxu0 0.0
      %1611 = vmatmul.mubr.f32.gmra.mrb[0].mxu0 %v200
      %v1612 = vpop.f32.mrb[0].mxu0
      %v1613 = vadd.f32 %v1513, %v1612
      %v1614 = vpop.f32.mrb[0].mxu0
      %1615 = vmatprep.mubr.f32.mxu0 0.0
      %1616 = vmatmul.mubr.f32.gmra.mrb[0].mxu0 %v203
      %v1617 = vpop.f32.mrb[0].mxu0
      %v1618 = vadd.f32 %v1518, %v1617
      %v1619 = vpop.f32.mrb[0].mxu0
      %1620 = vmatprep.mubr.f32.mxu0 0.0
      %1621 = vmatmul.mubr.f32.gmra.mrb[0].mxu0 %v206
      %v1622 = vpop.f32.mrb[0].mxu0
      %v1623 = vadd.f32 %v1523, %v1622
      %v1624 = vpop.f32.mrb[0].mxu0
      %1625 = vmatprep.mubr.f32.mxu0 0.0
      %1626 = vmatmul.mubr.f32.gmra.mrb[0].mxu0 %v209
      %v1627 = vpop.f32.mrb[0].mxu0
      %v1628 = vadd.f32 %v1528, %v1627
      %v1629 = vpop.f32.mrb[0].mxu0
      %1630 = vmatprep.mubr.f32.mxu0 0.0
      %1631 = vmatmul.mubr.f32.gmra.mrb[0].mxu0 %v212
      %v1632 = vpop.f32.mrb[0].mxu0
      %v1633 = vadd.f32 %v1533, %v1632
      %v1634 = vpop.f32.mrb[0].mxu0
      %1635 = vmatprep.mubr.f32.mxu0 0.0
      %1636 = vmatmul.mubr.f32.gmra.mrb[0].mxu0 %v215
      %v1637 = vpop.f32.mrb[0].mxu0
      %v1638 = vadd.f32 %v1538, %v1637
      %v1639 = vpop.f32.mrb[0].mxu0
      %1640 = vdwg.mxu0
      %v1641 = vld [vmem:[%s182 + $0x1] sm:$0xff]
      %v1642 = vld [vmem:[%s182 + $0x9] sm:$0xff]
      %v1643 = vld [vmem:[%s182 + $0x11] sm:$0xff]
      %v1644 = vld [vmem:[%s182 + $0x19] sm:$0xff]
      %v1645 = vld [vmem:[%s182 + $0x21] sm:$0xff]
      %v1646 = vld [vmem:[%s182 + $0x29] sm:$0xff]
      %v1647 = vld [vmem:[%s182 + $0x31] sm:$0xff]
      %v1649 = vsel %vm195, %v1641, 0
      %v1652 = vsel %vm195, %v1642, 0
      %v1655 = vsel %vm195, %v1643, 0
      %v1658 = vsel %vm195, %v1644, 0
      %v1661 = vsel %vm195, %v1645, 0
      %v1664 = vsel %vm195, %v1646, 0
      %v1667 = vsel %vm195, %v1647, 0
      %1669 = vmatprep.subr.mxu0 0.0
      %1670 = vmatpush1.msra.mxu0 %v446
      %1671 = vmatprep.subr.mxu0 0.0
      %1672 = vmatpush1.msra.mxu0 %v447
      %1673 = vmatprep.subr.mxu0 0.0
      %1674 = vmatpush1.msra.mxu0 %v448
      %1675 = vmatprep.subr.mxu0 0.0
      %1676 = vmatpush1.msra.mxu0 %v449
      %1677 = vmatprep.subr.mxu0 0.0
      %1678 = vmatpush1.msra.mxu0 0.0
      %1679 = vmatprep.subr.mxu0 0.0
      %1680 = vmatpush1.msra.mxu0 0.0
      %1681 = vmatprep.subr.mxu0 0.0
      %1682 = vmatpush1.msra.mxu0 0.0
      %1683 = vmatprep.subr.mxu0 0.0
      %1684 = vmatpush1.msra.mxu0 0.0
      %1685 = vmatprep.subr.mxu0 0.0
      %1686 = vmatpush1.msra.mxu0 0.0
      %1687 = vmatprep.subr.mxu0 0.0
      %1688 = vmatpush1.msra.mxu0 0.0
      %1689 = vmatprep.subr.mxu0 0.0
      %1690 = vmatpush1.msra.mxu0 0.0
      %1691 = vmatprep.subr.mxu0 0.0
      %1692 = vmatpush1.msra.mxu0 0.0
      %1693 = vmatprep.subr.mxu0 0.0
      %1694 = vmatpush1.msra.mxu0 0.0
      %1695 = vmatprep.subr.mxu0 0.0
      %1696 = vmatpush1.msra.mxu0 0.0
      %1697 = vmatprep.subr.mxu0 0.0
      %1698 = vmatpush1.msra.mxu0 0.0
      %1699 = vmatprep.subr.mxu0 0.0
      %1700 = vmatpush1.msra.mxu0 0.0
      %1701 = vmatprep.subr.mxu0 0.0
      %1702 = vmatpush1.msra.mxu0 0.0
      %1703 = vmatprep.subr.mxu0 0.0
      %1704 = vmatpush1.msra.mxu0 0.0
      %1705 = vmatprep.subr.mxu0 0.0
      %1706 = vmatpush1.msra.mxu0 0.0
      %1707 = vmatprep.subr.mxu0 0.0
      %1708 = vmatpush1.msra.mxu0 0.0
      %1709 = vmatprep.subr.mxu0 0.0
      %1710 = vmatpush1.msra.mxu0 0.0
      %1711 = vmatprep.subr.mxu0 0.0
      %1712 = vmatpush1.msra.mxu0 0.0
      %1713 = vmatprep.subr.mxu0 0.0
      %1714 = vmatpush1.msra.mxu0 0.0
      %1715 = vmatprep.subr.mxu0 0.0
      %1716 = vmatpush1.msra.mxu0 0.0
      %1717 = vmatprep.subr.mxu0 0.0
      %1718 = vmatpush1.msra.mxu0 0.0
      %1719 = vmatprep.subr.mxu0 0.0
      %1720 = vmatpush1.msra.mxu0 0.0
      %1721 = vmatprep.subr.mxu0 0.0
      %1722 = vmatpush1.msra.mxu0 0.0
      %1723 = vmatprep.subr.mxu0 0.0
      %1724 = vmatpush1.msra.mxu0 0.0
      %1725 = vmatprep.subr.mxu0 0.0
      %1726 = vmatpush1.msra.mxu0 0.0
      %1727 = vmatprep.subr.mxu0 0.0
      %1728 = vmatpush1.msra.mxu0 0.0
      %1729 = vmatprep.subr.mxu0 0.0
      %1730 = vmatpush1.msra.mxu0 0.0
      %1731 = vmatprep.subr.mxu0 0.0
      %1732 = vmatpush1.msra.mxu0 0.0
      %1733 = vmatprep.mubr.f32.mxu0 0.0
      %1734 = vmatmul.mubr.f32.gmra.mrb[0].mxu0 %v1649
      %v1735 = vpop.f32.mrb[0].mxu0
      %v1736 = vadd.f32 0.0, %v1735
      %v1737 = vpop.f32.mrb[0].mxu0
      %1738 = vmatprep.mubr.f32.mxu0 0.0
      %1739 = vmatmul.mubr.f32.gmra.mrb[0].mxu0 %v1652
      %v1740 = vpop.f32.mrb[0].mxu0
      %v1741 = vadd.f32 0.0, %v1740
      %v1742 = vpop.f32.mrb[0].mxu0
      %1743 = vmatprep.mubr.f32.mxu0 0.0
      %1744 = vmatmul.mubr.f32.gmra.mrb[0].mxu0 %v1655
      %v1745 = vpop.f32.mrb[0].mxu0
      %v1746 = vadd.f32 0.0, %v1745
      %v1747 = vpop.f32.mrb[0].mxu0
      %1748 = vmatprep.mubr.f32.mxu0 0.0
      %1749 = vmatmul.mubr.f32.gmra.mrb[0].mxu0 %v1658
      %v1750 = vpop.f32.mrb[0].mxu0
      %v1751 = vadd.f32 0.0, %v1750
      %v1752 = vpop.f32.mrb[0].mxu0
      %1753 = vmatprep.mubr.f32.mxu0 0.0
      %1754 = vmatmul.mubr.f32.gmra.mrb[0].mxu0 %v1661
      %v1755 = vpop.f32.mrb[0].mxu0
      %v1756 = vadd.f32 0.0, %v1755
      %v1757 = vpop.f32.mrb[0].mxu0
      %1758 = vmatprep.mubr.f32.mxu0 0.0
      %1759 = vmatmul.mubr.f32.gmra.mrb[0].mxu0 %v1664
      %v1760 = vpop.f32.mrb[0].mxu0
      %v1761 = vadd.f32 0.0, %v1760
      %v1762 = vpop.f32.mrb[0].mxu0
      %1763 = vmatprep.mubr.f32.mxu0 0.0
      %1764 = vmatmul.mubr.f32.gmra.mrb[0].mxu0 %v1667
      %v1765 = vpop.f32.mrb[0].mxu0
      %v1766 = vadd.f32 0.0, %v1765
      %v1767 = vpop.f32.mrb[0].mxu0
      %1768 = vdwg.mxu0
      %v1769 = vadd.f32 %v1608, %v1736
      %v1770 = vadd.f32 %v1613, %v1741
      %v1771 = vadd.f32 %v1618, %v1746
      %v1772 = vadd.f32 %v1623, %v1751
      %v1773 = vadd.f32 %v1628, %v1756
      %v1774 = vadd.f32 %v1633, %v1761
      %v1775 = vadd.f32 %v1638, %v1766
      %1776 = vmatprep.subr.mxu0 0.0
      %1777 = vmatpush1.msra.mxu0 %v587
      %1778 = vmatprep.subr.mxu0 0.0
      %1779 = vmatpush1.msra.mxu0 %v588
      %1780 = vmatprep.subr.mxu0 0.0
      %1781 = vmatpush1.msra.mxu0 %v589
      %1782 = vmatprep.subr.mxu0 0.0
      %1783 = vmatpush1.msra.mxu0 %v590
      %1784 = vmatprep.subr.mxu0 0.0
      %1785 = vmatpush1.msra.mxu0 0.0
      %1786 = vmatprep.subr.mxu0 0.0
      %1787 = vmatpush1.msra.mxu0 0.0
      %1788 = vmatprep.subr.mxu0 0.0
      %1789 = vmatpush1.msra.mxu0 0.0
      %1790 = vmatprep.subr.mxu0 0.0
      %1791 = vmatpush1.msra.mxu0 0.0
      %1792 = vmatprep.subr.mxu0 0.0
      %1793 = vmatpush1.msra.mxu0 0.0
      %1794 = vmatprep.subr.mxu0 0.0
      %1795 = vmatpush1.msra.mxu0 0.0
      %1796 = vmatprep.subr.mxu0 0.0
      %1797 = vmatpush1.msra.mxu0 0.0
      %1798 = vmatprep.subr.mxu0 0.0
      %1799 = vmatpush1.msra.mxu0 0.0
      %1800 = vmatprep.subr.mxu0 0.0
      %1801 = vmatpush1.msra.mxu0 0.0
      %1802 = vmatprep.subr.mxu0 0.0
      %1803 = vmatpush1.msra.mxu0 0.0
      %1804 = vmatprep.subr.mxu0 0.0
      %1805 = vmatpush1.msra.mxu0 0.0
      %1806 = vmatprep.subr.mxu0 0.0
      %1807 = vmatpush1.msra.mxu0 0.0
      %1808 = vmatprep.subr.mxu0 0.0
      %1809 = vmatpush1.msra.mxu0 0.0
      %1810 = vmatprep.subr.mxu0 0.0
      %1811 = vmatpush1.msra.mxu0 0.0
      %1812 = vmatprep.subr.mxu0 0.0
      %1813 = vmatpush1.msra.mxu0 0.0
      %1814 = vmatprep.subr.mxu0 0.0
      %1815 = vmatpush1.msra.mxu0 0.0
      %1816 = vmatprep.subr.mxu0 0.0
      %1817 = vmatpush1.msra.mxu0 0.0
      %1818 = vmatprep.subr.mxu0 0.0
      %1819 = vmatpush1.msra.mxu0 0.0
      %1820 = vmatprep.subr.mxu0 0.0
      %1821 = vmatpush1.msra.mxu0 0.0
      %1822 = vmatprep.subr.mxu0 0.0
      %1823 = vmatpush1.msra.mxu0 0.0
      %1824 = vmatprep.subr.mxu0 0.0
      %1825 = vmatpush1.msra.mxu0 0.0
      %1826 = vmatprep.subr.mxu0 0.0
      %1827 = vmatpush1.msra.mxu0 0.0
      %1828 = vmatprep.subr.mxu0 0.0
      %1829 = vmatpush1.msra.mxu0 0.0
      %1830 = vmatprep.subr.mxu0 0.0
      %1831 = vmatpush1.msra.mxu0 0.0
      %1832 = vmatprep.subr.mxu0 0.0
      %1833 = vmatpush1.msra.mxu0 0.0
      %1834 = vmatprep.subr.mxu0 0.0
      %1835 = vmatpush1.msra.mxu0 0.0
      %1836 = vmatprep.subr.mxu0 0.0
      %1837 = vmatpush1.msra.mxu0 0.0
      %1838 = vmatprep.subr.mxu0 0.0
      %1839 = vmatpush1.msra.mxu0 0.0
      %1840 = vmatprep.mubr.f32.mxu0 0.0
      %1841 = vmatmul.mubr.f32.gmra.mrb[0].mxu0 %v733
      %v1842 = vpop.f32.mrb[0].mxu0
      %v1843 = vadd.f32 0.0, %v1842
      %v1844 = vpop.f32.mrb[0].mxu0
      %1845 = vmatprep.mubr.f32.mxu0 0.0
      %1846 = vmatmul.mubr.f32.gmra.mrb[0].mxu0 %v736
      %v1847 = vpop.f32.mrb[0].mxu0
      %v1848 = vadd.f32 0.0, %v1847
      %v1849 = vpop.f32.mrb[0].mxu0
      %1850 = vmatprep.mubr.f32.mxu0 0.0
      %1851 = vmatmul.mubr.f32.gmra.mrb[0].mxu0 %v739
      %v1852 = vpop.f32.mrb[0].mxu0
      %v1853 = vadd.f32 0.0, %v1852
      %v1854 = vpop.f32.mrb[0].mxu0
      %1855 = vmatprep.mubr.f32.mxu0 0.0
      %1856 = vmatmul.mubr.f32.gmra.mrb[0].mxu0 %v742
      %v1857 = vpop.f32.mrb[0].mxu0
      %v1858 = vadd.f32 0.0, %v1857
      %v1859 = vpop.f32.mrb[0].mxu0
      %1860 = vmatprep.mubr.f32.mxu0 0.0
      %1861 = vmatmul.mubr.f32.gmra.mrb[0].mxu0 %v745
      %v1862 = vpop.f32.mrb[0].mxu0
      %v1863 = vadd.f32 0.0, %v1862
      %v1864 = vpop.f32.mrb[0].mxu0
      %1865 = vmatprep.mubr.f32.mxu0 0.0
      %1866 = vmatmul.mubr.f32.gmra.mrb[0].mxu0 %v748
      %v1867 = vpop.f32.mrb[0].mxu0
      %v1868 = vadd.f32 0.0, %v1867
      %v1869 = vpop.f32.mrb[0].mxu0
      %1870 = vmatprep.mubr.f32.mxu0 0.0
      %1871 = vmatmul.mubr.f32.gmra.mrb[0].mxu0 %v751
      %v1872 = vpop.f32.mrb[0].mxu0
      %v1873 = vadd.f32 0.0, %v1872
      %v1874 = vpop.f32.mrb[0].mxu0
      %1875 = vdwg.mxu0
      %v1876 = vadd.f32 %v1769, %v1843
      %v1877 = vadd.f32 %v1770, %v1848
      %v1878 = vadd.f32 %v1771, %v1853
      %v1879 = vadd.f32 %v1772, %v1858
      %v1880 = vadd.f32 %v1773, %v1863
      %v1881 = vadd.f32 %v1774, %v1868
      %v1882 = vadd.f32 %v1775, %v1873
      %1883 = vmatprep.subr.mxu0 0.0
      %1884 = vmatpush1.msra.mxu0 %v728
      %1885 = vmatprep.subr.mxu0 0.0
      %1886 = vmatpush1.msra.mxu0 %v729
      %1887 = vmatprep.subr.mxu0 0.0
      %1888 = vmatpush1.msra.mxu0 %v730
      %1889 = vmatprep.subr.mxu0 0.0
      %1890 = vmatpush1.msra.mxu0 %v731
      %1891 = vmatprep.subr.mxu0 0.0
      %1892 = vmatpush1.msra.mxu0 0.0
      %1893 = vmatprep.subr.mxu0 0.0
      %1894 = vmatpush1.msra.mxu0 0.0
      %1895 = vmatprep.subr.mxu0 0.0
      %1896 = vmatpush1.msra.mxu0 0.0
      %1897 = vmatprep.subr.mxu0 0.0
      %1898 = vmatpush1.msra.mxu0 0.0
      %1899 = vmatprep.subr.mxu0 0.0
      %1900 = vmatpush1.msra.mxu0 0.0
      %1901 = vmatprep.subr.mxu0 0.0
      %1902 = vmatpush1.msra.mxu0 0.0
      %1903 = vmatprep.subr.mxu0 0.0
      %1904 = vmatpush1.msra.mxu0 0.0
      %1905 = vmatprep.subr.mxu0 0.0
      %1906 = vmatpush1.msra.mxu0 0.0
      %1907 = vmatprep.subr.mxu0 0.0
      %1908 = vmatpush1.msra.mxu0 0.0
      %1909 = vmatprep.subr.mxu0 0.0
      %1910 = vmatpush1.msra.mxu0 0.0
      %1911 = vmatprep.subr.mxu0 0.0
      %1912 = vmatpush1.msra.mxu0 0.0
      %1913 = vmatprep.subr.mxu0 0.0
      %1914 = vmatpush1.msra.mxu0 0.0
      %1915 = vmatprep.subr.mxu0 0.0
      %1916 = vmatpush1.msra.mxu0 0.0
      %1917 = vmatprep.subr.mxu0 0.0
      %1918 = vmatpush1.msra.mxu0 0.0
      %1919 = vmatprep.subr.mxu0 0.0
      %1920 = vmatpush1.msra.mxu0 0.0
      %1921 = vmatprep.subr.mxu0 0.0
      %1922 = vmatpush1.msra.mxu0 0.0
      %1923 = vmatprep.subr.mxu0 0.0
      %1924 = vmatpush1.msra.mxu0 0.0
      %1925 = vmatprep.subr.mxu0 0.0
      %1926 = vmatpush1.msra.mxu0 0.0
      %1927 = vmatprep.subr.mxu0 0.0
      %1928 = vmatpush1.msra.mxu0 0.0
      %1929 = vmatprep.subr.mxu0 0.0
      %1930 = vmatpush1.msra.mxu0 0.0
      %1931 = vmatprep.subr.mxu0 0.0
      %1932 = vmatpush1.msra.mxu0 0.0
      %1933 = vmatprep.subr.mxu0 0.0
      %1934 = vmatpush1.msra.mxu0 0.0
      %1935 = vmatprep.subr.mxu0 0.0
      %1936 = vmatpush1.msra.mxu0 0.0
      %1937 = vmatprep.subr.mxu0 0.0
      %1938 = vmatpush1.msra.mxu0 0.0
      %1939 = vmatprep.subr.mxu0 0.0
      %1940 = vmatpush1.msra.mxu0 0.0
      %1941 = vmatprep.subr.mxu0 0.0
      %1942 = vmatpush1.msra.mxu0 0.0
      %1943 = vmatprep.subr.mxu0 0.0
      %1944 = vmatpush1.msra.mxu0 0.0
      %1945 = vmatprep.subr.mxu0 0.0
      %1946 = vmatpush1.msra.mxu0 0.0
      %1947 = vmatprep.mubr.f32.mxu0 0.0
      %1948 = vmatmul.mubr.f32.gmra.mrb[0].mxu0 %v873
      %v1949 = vpop.f32.mrb[0].mxu0
      %v1950 = vadd.f32 0.0, %v1949
      %v1951 = vpop.f32.mrb[0].mxu0
      %1952 = vmatprep.mubr.f32.mxu0 0.0
      %1953 = vmatmul.mubr.f32.gmra.mrb[0].mxu0 %v876
      %v1954 = vpop.f32.mrb[0].mxu0
      %v1955 = vadd.f32 0.0, %v1954
      %v1956 = vpop.f32.mrb[0].mxu0
      %1957 = vmatprep.mubr.f32.mxu0 0.0
      %1958 = vmatmul.mubr.f32.gmra.mrb[0].mxu0 %v879
      %v1959 = vpop.f32.mrb[0].mxu0
      %v1960 = vadd.f32 0.0, %v1959
      %v1961 = vpop.f32.mrb[0].mxu0
      %1962 = vmatprep.mubr.f32.mxu0 0.0
      %1963 = vmatmul.mubr.f32.gmra.mrb[0].mxu0 %v882
      %v1964 = vpop.f32.mrb[0].mxu0
      %v1965 = vadd.f32 0.0, %v1964
      %v1966 = vpop.f32.mrb[0].mxu0
      %1967 = vmatprep.mubr.f32.mxu0 0.0
      %1968 = vmatmul.mubr.f32.gmra.mrb[0].mxu0 %v885
      %v1969 = vpop.f32.mrb[0].mxu0
      %v1970 = vadd.f32 0.0, %v1969
      %v1971 = vpop.f32.mrb[0].mxu0
      %1972 = vmatprep.mubr.f32.mxu0 0.0
      %1973 = vmatmul.mubr.f32.gmra.mrb[0].mxu0 %v888
      %v1974 = vpop.f32.mrb[0].mxu0
      %v1975 = vadd.f32 0.0, %v1974
      %v1976 = vpop.f32.mrb[0].mxu0
      %1977 = vmatprep.mubr.f32.mxu0 0.0
      %1978 = vmatmul.mubr.f32.gmra.mrb[0].mxu0 %v891
      %v1979 = vpop.f32.mrb[0].mxu0
      %v1980 = vadd.f32 0.0, %v1979
      %v1981 = vpop.f32.mrb[0].mxu0
      %1982 = vdwg.mxu0
      %v1983 = vadd.f32 %v1876, %v1950
      %v1984 = vadd.f32 %v1877, %v1955
      %v1985 = vadd.f32 %v1878, %v1960
      %v1986 = vadd.f32 %v1879, %v1965
      %v1987 = vadd.f32 %v1880, %v1970
      %v1988 = vadd.f32 %v1881, %v1975
      %v1989 = vadd.f32 %v1882, %v1980
      %v1990 = vld [vmem:[%s719 + $0x1] sm:$0xff]
      %v1991 = vld [vmem:[%s719 + $0x9] sm:$0xff]
      %v1992 = vld [vmem:[%s719 + $0x11] sm:$0xff]
      %v1993 = vld [vmem:[%s719 + $0x19] sm:$0xff]
      %v1994 = vld [vmem:[%s719 + $0x21] sm:$0xff]
      %v1995 = vld [vmem:[%s719 + $0x29] sm:$0xff]
      %v1996 = vld [vmem:[%s719 + $0x31] sm:$0xff]
      %v1998 = vsel %vm195, %v1990, 0
      %v2001 = vsel %vm195, %v1991, 0
      %v2004 = vsel %vm195, %v1992, 0
      %v2007 = vsel %vm195, %v1993, 0
      %v2010 = vsel %vm195, %v1994, 0
      %v2013 = vsel %vm195, %v1995, 0
      %v2016 = vsel %vm195, %v1996, 0
      %2018 = vmatprep.subr.mxu0 0.0
      %2019 = vmatpush1.msra.mxu0 %v868
      %2020 = vmatprep.subr.mxu0 0.0
      %2021 = vmatpush1.msra.mxu0 %v869
      %2022 = vmatprep.subr.mxu0 0.0
      %2023 = vmatpush1.msra.mxu0 %v870
      %2024 = vmatprep.subr.mxu0 0.0
      %2025 = vmatpush1.msra.mxu0 %v871
      %2026 = vmatprep.subr.mxu0 0.0
      %2027 = vmatpush1.msra.mxu0 0.0
      %2028 = vmatprep.subr.mxu0 0.0
      %2029 = vmatpush1.msra.mxu0 0.0
      %2030 = vmatprep.subr.mxu0 0.0
      %2031 = vmatpush1.msra.mxu0 0.0
      %2032 = vmatprep.subr.mxu0 0.0
      %2033 = vmatpush1.msra.mxu0 0.0
      %2034 = vmatprep.subr.mxu0 0.0
      %2035 = vmatpush1.msra.mxu0 0.0
      %2036 = vmatprep.subr.mxu0 0.0
      %2037 = vmatpush1.msra.mxu0 0.0
      %2038 = vmatprep.subr.mxu0 0.0
      %2039 = vmatpush1.msra.mxu0 0.0
      %2040 = vmatprep.subr.mxu0 0.0
      %2041 = vmatpush1.msra.mxu0 0.0
      %2042 = vmatprep.subr.mxu0 0.0
      %2043 = vmatpush1.msra.mxu0 0.0
      %2044 = vmatprep.subr.mxu0 0.0
      %2045 = vmatpush1.msra.mxu0 0.0
      %2046 = vmatprep.subr.mxu0 0.0
      %2047 = vmatpush1.msra.mxu0 0.0
      %2048 = vmatprep.subr.mxu0 0.0
      %2049 = vmatpush1.msra.mxu0 0.0
      %2050 = vmatprep.subr.mxu0 0.0
      %2051 = vmatpush1.msra.mxu0 0.0
      %2052 = vmatprep.subr.mxu0 0.0
      %2053 = vmatpush1.msra.mxu0 0.0
      %2054 = vmatprep.subr.mxu0 0.0
      %2055 = vmatpush1.msra.mxu0 0.0
      %2056 = vmatprep.subr.mxu0 0.0
      %2057 = vmatpush1.msra.mxu0 0.0
      %2058 = vmatprep.subr.mxu0 0.0
      %2059 = vmatpush1.msra.mxu0 0.0
      %2060 = vmatprep.subr.mxu0 0.0
      %2061 = vmatpush1.msra.mxu0 0.0
      %2062 = vmatprep.subr.mxu0 0.0
      %2063 = vmatpush1.msra.mxu0 0.0
      %2064 = vmatprep.subr.mxu0 0.0
      %2065 = vmatpush1.msra.mxu0 0.0
      %2066 = vmatprep.subr.mxu0 0.0
      %2067 = vmatpush1.msra.mxu0 0.0
      %2068 = vmatprep.subr.mxu0 0.0
      %2069 = vmatpush1.msra.mxu0 0.0
      %2070 = vmatprep.subr.mxu0 0.0
      %2071 = vmatpush1.msra.mxu0 0.0
      %2072 = vmatprep.subr.mxu0 0.0
      %2073 = vmatpush1.msra.mxu0 0.0
      %2074 = vmatprep.subr.mxu0 0.0
      %2075 = vmatpush1.msra.mxu0 0.0
      %2076 = vmatprep.subr.mxu0 0.0
      %2077 = vmatpush1.msra.mxu0 0.0
      %2078 = vmatprep.subr.mxu0 0.0
      %2079 = vmatpush1.msra.mxu0 0.0
      %2080 = vmatprep.subr.mxu0 0.0
      %2081 = vmatpush1.msra.mxu0 0.0
      %2082 = vmatprep.mubr.f32.mxu0 0.0
      %2083 = vmatmul.mubr.f32.gmra.mrb[0].mxu0 %v1998
      %v2084 = vpop.f32.mrb[0].mxu0
      %v2085 = vadd.f32 0.0, %v2084
      %v2086 = vpop.f32.mrb[0].mxu0
      %2087 = vmatprep.mubr.f32.mxu0 0.0
      %2088 = vmatmul.mubr.f32.gmra.mrb[0].mxu0 %v2001
      %v2089 = vpop.f32.mrb[0].mxu0
      %v2090 = vadd.f32 0.0, %v2089
      %v2091 = vpop.f32.mrb[0].mxu0
      %2092 = vmatprep.mubr.f32.mxu0 0.0
      %2093 = vmatmul.mubr.f32.gmra.mrb[0].mxu0 %v2004
      %v2094 = vpop.f32.mrb[0].mxu0
      %v2095 = vadd.f32 0.0, %v2094
      %v2096 = vpop.f32.mrb[0].mxu0
      %2097 = vmatprep.mubr.f32.mxu0 0.0
      %2098 = vmatmul.mubr.f32.gmra.mrb[0].mxu0 %v2007
      %v2099 = vpop.f32.mrb[0].mxu0
      %v2100 = vadd.f32 0.0, %v2099
      %v2101 = vpop.f32.mrb[0].mxu0
      %2102 = vmatprep.mubr.f32.mxu0 0.0
      %2103 = vmatmul.mubr.f32.gmra.mrb[0].mxu0 %v2010
      %v2104 = vpop.f32.mrb[0].mxu0
      %v2105 = vadd.f32 0.0, %v2104
      %v2106 = vpop.f32.mrb[0].mxu0
      %2107 = vmatprep.mubr.f32.mxu0 0.0
      %2108 = vmatmul.mubr.f32.gmra.mrb[0].mxu0 %v2013
      %v2109 = vpop.f32.mrb[0].mxu0
      %v2110 = vadd.f32 0.0, %v2109
      %v2111 = vpop.f32.mrb[0].mxu0
      %2112 = vmatprep.mubr.f32.mxu0 0.0
      %2113 = vmatmul.mubr.f32.gmra.mrb[0].mxu0 %v2016
      %v2114 = vpop.f32.mrb[0].mxu0
      %v2115 = vadd.f32 0.0, %v2114
      %v2116 = vpop.f32.mrb[0].mxu0
      %2117 = vdwg.mxu0
      %v2118 = vadd.f32 %v1983, %v2085
      %v2119 = vadd.f32 %v1984, %v2090
      %v2120 = vadd.f32 %v1985, %v2095
      %v2121 = vadd.f32 %v1986, %v2100
      %v2122 = vadd.f32 %v1987, %v2105
      %v2123 = vadd.f32 %v1988, %v2110
      %v2124 = vadd.f32 %v1989, %v2115
      %2125 = vmatprep.subr.mxu0 0.0
      %2126 = vmatpush1.msra.mxu0 %v1008
      %2127 = vmatprep.subr.mxu0 0.0
      %2128 = vmatpush1.msra.mxu0 %v1009
      %2129 = vmatprep.subr.mxu0 0.0
      %2130 = vmatpush1.msra.mxu0 %v1010
      %2131 = vmatprep.subr.mxu0 0.0
      %2132 = vmatpush1.msra.mxu0 %v1011
      %2133 = vmatprep.subr.mxu0 0.0
      %2134 = vmatpush1.msra.mxu0 0.0
      %2135 = vmatprep.subr.mxu0 0.0
      %2136 = vmatpush1.msra.mxu0 0.0
      %2137 = vmatprep.subr.mxu0 0.0
      %2138 = vmatpush1.msra.mxu0 0.0
      %2139 = vmatprep.subr.mxu0 0.0
      %2140 = vmatpush1.msra.mxu0 0.0
      %2141 = vmatprep.subr.mxu0 0.0
      %2142 = vmatpush1.msra.mxu0 0.0
      %2143 = vmatprep.subr.mxu0 0.0
      %2144 = vmatpush1.msra.mxu0 0.0
      %2145 = vmatprep.subr.mxu0 0.0
      %2146 = vmatpush1.msra.mxu0 0.0
      %2147 = vmatprep.subr.mxu0 0.0
      %2148 = vmatpush1.msra.mxu0 0.0
      %2149 = vmatprep.subr.mxu0 0.0
      %2150 = vmatpush1.msra.mxu0 0.0
      %2151 = vmatprep.subr.mxu0 0.0
      %2152 = vmatpush1.msra.mxu0 0.0
      %2153 = vmatprep.subr.mxu0 0.0
      %2154 = vmatpush1.msra.mxu0 0.0
      %2155 = vmatprep.subr.mxu0 0.0
      %2156 = vmatpush1.msra.mxu0 0.0
      %2157 = vmatprep.subr.mxu0 0.0
      %2158 = vmatpush1.msra.mxu0 0.0
      %2159 = vmatprep.subr.mxu0 0.0
      %2160 = vmatpush1.msra.mxu0 0.0
      %2161 = vmatprep.subr.mxu0 0.0
      %2162 = vmatpush1.msra.mxu0 0.0
      %2163 = vmatprep.subr.mxu0 0.0
      %2164 = vmatpush1.msra.mxu0 0.0
      %2165 = vmatprep.subr.mxu0 0.0
      %2166 = vmatpush1.msra.mxu0 0.0
      %2167 = vmatprep.subr.mxu0 0.0
      %2168 = vmatpush1.msra.mxu0 0.0
      %2169 = vmatprep.subr.mxu0 0.0
      %2170 = vmatpush1.msra.mxu0 0.0
      %2171 = vmatprep.subr.mxu0 0.0
      %2172 = vmatpush1.msra.mxu0 0.0
      %2173 = vmatprep.subr.mxu0 0.0
      %2174 = vmatpush1.msra.mxu0 0.0
      %2175 = vmatprep.subr.mxu0 0.0
      %2176 = vmatpush1.msra.mxu0 0.0
      %2177 = vmatprep.subr.mxu0 0.0
      %2178 = vmatpush1.msra.mxu0 0.0
      %2179 = vmatprep.subr.mxu0 0.0
      %2180 = vmatpush1.msra.mxu0 0.0
      %2181 = vmatprep.subr.mxu0 0.0
      %2182 = vmatpush1.msra.mxu0 0.0
      %2183 = vmatprep.subr.mxu0 0.0
      %2184 = vmatpush1.msra.mxu0 0.0
      %2185 = vmatprep.subr.mxu0 0.0
      %2186 = vmatpush1.msra.mxu0 0.0
      %2187 = vmatprep.subr.mxu0 0.0
      %2188 = vmatpush1.msra.mxu0 0.0
      %2189 = vmatprep.mubr.f32.mxu0 0.0
      %2190 = vmatmul.mubr.f32.gmra.mrb[0].mxu0 %v1153
      %v2191 = vpop.f32.mrb[0].mxu0
      %v2192 = vadd.f32 0.0, %v2191
      %v2193 = vpop.f32.mrb[0].mxu0
      %2194 = vmatprep.mubr.f32.mxu0 0.0
      %2195 = vmatmul.mubr.f32.gmra.mrb[0].mxu0 %v1156
      %v2196 = vpop.f32.mrb[0].mxu0
      %v2197 = vadd.f32 0.0, %v2196
      %v2198 = vpop.f32.mrb[0].mxu0
      %2199 = vmatprep.mubr.f32.mxu0 0.0
      %2200 = vmatmul.mubr.f32.gmra.mrb[0].mxu0 %v1159
      %v2201 = vpop.f32.mrb[0].mxu0
      %v2202 = vadd.f32 0.0, %v2201
      %v2203 = vpop.f32.mrb[0].mxu0
      %2204 = vmatprep.mubr.f32.mxu0 0.0
      %2205 = vmatmul.mubr.f32.gmra.mrb[0].mxu0 %v1162
      %v2206 = vpop.f32.mrb[0].mxu0
      %v2207 = vadd.f32 0.0, %v2206
      %v2208 = vpop.f32.mrb[0].mxu0
      %2209 = vmatprep.mubr.f32.mxu0 0.0
      %2210 = vmatmul.mubr.f32.gmra.mrb[0].mxu0 %v1165
      %v2211 = vpop.f32.mrb[0].mxu0
      %v2212 = vadd.f32 0.0, %v2211
      %v2213 = vpop.f32.mrb[0].mxu0
      %2214 = vmatprep.mubr.f32.mxu0 0.0
      %2215 = vmatmul.mubr.f32.gmra.mrb[0].mxu0 %v1168
      %v2216 = vpop.f32.mrb[0].mxu0
      %v2217 = vadd.f32 0.0, %v2216
      %v2218 = vpop.f32.mrb[0].mxu0
      %2219 = vmatprep.mubr.f32.mxu0 0.0
      %2220 = vmatmul.mubr.f32.gmra.mrb[0].mxu0 %v1171
      %v2221 = vpop.f32.mrb[0].mxu0
      %v2222 = vadd.f32 0.0, %v2221
      %v2223 = vpop.f32.mrb[0].mxu0
      %2224 = vdwg.mxu0
      %v2225 = vadd.f32 %v2118, %v2192
      %v2226 = vadd.f32 %v2119, %v2197
      %v2227 = vadd.f32 %v2120, %v2202
      %v2228 = vadd.f32 %v2121, %v2207
      %v2229 = vadd.f32 %v2122, %v2212
      %v2230 = vadd.f32 %v2123, %v2217
      %v2231 = vadd.f32 %v2124, %v2222
      %2232 = vmatprep.subr.mxu0 0.0
      %2233 = vmatpush1.msra.mxu0 %v1148
      %2234 = vmatprep.subr.mxu0 0.0
      %2235 = vmatpush1.msra.mxu0 %v1149
      %2236 = vmatprep.subr.mxu0 0.0
      %2237 = vmatpush1.msra.mxu0 %v1150
      %2238 = vmatprep.subr.mxu0 0.0
      %2239 = vmatpush1.msra.mxu0 %v1151
      %2240 = vmatprep.subr.mxu0 0.0
      %2241 = vmatpush1.msra.mxu0 0.0
      %2242 = vmatprep.subr.mxu0 0.0
      %2243 = vmatpush1.msra.mxu0 0.0
      %2244 = vmatprep.subr.mxu0 0.0
      %2245 = vmatpush1.msra.mxu0 0.0
      %2246 = vmatprep.subr.mxu0 0.0
      %2247 = vmatpush1.msra.mxu0 0.0
      %2248 = vmatprep.subr.mxu0 0.0
      %2249 = vmatpush1.msra.mxu0 0.0
      %2250 = vmatprep.subr.mxu0 0.0
      %2251 = vmatpush1.msra.mxu0 0.0
      %2252 = vmatprep.subr.mxu0 0.0
      %2253 = vmatpush1.msra.mxu0 0.0
      %2254 = vmatprep.subr.mxu0 0.0
      %2255 = vmatpush1.msra.mxu0 0.0
      %2256 = vmatprep.subr.mxu0 0.0
      %2257 = vmatpush1.msra.mxu0 0.0
      %2258 = vmatprep.subr.mxu0 0.0
      %2259 = vmatpush1.msra.mxu0 0.0
      %2260 = vmatprep.subr.mxu0 0.0
      %2261 = vmatpush1.msra.mxu0 0.0
      %2262 = vmatprep.subr.mxu0 0.0
      %2263 = vmatpush1.msra.mxu0 0.0
      %2264 = vmatprep.subr.mxu0 0.0
      %2265 = vmatpush1.msra.mxu0 0.0
      %2266 = vmatprep.subr.mxu0 0.0
      %2267 = vmatpush1.msra.mxu0 0.0
      %2268 = vmatprep.subr.mxu0 0.0
      %2269 = vmatpush1.msra.mxu0 0.0
      %2270 = vmatprep.subr.mxu0 0.0
      %2271 = vmatpush1.msra.mxu0 0.0
      %2272 = vmatprep.subr.mxu0 0.0
      %2273 = vmatpush1.msra.mxu0 0.0
      %2274 = vmatprep.subr.mxu0 0.0
      %2275 = vmatpush1.msra.mxu0 0.0
      %2276 = vmatprep.subr.mxu0 0.0
      %2277 = vmatpush1.msra.mxu0 0.0
      %2278 = vmatprep.subr.mxu0 0.0
      %2279 = vmatpush1.msra.mxu0 0.0
      %2280 = vmatprep.subr.mxu0 0.0
      %2281 = vmatpush1.msra.mxu0 0.0
      %2282 = vmatprep.subr.mxu0 0.0
      %2283 = vmatpush1.msra.mxu0 0.0
      %2284 = vmatprep.subr.mxu0 0.0
      %2285 = vmatpush1.msra.mxu0 0.0
      %2286 = vmatprep.subr.mxu0 0.0
      %2287 = vmatpush1.msra.mxu0 0.0
      %2288 = vmatprep.subr.mxu0 0.0
      %2289 = vmatpush1.msra.mxu0 0.0
      %2290 = vmatprep.subr.mxu0 0.0
      %2291 = vmatpush1.msra.mxu0 0.0
      %2292 = vmatprep.subr.mxu0 0.0
      %2293 = vmatpush1.msra.mxu0 0.0
      %2294 = vmatprep.subr.mxu0 0.0
      %2295 = vmatpush1.msra.mxu0 0.0
      %2296 = vmatprep.mubr.f32.mxu0 0.0
      %2297 = vmatmul.mubr.f32.gmra.mrb[0].mxu0 %v1293
      %v2298 = vpop.f32.mrb[0].mxu0
      %v2299 = vadd.f32 0.0, %v2298
      %v2300 = vpop.f32.mrb[0].mxu0
      %2301 = vmatprep.mubr.f32.mxu0 0.0
      %2302 = vmatmul.mubr.f32.gmra.mrb[0].mxu0 %v1296
      %v2303 = vpop.f32.mrb[0].mxu0
      %v2304 = vadd.f32 0.0, %v2303
      %v2305 = vpop.f32.mrb[0].mxu0
      %2306 = vmatprep.mubr.f32.mxu0 0.0
      %2307 = vmatmul.mubr.f32.gmra.mrb[0].mxu0 %v1299
      %v2308 = vpop.f32.mrb[0].mxu0
      %v2309 = vadd.f32 0.0, %v2308
      %v2310 = vpop.f32.mrb[0].mxu0
      %2311 = vmatprep.mubr.f32.mxu0 0.0
      %2312 = vmatmul.mubr.f32.gmra.mrb[0].mxu0 %v1302
      %v2313 = vpop.f32.mrb[0].mxu0
      %v2314 = vadd.f32 0.0, %v2313
      %v2315 = vpop.f32.mrb[0].mxu0
      %2316 = vmatprep.mubr.f32.mxu0 0.0
      %2317 = vmatmul.mubr.f32.gmra.mrb[0].mxu0 %v1305
      %v2318 = vpop.f32.mrb[0].mxu0
      %v2319 = vadd.f32 0.0, %v2318
      %v2320 = vpop.f32.mrb[0].mxu0
      %2321 = vmatprep.mubr.f32.mxu0 0.0
      %2322 = vmatmul.mubr.f32.gmra.mrb[0].mxu0 %v1308
      %v2323 = vpop.f32.mrb[0].mxu0
      %v2324 = vadd.f32 0.0, %v2323
      %v2325 = vpop.f32.mrb[0].mxu0
      %2326 = vmatprep.mubr.f32.mxu0 0.0
      %2327 = vmatmul.mubr.f32.gmra.mrb[0].mxu0 %v1311
      %v2328 = vpop.f32.mrb[0].mxu0
      %v2329 = vadd.f32 0.0, %v2328
      %v2330 = vpop.f32.mrb[0].mxu0
      %2331 = vdwg.mxu0
      %v2332 = vadd.f32 %v2225, %v2299
      %v2333 = vadd.f32 %v2226, %v2304
      %v2334 = vadd.f32 %v2227, %v2309
      %v2335 = vadd.f32 %v2228, %v2314
      %v2336 = vadd.f32 %v2229, %v2319
      %v2337 = vadd.f32 %v2230, %v2324
      %v2338 = vadd.f32 %v2231, %v2329
      %v2339 = vld [vmem:[%s182 + $0x9] sm:$0xff]
      %v2340 = vld [vmem:[%s182 + $0x11] sm:$0xff]
      %v2341 = vld [vmem:[%s182 + $0x19] sm:$0xff]
      %v2342 = vld [vmem:[%s182 + $0x21] sm:$0xff]
      %v2343 = vld [vmem:[%s182 + $0x29] sm:$0xff]
      %v2344 = vld [vmem:[%s182 + $0x31] sm:$0xff]
      %v2345 = vld [vmem:[%s182 + $0x39] sm:$0xff]
      %v2347 = vsel %vm195, %v2339, 0
      %v2350 = vsel %vm195, %v2340, 0
      %v2353 = vsel %vm195, %v2341, 0
      %v2356 = vsel %vm195, %v2342, 0
      %v2359 = vsel %vm195, %v2343, 0
      %v2362 = vsel %vm195, %v2344, 0
      %v2365 = vsel %vm195, %v2345, 0
      %2367 = vmatprep.subr.mxu0 0.0
      %2368 = vmatpush1.msra.mxu0 %v1288
      %2369 = vmatprep.subr.mxu0 0.0
      %2370 = vmatpush1.msra.mxu0 %v1289
      %2371 = vmatprep.subr.mxu0 0.0
      %2372 = vmatpush1.msra.mxu0 %v1290
      %2373 = vmatprep.subr.mxu0 0.0
      %2374 = vmatpush1.msra.mxu0 %v1291
      %2375 = vmatprep.subr.mxu0 0.0
      %2376 = vmatpush1.msra.mxu0 0.0
      %2377 = vmatprep.subr.mxu0 0.0
      %2378 = vmatpush1.msra.mxu0 0.0
      %2379 = vmatprep.subr.mxu0 0.0
      %2380 = vmatpush1.msra.mxu0 0.0
      %2381 = vmatprep.subr.mxu0 0.0
      %2382 = vmatpush1.msra.mxu0 0.0
      %2383 = vmatprep.subr.mxu0 0.0
      %2384 = vmatpush1.msra.mxu0 0.0
      %2385 = vmatprep.subr.mxu0 0.0
      %2386 = vmatpush1.msra.mxu0 0.0
      %2387 = vmatprep.subr.mxu0 0.0
      %2388 = vmatpush1.msra.mxu0 0.0
      %2389 = vmatprep.subr.mxu0 0.0
      %2390 = vmatpush1.msra.mxu0 0.0
      %2391 = vmatprep.subr.mxu0 0.0
      %2392 = vmatpush1.msra.mxu0 0.0
      %2393 = vmatprep.subr.mxu0 0.0
      %2394 = vmatpush1.msra.mxu0 0.0
      %2395 = vmatprep.subr.mxu0 0.0
      %2396 = vmatpush1.msra.mxu0 0.0
      %2397 = vmatprep.subr.mxu0 0.0
      %2398 = vmatpush1.msra.mxu0 0.0
      %2399 = vmatprep.subr.mxu0 0.0
      %2400 = vmatpush1.msra.mxu0 0.0
      %2401 = vmatprep.subr.mxu0 0.0
      %2402 = vmatpush1.msra.mxu0 0.0
      %2403 = vmatprep.subr.mxu0 0.0
      %2404 = vmatpush1.msra.mxu0 0.0
      %2405 = vmatprep.subr.mxu0 0.0
      %2406 = vmatpush1.msra.mxu0 0.0
      %2407 = vmatprep.subr.mxu0 0.0
      %2408 = vmatpush1.msra.mxu0 0.0
      %2409 = vmatprep.subr.mxu0 0.0
      %2410 = vmatpush1.msra.mxu0 0.0
      %2411 = vmatprep.subr.mxu0 0.0
      %2412 = vmatpush1.msra.mxu0 0.0
      %2413 = vmatprep.subr.mxu0 0.0
      %2414 = vmatpush1.msra.mxu0 0.0
      %2415 = vmatprep.subr.mxu0 0.0
      %2416 = vmatpush1.msra.mxu0 0.0
      %2417 = vmatprep.subr.mxu0 0.0
      %2418 = vmatpush1.msra.mxu0 0.0
      %2419 = vmatprep.subr.mxu0 0.0
      %2420 = vmatpush1.msra.mxu0 0.0
      %2421 = vmatprep.subr.mxu0 0.0
      %2422 = vmatpush1.msra.mxu0 0.0
      %2423 = vmatprep.subr.mxu0 0.0
      %2424 = vmatpush1.msra.mxu0 0.0
      %2425 = vmatprep.subr.mxu0 0.0
      %2426 = vmatpush1.msra.mxu0 0.0
      %2427 = vmatprep.subr.mxu0 0.0
      %2428 = vmatpush1.msra.mxu0 0.0
      %2429 = vmatprep.subr.mxu0 0.0
      %2430 = vmatpush1.msra.mxu0 0.0
      %2431 = vmatprep.mubr.f32.mxu0 0.0
      %2432 = vmatmul.mubr.f32.gmra.mrb[0].mxu0 %v2347
      %v2433 = vpop.f32.mrb[0].mxu0
      %v2434 = vadd.f32 0.0, %v2433
      %v2435 = vpop.f32.mrb[0].mxu0
      %2436 = vmatprep.mubr.f32.mxu0 0.0
      %2437 = vmatmul.mubr.f32.gmra.mrb[0].mxu0 %v2350
      %v2438 = vpop.f32.mrb[0].mxu0
      %v2439 = vadd.f32 0.0, %v2438
      %v2440 = vpop.f32.mrb[0].mxu0
      %2441 = vmatprep.mubr.f32.mxu0 0.0
      %2442 = vmatmul.mubr.f32.gmra.mrb[0].mxu0 %v2353
      %v2443 = vpop.f32.mrb[0].mxu0
      %v2444 = vadd.f32 0.0, %v2443
      %v2445 = vpop.f32.mrb[0].mxu0
      %2446 = vmatprep.mubr.f32.mxu0 0.0
      %2447 = vmatmul.mubr.f32.gmra.mrb[0].mxu0 %v2356
      %v2448 = vpop.f32.mrb[0].mxu0
      %v2449 = vadd.f32 0.0, %v2448
      %v2450 = vpop.f32.mrb[0].mxu0
      %2451 = vmatprep.mubr.f32.mxu0 0.0
      %2452 = vmatmul.mubr.f32.gmra.mrb[0].mxu0 %v2359
      %v2453 = vpop.f32.mrb[0].mxu0
      %v2454 = vadd.f32 0.0, %v2453
      %v2455 = vpop.f32.mrb[0].mxu0
      %2456 = vmatprep.mubr.f32.mxu0 0.0
      %2457 = vmatmul.mubr.f32.gmra.mrb[0].mxu0 %v2362
      %v2458 = vpop.f32.mrb[0].mxu0
      %v2459 = vadd.f32 0.0, %v2458
      %v2460 = vpop.f32.mrb[0].mxu0
      %2461 = vmatprep.mubr.f32.mxu0 0.0
      %2462 = vmatmul.mubr.f32.gmra.mrb[0].mxu0 %v2365
      %v2463 = vpop.f32.mrb[0].mxu0
      %v2464 = vadd.f32 0.0, %v2463
      %v2465 = vpop.f32.mrb[0].mxu0
      %2466 = vdwg.mxu0
      %v2467 = vadd.f32 %v2332, %v2434
      %v2468 = vadd.f32 %v2333, %v2439
      %v2469 = vadd.f32 %v2334, %v2444
      %v2470 = vadd.f32 %v2335, %v2449
      %v2471 = vadd.f32 %v2336, %v2454
      %v2472 = vadd.f32 %v2337, %v2459
      %v2473 = vadd.f32 %v2338, %v2464
      %v2474 = vadd.f32 %v2467, %v1425
      %v2475 = vadd.f32 %v2468, %v1425
      %v2476 = vadd.f32 %v2469, %v1425
      %v2477 = vadd.f32 %v2470, %v1425
      %v2478 = vadd.f32 %v2471, %v1425
      %v2479 = vadd.f32 %v2472, %v1425
      %v2480 = vadd.f32 %v2473, %v1425
      %v2481 = vmax.f32 %v2474, 0.0
      %v2482 = vmax.f32 %v2475, 0.0
      %v2483 = vmax.f32 %v2476, 0.0
      %v2484 = vmax.f32 %v2477, 0.0
      %v2485 = vmax.f32 %v2478, 0.0
      %v2486 = vmax.f32 %v2479, 0.0
      %v2487 = vmax.f32 %v2480, 0.0
      %v2488 = vmax.f32 %v1434, %v2481
      %v2489 = vmax.f32 %v1435, %v2482
      %v2490 = vmax.f32 %v1436, %v2483
      %v2491 = vmax.f32 %v1437, %v2484
      %v2492 = vmax.f32 %v1438, %v2485
      %v2493 = vmax.f32 %v1439, %v2486
      %v2494 = vmax.f32 %v1440, %v2487
      %2495 = vmatprep.subr.mxu0 0.0
      %2496 = vmatpush1.msra.mxu0 %v191
      %2497 = vmatprep.subr.mxu0 0.0
      %2498 = vmatpush1.msra.mxu0 %v192
      %2499 = vmatprep.subr.mxu0 0.0
      %2500 = vmatpush1.msra.mxu0 %v193
      %2501 = vmatprep.subr.mxu0 0.0
      %2502 = vmatpush1.msra.mxu0 %v194
      %2503 = vmatprep.subr.mxu0 0.0
      %2504 = vmatpush1.msra.mxu0 0.0
      %2505 = vmatprep.subr.mxu0 0.0
      %2506 = vmatpush1.msra.mxu0 0.0
      %2507 = vmatprep.subr.mxu0 0.0
      %2508 = vmatpush1.msra.mxu0 0.0
      %2509 = vmatprep.subr.mxu0 0.0
      %2510 = vmatpush1.msra.mxu0 0.0
      %2511 = vmatprep.subr.mxu0 0.0
      %2512 = vmatpush1.msra.mxu0 0.0
      %2513 = vmatprep.subr.mxu0 0.0
      %2514 = vmatpush1.msra.mxu0 0.0
      %2515 = vmatprep.subr.mxu0 0.0
      %2516 = vmatpush1.msra.mxu0 0.0
      %2517 = vmatprep.subr.mxu0 0.0
      %2518 = vmatpush1.msra.mxu0 0.0
      %2519 = vmatprep.subr.mxu0 0.0
      %2520 = vmatpush1.msra.mxu0 0.0
      %2521 = vmatprep.subr.mxu0 0.0
      %2522 = vmatpush1.msra.mxu0 0.0
      %2523 = vmatprep.subr.mxu0 0.0
      %2524 = vmatpush1.msra.mxu0 0.0
      %2525 = vmatprep.subr.mxu0 0.0
      %2526 = vmatpush1.msra.mxu0 0.0
      %2527 = vmatprep.subr.mxu0 0.0
      %2528 = vmatpush1.msra.mxu0 0.0
      %2529 = vmatprep.subr.mxu0 0.0
      %2530 = vmatpush1.msra.mxu0 0.0
      %2531 = vmatprep.subr.mxu0 0.0
      %2532 = vmatpush1.msra.mxu0 0.0
      %2533 = vmatprep.subr.mxu0 0.0
      %2534 = vmatpush1.msra.mxu0 0.0
      %2535 = vmatprep.subr.mxu0 0.0
      %2536 = vmatpush1.msra.mxu0 0.0
      %2537 = vmatprep.subr.mxu0 0.0
      %2538 = vmatpush1.msra.mxu0 0.0
      %2539 = vmatprep.subr.mxu0 0.0
      %2540 = vmatpush1.msra.mxu0 0.0
      %2541 = vmatprep.subr.mxu0 0.0
      %2542 = vmatpush1.msra.mxu0 0.0
      %2543 = vmatprep.subr.mxu0 0.0
      %2544 = vmatpush1.msra.mxu0 0.0
      %2545 = vmatprep.subr.mxu0 0.0
      %2546 = vmatpush1.msra.mxu0 0.0
      %2547 = vmatprep.subr.mxu0 0.0
      %2548 = vmatpush1.msra.mxu0 0.0
      %2549 = vmatprep.subr.mxu0 0.0
      %2550 = vmatpush1.msra.mxu0 0.0
      %2551 = vmatprep.subr.mxu0 0.0
      %2552 = vmatpush1.msra.mxu0 0.0
      %2553 = vmatprep.subr.mxu0 0.0
      %2554 = vmatpush1.msra.mxu0 0.0
      %2555 = vmatprep.subr.mxu0 0.0
      %2556 = vmatpush1.msra.mxu0 0.0
      %2557 = vmatprep.subr.mxu0 0.0
      %2558 = vmatpush1.msra.mxu0 0.0
      %2559 = vmatprep.mubr.f32.mxu0 0.0
      %2560 = vmatmul.mubr.f32.gmra.mrb[0].mxu0 %v733
      %v2561 = vpop.f32.mrb[0].mxu0
      %v2562 = vadd.f32 0.0, %v2561
      %v2563 = vpop.f32.mrb[0].mxu0
      %2564 = vmatprep.mubr.f32.mxu0 0.0
      %2565 = vmatmul.mubr.f32.gmra.mrb[0].mxu0 %v736
      %v2566 = vpop.f32.mrb[0].mxu0
      %v2567 = vadd.f32 0.0, %v2566
      %v2568 = vpop.f32.mrb[0].mxu0
      %2569 = vmatprep.mubr.f32.mxu0 0.0
      %2570 = vmatmul.mubr.f32.gmra.mrb[0].mxu0 %v739
      %v2571 = vpop.f32.mrb[0].mxu0
      %v2572 = vadd.f32 0.0, %v2571
      %v2573 = vpop.f32.mrb[0].mxu0
      %2574 = vmatprep.mubr.f32.mxu0 0.0
      %2575 = vmatmul.mubr.f32.gmra.mrb[0].mxu0 %v742
      %v2576 = vpop.f32.mrb[0].mxu0
      %v2577 = vadd.f32 0.0, %v2576
      %v2578 = vpop.f32.mrb[0].mxu0
      %2579 = vmatprep.mubr.f32.mxu0 0.0
      %2580 = vmatmul.mubr.f32.gmra.mrb[0].mxu0 %v745
      %v2581 = vpop.f32.mrb[0].mxu0
      %v2582 = vadd.f32 0.0, %v2581
      %v2583 = vpop.f32.mrb[0].mxu0
      %2584 = vmatprep.mubr.f32.mxu0 0.0
      %2585 = vmatmul.mubr.f32.gmra.mrb[0].mxu0 %v748
      %v2586 = vpop.f32.mrb[0].mxu0
      %v2587 = vadd.f32 0.0, %v2586
      %v2588 = vpop.f32.mrb[0].mxu0
      %2589 = vmatprep.mubr.f32.mxu0 0.0
      %2590 = vmatmul.mubr.f32.gmra.mrb[0].mxu0 %v751
      %v2591 = vpop.f32.mrb[0].mxu0
      %v2592 = vadd.f32 0.0, %v2591
      %v2593 = vpop.f32.mrb[0].mxu0
      %2594 = vdwg.mxu0
      %2595 = vmatprep.subr.mxu0 0.0
      %2596 = vmatpush1.msra.mxu0 %v178
      %2597 = vmatprep.subr.mxu0 0.0
      %2598 = vmatpush1.msra.mxu0 %v179
      %2599 = vmatprep.subr.mxu0 0.0
      %2600 = vmatpush1.msra.mxu0 %v180
      %2601 = vmatprep.subr.mxu0 0.0
      %2602 = vmatpush1.msra.mxu0 %v181
      %2603 = vmatprep.subr.mxu0 0.0
      %2604 = vmatpush1.msra.mxu0 0.0
      %2605 = vmatprep.subr.mxu0 0.0
      %2606 = vmatpush1.msra.mxu0 0.0
      %2607 = vmatprep.subr.mxu0 0.0
      %2608 = vmatpush1.msra.mxu0 0.0
      %2609 = vmatprep.subr.mxu0 0.0
      %2610 = vmatpush1.msra.mxu0 0.0
      %2611 = vmatprep.subr.mxu0 0.0
      %2612 = vmatpush1.msra.mxu0 0.0
      %2613 = vmatprep.subr.mxu0 0.0
      %2614 = vmatpush1.msra.mxu0 0.0
      %2615 = vmatprep.subr.mxu0 0.0
      %2616 = vmatpush1.msra.mxu0 0.0
      %2617 = vmatprep.subr.mxu0 0.0
      %2618 = vmatpush1.msra.mxu0 0.0
      %2619 = vmatprep.subr.mxu0 0.0
      %2620 = vmatpush1.msra.mxu0 0.0
      %2621 = vmatprep.subr.mxu0 0.0
      %2622 = vmatpush1.msra.mxu0 0.0
      %2623 = vmatprep.subr.mxu0 0.0
      %2624 = vmatpush1.msra.mxu0 0.0
      %2625 = vmatprep.subr.mxu0 0.0
      %2626 = vmatpush1.msra.mxu0 0.0
      %2627 = vmatprep.subr.mxu0 0.0
      %2628 = vmatpush1.msra.mxu0 0.0
      %2629 = vmatprep.subr.mxu0 0.0
      %2630 = vmatpush1.msra.mxu0 0.0
      %2631 = vmatprep.subr.mxu0 0.0
      %2632 = vmatpush1.msra.mxu0 0.0
      %2633 = vmatprep.subr.mxu0 0.0
      %2634 = vmatpush1.msra.mxu0 0.0
      %2635 = vmatprep.subr.mxu0 0.0
      %2636 = vmatpush1.msra.mxu0 0.0
      %2637 = vmatprep.subr.mxu0 0.0
      %2638 = vmatpush1.msra.mxu0 0.0
      %2639 = vmatprep.subr.mxu0 0.0
      %2640 = vmatpush1.msra.mxu0 0.0
      %2641 = vmatprep.subr.mxu0 0.0
      %2642 = vmatpush1.msra.mxu0 0.0
      %2643 = vmatprep.subr.mxu0 0.0
      %2644 = vmatpush1.msra.mxu0 0.0
      %2645 = vmatprep.subr.mxu0 0.0
      %2646 = vmatpush1.msra.mxu0 0.0
      %2647 = vmatprep.subr.mxu0 0.0
      %2648 = vmatpush1.msra.mxu0 0.0
      %2649 = vmatprep.subr.mxu0 0.0
      %2650 = vmatpush1.msra.mxu0 0.0
      %2651 = vmatprep.subr.mxu0 0.0
      %2652 = vmatpush1.msra.mxu0 0.0
      %2653 = vmatprep.subr.mxu0 0.0
      %2654 = vmatpush1.msra.mxu0 0.0
      %2655 = vmatprep.subr.mxu0 0.0
      %2656 = vmatpush1.msra.mxu0 0.0
      %2657 = vmatprep.subr.mxu0 0.0
      %2658 = vmatpush1.msra.mxu0 0.0
      %2659 = vmatprep.mubr.f32.mxu0 0.0
      %2660 = vmatmul.mubr.f32.gmra.mrb[0].mxu0 %v592
      %v2661 = vpop.f32.mrb[0].mxu0
      %v2662 = vadd.f32 %v2562, %v2661
      %v2663 = vpop.f32.mrb[0].mxu0
      %2664 = vmatprep.mubr.f32.mxu0 0.0
      %2665 = vmatmul.mubr.f32.gmra.mrb[0].mxu0 %v595
      %v2666 = vpop.f32.mrb[0].mxu0
      %v2667 = vadd.f32 %v2567, %v2666
      %v2668 = vpop.f32.mrb[0].mxu0
      %2669 = vmatprep.mubr.f32.mxu0 0.0
      %2670 = vmatmul.mubr.f32.gmra.mrb[0].mxu0 %v598
      %v2671 = vpop.f32.mrb[0].mxu0
      %v2672 = vadd.f32 %v2572, %v2671
      %v2673 = vpop.f32.mrb[0].mxu0
      %2674 = vmatprep.mubr.f32.mxu0 0.0
      %2675 = vmatmul.mubr.f32.gmra.mrb[0].mxu0 %v601
      %v2676 = vpop.f32.mrb[0].mxu0
      %v2677 = vadd.f32 %v2577, %v2676
      %v2678 = vpop.f32.mrb[0].mxu0
      %2679 = vmatprep.mubr.f32.mxu0 0.0
      %2680 = vmatmul.mubr.f32.gmra.mrb[0].mxu0 %v604
      %v2681 = vpop.f32.mrb[0].mxu0
      %v2682 = vadd.f32 %v2582, %v2681
      %v2683 = vpop.f32.mrb[0].mxu0
      %2684 = vmatprep.mubr.f32.mxu0 0.0
      %2685 = vmatmul.mubr.f32.gmra.mrb[0].mxu0 %v607
      %v2686 = vpop.f32.mrb[0].mxu0
      %v2687 = vadd.f32 %v2587, %v2686
      %v2688 = vpop.f32.mrb[0].mxu0
      %2689 = vmatprep.mubr.f32.mxu0 0.0
      %2690 = vmatmul.mubr.f32.gmra.mrb[0].mxu0 %v610
      %v2691 = vpop.f32.mrb[0].mxu0
      %v2692 = vadd.f32 %v2592, %v2691
      %v2693 = vpop.f32.mrb[0].mxu0
      %2694 = vdwg.mxu0
      %2695 = vmatprep.subr.mxu0 0.0
      %2696 = vmatpush1.msra.mxu0 %v446
      %2697 = vmatprep.subr.mxu0 0.0
      %2698 = vmatpush1.msra.mxu0 %v447
      %2699 = vmatprep.subr.mxu0 0.0
      %2700 = vmatpush1.msra.mxu0 %v448
      %2701 = vmatprep.subr.mxu0 0.0
      %2702 = vmatpush1.msra.mxu0 %v449
      %2703 = vmatprep.subr.mxu0 0.0
      %2704 = vmatpush1.msra.mxu0 0.0
      %2705 = vmatprep.subr.mxu0 0.0
      %2706 = vmatpush1.msra.mxu0 0.0
      %2707 = vmatprep.subr.mxu0 0.0
      %2708 = vmatpush1.msra.mxu0 0.0
      %2709 = vmatprep.subr.mxu0 0.0
      %2710 = vmatpush1.msra.mxu0 0.0
      %2711 = vmatprep.subr.mxu0 0.0
      %2712 = vmatpush1.msra.mxu0 0.0
      %2713 = vmatprep.subr.mxu0 0.0
      %2714 = vmatpush1.msra.mxu0 0.0
      %2715 = vmatprep.subr.mxu0 0.0
      %2716 = vmatpush1.msra.mxu0 0.0
      %2717 = vmatprep.subr.mxu0 0.0
      %2718 = vmatpush1.msra.mxu0 0.0
      %2719 = vmatprep.subr.mxu0 0.0
      %2720 = vmatpush1.msra.mxu0 0.0
      %2721 = vmatprep.subr.mxu0 0.0
      %2722 = vmatpush1.msra.mxu0 0.0
      %2723 = vmatprep.subr.mxu0 0.0
      %2724 = vmatpush1.msra.mxu0 0.0
      %2725 = vmatprep.subr.mxu0 0.0
      %2726 = vmatpush1.msra.mxu0 0.0
      %2727 = vmatprep.subr.mxu0 0.0
      %2728 = vmatpush1.msra.mxu0 0.0
      %2729 = vmatprep.subr.mxu0 0.0
      %2730 = vmatpush1.msra.mxu0 0.0
      %2731 = vmatprep.subr.mxu0 0.0
      %2732 = vmatpush1.msra.mxu0 0.0
      %2733 = vmatprep.subr.mxu0 0.0
      %2734 = vmatpush1.msra.mxu0 0.0
      %2735 = vmatprep.subr.mxu0 0.0
      %2736 = vmatpush1.msra.mxu0 0.0
      %2737 = vmatprep.subr.mxu0 0.0
      %2738 = vmatpush1.msra.mxu0 0.0
      %2739 = vmatprep.subr.mxu0 0.0
      %2740 = vmatpush1.msra.mxu0 0.0
      %2741 = vmatprep.subr.mxu0 0.0
      %2742 = vmatpush1.msra.mxu0 0.0
      %2743 = vmatprep.subr.mxu0 0.0
      %2744 = vmatpush1.msra.mxu0 0.0
      %2745 = vmatprep.subr.mxu0 0.0
      %2746 = vmatpush1.msra.mxu0 0.0
      %2747 = vmatprep.subr.mxu0 0.0
      %2748 = vmatpush1.msra.mxu0 0.0
      %2749 = vmatprep.subr.mxu0 0.0
      %2750 = vmatpush1.msra.mxu0 0.0
      %2751 = vmatprep.subr.mxu0 0.0
      %2752 = vmatpush1.msra.mxu0 0.0
      %2753 = vmatprep.subr.mxu0 0.0
      %2754 = vmatpush1.msra.mxu0 0.0
      %2755 = vmatprep.subr.mxu0 0.0
      %2756 = vmatpush1.msra.mxu0 0.0
      %2757 = vmatprep.subr.mxu0 0.0
      %2758 = vmatpush1.msra.mxu0 0.0
      %2759 = vmatprep.mubr.f32.mxu0 0.0
      %2760 = vmatmul.mubr.f32.gmra.mrb[0].mxu0 %v873
      %v2761 = vpop.f32.mrb[0].mxu0
      %v2762 = vadd.f32 0.0, %v2761
      %v2763 = vpop.f32.mrb[0].mxu0
      %2764 = vmatprep.mubr.f32.mxu0 0.0
      %2765 = vmatmul.mubr.f32.gmra.mrb[0].mxu0 %v876
      %v2766 = vpop.f32.mrb[0].mxu0
      %v2767 = vadd.f32 0.0, %v2766
      %v2768 = vpop.f32.mrb[0].mxu0
      %2769 = vmatprep.mubr.f32.mxu0 0.0
      %2770 = vmatmul.mubr.f32.gmra.mrb[0].mxu0 %v879
      %v2771 = vpop.f32.mrb[0].mxu0
      %v2772 = vadd.f32 0.0, %v2771
      %v2773 = vpop.f32.mrb[0].mxu0
      %2774 = vmatprep.mubr.f32.mxu0 0.0
      %2775 = vmatmul.mubr.f32.gmra.mrb[0].mxu0 %v882
      %v2776 = vpop.f32.mrb[0].mxu0
      %v2777 = vadd.f32 0.0, %v2776
      %v2778 = vpop.f32.mrb[0].mxu0
      %2779 = vmatprep.mubr.f32.mxu0 0.0
      %2780 = vmatmul.mubr.f32.gmra.mrb[0].mxu0 %v885
      %v2781 = vpop.f32.mrb[0].mxu0
      %v2782 = vadd.f32 0.0, %v2781
      %v2783 = vpop.f32.mrb[0].mxu0
      %2784 = vmatprep.mubr.f32.mxu0 0.0
      %2785 = vmatmul.mubr.f32.gmra.mrb[0].mxu0 %v888
      %v2786 = vpop.f32.mrb[0].mxu0
      %v2787 = vadd.f32 0.0, %v2786
      %v2788 = vpop.f32.mrb[0].mxu0
      %2789 = vmatprep.mubr.f32.mxu0 0.0
      %2790 = vmatmul.mubr.f32.gmra.mrb[0].mxu0 %v891
      %v2791 = vpop.f32.mrb[0].mxu0
      %v2792 = vadd.f32 0.0, %v2791
      %v2793 = vpop.f32.mrb[0].mxu0
      %2794 = vdwg.mxu0
      %v2795 = vadd.f32 %v2662, %v2762
      %v2796 = vadd.f32 %v2667, %v2767
      %v2797 = vadd.f32 %v2672, %v2772
      %v2798 = vadd.f32 %v2677, %v2777
      %v2799 = vadd.f32 %v2682, %v2782
      %v2800 = vadd.f32 %v2687, %v2787
      %v2801 = vadd.f32 %v2692, %v2792
      %2802 = vmatprep.subr.mxu0 0.0
      %2803 = vmatpush1.msra.mxu0 %v587
      %2804 = vmatprep.subr.mxu0 0.0
      %2805 = vmatpush1.msra.mxu0 %v588
      %2806 = vmatprep.subr.mxu0 0.0
      %2807 = vmatpush1.msra.mxu0 %v589
      %2808 = vmatprep.subr.mxu0 0.0
      %2809 = vmatpush1.msra.mxu0 %v590
      %2810 = vmatprep.subr.mxu0 0.0
      %2811 = vmatpush1.msra.mxu0 0.0
      %2812 = vmatprep.subr.mxu0 0.0
      %2813 = vmatpush1.msra.mxu0 0.0
      %2814 = vmatprep.subr.mxu0 0.0
      %2815 = vmatpush1.msra.mxu0 0.0
      %2816 = vmatprep.subr.mxu0 0.0
      %2817 = vmatpush1.msra.mxu0 0.0
      %2818 = vmatprep.subr.mxu0 0.0
      %2819 = vmatpush1.msra.mxu0 0.0
      %2820 = vmatprep.subr.mxu0 0.0
      %2821 = vmatpush1.msra.mxu0 0.0
      %2822 = vmatprep.subr.mxu0 0.0
      %2823 = vmatpush1.msra.mxu0 0.0
      %2824 = vmatprep.subr.mxu0 0.0
      %2825 = vmatpush1.msra.mxu0 0.0
      %2826 = vmatprep.subr.mxu0 0.0
      %2827 = vmatpush1.msra.mxu0 0.0
      %2828 = vmatprep.subr.mxu0 0.0
      %2829 = vmatpush1.msra.mxu0 0.0
      %2830 = vmatprep.subr.mxu0 0.0
      %2831 = vmatpush1.msra.mxu0 0.0
      %2832 = vmatprep.subr.mxu0 0.0
      %2833 = vmatpush1.msra.mxu0 0.0
      %2834 = vmatprep.subr.mxu0 0.0
      %2835 = vmatpush1.msra.mxu0 0.0
      %2836 = vmatprep.subr.mxu0 0.0
      %2837 = vmatpush1.msra.mxu0 0.0
      %2838 = vmatprep.subr.mxu0 0.0
      %2839 = vmatpush1.msra.mxu0 0.0
      %2840 = vmatprep.subr.mxu0 0.0
      %2841 = vmatpush1.msra.mxu0 0.0
      %2842 = vmatprep.subr.mxu0 0.0
      %2843 = vmatpush1.msra.mxu0 0.0
      %2844 = vmatprep.subr.mxu0 0.0
      %2845 = vmatpush1.msra.mxu0 0.0
      %2846 = vmatprep.subr.mxu0 0.0
      %2847 = vmatpush1.msra.mxu0 0.0
      %2848 = vmatprep.subr.mxu0 0.0
      %2849 = vmatpush1.msra.mxu0 0.0
      %2850 = vmatprep.subr.mxu0 0.0
      %2851 = vmatpush1.msra.mxu0 0.0
      %2852 = vmatprep.subr.mxu0 0.0
      %2853 = vmatpush1.msra.mxu0 0.0
      %2854 = vmatprep.subr.mxu0 0.0
      %2855 = vmatpush1.msra.mxu0 0.0
      %2856 = vmatprep.subr.mxu0 0.0
      %2857 = vmatpush1.msra.mxu0 0.0
      %2858 = vmatprep.subr.mxu0 0.0
      %2859 = vmatpush1.msra.mxu0 0.0
      %2860 = vmatprep.subr.mxu0 0.0
      %2861 = vmatpush1.msra.mxu0 0.0
      %2862 = vmatprep.subr.mxu0 0.0
      %2863 = vmatpush1.msra.mxu0 0.0
      %2864 = vmatprep.subr.mxu0 0.0
      %2865 = vmatpush1.msra.mxu0 0.0
      %2866 = vmatprep.mubr.f32.mxu0 0.0
      %2867 = vmatmul.mubr.f32.gmra.mrb[0].mxu0 %v1013
      %v2868 = vpop.f32.mrb[0].mxu0
      %v2869 = vadd.f32 0.0, %v2868
      %v2870 = vpop.f32.mrb[0].mxu0
      %2871 = vmatprep.mubr.f32.mxu0 0.0
      %2872 = vmatmul.mubr.f32.gmra.mrb[0].mxu0 %v1016
      %v2873 = vpop.f32.mrb[0].mxu0
      %v2874 = vadd.f32 0.0, %v2873
      %v2875 = vpop.f32.mrb[0].mxu0
      %2876 = vmatprep.mubr.f32.mxu0 0.0
      %2877 = vmatmul.mubr.f32.gmra.mrb[0].mxu0 %v1019
      %v2878 = vpop.f32.mrb[0].mxu0
      %v2879 = vadd.f32 0.0, %v2878
      %v2880 = vpop.f32.mrb[0].mxu0
      %2881 = vmatprep.mubr.f32.mxu0 0.0
      %2882 = vmatmul.mubr.f32.gmra.mrb[0].mxu0 %v1022
      %v2883 = vpop.f32.mrb[0].mxu0
      %v2884 = vadd.f32 0.0, %v2883
      %v2885 = vpop.f32.mrb[0].mxu0
      %2886 = vmatprep.mubr.f32.mxu0 0.0
      %2887 = vmatmul.mubr.f32.gmra.mrb[0].mxu0 %v1025
      %v2888 = vpop.f32.mrb[0].mxu0
      %v2889 = vadd.f32 0.0, %v2888
      %v2890 = vpop.f32.mrb[0].mxu0
      %2891 = vmatprep.mubr.f32.mxu0 0.0
      %2892 = vmatmul.mubr.f32.gmra.mrb[0].mxu0 %v1028
      %v2893 = vpop.f32.mrb[0].mxu0
      %v2894 = vadd.f32 0.0, %v2893
      %v2895 = vpop.f32.mrb[0].mxu0
      %2896 = vmatprep.mubr.f32.mxu0 0.0
      %2897 = vmatmul.mubr.f32.gmra.mrb[0].mxu0 %v1031
      %v2898 = vpop.f32.mrb[0].mxu0
      %v2899 = vadd.f32 0.0, %v2898
      %v2900 = vpop.f32.mrb[0].mxu0
      %2901 = vdwg.mxu0
      %v2902 = vadd.f32 %v2795, %v2869
      %v2903 = vadd.f32 %v2796, %v2874
      %v2904 = vadd.f32 %v2797, %v2879
      %v2905 = vadd.f32 %v2798, %v2884
      %v2906 = vadd.f32 %v2799, %v2889
      %v2907 = vadd.f32 %v2800, %v2894
      %v2908 = vadd.f32 %v2801, %v2899
      %2909 = vmatprep.subr.mxu0 0.0
      %2910 = vmatpush1.msra.mxu0 %v728
      %2911 = vmatprep.subr.mxu0 0.0
      %2912 = vmatpush1.msra.mxu0 %v729
      %2913 = vmatprep.subr.mxu0 0.0
      %2914 = vmatpush1.msra.mxu0 %v730
      %2915 = vmatprep.subr.mxu0 0.0
      %2916 = vmatpush1.msra.mxu0 %v731
      %2917 = vmatprep.subr.mxu0 0.0
      %2918 = vmatpush1.msra.mxu0 0.0
      %2919 = vmatprep.subr.mxu0 0.0
      %2920 = vmatpush1.msra.mxu0 0.0
      %2921 = vmatprep.subr.mxu0 0.0
      %2922 = vmatpush1.msra.mxu0 0.0
      %2923 = vmatprep.subr.mxu0 0.0
      %2924 = vmatpush1.msra.mxu0 0.0
      %2925 = vmatprep.subr.mxu0 0.0
      %2926 = vmatpush1.msra.mxu0 0.0
      %2927 = vmatprep.subr.mxu0 0.0
      %2928 = vmatpush1.msra.mxu0 0.0
      %2929 = vmatprep.subr.mxu0 0.0
      %2930 = vmatpush1.msra.mxu0 0.0
      %2931 = vmatprep.subr.mxu0 0.0
      %2932 = vmatpush1.msra.mxu0 0.0
      %2933 = vmatprep.subr.mxu0 0.0
      %2934 = vmatpush1.msra.mxu0 0.0
      %2935 = vmatprep.subr.mxu0 0.0
      %2936 = vmatpush1.msra.mxu0 0.0
      %2937 = vmatprep.subr.mxu0 0.0
      %2938 = vmatpush1.msra.mxu0 0.0
      %2939 = vmatprep.subr.mxu0 0.0
      %2940 = vmatpush1.msra.mxu0 0.0
      %2941 = vmatprep.subr.mxu0 0.0
      %2942 = vmatpush1.msra.mxu0 0.0
      %2943 = vmatprep.subr.mxu0 0.0
      %2944 = vmatpush1.msra.mxu0 0.0
      %2945 = vmatprep.subr.mxu0 0.0
      %2946 = vmatpush1.msra.mxu0 0.0
      %2947 = vmatprep.subr.mxu0 0.0
      %2948 = vmatpush1.msra.mxu0 0.0
      %2949 = vmatprep.subr.mxu0 0.0
      %2950 = vmatpush1.msra.mxu0 0.0
      %2951 = vmatprep.subr.mxu0 0.0
      %2952 = vmatpush1.msra.mxu0 0.0
      %2953 = vmatprep.subr.mxu0 0.0
      %2954 = vmatpush1.msra.mxu0 0.0
      %2955 = vmatprep.subr.mxu0 0.0
      %2956 = vmatpush1.msra.mxu0 0.0
      %2957 = vmatprep.subr.mxu0 0.0
      %2958 = vmatpush1.msra.mxu0 0.0
      %2959 = vmatprep.subr.mxu0 0.0
      %2960 = vmatpush1.msra.mxu0 0.0
      %2961 = vmatprep.subr.mxu0 0.0
      %2962 = vmatpush1.msra.mxu0 0.0
      %2963 = vmatprep.subr.mxu0 0.0
      %2964 = vmatpush1.msra.mxu0 0.0
      %2965 = vmatprep.subr.mxu0 0.0
      %2966 = vmatpush1.msra.mxu0 0.0
      %2967 = vmatprep.subr.mxu0 0.0
      %2968 = vmatpush1.msra.mxu0 0.0
      %2969 = vmatprep.subr.mxu0 0.0
      %2970 = vmatpush1.msra.mxu0 0.0
      %2971 = vmatprep.subr.mxu0 0.0
      %2972 = vmatpush1.msra.mxu0 0.0
      %2973 = vmatprep.mubr.f32.mxu0 0.0
      %2974 = vmatmul.mubr.f32.gmra.mrb[0].mxu0 %v1153
      %v2975 = vpop.f32.mrb[0].mxu0
      %v2976 = vadd.f32 0.0, %v2975
      %v2977 = vpop.f32.mrb[0].mxu0
      %2978 = vmatprep.mubr.f32.mxu0 0.0
      %2979 = vmatmul.mubr.f32.gmra.mrb[0].mxu0 %v1156
      %v2980 = vpop.f32.mrb[0].mxu0
      %v2981 = vadd.f32 0.0, %v2980
      %v2982 = vpop.f32.mrb[0].mxu0
      %2983 = vmatprep.mubr.f32.mxu0 0.0
      %2984 = vmatmul.mubr.f32.gmra.mrb[0].mxu0 %v1159
      %v2985 = vpop.f32.mrb[0].mxu0
      %v2986 = vadd.f32 0.0, %v2985
      %v2987 = vpop.f32.mrb[0].mxu0
      %2988 = vmatprep.mubr.f32.mxu0 0.0
      %2989 = vmatmul.mubr.f32.gmra.mrb[0].mxu0 %v1162
      %v2990 = vpop.f32.mrb[0].mxu0
      %v2991 = vadd.f32 0.0, %v2990
      %v2992 = vpop.f32.mrb[0].mxu0
      %2993 = vmatprep.mubr.f32.mxu0 0.0
      %2994 = vmatmul.mubr.f32.gmra.mrb[0].mxu0 %v1165
      %v2995 = vpop.f32.mrb[0].mxu0
      %v2996 = vadd.f32 0.0, %v2995
      %v2997 = vpop.f32.mrb[0].mxu0
      %2998 = vmatprep.mubr.f32.mxu0 0.0
      %2999 = vmatmul.mubr.f32.gmra.mrb[0].mxu0 %v1168
      %v3000 = vpop.f32.mrb[0].mxu0
      %v3001 = vadd.f32 0.0, %v3000
      %v3002 = vpop.f32.mrb[0].mxu0
      %3003 = vmatprep.mubr.f32.mxu0 0.0
      %3004 = vmatmul.mubr.f32.gmra.mrb[0].mxu0 %v1171
      %v3005 = vpop.f32.mrb[0].mxu0
      %v3006 = vadd.f32 0.0, %v3005
      %v3007 = vpop.f32.mrb[0].mxu0
      %3008 = vdwg.mxu0
      %v3009 = vadd.f32 %v2902, %v2976
      %v3010 = vadd.f32 %v2903, %v2981
      %v3011 = vadd.f32 %v2904, %v2986
      %v3012 = vadd.f32 %v2905, %v2991
      %v3013 = vadd.f32 %v2906, %v2996
      %v3014 = vadd.f32 %v2907, %v3001
      %v3015 = vadd.f32 %v2908, %v3006
      %3016 = vmatprep.subr.mxu0 0.0
      %3017 = vmatpush1.msra.mxu0 %v868
      %3018 = vmatprep.subr.mxu0 0.0
      %3019 = vmatpush1.msra.mxu0 %v869
      %3020 = vmatprep.subr.mxu0 0.0
      %3021 = vmatpush1.msra.mxu0 %v870
      %3022 = vmatprep.subr.mxu0 0.0
      %3023 = vmatpush1.msra.mxu0 %v871
      %3024 = vmatprep.subr.mxu0 0.0
      %3025 = vmatpush1.msra.mxu0 0.0
      %3026 = vmatprep.subr.mxu0 0.0
      %3027 = vmatpush1.msra.mxu0 0.0
      %3028 = vmatprep.subr.mxu0 0.0
      %3029 = vmatpush1.msra.mxu0 0.0
      %3030 = vmatprep.subr.mxu0 0.0
      %3031 = vmatpush1.msra.mxu0 0.0
      %3032 = vmatprep.subr.mxu0 0.0
      %3033 = vmatpush1.msra.mxu0 0.0
      %3034 = vmatprep.subr.mxu0 0.0
      %3035 = vmatpush1.msra.mxu0 0.0
      %3036 = vmatprep.subr.mxu0 0.0
      %3037 = vmatpush1.msra.mxu0 0.0
      %3038 = vmatprep.subr.mxu0 0.0
      %3039 = vmatpush1.msra.mxu0 0.0
      %3040 = vmatprep.subr.mxu0 0.0
      %3041 = vmatpush1.msra.mxu0 0.0
      %3042 = vmatprep.subr.mxu0 0.0
      %3043 = vmatpush1.msra.mxu0 0.0
      %3044 = vmatprep.subr.mxu0 0.0
      %3045 = vmatpush1.msra.mxu0 0.0
      %3046 = vmatprep.subr.mxu0 0.0
      %3047 = vmatpush1.msra.mxu0 0.0
      %3048 = vmatprep.subr.mxu0 0.0
      %3049 = vmatpush1.msra.mxu0 0.0
      %3050 = vmatprep.subr.mxu0 0.0
      %3051 = vmatpush1.msra.mxu0 0.0
      %3052 = vmatprep.subr.mxu0 0.0
      %3053 = vmatpush1.msra.mxu0 0.0
      %3054 = vmatprep.subr.mxu0 0.0
      %3055 = vmatpush1.msra.mxu0 0.0
      %3056 = vmatprep.subr.mxu0 0.0
      %3057 = vmatpush1.msra.mxu0 0.0
      %3058 = vmatprep.subr.mxu0 0.0
      %3059 = vmatpush1.msra.mxu0 0.0
      %3060 = vmatprep.subr.mxu0 0.0
      %3061 = vmatpush1.msra.mxu0 0.0
      %3062 = vmatprep.subr.mxu0 0.0
      %3063 = vmatpush1.msra.mxu0 0.0
      %3064 = vmatprep.subr.mxu0 0.0
      %3065 = vmatpush1.msra.mxu0 0.0
      %3066 = vmatprep.subr.mxu0 0.0
      %3067 = vmatpush1.msra.mxu0 0.0
      %3068 = vmatprep.subr.mxu0 0.0
      %3069 = vmatpush1.msra.mxu0 0.0
      %3070 = vmatprep.subr.mxu0 0.0
      %3071 = vmatpush1.msra.mxu0 0.0
      %3072 = vmatprep.subr.mxu0 0.0
      %3073 = vmatpush1.msra.mxu0 0.0
      %3074 = vmatprep.subr.mxu0 0.0
      %3075 = vmatpush1.msra.mxu0 0.0
      %3076 = vmatprep.subr.mxu0 0.0
      %3077 = vmatpush1.msra.mxu0 0.0
      %3078 = vmatprep.subr.mxu0 0.0
      %3079 = vmatpush1.msra.mxu0 0.0
      %3080 = vmatprep.mubr.f32.mxu0 0.0
      %3081 = vmatmul.mubr.f32.gmra.mrb[0].mxu0 %v1293
      %v3082 = vpop.f32.mrb[0].mxu0
      %v3083 = vadd.f32 0.0, %v3082
      %v3084 = vpop.f32.mrb[0].mxu0
      %3085 = vmatprep.mubr.f32.mxu0 0.0
      %3086 = vmatmul.mubr.f32.gmra.mrb[0].mxu0 %v1296
      %v3087 = vpop.f32.mrb[0].mxu0
      %v3088 = vadd.f32 0.0, %v3087
      %v3089 = vpop.f32.mrb[0].mxu0
      %3090 = vmatprep.mubr.f32.mxu0 0.0
      %3091 = vmatmul.mubr.f32.gmra.mrb[0].mxu0 %v1299
      %v3092 = vpop.f32.mrb[0].mxu0
      %v3093 = vadd.f32 0.0, %v3092
      %v3094 = vpop.f32.mrb[0].mxu0
      %3095 = vmatprep.mubr.f32.mxu0 0.0
      %3096 = vmatmul.mubr.f32.gmra.mrb[0].mxu0 %v1302
      %v3097 = vpop.f32.mrb[0].mxu0
      %v3098 = vadd.f32 0.0, %v3097
      %v3099 = vpop.f32.mrb[0].mxu0
      %3100 = vmatprep.mubr.f32.mxu0 0.0
      %3101 = vmatmul.mubr.f32.gmra.mrb[0].mxu0 %v1305
      %v3102 = vpop.f32.mrb[0].mxu0
      %v3103 = vadd.f32 0.0, %v3102
      %v3104 = vpop.f32.mrb[0].mxu0
      %3105 = vmatprep.mubr.f32.mxu0 0.0
      %3106 = vmatmul.mubr.f32.gmra.mrb[0].mxu0 %v1308
      %v3107 = vpop.f32.mrb[0].mxu0
      %v3108 = vadd.f32 0.0, %v3107
      %v3109 = vpop.f32.mrb[0].mxu0
      %3110 = vmatprep.mubr.f32.mxu0 0.0
      %3111 = vmatmul.mubr.f32.gmra.mrb[0].mxu0 %v1311
      %v3112 = vpop.f32.mrb[0].mxu0
      %v3113 = vadd.f32 0.0, %v3112
      %v3114 = vpop.f32.mrb[0].mxu0
      %3115 = vdwg.mxu0
      %v3116 = vadd.f32 %v3009, %v3083
      %v3117 = vadd.f32 %v3010, %v3088
      %v3118 = vadd.f32 %v3011, %v3093
      %v3119 = vadd.f32 %v3012, %v3098
      %v3120 = vadd.f32 %v3013, %v3103
      %v3121 = vadd.f32 %v3014, %v3108
      %v3122 = vadd.f32 %v3015, %v3113
      %v3123 = vld [vmem:[%s578 + $0x8] sm:$0xff]
      %v3124 = vld [vmem:[%s578 + $0x10] sm:$0xff]
      %v3125 = vld [vmem:[%s578 + $0x18] sm:$0xff]
      %v3126 = vld [vmem:[%s578 + $0x20] sm:$0xff]
      %v3127 = vld [vmem:[%s578 + $0x28] sm:$0xff]
      %v3128 = vld [vmem:[%s578 + $0x30] sm:$0xff]
      %v3129 = vld [vmem:[%s578 + $0x38] sm:$0xff]
      %v3131 = vsel %vm195, %v3123, 0
      %v3134 = vsel %vm195, %v3124, 0
      %v3137 = vsel %vm195, %v3125, 0
      %v3140 = vsel %vm195, %v3126, 0
      %v3143 = vsel %vm195, %v3127, 0
      %v3146 = vsel %vm195, %v3128, 0
      %v3149 = vsel %vm195, %v3129, 0
      %3151 = vmatprep.subr.mxu0 0.0
      %3152 = vmatpush1.msra.mxu0 %v1008
      %3153 = vmatprep.subr.mxu0 0.0
      %3154 = vmatpush1.msra.mxu0 %v1009
      %3155 = vmatprep.subr.mxu0 0.0
      %3156 = vmatpush1.msra.mxu0 %v1010
      %3157 = vmatprep.subr.mxu0 0.0
      %3158 = vmatpush1.msra.mxu0 %v1011
      %3159 = vmatprep.subr.mxu0 0.0
      %3160 = vmatpush1.msra.mxu0 0.0
      %3161 = vmatprep.subr.mxu0 0.0
      %3162 = vmatpush1.msra.mxu0 0.0
      %3163 = vmatprep.subr.mxu0 0.0
      %3164 = vmatpush1.msra.mxu0 0.0
      %3165 = vmatprep.subr.mxu0 0.0
      %3166 = vmatpush1.msra.mxu0 0.0
      %3167 = vmatprep.subr.mxu0 0.0
      %3168 = vmatpush1.msra.mxu0 0.0
      %3169 = vmatprep.subr.mxu0 0.0
      %3170 = vmatpush1.msra.mxu0 0.0
      %3171 = vmatprep.subr.mxu0 0.0
      %3172 = vmatpush1.msra.mxu0 0.0
      %3173 = vmatprep.subr.mxu0 0.0
      %3174 = vmatpush1.msra.mxu0 0.0
      %3175 = vmatprep.subr.mxu0 0.0
      %3176 = vmatpush1.msra.mxu0 0.0
      %3177 = vmatprep.subr.mxu0 0.0
      %3178 = vmatpush1.msra.mxu0 0.0
      %3179 = vmatprep.subr.mxu0 0.0
      %3180 = vmatpush1.msra.mxu0 0.0
      %3181 = vmatprep.subr.mxu0 0.0
      %3182 = vmatpush1.msra.mxu0 0.0
      %3183 = vmatprep.subr.mxu0 0.0
      %3184 = vmatpush1.msra.mxu0 0.0
      %3185 = vmatprep.subr.mxu0 0.0
      %3186 = vmatpush1.msra.mxu0 0.0
      %3187 = vmatprep.subr.mxu0 0.0
      %3188 = vmatpush1.msra.mxu0 0.0
      %3189 = vmatprep.subr.mxu0 0.0
      %3190 = vmatpush1.msra.mxu0 0.0
      %3191 = vmatprep.subr.mxu0 0.0
      %3192 = vmatpush1.msra.mxu0 0.0
      %3193 = vmatprep.subr.mxu0 0.0
      %3194 = vmatpush1.msra.mxu0 0.0
      %3195 = vmatprep.subr.mxu0 0.0
      %3196 = vmatpush1.msra.mxu0 0.0
      %3197 = vmatprep.subr.mxu0 0.0
      %3198 = vmatpush1.msra.mxu0 0.0
      %3199 = vmatprep.subr.mxu0 0.0
      %3200 = vmatpush1.msra.mxu0 0.0
      %3201 = vmatprep.subr.mxu0 0.0
      %3202 = vmatpush1.msra.mxu0 0.0
      %3203 = vmatprep.subr.mxu0 0.0
      %3204 = vmatpush1.msra.mxu0 0.0
      %3205 = vmatprep.subr.mxu0 0.0
      %3206 = vmatpush1.msra.mxu0 0.0
      %3207 = vmatprep.subr.mxu0 0.0
      %3208 = vmatpush1.msra.mxu0 0.0
      %3209 = vmatprep.subr.mxu0 0.0
      %3210 = vmatpush1.msra.mxu0 0.0
      %3211 = vmatprep.subr.mxu0 0.0
      %3212 = vmatpush1.msra.mxu0 0.0
      %3213 = vmatprep.subr.mxu0 0.0
      %3214 = vmatpush1.msra.mxu0 0.0
      %3215 = vmatprep.mubr.f32.mxu0 0.0
      %3216 = vmatmul.mubr.f32.gmra.mrb[0].mxu0 %v3131
      %v3217 = vpop.f32.mrb[0].mxu0
      %v3218 = vadd.f32 0.0, %v3217
      %v3219 = vpop.f32.mrb[0].mxu0
      %3220 = vmatprep.mubr.f32.mxu0 0.0
      %3221 = vmatmul.mubr.f32.gmra.mrb[0].mxu0 %v3134
      %v3222 = vpop.f32.mrb[0].mxu0
      %v3223 = vadd.f32 0.0, %v3222
      %v3224 = vpop.f32.mrb[0].mxu0
      %3225 = vmatprep.mubr.f32.mxu0 0.0
      %3226 = vmatmul.mubr.f32.gmra.mrb[0].mxu0 %v3137
      %v3227 = vpop.f32.mrb[0].mxu0
      %v3228 = vadd.f32 0.0, %v3227
      %v3229 = vpop.f32.mrb[0].mxu0
      %3230 = vmatprep.mubr.f32.mxu0 0.0
      %3231 = vmatmul.mubr.f32.gmra.mrb[0].mxu0 %v3140
      %v3232 = vpop.f32.mrb[0].mxu0
      %v3233 = vadd.f32 0.0, %v3232
      %v3234 = vpop.f32.mrb[0].mxu0
      %3235 = vmatprep.mubr.f32.mxu0 0.0
      %3236 = vmatmul.mubr.f32.gmra.mrb[0].mxu0 %v3143
      %v3237 = vpop.f32.mrb[0].mxu0
      %v3238 = vadd.f32 0.0, %v3237
      %v3239 = vpop.f32.mrb[0].mxu0
      %3240 = vmatprep.mubr.f32.mxu0 0.0
      %3241 = vmatmul.mubr.f32.gmra.mrb[0].mxu0 %v3146
      %v3242 = vpop.f32.mrb[0].mxu0
      %v3243 = vadd.f32 0.0, %v3242
      %v3244 = vpop.f32.mrb[0].mxu0
      %3245 = vmatprep.mubr.f32.mxu0 0.0
      %3246 = vmatmul.mubr.f32.gmra.mrb[0].mxu0 %v3149
      %v3247 = vpop.f32.mrb[0].mxu0
      %v3248 = vadd.f32 0.0, %v3247
      %v3249 = vpop.f32.mrb[0].mxu0
      %3250 = vdwg.mxu0
      %v3251 = vadd.f32 %v3116, %v3218
      %v3252 = vadd.f32 %v3117, %v3223
      %v3253 = vadd.f32 %v3118, %v3228
      %v3254 = vadd.f32 %v3119, %v3233
      %v3255 = vadd.f32 %v3120, %v3238
      %v3256 = vadd.f32 %v3121, %v3243
      %v3257 = vadd.f32 %v3122, %v3248
      %v3258 = vld [vmem:[%s719 + $0x8] sm:$0xff]
      %v3259 = vld [vmem:[%s719 + $0x10] sm:$0xff]
      %v3260 = vld [vmem:[%s719 + $0x18] sm:$0xff]
      %v3261 = vld [vmem:[%s719 + $0x20] sm:$0xff]
      %v3262 = vld [vmem:[%s719 + $0x28] sm:$0xff]
      %v3263 = vld [vmem:[%s719 + $0x30] sm:$0xff]
      %v3264 = vld [vmem:[%s719 + $0x38] sm:$0xff]
      %v3266 = vsel %vm195, %v3258, 0
      %v3269 = vsel %vm195, %v3259, 0
      %v3272 = vsel %vm195, %v3260, 0
      %v3275 = vsel %vm195, %v3261, 0
      %v3278 = vsel %vm195, %v3262, 0
      %v3281 = vsel %vm195, %v3263, 0
      %v3284 = vsel %vm195, %v3264, 0
      %3286 = vmatprep.subr.mxu0 0.0
      %3287 = vmatpush1.msra.mxu0 %v1148
      %3288 = vmatprep.subr.mxu0 0.0
      %3289 = vmatpush1.msra.mxu0 %v1149
      %3290 = vmatprep.subr.mxu0 0.0
      %3291 = vmatpush1.msra.mxu0 %v1150
      %3292 = vmatprep.subr.mxu0 0.0
      %3293 = vmatpush1.msra.mxu0 %v1151
      %3294 = vmatprep.subr.mxu0 0.0
      %3295 = vmatpush1.msra.mxu0 0.0
      %3296 = vmatprep.subr.mxu0 0.0
      %3297 = vmatpush1.msra.mxu0 0.0
      %3298 = vmatprep.subr.mxu0 0.0
      %3299 = vmatpush1.msra.mxu0 0.0
      %3300 = vmatprep.subr.mxu0 0.0
      %3301 = vmatpush1.msra.mxu0 0.0
      %3302 = vmatprep.subr.mxu0 0.0
      %3303 = vmatpush1.msra.mxu0 0.0
      %3304 = vmatprep.subr.mxu0 0.0
      %3305 = vmatpush1.msra.mxu0 0.0
      %3306 = vmatprep.subr.mxu0 0.0
      %3307 = vmatpush1.msra.mxu0 0.0
      %3308 = vmatprep.subr.mxu0 0.0
      %3309 = vmatpush1.msra.mxu0 0.0
      %3310 = vmatprep.subr.mxu0 0.0
      %3311 = vmatpush1.msra.mxu0 0.0
      %3312 = vmatprep.subr.mxu0 0.0
      %3313 = vmatpush1.msra.mxu0 0.0
      %3314 = vmatprep.subr.mxu0 0.0
      %3315 = vmatpush1.msra.mxu0 0.0
      %3316 = vmatprep.subr.mxu0 0.0
      %3317 = vmatpush1.msra.mxu0 0.0
      %3318 = vmatprep.subr.mxu0 0.0
      %3319 = vmatpush1.msra.mxu0 0.0
      %3320 = vmatprep.subr.mxu0 0.0
      %3321 = vmatpush1.msra.mxu0 0.0
      %3322 = vmatprep.subr.mxu0 0.0
      %3323 = vmatpush1.msra.mxu0 0.0
      %3324 = vmatprep.subr.mxu0 0.0
      %3325 = vmatpush1.msra.mxu0 0.0
      %3326 = vmatprep.subr.mxu0 0.0
      %3327 = vmatpush1.msra.mxu0 0.0
      %3328 = vmatprep.subr.mxu0 0.0
      %3329 = vmatpush1.msra.mxu0 0.0
      %3330 = vmatprep.subr.mxu0 0.0
      %3331 = vmatpush1.msra.mxu0 0.0
      %3332 = vmatprep.subr.mxu0 0.0
      %3333 = vmatpush1.msra.mxu0 0.0
      %3334 = vmatprep.subr.mxu0 0.0
      %3335 = vmatpush1.msra.mxu0 0.0
      %3336 = vmatprep.subr.mxu0 0.0
      %3337 = vmatpush1.msra.mxu0 0.0
      %3338 = vmatprep.subr.mxu0 0.0
      %3339 = vmatpush1.msra.mxu0 0.0
      %3340 = vmatprep.subr.mxu0 0.0
      %3341 = vmatpush1.msra.mxu0 0.0
      %3342 = vmatprep.subr.mxu0 0.0
      %3343 = vmatpush1.msra.mxu0 0.0
      %3344 = vmatprep.subr.mxu0 0.0
      %3345 = vmatpush1.msra.mxu0 0.0
      %3346 = vmatprep.subr.mxu0 0.0
      %3347 = vmatpush1.msra.mxu0 0.0
      %3348 = vmatprep.subr.mxu0 0.0
      %3349 = vmatpush1.msra.mxu0 0.0
      %3350 = vmatprep.mubr.f32.mxu0 0.0
      %3351 = vmatmul.mubr.f32.gmra.mrb[0].mxu0 %v3266
      %v3352 = vpop.f32.mrb[0].mxu0
      %v3353 = vadd.f32 0.0, %v3352
      %v3354 = vpop.f32.mrb[0].mxu0
      %3355 = vmatprep.mubr.f32.mxu0 0.0
      %3356 = vmatmul.mubr.f32.gmra.mrb[0].mxu0 %v3269
      %v3357 = vpop.f32.mrb[0].mxu0
      %v3358 = vadd.f32 0.0, %v3357
      %v3359 = vpop.f32.mrb[0].mxu0
      %3360 = vmatprep.mubr.f32.mxu0 0.0
      %3361 = vmatmul.mubr.f32.gmra.mrb[0].mxu0 %v3272
      %v3362 = vpop.f32.mrb[0].mxu0
      %v3363 = vadd.f32 0.0, %v3362
      %v3364 = vpop.f32.mrb[0].mxu0
      %3365 = vmatprep.mubr.f32.mxu0 0.0
      %3366 = vmatmul.mubr.f32.gmra.mrb[0].mxu0 %v3275
      %v3367 = vpop.f32.mrb[0].mxu0
      %v3368 = vadd.f32 0.0, %v3367
      %v3369 = vpop.f32.mrb[0].mxu0
      %3370 = vmatprep.mubr.f32.mxu0 0.0
      %3371 = vmatmul.mubr.f32.gmra.mrb[0].mxu0 %v3278
      %v3372 = vpop.f32.mrb[0].mxu0
      %v3373 = vadd.f32 0.0, %v3372
      %v3374 = vpop.f32.mrb[0].mxu0
      %3375 = vmatprep.mubr.f32.mxu0 0.0
      %3376 = vmatmul.mubr.f32.gmra.mrb[0].mxu0 %v3281
      %v3377 = vpop.f32.mrb[0].mxu0
      %v3378 = vadd.f32 0.0, %v3377
      %v3379 = vpop.f32.mrb[0].mxu0
      %3380 = vmatprep.mubr.f32.mxu0 0.0
      %3381 = vmatmul.mubr.f32.gmra.mrb[0].mxu0 %v3284
      %v3382 = vpop.f32.mrb[0].mxu0
      %v3383 = vadd.f32 0.0, %v3382
      %v3384 = vpop.f32.mrb[0].mxu0
      %3385 = vdwg.mxu0
      %v3386 = vadd.f32 %v3251, %v3353
      %v3387 = vadd.f32 %v3252, %v3358
      %v3388 = vadd.f32 %v3253, %v3363
      %v3389 = vadd.f32 %v3254, %v3368
      %v3390 = vadd.f32 %v3255, %v3373
      %v3391 = vadd.f32 %v3256, %v3378
      %v3392 = vadd.f32 %v3257, %v3383
      %v3393 = vld [vmem:[%s578 + $0x9] sm:$0xff]
      %v3394 = vld [vmem:[%s578 + $0x11] sm:$0xff]
      %v3395 = vld [vmem:[%s578 + $0x19] sm:$0xff]
      %v3396 = vld [vmem:[%s578 + $0x21] sm:$0xff]
      %v3397 = vld [vmem:[%s578 + $0x29] sm:$0xff]
      %v3398 = vld [vmem:[%s578 + $0x31] sm:$0xff]
      %v3399 = vld [vmem:[%s578 + $0x39] sm:$0xff]
      %v3401 = vsel %vm195, %v3393, 0
      %v3404 = vsel %vm195, %v3394, 0
      %v3407 = vsel %vm195, %v3395, 0
      %v3410 = vsel %vm195, %v3396, 0
      %v3413 = vsel %vm195, %v3397, 0
      %v3416 = vsel %vm195, %v3398, 0
      %v3419 = vsel %vm195, %v3399, 0
      %3421 = vmatprep.subr.mxu0 0.0
      %3422 = vmatpush1.msra.mxu0 %v1288
      %3423 = vmatprep.subr.mxu0 0.0
      %3424 = vmatpush1.msra.mxu0 %v1289
      %3425 = vmatprep.subr.mxu0 0.0
      %3426 = vmatpush1.msra.mxu0 %v1290
      %3427 = vmatprep.subr.mxu0 0.0
      %3428 = vmatpush1.msra.mxu0 %v1291
      %3429 = vmatprep.subr.mxu0 0.0
      %3430 = vmatpush1.msra.mxu0 0.0
      %3431 = vmatprep.subr.mxu0 0.0
      %3432 = vmatpush1.msra.mxu0 0.0
      %3433 = vmatprep.subr.mxu0 0.0
      %3434 = vmatpush1.msra.mxu0 0.0
      %3435 = vmatprep.subr.mxu0 0.0
      %3436 = vmatpush1.msra.mxu0 0.0
      %3437 = vmatprep.subr.mxu0 0.0
      %3438 = vmatpush1.msra.mxu0 0.0
      %3439 = vmatprep.subr.mxu0 0.0
      %3440 = vmatpush1.msra.mxu0 0.0
      %3441 = vmatprep.subr.mxu0 0.0
      %3442 = vmatpush1.msra.mxu0 0.0
      %3443 = vmatprep.subr.mxu0 0.0
      %3444 = vmatpush1.msra.mxu0 0.0
      %3445 = vmatprep.subr.mxu0 0.0
      %3446 = vmatpush1.msra.mxu0 0.0
      %3447 = vmatprep.subr.mxu0 0.0
      %3448 = vmatpush1.msra.mxu0 0.0
      %3449 = vmatprep.subr.mxu0 0.0
      %3450 = vmatpush1.msra.mxu0 0.0
      %3451 = vmatprep.subr.mxu0 0.0
      %3452 = vmatpush1.msra.mxu0 0.0
      %3453 = vmatprep.subr.mxu0 0.0
      %3454 = vmatpush1.msra.mxu0 0.0
      %3455 = vmatprep.subr.mxu0 0.0
      %3456 = vmatpush1.msra.mxu0 0.0
      %3457 = vmatprep.subr.mxu0 0.0
      %3458 = vmatpush1.msra.mxu0 0.0
      %3459 = vmatprep.subr.mxu0 0.0
      %3460 = vmatpush1.msra.mxu0 0.0
      %3461 = vmatprep.subr.mxu0 0.0
      %3462 = vmatpush1.msra.mxu0 0.0
      %3463 = vmatprep.subr.mxu0 0.0
      %3464 = vmatpush1.msra.mxu0 0.0
      %3465 = vmatprep.subr.mxu0 0.0
      %3466 = vmatpush1.msra.mxu0 0.0
      %3467 = vmatprep.subr.mxu0 0.0
      %3468 = vmatpush1.msra.mxu0 0.0
      %3469 = vmatprep.subr.mxu0 0.0
      %3470 = vmatpush1.msra.mxu0 0.0
      %3471 = vmatprep.subr.mxu0 0.0
      %3472 = vmatpush1.msra.mxu0 0.0
      %3473 = vmatprep.subr.mxu0 0.0
      %3474 = vmatpush1.msra.mxu0 0.0
      %3475 = vmatprep.subr.mxu0 0.0
      %3476 = vmatpush1.msra.mxu0 0.0
      %3477 = vmatprep.subr.mxu0 0.0
      %3478 = vmatpush1.msra.mxu0 0.0
      %3479 = vmatprep.subr.mxu0 0.0
      %3480 = vmatpush1.msra.mxu0 0.0
      %3481 = vmatprep.subr.mxu0 0.0
      %3482 = vmatpush1.msra.mxu0 0.0
      %3483 = vmatprep.subr.mxu0 0.0
      %3484 = vmatpush1.msra.mxu0 0.0
      %3485 = vmatprep.mubr.f32.mxu0 0.0
      %3486 = vmatmul.mubr.f32.gmra.mrb[0].mxu0 %v3401
      %v3487 = vpop.f32.mrb[0].mxu0
      %v3488 = vadd.f32 0.0, %v3487
      %v3489 = vpop.f32.mrb[0].mxu0
      %3490 = vmatprep.mubr.f32.mxu0 0.0
      %3491 = vmatmul.mubr.f32.gmra.mrb[0].mxu0 %v3404
      %v3492 = vpop.f32.mrb[0].mxu0
      %v3493 = vadd.f32 0.0, %v3492
      %v3494 = vpop.f32.mrb[0].mxu0
      %3495 = vmatprep.mubr.f32.mxu0 0.0
      %3496 = vmatmul.mubr.f32.gmra.mrb[0].mxu0 %v3407
      %v3497 = vpop.f32.mrb[0].mxu0
      %v3498 = vadd.f32 0.0, %v3497
      %v3499 = vpop.f32.mrb[0].mxu0
      %3500 = vmatprep.mubr.f32.mxu0 0.0
      %3501 = vmatmul.mubr.f32.gmra.mrb[0].mxu0 %v3410
      %v3502 = vpop.f32.mrb[0].mxu0
      %v3503 = vadd.f32 0.0, %v3502
      %v3504 = vpop.f32.mrb[0].mxu0
      %3505 = vmatprep.mubr.f32.mxu0 0.0
      %3506 = vmatmul.mubr.f32.gmra.mrb[0].mxu0 %v3413
      %v3507 = vpop.f32.mrb[0].mxu0
      %v3508 = vadd.f32 0.0, %v3507
      %v3509 = vpop.f32.mrb[0].mxu0
      %3510 = vmatprep.mubr.f32.mxu0 0.0
      %3511 = vmatmul.mubr.f32.gmra.mrb[0].mxu0 %v3416
      %v3512 = vpop.f32.mrb[0].mxu0
      %v3513 = vadd.f32 0.0, %v3512
      %v3514 = vpop.f32.mrb[0].mxu0
      %3515 = vmatprep.mubr.f32.mxu0 0.0
      %3516 = vmatmul.mubr.f32.gmra.mrb[0].mxu0 %v3419
      %v3517 = vpop.f32.mrb[0].mxu0
      %v3518 = vadd.f32 0.0, %v3517
      %v3519 = vpop.f32.mrb[0].mxu0
      %3520 = vdwg.mxu0
      %v3521 = vadd.f32 %v3386, %v3488
      %v3522 = vadd.f32 %v3387, %v3493
      %v3523 = vadd.f32 %v3388, %v3498
      %v3524 = vadd.f32 %v3389, %v3503
      %v3525 = vadd.f32 %v3390, %v3508
      %v3526 = vadd.f32 %v3391, %v3513
      %v3527 = vadd.f32 %v3392, %v3518
      %v3528 = vadd.f32 %v3521, %v1425
      %v3529 = vadd.f32 %v3522, %v1425
      %v3530 = vadd.f32 %v3523, %v1425
      %v3531 = vadd.f32 %v3524, %v1425
      %v3532 = vadd.f32 %v3525, %v1425
      %v3533 = vadd.f32 %v3526, %v1425
      %v3534 = vadd.f32 %v3527, %v1425
      %v3535 = vmax.f32 %v3528, 0.0
      %v3536 = vmax.f32 %v3529, 0.0
      %v3537 = vmax.f32 %v3530, 0.0
      %v3538 = vmax.f32 %v3531, 0.0
      %v3539 = vmax.f32 %v3532, 0.0
      %v3540 = vmax.f32 %v3533, 0.0
      %v3541 = vmax.f32 %v3534, 0.0
      %v3542 = vmax.f32 %v2488, %v3535
      %v3543 = vmax.f32 %v2489, %v3536
      %v3544 = vmax.f32 %v2490, %v3537
      %v3545 = vmax.f32 %v2491, %v3538
      %v3546 = vmax.f32 %v2492, %v3539
      %v3547 = vmax.f32 %v2493, %v3540
      %v3548 = vmax.f32 %v2494, %v3541
      %3549 = vmatprep.subr.mxu0 0.0
      %3550 = vmatpush1.msra.mxu0 %v191
      %3551 = vmatprep.subr.mxu0 0.0
      %3552 = vmatpush1.msra.mxu0 %v192
      %3553 = vmatprep.subr.mxu0 0.0
      %3554 = vmatpush1.msra.mxu0 %v193
      %3555 = vmatprep.subr.mxu0 0.0
      %3556 = vmatpush1.msra.mxu0 %v194
      %3557 = vmatprep.subr.mxu0 0.0
      %3558 = vmatpush1.msra.mxu0 0.0
      %3559 = vmatprep.subr.mxu0 0.0
      %3560 = vmatpush1.msra.mxu0 0.0
      %3561 = vmatprep.subr.mxu0 0.0
      %3562 = vmatpush1.msra.mxu0 0.0
      %3563 = vmatprep.subr.mxu0 0.0
      %3564 = vmatpush1.msra.mxu0 0.0
      %3565 = vmatprep.subr.mxu0 0.0
      %3566 = vmatpush1.msra.mxu0 0.0
      %3567 = vmatprep.subr.mxu0 0.0
      %3568 = vmatpush1.msra.mxu0 0.0
      %3569 = vmatprep.subr.mxu0 0.0
      %3570 = vmatpush1.msra.mxu0 0.0
      %3571 = vmatprep.subr.mxu0 0.0
      %3572 = vmatpush1.msra.mxu0 0.0
      %3573 = vmatprep.subr.mxu0 0.0
      %3574 = vmatpush1.msra.mxu0 0.0
      %3575 = vmatprep.subr.mxu0 0.0
      %3576 = vmatpush1.msra.mxu0 0.0
      %3577 = vmatprep.subr.mxu0 0.0
      %3578 = vmatpush1.msra.mxu0 0.0
      %3579 = vmatprep.subr.mxu0 0.0
      %3580 = vmatpush1.msra.mxu0 0.0
      %3581 = vmatprep.subr.mxu0 0.0
      %3582 = vmatpush1.msra.mxu0 0.0
      %3583 = vmatprep.subr.mxu0 0.0
      %3584 = vmatpush1.msra.mxu0 0.0
      %3585 = vmatprep.subr.mxu0 0.0
      %3586 = vmatpush1.msra.mxu0 0.0
      %3587 = vmatprep.subr.mxu0 0.0
      %3588 = vmatpush1.msra.mxu0 0.0
      %3589 = vmatprep.subr.mxu0 0.0
      %3590 = vmatpush1.msra.mxu0 0.0
      %3591 = vmatprep.subr.mxu0 0.0
      %3592 = vmatpush1.msra.mxu0 0.0
      %3593 = vmatprep.subr.mxu0 0.0
      %3594 = vmatpush1.msra.mxu0 0.0
      %3595 = vmatprep.subr.mxu0 0.0
      %3596 = vmatpush1.msra.mxu0 0.0
      %3597 = vmatprep.subr.mxu0 0.0
      %3598 = vmatpush1.msra.mxu0 0.0
      %3599 = vmatprep.subr.mxu0 0.0
      %3600 = vmatpush1.msra.mxu0 0.0
      %3601 = vmatprep.subr.mxu0 0.0
      %3602 = vmatpush1.msra.mxu0 0.0
      %3603 = vmatprep.subr.mxu0 0.0
      %3604 = vmatpush1.msra.mxu0 0.0
      %3605 = vmatprep.subr.mxu0 0.0
      %3606 = vmatpush1.msra.mxu0 0.0
      %3607 = vmatprep.subr.mxu0 0.0
      %3608 = vmatpush1.msra.mxu0 0.0
      %3609 = vmatprep.subr.mxu0 0.0
      %3610 = vmatpush1.msra.mxu0 0.0
      %3611 = vmatprep.subr.mxu0 0.0
      %3612 = vmatpush1.msra.mxu0 0.0
      %3613 = vmatprep.mubr.f32.mxu0 0.0
      %3614 = vmatmul.mubr.f32.gmra.mrb[0].mxu0 %v873
      %v3615 = vpop.f32.mrb[0].mxu0
      %v3616 = vadd.f32 0.0, %v3615
      %v3617 = vpop.f32.mrb[0].mxu0
      %3618 = vmatprep.mubr.f32.mxu0 0.0
      %3619 = vmatmul.mubr.f32.gmra.mrb[0].mxu0 %v876
      %v3620 = vpop.f32.mrb[0].mxu0
      %v3621 = vadd.f32 0.0, %v3620
      %v3622 = vpop.f32.mrb[0].mxu0
      %3623 = vmatprep.mubr.f32.mxu0 0.0
      %3624 = vmatmul.mubr.f32.gmra.mrb[0].mxu0 %v879
      %v3625 = vpop.f32.mrb[0].mxu0
      %v3626 = vadd.f32 0.0, %v3625
      %v3627 = vpop.f32.mrb[0].mxu0
      %3628 = vmatprep.mubr.f32.mxu0 0.0
      %3629 = vmatmul.mubr.f32.gmra.mrb[0].mxu0 %v882
      %v3630 = vpop.f32.mrb[0].mxu0
      %v3631 = vadd.f32 0.0, %v3630
      %v3632 = vpop.f32.mrb[0].mxu0
      %3633 = vmatprep.mubr.f32.mxu0 0.0
      %3634 = vmatmul.mubr.f32.gmra.mrb[0].mxu0 %v885
      %v3635 = vpop.f32.mrb[0].mxu0
      %v3636 = vadd.f32 0.0, %v3635
      %v3637 = vpop.f32.mrb[0].mxu0
      %3638 = vmatprep.mubr.f32.mxu0 0.0
      %3639 = vmatmul.mubr.f32.gmra.mrb[0].mxu0 %v888
      %v3640 = vpop.f32.mrb[0].mxu0
      %v3641 = vadd.f32 0.0, %v3640
      %v3642 = vpop.f32.mrb[0].mxu0
      %3643 = vmatprep.mubr.f32.mxu0 0.0
      %3644 = vmatmul.mubr.f32.gmra.mrb[0].mxu0 %v891
      %v3645 = vpop.f32.mrb[0].mxu0
      %v3646 = vadd.f32 0.0, %v3645
      %v3647 = vpop.f32.mrb[0].mxu0
      %3648 = vdwg.mxu0
      %3649 = vmatprep.subr.mxu0 0.0
      %3650 = vmatpush1.msra.mxu0 %v178
      %3651 = vmatprep.subr.mxu0 0.0
      %3652 = vmatpush1.msra.mxu0 %v179
      %3653 = vmatprep.subr.mxu0 0.0
      %3654 = vmatpush1.msra.mxu0 %v180
      %3655 = vmatprep.subr.mxu0 0.0
      %3656 = vmatpush1.msra.mxu0 %v181
      %3657 = vmatprep.subr.mxu0 0.0
      %3658 = vmatpush1.msra.mxu0 0.0
      %3659 = vmatprep.subr.mxu0 0.0
      %3660 = vmatpush1.msra.mxu0 0.0
      %3661 = vmatprep.subr.mxu0 0.0
      %3662 = vmatpush1.msra.mxu0 0.0
      %3663 = vmatprep.subr.mxu0 0.0
      %3664 = vmatpush1.msra.mxu0 0.0
      %3665 = vmatprep.subr.mxu0 0.0
      %3666 = vmatpush1.msra.mxu0 0.0
      %3667 = vmatprep.subr.mxu0 0.0
      %3668 = vmatpush1.msra.mxu0 0.0
      %3669 = vmatprep.subr.mxu0 0.0
      %3670 = vmatpush1.msra.mxu0 0.0
      %3671 = vmatprep.subr.mxu0 0.0
      %3672 = vmatpush1.msra.mxu0 0.0
      %3673 = vmatprep.subr.mxu0 0.0
      %3674 = vmatpush1.msra.mxu0 0.0
      %3675 = vmatprep.subr.mxu0 0.0
      %3676 = vmatpush1.msra.mxu0 0.0
      %3677 = vmatprep.subr.mxu0 0.0
      %3678 = vmatpush1.msra.mxu0 0.0
      %3679 = vmatprep.subr.mxu0 0.0
      %3680 = vmatpush1.msra.mxu0 0.0
      %3681 = vmatprep.subr.mxu0 0.0
      %3682 = vmatpush1.msra.mxu0 0.0
      %3683 = vmatprep.subr.mxu0 0.0
      %3684 = vmatpush1.msra.mxu0 0.0
      %3685 = vmatprep.subr.mxu0 0.0
      %3686 = vmatpush1.msra.mxu0 0.0
      %3687 = vmatprep.subr.mxu0 0.0
      %3688 = vmatpush1.msra.mxu0 0.0
      %3689 = vmatprep.subr.mxu0 0.0
      %3690 = vmatpush1.msra.mxu0 0.0
      %3691 = vmatprep.subr.mxu0 0.0
      %3692 = vmatpush1.msra.mxu0 0.0
      %3693 = vmatprep.subr.mxu0 0.0
      %3694 = vmatpush1.msra.mxu0 0.0
      %3695 = vmatprep.subr.mxu0 0.0
      %3696 = vmatpush1.msra.mxu0 0.0
      %3697 = vmatprep.subr.mxu0 0.0
      %3698 = vmatpush1.msra.mxu0 0.0
      %3699 = vmatprep.subr.mxu0 0.0
      %3700 = vmatpush1.msra.mxu0 0.0
      %3701 = vmatprep.subr.mxu0 0.0
      %3702 = vmatpush1.msra.mxu0 0.0
      %3703 = vmatprep.subr.mxu0 0.0
      %3704 = vmatpush1.msra.mxu0 0.0
      %3705 = vmatprep.subr.mxu0 0.0
      %3706 = vmatpush1.msra.mxu0 0.0
      %3707 = vmatprep.subr.mxu0 0.0
      %3708 = vmatpush1.msra.mxu0 0.0
      %3709 = vmatprep.subr.mxu0 0.0
      %3710 = vmatpush1.msra.mxu0 0.0
      %3711 = vmatprep.subr.mxu0 0.0
      %3712 = vmatpush1.msra.mxu0 0.0
      %3713 = vmatprep.mubr.f32.mxu0 0.0
      %3714 = vmatmul.mubr.f32.gmra.mrb[0].mxu0 %v733
      %v3715 = vpop.f32.mrb[0].mxu0
      %v3716 = vadd.f32 %v3616, %v3715
      %v3717 = vpop.f32.mrb[0].mxu0
      %3718 = vmatprep.mubr.f32.mxu0 0.0
      %3719 = vmatmul.mubr.f32.gmra.mrb[0].mxu0 %v736
      %v3720 = vpop.f32.mrb[0].mxu0
      %v3721 = vadd.f32 %v3621, %v3720
      %v3722 = vpop.f32.mrb[0].mxu0
      %3723 = vmatprep.mubr.f32.mxu0 0.0
      %3724 = vmatmul.mubr.f32.gmra.mrb[0].mxu0 %v739
      %v3725 = vpop.f32.mrb[0].mxu0
      %v3726 = vadd.f32 %v3626, %v3725
      %v3727 = vpop.f32.mrb[0].mxu0
      %3728 = vmatprep.mubr.f32.mxu0 0.0
      %3729 = vmatmul.mubr.f32.gmra.mrb[0].mxu0 %v742
      %v3730 = vpop.f32.mrb[0].mxu0
      %v3731 = vadd.f32 %v3631, %v3730
      %v3732 = vpop.f32.mrb[0].mxu0
      %3733 = vmatprep.mubr.f32.mxu0 0.0
      %3734 = vmatmul.mubr.f32.gmra.mrb[0].mxu0 %v745
      %v3735 = vpop.f32.mrb[0].mxu0
      %v3736 = vadd.f32 %v3636, %v3735
      %v3737 = vpop.f32.mrb[0].mxu0
      %3738 = vmatprep.mubr.f32.mxu0 0.0
      %3739 = vmatmul.mubr.f32.gmra.mrb[0].mxu0 %v748
      %v3740 = vpop.f32.mrb[0].mxu0
      %v3741 = vadd.f32 %v3641, %v3740
      %v3742 = vpop.f32.mrb[0].mxu0
      %3743 = vmatprep.mubr.f32.mxu0 0.0
      %3744 = vmatmul.mubr.f32.gmra.mrb[0].mxu0 %v751
      %v3745 = vpop.f32.mrb[0].mxu0
      %v3746 = vadd.f32 %v3646, %v3745
      %v3747 = vpop.f32.mrb[0].mxu0
      %3748 = vdwg.mxu0
      %3749 = vmatprep.subr.mxu0 0.0
      %3750 = vmatpush1.msra.mxu0 %v446
      %3751 = vmatprep.subr.mxu0 0.0
      %3752 = vmatpush1.msra.mxu0 %v447
      %3753 = vmatprep.subr.mxu0 0.0
      %3754 = vmatpush1.msra.mxu0 %v448
      %3755 = vmatprep.subr.mxu0 0.0
      %3756 = vmatpush1.msra.mxu0 %v449
      %3757 = vmatprep.subr.mxu0 0.0
      %3758 = vmatpush1.msra.mxu0 0.0
      %3759 = vmatprep.subr.mxu0 0.0
      %3760 = vmatpush1.msra.mxu0 0.0
      %3761 = vmatprep.subr.mxu0 0.0
      %3762 = vmatpush1.msra.mxu0 0.0
      %3763 = vmatprep.subr.mxu0 0.0
      %3764 = vmatpush1.msra.mxu0 0.0
      %3765 = vmatprep.subr.mxu0 0.0
      %3766 = vmatpush1.msra.mxu0 0.0
      %3767 = vmatprep.subr.mxu0 0.0
      %3768 = vmatpush1.msra.mxu0 0.0
      %3769 = vmatprep.subr.mxu0 0.0
      %3770 = vmatpush1.msra.mxu0 0.0
      %3771 = vmatprep.subr.mxu0 0.0
      %3772 = vmatpush1.msra.mxu0 0.0
      %3773 = vmatprep.subr.mxu0 0.0
      %3774 = vmatpush1.msra.mxu0 0.0
      %3775 = vmatprep.subr.mxu0 0.0
      %3776 = vmatpush1.msra.mxu0 0.0
      %3777 = vmatprep.subr.mxu0 0.0
      %3778 = vmatpush1.msra.mxu0 0.0
      %3779 = vmatprep.subr.mxu0 0.0
      %3780 = vmatpush1.msra.mxu0 0.0
      %3781 = vmatprep.subr.mxu0 0.0
      %3782 = vmatpush1.msra.mxu0 0.0
      %3783 = vmatprep.subr.mxu0 0.0
      %3784 = vmatpush1.msra.mxu0 0.0
      %3785 = vmatprep.subr.mxu0 0.0
      %3786 = vmatpush1.msra.mxu0 0.0
      %3787 = vmatprep.subr.mxu0 0.0
      %3788 = vmatpush1.msra.mxu0 0.0
      %3789 = vmatprep.subr.mxu0 0.0
      %3790 = vmatpush1.msra.mxu0 0.0
      %3791 = vmatprep.subr.mxu0 0.0
      %3792 = vmatpush1.msra.mxu0 0.0
      %3793 = vmatprep.subr.mxu0 0.0
      %3794 = vmatpush1.msra.mxu0 0.0
      %3795 = vmatprep.subr.mxu0 0.0
      %3796 = vmatpush1.msra.mxu0 0.0
      %3797 = vmatprep.subr.mxu0 0.0
      %3798 = vmatpush1.msra.mxu0 0.0
      %3799 = vmatprep.subr.mxu0 0.0
      %3800 = vmatpush1.msra.mxu0 0.0
      %3801 = vmatprep.subr.mxu0 0.0
      %3802 = vmatpush1.msra.mxu0 0.0
      %3803 = vmatprep.subr.mxu0 0.0
      %3804 = vmatpush1.msra.mxu0 0.0
      %3805 = vmatprep.subr.mxu0 0.0
      %3806 = vmatpush1.msra.mxu0 0.0
      %3807 = vmatprep.subr.mxu0 0.0
      %3808 = vmatpush1.msra.mxu0 0.0
      %3809 = vmatprep.subr.mxu0 0.0
      %3810 = vmatpush1.msra.mxu0 0.0
      %3811 = vmatprep.subr.mxu0 0.0
      %3812 = vmatpush1.msra.mxu0 0.0
      %3813 = vmatprep.mubr.f32.mxu0 0.0
      %3814 = vmatmul.mubr.f32.gmra.mrb[0].mxu0 %v1998
      %v3815 = vpop.f32.mrb[0].mxu0
      %v3816 = vadd.f32 0.0, %v3815
      %v3817 = vpop.f32.mrb[0].mxu0
      %3818 = vmatprep.mubr.f32.mxu0 0.0
      %3819 = vmatmul.mubr.f32.gmra.mrb[0].mxu0 %v2001
      %v3820 = vpop.f32.mrb[0].mxu0
      %v3821 = vadd.f32 0.0, %v3820
      %v3822 = vpop.f32.mrb[0].mxu0
      %3823 = vmatprep.mubr.f32.mxu0 0.0
      %3824 = vmatmul.mubr.f32.gmra.mrb[0].mxu0 %v2004
      %v3825 = vpop.f32.mrb[0].mxu0
      %v3826 = vadd.f32 0.0, %v3825
      %v3827 = vpop.f32.mrb[0].mxu0
      %3828 = vmatprep.mubr.f32.mxu0 0.0
      %3829 = vmatmul.mubr.f32.gmra.mrb[0].mxu0 %v2007
      %v3830 = vpop.f32.mrb[0].mxu0
      %v3831 = vadd.f32 0.0, %v3830
      %v3832 = vpop.f32.mrb[0].mxu0
      %3833 = vmatprep.mubr.f32.mxu0 0.0
      %3834 = vmatmul.mubr.f32.gmra.mrb[0].mxu0 %v2010
      %v3835 = vpop.f32.mrb[0].mxu0
      %v3836 = vadd.f32 0.0, %v3835
      %v3837 = vpop.f32.mrb[0].mxu0
      %3838 = vmatprep.mubr.f32.mxu0 0.0
      %3839 = vmatmul.mubr.f32.gmra.mrb[0].mxu0 %v2013
      %v3840 = vpop.f32.mrb[0].mxu0
      %v3841 = vadd.f32 0.0, %v3840
      %v3842 = vpop.f32.mrb[0].mxu0
      %3843 = vmatprep.mubr.f32.mxu0 0.0
      %3844 = vmatmul.mubr.f32.gmra.mrb[0].mxu0 %v2016
      %v3845 = vpop.f32.mrb[0].mxu0
      %v3846 = vadd.f32 0.0, %v3845
      %v3847 = vpop.f32.mrb[0].mxu0
      %3848 = vdwg.mxu0
      %v3849 = vadd.f32 %v3716, %v3816
      %v3850 = vadd.f32 %v3721, %v3821
      %v3851 = vadd.f32 %v3726, %v3826
      %v3852 = vadd.f32 %v3731, %v3831
      %v3853 = vadd.f32 %v3736, %v3836
      %v3854 = vadd.f32 %v3741, %v3841
      %v3855 = vadd.f32 %v3746, %v3846
      %3856 = vmatprep.subr.mxu0 0.0
      %3857 = vmatpush1.msra.mxu0 %v587
      %3858 = vmatprep.subr.mxu0 0.0
      %3859 = vmatpush1.msra.mxu0 %v588
      %3860 = vmatprep.subr.mxu0 0.0
      %3861 = vmatpush1.msra.mxu0 %v589
      %3862 = vmatprep.subr.mxu0 0.0
      %3863 = vmatpush1.msra.mxu0 %v590
      %3864 = vmatprep.subr.mxu0 0.0
      %3865 = vmatpush1.msra.mxu0 0.0
      %3866 = vmatprep.subr.mxu0 0.0
      %3867 = vmatpush1.msra.mxu0 0.0
      %3868 = vmatprep.subr.mxu0 0.0
      %3869 = vmatpush1.msra.mxu0 0.0
      %3870 = vmatprep.subr.mxu0 0.0
      %3871 = vmatpush1.msra.mxu0 0.0
      %3872 = vmatprep.subr.mxu0 0.0
      %3873 = vmatpush1.msra.mxu0 0.0
      %3874 = vmatprep.subr.mxu0 0.0
      %3875 = vmatpush1.msra.mxu0 0.0
      %3876 = vmatprep.subr.mxu0 0.0
      %3877 = vmatpush1.msra.mxu0 0.0
      %3878 = vmatprep.subr.mxu0 0.0
      %3879 = vmatpush1.msra.mxu0 0.0
      %3880 = vmatprep.subr.mxu0 0.0
      %3881 = vmatpush1.msra.mxu0 0.0
      %3882 = vmatprep.subr.mxu0 0.0
      %3883 = vmatpush1.msra.mxu0 0.0
      %3884 = vmatprep.subr.mxu0 0.0
      %3885 = vmatpush1.msra.mxu0 0.0
      %3886 = vmatprep.subr.mxu0 0.0
      %3887 = vmatpush1.msra.mxu0 0.0
      %3888 = vmatprep.subr.mxu0 0.0
      %3889 = vmatpush1.msra.mxu0 0.0
      %3890 = vmatprep.subr.mxu0 0.0
      %3891 = vmatpush1.msra.mxu0 0.0
      %3892 = vmatprep.subr.mxu0 0.0
      %3893 = vmatpush1.msra.mxu0 0.0
      %3894 = vmatprep.subr.mxu0 0.0
      %3895 = vmatpush1.msra.mxu0 0.0
      %3896 = vmatprep.subr.mxu0 0.0
      %3897 = vmatpush1.msra.mxu0 0.0
      %3898 = vmatprep.subr.mxu0 0.0
      %3899 = vmatpush1.msra.mxu0 0.0
      %3900 = vmatprep.subr.mxu0 0.0
      %3901 = vmatpush1.msra.mxu0 0.0
      %3902 = vmatprep.subr.mxu0 0.0
      %3903 = vmatpush1.msra.mxu0 0.0
      %3904 = vmatprep.subr.mxu0 0.0
      %3905 = vmatpush1.msra.mxu0 0.0
      %3906 = vmatprep.subr.mxu0 0.0
      %3907 = vmatpush1.msra.mxu0 0.0
      %3908 = vmatprep.subr.mxu0 0.0
      %3909 = vmatpush1.msra.mxu0 0.0
      %3910 = vmatprep.subr.mxu0 0.0
      %3911 = vmatpush1.msra.mxu0 0.0
      %3912 = vmatprep.subr.mxu0 0.0
      %3913 = vmatpush1.msra.mxu0 0.0
      %3914 = vmatprep.subr.mxu0 0.0
      %3915 = vmatpush1.msra.mxu0 0.0
      %3916 = vmatprep.subr.mxu0 0.0
      %3917 = vmatpush1.msra.mxu0 0.0
      %3918 = vmatprep.subr.mxu0 0.0
      %3919 = vmatpush1.msra.mxu0 0.0
      %3920 = vmatprep.mubr.f32.mxu0 0.0
      %3921 = vmatmul.mubr.f32.gmra.mrb[0].mxu0 %v1153
      %v3922 = vpop.f32.mrb[0].mxu0
      %v3923 = vadd.f32 0.0, %v3922
      %v3924 = vpop.f32.mrb[0].mxu0
      %3925 = vmatprep.mubr.f32.mxu0 0.0
      %3926 = vmatmul.mubr.f32.gmra.mrb[0].mxu0 %v1156
      %v3927 = vpop.f32.mrb[0].mxu0
      %v3928 = vadd.f32 0.0, %v3927
      %v3929 = vpop.f32.mrb[0].mxu0
      %3930 = vmatprep.mubr.f32.mxu0 0.0
      %3931 = vmatmul.mubr.f32.gmra.mrb[0].mxu0 %v1159
      %v3932 = vpop.f32.mrb[0].mxu0
      %v3933 = vadd.f32 0.0, %v3932
      %v3934 = vpop.f32.mrb[0].mxu0
      %3935 = vmatprep.mubr.f32.mxu0 0.0
      %3936 = vmatmul.mubr.f32.gmra.mrb[0].mxu0 %v1162
      %v3937 = vpop.f32.mrb[0].mxu0
      %v3938 = vadd.f32 0.0, %v3937
      %v3939 = vpop.f32.mrb[0].mxu0
      %3940 = vmatprep.mubr.f32.mxu0 0.0
      %3941 = vmatmul.mubr.f32.gmra.mrb[0].mxu0 %v1165
      %v3942 = vpop.f32.mrb[0].mxu0
      %v3943 = vadd.f32 0.0, %v3942
      %v3944 = vpop.f32.mrb[0].mxu0
      %3945 = vmatprep.mubr.f32.mxu0 0.0
      %3946 = vmatmul.mubr.f32.gmra.mrb[0].mxu0 %v1168
      %v3947 = vpop.f32.mrb[0].mxu0
      %v3948 = vadd.f32 0.0, %v3947
      %v3949 = vpop.f32.mrb[0].mxu0
      %3950 = vmatprep.mubr.f32.mxu0 0.0
      %3951 = vmatmul.mubr.f32.gmra.mrb[0].mxu0 %v1171
      %v3952 = vpop.f32.mrb[0].mxu0
      %v3953 = vadd.f32 0.0, %v3952
      %v3954 = vpop.f32.mrb[0].mxu0
      %3955 = vdwg.mxu0
      %v3956 = vadd.f32 %v3849, %v3923
      %v3957 = vadd.f32 %v3850, %v3928
      %v3958 = vadd.f32 %v3851, %v3933
      %v3959 = vadd.f32 %v3852, %v3938
      %v3960 = vadd.f32 %v3853, %v3943
      %v3961 = vadd.f32 %v3854, %v3948
      %v3962 = vadd.f32 %v3855, %v3953
      %3963 = vmatprep.subr.mxu0 0.0
      %3964 = vmatpush1.msra.mxu0 %v728
      %3965 = vmatprep.subr.mxu0 0.0
      %3966 = vmatpush1.msra.mxu0 %v729
      %3967 = vmatprep.subr.mxu0 0.0
      %3968 = vmatpush1.msra.mxu0 %v730
      %3969 = vmatprep.subr.mxu0 0.0
      %3970 = vmatpush1.msra.mxu0 %v731
      %3971 = vmatprep.subr.mxu0 0.0
      %3972 = vmatpush1.msra.mxu0 0.0
      %3973 = vmatprep.subr.mxu0 0.0
      %3974 = vmatpush1.msra.mxu0 0.0
      %3975 = vmatprep.subr.mxu0 0.0
      %3976 = vmatpush1.msra.mxu0 0.0
      %3977 = vmatprep.subr.mxu0 0.0
      %3978 = vmatpush1.msra.mxu0 0.0
      %3979 = vmatprep.subr.mxu0 0.0
      %3980 = vmatpush1.msra.mxu0 0.0
      %3981 = vmatprep.subr.mxu0 0.0
      %3982 = vmatpush1.msra.mxu0 0.0
      %3983 = vmatprep.subr.mxu0 0.0
      %3984 = vmatpush1.msra.mxu0 0.0
      %3985 = vmatprep.subr.mxu0 0.0
      %3986 = vmatpush1.msra.mxu0 0.0
      %3987 = vmatprep.subr.mxu0 0.0
      %3988 = vmatpush1.msra.mxu0 0.0
      %3989 = vmatprep.subr.mxu0 0.0
      %3990 = vmatpush1.msra.mxu0 0.0
      %3991 = vmatprep.subr.mxu0 0.0
      %3992 = vmatpush1.msra.mxu0 0.0
      %3993 = vmatprep.subr.mxu0 0.0
      %3994 = vmatpush1.msra.mxu0 0.0
      %3995 = vmatprep.subr.mxu0 0.0
      %3996 = vmatpush1.msra.mxu0 0.0
      %3997 = vmatprep.subr.mxu0 0.0
      %3998 = vmatpush1.msra.mxu0 0.0
      %3999 = vmatprep.subr.mxu0 0.0
      %4000 = vmatpush1.msra.mxu0 0.0
      %4001 = vmatprep.subr.mxu0 0.0
      %4002 = vmatpush1.msra.mxu0 0.0
      %4003 = vmatprep.subr.mxu0 0.0
      %4004 = vmatpush1.msra.mxu0 0.0
      %4005 = vmatprep.subr.mxu0 0.0
      %4006 = vmatpush1.msra.mxu0 0.0
      %4007 = vmatprep.subr.mxu0 0.0
      %4008 = vmatpush1.msra.mxu0 0.0
      %4009 = vmatprep.subr.mxu0 0.0
      %4010 = vmatpush1.msra.mxu0 0.0
      %4011 = vmatprep.subr.mxu0 0.0
      %4012 = vmatpush1.msra.mxu0 0.0
      %4013 = vmatprep.subr.mxu0 0.0
      %4014 = vmatpush1.msra.mxu0 0.0
      %4015 = vmatprep.subr.mxu0 0.0
      %4016 = vmatpush1.msra.mxu0 0.0
      %4017 = vmatprep.subr.mxu0 0.0
      %4018 = vmatpush1.msra.mxu0 0.0
      %4019 = vmatprep.subr.mxu0 0.0
      %4020 = vmatpush1.msra.mxu0 0.0
      %4021 = vmatprep.subr.mxu0 0.0
      %4022 = vmatpush1.msra.mxu0 0.0
      %4023 = vmatprep.subr.mxu0 0.0
      %4024 = vmatpush1.msra.mxu0 0.0
      %4025 = vmatprep.subr.mxu0 0.0
      %4026 = vmatpush1.msra.mxu0 0.0
      %4027 = vmatprep.mubr.f32.mxu0 0.0
      %4028 = vmatmul.mubr.f32.gmra.mrb[0].mxu0 %v1293
      %v4029 = vpop.f32.mrb[0].mxu0
      %v4030 = vadd.f32 0.0, %v4029
      %v4031 = vpop.f32.mrb[0].mxu0
      %4032 = vmatprep.mubr.f32.mxu0 0.0
      %4033 = vmatmul.mubr.f32.gmra.mrb[0].mxu0 %v1296
      %v4034 = vpop.f32.mrb[0].mxu0
      %v4035 = vadd.f32 0.0, %v4034
      %v4036 = vpop.f32.mrb[0].mxu0
      %4037 = vmatprep.mubr.f32.mxu0 0.0
      %4038 = vmatmul.mubr.f32.gmra.mrb[0].mxu0 %v1299
      %v4039 = vpop.f32.mrb[0].mxu0
      %v4040 = vadd.f32 0.0, %v4039
      %v4041 = vpop.f32.mrb[0].mxu0
      %4042 = vmatprep.mubr.f32.mxu0 0.0
      %4043 = vmatmul.mubr.f32.gmra.mrb[0].mxu0 %v1302
      %v4044 = vpop.f32.mrb[0].mxu0
      %v4045 = vadd.f32 0.0, %v4044
      %v4046 = vpop.f32.mrb[0].mxu0
      %4047 = vmatprep.mubr.f32.mxu0 0.0
      %4048 = vmatmul.mubr.f32.gmra.mrb[0].mxu0 %v1305
      %v4049 = vpop.f32.mrb[0].mxu0
      %v4050 = vadd.f32 0.0, %v4049
      %v4051 = vpop.f32.mrb[0].mxu0
      %4052 = vmatprep.mubr.f32.mxu0 0.0
      %4053 = vmatmul.mubr.f32.gmra.mrb[0].mxu0 %v1308
      %v4054 = vpop.f32.mrb[0].mxu0
      %v4055 = vadd.f32 0.0, %v4054
      %v4056 = vpop.f32.mrb[0].mxu0
      %4057 = vmatprep.mubr.f32.mxu0 0.0
      %4058 = vmatmul.mubr.f32.gmra.mrb[0].mxu0 %v1311
      %v4059 = vpop.f32.mrb[0].mxu0
      %v4060 = vadd.f32 0.0, %v4059
      %v4061 = vpop.f32.mrb[0].mxu0
      %4062 = vdwg.mxu0
      %v4063 = vadd.f32 %v3956, %v4030
      %v4064 = vadd.f32 %v3957, %v4035
      %v4065 = vadd.f32 %v3958, %v4040
      %v4066 = vadd.f32 %v3959, %v4045
      %v4067 = vadd.f32 %v3960, %v4050
      %v4068 = vadd.f32 %v3961, %v4055
      %v4069 = vadd.f32 %v3962, %v4060
      %4070 = vmatprep.subr.mxu0 0.0
      %4071 = vmatpush1.msra.mxu0 %v868
      %4072 = vmatprep.subr.mxu0 0.0
      %4073 = vmatpush1.msra.mxu0 %v869
      %4074 = vmatprep.subr.mxu0 0.0
      %4075 = vmatpush1.msra.mxu0 %v870
      %4076 = vmatprep.subr.mxu0 0.0
      %4077 = vmatpush1.msra.mxu0 %v871
      %4078 = vmatprep.subr.mxu0 0.0
      %4079 = vmatpush1.msra.mxu0 0.0
      %4080 = vmatprep.subr.mxu0 0.0
      %4081 = vmatpush1.msra.mxu0 0.0
      %4082 = vmatprep.subr.mxu0 0.0
      %4083 = vmatpush1.msra.mxu0 0.0
      %4084 = vmatprep.subr.mxu0 0.0
      %4085 = vmatpush1.msra.mxu0 0.0
      %4086 = vmatprep.subr.mxu0 0.0
      %4087 = vmatpush1.msra.mxu0 0.0
      %4088 = vmatprep.subr.mxu0 0.0
      %4089 = vmatpush1.msra.mxu0 0.0
      %4090 = vmatprep.subr.mxu0 0.0
      %4091 = vmatpush1.msra.mxu0 0.0
      %4092 = vmatprep.subr.mxu0 0.0
      %4093 = vmatpush1.msra.mxu0 0.0
      %4094 = vmatprep.subr.mxu0 0.0
      %4095 = vmatpush1.msra.mxu0 0.0
      %4096 = vmatprep.subr.mxu0 0.0
      %4097 = vmatpush1.msra.mxu0 0.0
      %4098 = vmatprep.subr.mxu0 0.0
      %4099 = vmatpush1.msra.mxu0 0.0
      %4100 = vmatprep.subr.mxu0 0.0
      %4101 = vmatpush1.msra.mxu0 0.0
      %4102 = vmatprep.subr.mxu0 0.0
      %4103 = vmatpush1.msra.mxu0 0.0
      %4104 = vmatprep.subr.mxu0 0.0
      %4105 = vmatpush1.msra.mxu0 0.0
      %4106 = vmatprep.subr.mxu0 0.0
      %4107 = vmatpush1.msra.mxu0 0.0
      %4108 = vmatprep.subr.mxu0 0.0
      %4109 = vmatpush1.msra.mxu0 0.0
      %4110 = vmatprep.subr.mxu0 0.0
      %4111 = vmatpush1.msra.mxu0 0.0
      %4112 = vmatprep.subr.mxu0 0.0
      %4113 = vmatpush1.msra.mxu0 0.0
      %4114 = vmatprep.subr.mxu0 0.0
      %4115 = vmatpush1.msra.mxu0 0.0
      %4116 = vmatprep.subr.mxu0 0.0
      %4117 = vmatpush1.msra.mxu0 0.0
      %4118 = vmatprep.subr.mxu0 0.0
      %4119 = vmatpush1.msra.mxu0 0.0
      %4120 = vmatprep.subr.mxu0 0.0
      %4121 = vmatpush1.msra.mxu0 0.0
      %4122 = vmatprep.subr.mxu0 0.0
      %4123 = vmatpush1.msra.mxu0 0.0
      %4124 = vmatprep.subr.mxu0 0.0
      %4125 = vmatpush1.msra.mxu0 0.0
      %4126 = vmatprep.subr.mxu0 0.0
      %4127 = vmatpush1.msra.mxu0 0.0
      %4128 = vmatprep.subr.mxu0 0.0
      %4129 = vmatpush1.msra.mxu0 0.0
      %4130 = vmatprep.subr.mxu0 0.0
      %4131 = vmatpush1.msra.mxu0 0.0
      %4132 = vmatprep.subr.mxu0 0.0
      %4133 = vmatpush1.msra.mxu0 0.0
      %4134 = vmatprep.mubr.f32.mxu0 0.0
      %4135 = vmatmul.mubr.f32.gmra.mrb[0].mxu0 %v2347
      %v4136 = vpop.f32.mrb[0].mxu0
      %v4137 = vadd.f32 0.0, %v4136
      %v4138 = vpop.f32.mrb[0].mxu0
      %4139 = vmatprep.mubr.f32.mxu0 0.0
      %4140 = vmatmul.mubr.f32.gmra.mrb[0].mxu0 %v2350
      %v4141 = vpop.f32.mrb[0].mxu0
      %v4142 = vadd.f32 0.0, %v4141
      %v4143 = vpop.f32.mrb[0].mxu0
      %4144 = vmatprep.mubr.f32.mxu0 0.0
      %4145 = vmatmul.mubr.f32.gmra.mrb[0].mxu0 %v2353
      %v4146 = vpop.f32.mrb[0].mxu0
      %v4147 = vadd.f32 0.0, %v4146
      %v4148 = vpop.f32.mrb[0].mxu0
      %4149 = vmatprep.mubr.f32.mxu0 0.0
      %4150 = vmatmul.mubr.f32.gmra.mrb[0].mxu0 %v2356
      %v4151 = vpop.f32.mrb[0].mxu0
      %v4152 = vadd.f32 0.0, %v4151
      %v4153 = vpop.f32.mrb[0].mxu0
      %4154 = vmatprep.mubr.f32.mxu0 0.0
      %4155 = vmatmul.mubr.f32.gmra.mrb[0].mxu0 %v2359
      %v4156 = vpop.f32.mrb[0].mxu0
      %v4157 = vadd.f32 0.0, %v4156
      %v4158 = vpop.f32.mrb[0].mxu0
      %4159 = vmatprep.mubr.f32.mxu0 0.0
      %4160 = vmatmul.mubr.f32.gmra.mrb[0].mxu0 %v2362
      %v4161 = vpop.f32.mrb[0].mxu0
      %v4162 = vadd.f32 0.0, %v4161
      %v4163 = vpop.f32.mrb[0].mxu0
      %4164 = vmatprep.mubr.f32.mxu0 0.0
      %4165 = vmatmul.mubr.f32.gmra.mrb[0].mxu0 %v2365
      %v4166 = vpop.f32.mrb[0].mxu0
      %v4167 = vadd.f32 0.0, %v4166
      %v4168 = vpop.f32.mrb[0].mxu0
      %4169 = vdwg.mxu0
      %v4170 = vadd.f32 %v4063, %v4137
      %v4171 = vadd.f32 %v4064, %v4142
      %v4172 = vadd.f32 %v4065, %v4147
      %v4173 = vadd.f32 %v4066, %v4152
      %v4174 = vadd.f32 %v4067, %v4157
      %v4175 = vadd.f32 %v4068, %v4162
      %v4176 = vadd.f32 %v4069, %v4167
      %4177 = vmatprep.subr.mxu0 0.0
      %4178 = vmatpush1.msra.mxu0 %v1008
      %4179 = vmatprep.subr.mxu0 0.0
      %4180 = vmatpush1.msra.mxu0 %v1009
      %4181 = vmatprep.subr.mxu0 0.0
      %4182 = vmatpush1.msra.mxu0 %v1010
      %4183 = vmatprep.subr.mxu0 0.0
      %4184 = vmatpush1.msra.mxu0 %v1011
      %4185 = vmatprep.subr.mxu0 0.0
      %4186 = vmatpush1.msra.mxu0 0.0
      %4187 = vmatprep.subr.mxu0 0.0
      %4188 = vmatpush1.msra.mxu0 0.0
      %4189 = vmatprep.subr.mxu0 0.0
      %4190 = vmatpush1.msra.mxu0 0.0
      %4191 = vmatprep.subr.mxu0 0.0
      %4192 = vmatpush1.msra.mxu0 0.0
      %4193 = vmatprep.subr.mxu0 0.0
      %4194 = vmatpush1.msra.mxu0 0.0
      %4195 = vmatprep.subr.mxu0 0.0
      %4196 = vmatpush1.msra.mxu0 0.0
      %4197 = vmatprep.subr.mxu0 0.0
      %4198 = vmatpush1.msra.mxu0 0.0
      %4199 = vmatprep.subr.mxu0 0.0
      %4200 = vmatpush1.msra.mxu0 0.0
      %4201 = vmatprep.subr.mxu0 0.0
      %4202 = vmatpush1.msra.mxu0 0.0
      %4203 = vmatprep.subr.mxu0 0.0
      %4204 = vmatpush1.msra.mxu0 0.0
      %4205 = vmatprep.subr.mxu0 0.0
      %4206 = vmatpush1.msra.mxu0 0.0
      %4207 = vmatprep.subr.mxu0 0.0
      %4208 = vmatpush1.msra.mxu0 0.0
      %4209 = vmatprep.subr.mxu0 0.0
      %4210 = vmatpush1.msra.mxu0 0.0
      %4211 = vmatprep.subr.mxu0 0.0
      %4212 = vmatpush1.msra.mxu0 0.0
      %4213 = vmatprep.subr.mxu0 0.0
      %4214 = vmatpush1.msra.mxu0 0.0
      %4215 = vmatprep.subr.mxu0 0.0
      %4216 = vmatpush1.msra.mxu0 0.0
      %4217 = vmatprep.subr.mxu0 0.0
      %4218 = vmatpush1.msra.mxu0 0.0
      %4219 = vmatprep.subr.mxu0 0.0
      %4220 = vmatpush1.msra.mxu0 0.0
      %4221 = vmatprep.subr.mxu0 0.0
      %4222 = vmatpush1.msra.mxu0 0.0
      %4223 = vmatprep.subr.mxu0 0.0
      %4224 = vmatpush1.msra.mxu0 0.0
      %4225 = vmatprep.subr.mxu0 0.0
      %4226 = vmatpush1.msra.mxu0 0.0
      %4227 = vmatprep.subr.mxu0 0.0
      %4228 = vmatpush1.msra.mxu0 0.0
      %4229 = vmatprep.subr.mxu0 0.0
      %4230 = vmatpush1.msra.mxu0 0.0
      %4231 = vmatprep.subr.mxu0 0.0
      %4232 = vmatpush1.msra.mxu0 0.0
      %4233 = vmatprep.subr.mxu0 0.0
      %4234 = vmatpush1.msra.mxu0 0.0
      %4235 = vmatprep.subr.mxu0 0.0
      %4236 = vmatpush1.msra.mxu0 0.0
      %4237 = vmatprep.subr.mxu0 0.0
      %4238 = vmatpush1.msra.mxu0 0.0
      %4239 = vmatprep.subr.mxu0 0.0
      %4240 = vmatpush1.msra.mxu0 0.0
      %4241 = vmatprep.mubr.f32.mxu0 0.0
      %4242 = vmatmul.mubr.f32.gmra.mrb[0].mxu0 %v3266
      %v4243 = vpop.f32.mrb[0].mxu0
      %v4244 = vadd.f32 0.0, %v4243
      %v4245 = vpop.f32.mrb[0].mxu0
      %4246 = vmatprep.mubr.f32.mxu0 0.0
      %4247 = vmatmul.mubr.f32.gmra.mrb[0].mxu0 %v3269
      %v4248 = vpop.f32.mrb[0].mxu0
      %v4249 = vadd.f32 0.0, %v4248
      %v4250 = vpop.f32.mrb[0].mxu0
      %4251 = vmatprep.mubr.f32.mxu0 0.0
      %4252 = vmatmul.mubr.f32.gmra.mrb[0].mxu0 %v3272
      %v4253 = vpop.f32.mrb[0].mxu0
      %v4254 = vadd.f32 0.0, %v4253
      %v4255 = vpop.f32.mrb[0].mxu0
      %4256 = vmatprep.mubr.f32.mxu0 0.0
      %4257 = vmatmul.mubr.f32.gmra.mrb[0].mxu0 %v3275
      %v4258 = vpop.f32.mrb[0].mxu0
      %v4259 = vadd.f32 0.0, %v4258
      %v4260 = vpop.f32.mrb[0].mxu0
      %4261 = vmatprep.mubr.f32.mxu0 0.0
      %4262 = vmatmul.mubr.f32.gmra.mrb[0].mxu0 %v3278
      %v4263 = vpop.f32.mrb[0].mxu0
      %v4264 = vadd.f32 0.0, %v4263
      %v4265 = vpop.f32.mrb[0].mxu0
      %4266 = vmatprep.mubr.f32.mxu0 0.0
      %4267 = vmatmul.mubr.f32.gmra.mrb[0].mxu0 %v3281
      %v4268 = vpop.f32.mrb[0].mxu0
      %v4269 = vadd.f32 0.0, %v4268
      %v4270 = vpop.f32.mrb[0].mxu0
      %4271 = vmatprep.mubr.f32.mxu0 0.0
      %4272 = vmatmul.mubr.f32.gmra.mrb[0].mxu0 %v3284
      %v4273 = vpop.f32.mrb[0].mxu0
      %v4274 = vadd.f32 0.0, %v4273
      %v4275 = vpop.f32.mrb[0].mxu0
      %4276 = vdwg.mxu0
      %v4277 = vadd.f32 %v4170, %v4244
      %v4278 = vadd.f32 %v4171, %v4249
      %v4279 = vadd.f32 %v4172, %v4254
      %v4280 = vadd.f32 %v4173, %v4259
      %v4281 = vadd.f32 %v4174, %v4264
      %v4282 = vadd.f32 %v4175, %v4269
      %v4283 = vadd.f32 %v4176, %v4274
      %4284 = vmatprep.subr.mxu0 0.0
      %4285 = vmatpush1.msra.mxu0 %v1148
      %4286 = vmatprep.subr.mxu0 0.0
      %4287 = vmatpush1.msra.mxu0 %v1149
      %4288 = vmatprep.subr.mxu0 0.0
      %4289 = vmatpush1.msra.mxu0 %v1150
      %4290 = vmatprep.subr.mxu0 0.0
      %4291 = vmatpush1.msra.mxu0 %v1151
      %4292 = vmatprep.subr.mxu0 0.0
      %4293 = vmatpush1.msra.mxu0 0.0
      %4294 = vmatprep.subr.mxu0 0.0
      %4295 = vmatpush1.msra.mxu0 0.0
      %4296 = vmatprep.subr.mxu0 0.0
      %4297 = vmatpush1.msra.mxu0 0.0
      %4298 = vmatprep.subr.mxu0 0.0
      %4299 = vmatpush1.msra.mxu0 0.0
      %4300 = vmatprep.subr.mxu0 0.0
      %4301 = vmatpush1.msra.mxu0 0.0
      %4302 = vmatprep.subr.mxu0 0.0
      %4303 = vmatpush1.msra.mxu0 0.0
      %4304 = vmatprep.subr.mxu0 0.0
      %4305 = vmatpush1.msra.mxu0 0.0
      %4306 = vmatprep.subr.mxu0 0.0
      %4307 = vmatpush1.msra.mxu0 0.0
      %4308 = vmatprep.subr.mxu0 0.0
      %4309 = vmatpush1.msra.mxu0 0.0
      %4310 = vmatprep.subr.mxu0 0.0
      %4311 = vmatpush1.msra.mxu0 0.0
      %4312 = vmatprep.subr.mxu0 0.0
      %4313 = vmatpush1.msra.mxu0 0.0
      %4314 = vmatprep.subr.mxu0 0.0
      %4315 = vmatpush1.msra.mxu0 0.0
      %4316 = vmatprep.subr.mxu0 0.0
      %4317 = vmatpush1.msra.mxu0 0.0
      %4318 = vmatprep.subr.mxu0 0.0
      %4319 = vmatpush1.msra.mxu0 0.0
      %4320 = vmatprep.subr.mxu0 0.0
      %4321 = vmatpush1.msra.mxu0 0.0
      %4322 = vmatprep.subr.mxu0 0.0
      %4323 = vmatpush1.msra.mxu0 0.0
      %4324 = vmatprep.subr.mxu0 0.0
      %4325 = vmatpush1.msra.mxu0 0.0
      %4326 = vmatprep.subr.mxu0 0.0
      %4327 = vmatpush1.msra.mxu0 0.0
      %4328 = vmatprep.subr.mxu0 0.0
      %4329 = vmatpush1.msra.mxu0 0.0
      %4330 = vmatprep.subr.mxu0 0.0
      %4331 = vmatpush1.msra.mxu0 0.0
      %4332 = vmatprep.subr.mxu0 0.0
      %4333 = vmatpush1.msra.mxu0 0.0
      %4334 = vmatprep.subr.mxu0 0.0
      %4335 = vmatpush1.msra.mxu0 0.0
      %4336 = vmatprep.subr.mxu0 0.0
      %4337 = vmatpush1.msra.mxu0 0.0
      %4338 = vmatprep.subr.mxu0 0.0
      %4339 = vmatpush1.msra.mxu0 0.0
      %4340 = vmatprep.subr.mxu0 0.0
      %4341 = vmatpush1.msra.mxu0 0.0
      %4342 = vmatprep.subr.mxu0 0.0
      %4343 = vmatpush1.msra.mxu0 0.0
      %4344 = vmatprep.subr.mxu0 0.0
      %4345 = vmatpush1.msra.mxu0 0.0
      %4346 = vmatprep.subr.mxu0 0.0
      %4347 = vmatpush1.msra.mxu0 0.0
      %4348 = vmatprep.mubr.f32.mxu0 0.0
      %4349 = vmatmul.mubr.f32.gmra.mrb[0].mxu0 %v3401
      %v4350 = vpop.f32.mrb[0].mxu0
      %v4351 = vadd.f32 0.0, %v4350
      %v4352 = vpop.f32.mrb[0].mxu0
      %4353 = vmatprep.mubr.f32.mxu0 0.0
      %4354 = vmatmul.mubr.f32.gmra.mrb[0].mxu0 %v3404
      %v4355 = vpop.f32.mrb[0].mxu0
      %v4356 = vadd.f32 0.0, %v4355
      %v4357 = vpop.f32.mrb[0].mxu0
      %4358 = vmatprep.mubr.f32.mxu0 0.0
      %4359 = vmatmul.mubr.f32.gmra.mrb[0].mxu0 %v3407
      %v4360 = vpop.f32.mrb[0].mxu0
      %v4361 = vadd.f32 0.0, %v4360
      %v4362 = vpop.f32.mrb[0].mxu0
      %4363 = vmatprep.mubr.f32.mxu0 0.0
      %4364 = vmatmul.mubr.f32.gmra.mrb[0].mxu0 %v3410
      %v4365 = vpop.f32.mrb[0].mxu0
      %v4366 = vadd.f32 0.0, %v4365
      %v4367 = vpop.f32.mrb[0].mxu0
      %4368 = vmatprep.mubr.f32.mxu0 0.0
      %4369 = vmatmul.mubr.f32.gmra.mrb[0].mxu0 %v3413
      %v4370 = vpop.f32.mrb[0].mxu0
      %v4371 = vadd.f32 0.0, %v4370
      %v4372 = vpop.f32.mrb[0].mxu0
      %4373 = vmatprep.mubr.f32.mxu0 0.0
      %4374 = vmatmul.mubr.f32.gmra.mrb[0].mxu0 %v3416
      %v4375 = vpop.f32.mrb[0].mxu0
      %v4376 = vadd.f32 0.0, %v4375
      %v4377 = vpop.f32.mrb[0].mxu0
      %4378 = vmatprep.mubr.f32.mxu0 0.0
      %4379 = vmatmul.mubr.f32.gmra.mrb[0].mxu0 %v3419
      %v4380 = vpop.f32.mrb[0].mxu0
      %v4381 = vadd.f32 0.0, %v4380
      %v4382 = vpop.f32.mrb[0].mxu0
      %4383 = vdwg.mxu0
      %v4384 = vadd.f32 %v4277, %v4351
      %v4385 = vadd.f32 %v4278, %v4356
      %v4386 = vadd.f32 %v4279, %v4361
      %v4387 = vadd.f32 %v4280, %v4366
      %v4388 = vadd.f32 %v4281, %v4371
      %v4389 = vadd.f32 %v4282, %v4376
      %v4390 = vadd.f32 %v4283, %v4381
      %v4391 = vld [vmem:[%s719 + $0x9] sm:$0xff]
      %v4392 = vld [vmem:[%s719 + $0x11] sm:$0xff]
      %v4393 = vld [vmem:[%s719 + $0x19] sm:$0xff]
      %v4394 = vld [vmem:[%s719 + $0x21] sm:$0xff]
      %v4395 = vld [vmem:[%s719 + $0x29] sm:$0xff]
      %v4396 = vld [vmem:[%s719 + $0x31] sm:$0xff]
      %v4397 = vld [vmem:[%s719 + $0x39] sm:$0xff]
      %v4399 = vsel %vm195, %v4391, 0
      %v4402 = vsel %vm195, %v4392, 0
      %v4405 = vsel %vm195, %v4393, 0
      %v4408 = vsel %vm195, %v4394, 0
      %v4411 = vsel %vm195, %v4395, 0
      %v4414 = vsel %vm195, %v4396, 0
      %v4417 = vsel %vm195, %v4397, 0
      %4419 = vmatprep.subr.mxu0 0.0
      %4420 = vmatpush1.msra.mxu0 %v1288
      %4421 = vmatprep.subr.mxu0 0.0
      %4422 = vmatpush1.msra.mxu0 %v1289
      %4423 = vmatprep.subr.mxu0 0.0
      %4424 = vmatpush1.msra.mxu0 %v1290
      %4425 = vmatprep.subr.mxu0 0.0
      %4426 = vmatpush1.msra.mxu0 %v1291
      %4427 = vmatprep.subr.mxu0 0.0
      %4428 = vmatpush1.msra.mxu0 0.0
      %4429 = vmatprep.subr.mxu0 0.0
      %4430 = vmatpush1.msra.mxu0 0.0
      %4431 = vmatprep.subr.mxu0 0.0
      %4432 = vmatpush1.msra.mxu0 0.0
      %4433 = vmatprep.subr.mxu0 0.0
      %4434 = vmatpush1.msra.mxu0 0.0
      %4435 = vmatprep.subr.mxu0 0.0
      %4436 = vmatpush1.msra.mxu0 0.0
      %4437 = vmatprep.subr.mxu0 0.0
      %4438 = vmatpush1.msra.mxu0 0.0
      %4439 = vmatprep.subr.mxu0 0.0
      %4440 = vmatpush1.msra.mxu0 0.0
      %4441 = vmatprep.subr.mxu0 0.0
      %4442 = vmatpush1.msra.mxu0 0.0
      %4443 = vmatprep.subr.mxu0 0.0
      %4444 = vmatpush1.msra.mxu0 0.0
      %4445 = vmatprep.subr.mxu0 0.0
      %4446 = vmatpush1.msra.mxu0 0.0
      %4447 = vmatprep.subr.mxu0 0.0
      %4448 = vmatpush1.msra.mxu0 0.0
      %4449 = vmatprep.subr.mxu0 0.0
      %4450 = vmatpush1.msra.mxu0 0.0
      %4451 = vmatprep.subr.mxu0 0.0
      %4452 = vmatpush1.msra.mxu0 0.0
      %4453 = vmatprep.subr.mxu0 0.0
      %4454 = vmatpush1.msra.mxu0 0.0
      %4455 = vmatprep.subr.mxu0 0.0
      %4456 = vmatpush1.msra.mxu0 0.0
      %4457 = vmatprep.subr.mxu0 0.0
      %4458 = vmatpush1.msra.mxu0 0.0
      %4459 = vmatprep.subr.mxu0 0.0
      %4460 = vmatpush1.msra.mxu0 0.0
      %4461 = vmatprep.subr.mxu0 0.0
      %4462 = vmatpush1.msra.mxu0 0.0
      %4463 = vmatprep.subr.mxu0 0.0
      %4464 = vmatpush1.msra.mxu0 0.0
      %4465 = vmatprep.subr.mxu0 0.0
      %4466 = vmatpush1.msra.mxu0 0.0
      %4467 = vmatprep.subr.mxu0 0.0
      %4468 = vmatpush1.msra.mxu0 0.0
      %4469 = vmatprep.subr.mxu0 0.0
      %4470 = vmatpush1.msra.mxu0 0.0
      %4471 = vmatprep.subr.mxu0 0.0
      %4472 = vmatpush1.msra.mxu0 0.0
      %4473 = vmatprep.subr.mxu0 0.0
      %4474 = vmatpush1.msra.mxu0 0.0
      %4475 = vmatprep.subr.mxu0 0.0
      %4476 = vmatpush1.msra.mxu0 0.0
      %4477 = vmatprep.subr.mxu0 0.0
      %4478 = vmatpush1.msra.mxu0 0.0
      %4479 = vmatprep.subr.mxu0 0.0
      %4480 = vmatpush1.msra.mxu0 0.0
      %4481 = vmatprep.subr.mxu0 0.0
      %4482 = vmatpush1.msra.mxu0 0.0
      %4483 = vmatprep.mubr.f32.mxu0 0.0
      %4484 = vmatmul.mubr.f32.gmra.mrb[0].mxu0 %v4399
      %v4485 = vpop.f32.mrb[0].mxu0
      %v4486 = vadd.f32 0.0, %v4485
      %v4487 = vpop.f32.mrb[0].mxu0
      %4488 = vmatprep.mubr.f32.mxu0 0.0
      %4489 = vmatmul.mubr.f32.gmra.mrb[0].mxu0 %v4402
      %v4490 = vpop.f32.mrb[0].mxu0
      %v4491 = vadd.f32 0.0, %v4490
      %v4492 = vpop.f32.mrb[0].mxu0
      %4493 = vmatprep.mubr.f32.mxu0 0.0
      %4494 = vmatmul.mubr.f32.gmra.mrb[0].mxu0 %v4405
      %v4495 = vpop.f32.mrb[0].mxu0
      %v4496 = vadd.f32 0.0, %v4495
      %v4497 = vpop.f32.mrb[0].mxu0
      %4498 = vmatprep.mubr.f32.mxu0 0.0
      %4499 = vmatmul.mubr.f32.gmra.mrb[0].mxu0 %v4408
      %v4500 = vpop.f32.mrb[0].mxu0
      %v4501 = vadd.f32 0.0, %v4500
      %v4502 = vpop.f32.mrb[0].mxu0
      %4503 = vmatprep.mubr.f32.mxu0 0.0
      %4504 = vmatmul.mubr.f32.gmra.mrb[0].mxu0 %v4411
      %v4505 = vpop.f32.mrb[0].mxu0
      %v4506 = vadd.f32 0.0, %v4505
      %v4507 = vpop.f32.mrb[0].mxu0
      %4508 = vmatprep.mubr.f32.mxu0 0.0
      %4509 = vmatmul.mubr.f32.gmra.mrb[0].mxu0 %v4414
      %v4510 = vpop.f32.mrb[0].mxu0
      %v4511 = vadd.f32 0.0, %v4510
      %v4512 = vpop.f32.mrb[0].mxu0
      %4513 = vmatprep.mubr.f32.mxu0 0.0
      %4514 = vmatmul.mubr.f32.gmra.mrb[0].mxu0 %v4417
      %v4515 = vpop.f32.mrb[0].mxu0
      %v4516 = vadd.f32 0.0, %v4515
      %v4517 = vpop.f32.mrb[0].mxu0
      %4518 = vdwg.mxu0
      %v4519 = vadd.f32 %v4384, %v4486
      %v4520 = vadd.f32 %v4385, %v4491
      %v4521 = vadd.f32 %v4386, %v4496
      %v4522 = vadd.f32 %v4387, %v4501
      %v4523 = vadd.f32 %v4388, %v4506
      %v4524 = vadd.f32 %v4389, %v4511
      %v4525 = vadd.f32 %v4390, %v4516
      %v4526 = vadd.f32 %v4519, %v1425
      %v4527 = vadd.f32 %v4520, %v1425
      %v4528 = vadd.f32 %v4521, %v1425
      %v4529 = vadd.f32 %v4522, %v1425
      %v4530 = vadd.f32 %v4523, %v1425
      %v4531 = vadd.f32 %v4524, %v1425
      %v4532 = vadd.f32 %v4525, %v1425
      %v4533 = vmax.f32 %v4526, 0.0
      %v4534 = vmax.f32 %v4527, 0.0
      %v4535 = vmax.f32 %v4528, 0.0
      %v4536 = vmax.f32 %v4529, 0.0
      %v4537 = vmax.f32 %v4530, 0.0
      %v4538 = vmax.f32 %v4531, 0.0
      %v4539 = vmax.f32 %v4532, 0.0
      %v4540 = vmax.f32 %v3542, %v4533
      %v4541 = vmax.f32 %v3543, %v4534
      %v4542 = vmax.f32 %v3544, %v4535
      %v4543 = vmax.f32 %v3545, %v4536
      %v4544 = vmax.f32 %v3546, %v4537
      %v4545 = vmax.f32 %v3547, %v4538
      %v4546 = vmax.f32 %v3548, %v4539
      %vm4547 = vcmask 523264
      %4548 = vst.msk [vmem:[%s170] sm:$0xff] %vm4547, %v4540
      %4549 = vst.msk [vmem:[%s170 + $0x8] sm:$0xff] %vm4547, %v4541
      %4550 = vst.msk [vmem:[%s170 + $0x10] sm:$0xff] %vm4547, %v4542
      %4551 = vst.msk [vmem:[%s170 + $0x18] sm:$0xff] %vm4547, %v4543
      %4552 = vst.msk [vmem:[%s170 + $0x20] sm:$0xff] %vm4547, %v4544
      %4553 = vst.msk [vmem:[%s170 + $0x28] sm:$0xff] %vm4547, %v4545
      %4554 = vst.msk [vmem:[%s170 + $0x30] sm:$0xff] %vm4547, %v4546
      %p4555 = scmp.lt.s32.totalorder %s14, 1
      %s4556 = scalar_select %p4555, %s14, 1
      %s4557 = smul.addr %s4556, 7
      %s4558 = smul.addr %s4557, 8
      %s4559 = scalar_lea.vmem %s3, %s4558
      // Predicated region
      $region33: #{net_forward.4} parent=31 // pred_check
        %p4560 = pneg %p100
      $region34: #{net_forward.4} parent=31 // pred_check_branch
        %4562 = sbr.rel (%p4560) target = $region36
      $region35: #{net_forward.4} parent=31 // pred_region
        _
      $region36: #{net_forward.4} parent=31 // pred_fallthru
        _
    $region32: #{net_forward.4} parent=5 // pred_fallthru
      _
    %p4563 = scmp.le.s32.totalorder 2, %s9
    // Predicated region
    $region37: #{net_forward.4} parent=5 // pred_check
      %p4564 = pneg %p4563
    $region38: #{net_forward.4} parent=5 // pred_check_branch
      %4566 = sbr.rel (%p4564) target = $region40
    $region39: #{net_forward.4} parent=5 // pred_region
      %s4567 = ssub.s32 %s9, 2
      // Predicated region
      $region41: #{net_forward.4} parent=39 // pred_check
        %p4568 = pneg %p106
      $region42: #{net_forward.4} parent=39 // pred_check_branch
        %4570 = sbr.rel (%p4568) target = $region44
      $region43: #{net_forward.4} parent=39 // pred_region
        %p4571 = scmp.lt.s32.totalorder %s15, 1
        %s4572 = scalar_select %p4571, %s15, 1
        %s4573 = smul.addr %s4572, 7
        %s4574 = smul.addr %s4573, 8
        %s4575 = scalar_lea.vmem %s3, %s4574
      $region44: #{net_forward.4} parent=39 // pred_fallthru
        _
    $region40: #{net_forward.4} parent=5 // pred_fallthru
      _
  $region6: #{net_forward.4} parent=0 // loop_footer
    %s13 = sadd.s32 1, %s9
  $region7: #{net_forward.4} parent=0 // loop_footer_branch
    %8 = sbr.rel target = $region3
  $region8: #{net_forward.4} parent=0 // loop_exit
    _

// kernel: net_forward.5
$region0: #{net_forward.5}
  #allocation0 [shape = 'u32[]', space=smem, size = 0x4, offset = 0x4, fixed_abs, tag = 'smem constant byte address 0x4 - core index']
  #allocation1 [shape = 'u32[144,128]{1,0:T(1,128)}', space=vmem, size = 0x12000, scoped, tag = 'internal scratch']
  %s0 = inlined_call_operand.vmem [shape: f32[2,3136], index: 0, kind: input, shape index: {}]
  %s1 = inlined_call_operand.vmem [shape: f32[3136,128], index: 1, kind: input, shape index: {}]
  %s2 = inlined_call_operand.vmem [shape: f32[1,128], index: 2, kind: input, shape index: {}]
  %s3 = inlined_call_operand.hbm [shape: f32[2,128], index: 3, kind: output, shape index: {}]
  %s4 = sld [smem:[#allocation0]]
  $region22: #{net_forward.5} parent=0
    _
  %s6 = ssub.s32 1, %s4
  %s7 = scalar_select 0, %s6, %s4
  $region1: #{net_forward.5} parent=0
    #allocation2 [shape = 'u8[1024]{0}', space=vmem, size = 0x400, scoped, tag = 'output window, operand 0, single buffered']
    #allocation3 [shape = 's32[1]{0}', space=sflag, size = 0x4, scoped, tag = 'scoped memory for net_forward.5']
    %8 = vsyncpa [#allocation3], 0
    // Predicated region
    $region2: #{net_forward.5} parent=1 // pred_check
      _
    $region3: #{net_forward.5} parent=1 // pred_check_branch
      %10 = sbr.rel (0) target = $region5
    $region4: #{net_forward.5} parent=1 // pred_region
      _
    $region5: #{net_forward.5} parent=1 // pred_fallthru
      _
    // Predicated region
    $region6: #{net_forward.5} parent=1 // pred_check
      _
    $region7: #{net_forward.5} parent=1 // pred_check_branch
      %12 = sbr.rel (0) target = $region9
    $region8: #{net_forward.5} parent=1 // pred_region
      _
    $region9: #{net_forward.5} parent=1 // pred_fallthru
      _
    // Predicated region
    $region10: #{net_forward.5} parent=1 // pred_check
      _
    $region11: #{net_forward.5} parent=1 // pred_check_branch
      %14 = sbr.rel (0) target = $region13
    $region12: #{net_forward.5} parent=1 // pred_region
      _
    $region13: #{net_forward.5} parent=1 // pred_fallthru
      _
    %v15 = vld [vmem:[%s0] sm:$0xff]
    %v16 = vld [vmem:[%s0 + $0x8] sm:$0xff]
    %v17 = vld [vmem:[%s0 + $0x10] sm:$0xff]
    %v18 = vld [vmem:[%s0 + $0x18] sm:$0xff]
    %v19 = vld [vmem:[%s0 + $0x20] sm:$0xff]
    %v20 = vld [vmem:[%s0 + $0x28] sm:$0xff]
    %v21 = vld [vmem:[%s0 + $0x30] sm:$0x3]
    %v22 = vld [vmem:[%s1] sm:$0xff]
    %v23 = vld [vmem:[%s1 + $0x8] sm:$0xff]
    %v24 = vld [vmem:[%s1 + $0x10] sm:$0xff]
    %v25 = vld [vmem:[%s1 + $0x18] sm:$0xff]
    %v26 = vld [vmem:[%s1 + $0x20] sm:$0xff]
    %v27 = vld [vmem:[%s1 + $0x28] sm:$0xff]
    %v28 = vld [vmem:[%s1 + $0x30] sm:$0xff]
    %v29 = vld [vmem:[%s1 + $0x38] sm:$0xff]
    %v30 = vld [vmem:[%s1 + $0x40] sm:$0xff]
    %v31 = vld [vmem:[%s1 + $0x48] sm:$0xff]
    %v32 = vld [vmem:[%s1 + $0x50] sm:$0xff]
    %v33 = vld [vmem:[%s1 + $0x58] sm:$0xff]
    %v34 = vld [vmem:[%s1 + $0x60] sm:$0xff]
    %v35 = vld [vmem:[%s1 + $0x68] sm:$0xff]
    %v36 = vld [vmem:[%s1 + $0x70] sm:$0xff]
    %v37 = vld [vmem:[%s1 + $0x78] sm:$0xff]
    %v38 = vld [vmem:[%s1 + $0x80] sm:$0xff]
    %v39 = vld [vmem:[%s1 + $0x88] sm:$0xff]
    %v40 = vld [vmem:[%s1 + $0x90] sm:$0xff]
    %v41 = vld [vmem:[%s1 + $0x98] sm:$0xff]
    %v42 = vld [vmem:[%s1 + $0xa0] sm:$0xff]
    %v43 = vld [vmem:[%s1 + $0xa8] sm:$0xff]
    %v44 = vld [vmem:[%s1 + $0xb0] sm:$0xff]
    %v45 = vld [vmem:[%s1 + $0xb8] sm:$0xff]
    %v46 = vld [vmem:[%s1 + $0xc0] sm:$0xff]
    %v47 = vld [vmem:[%s1 + $0xc8] sm:$0xff]
    %v48 = vld [vmem:[%s1 + $0xd0] sm:$0xff]
    %v49 = vld [vmem:[%s1 + $0xd8] sm:$0xff]
    %v50 = vld [vmem:[%s1 + $0xe0] sm:$0xff]
    %v51 = vld [vmem:[%s1 + $0xe8] sm:$0xff]
    %v52 = vld [vmem:[%s1 + $0xf0] sm:$0xff]
    %v53 = vld [vmem:[%s1 + $0xf8] sm:$0xff]
    %v54 = vld [vmem:[%s1 + $0x100] sm:$0xff]
    %v55 = vld [vmem:[%s1 + $0x108] sm:$0xff]
    %v56 = vld [vmem:[%s1 + $0x110] sm:$0xff]
    %v57 = vld [vmem:[%s1 + $0x118] sm:$0xff]
    %v58 = vld [vmem:[%s1 + $0x120] sm:$0xff]
    %v59 = vld [vmem:[%s1 + $0x128] sm:$0xff]
    %v60 = vld [vmem:[%s1 + $0x130] sm:$0xff]
    %v61 = vld [vmem:[%s1 + $0x138] sm:$0xff]
    %v62 = vld [vmem:[%s1 + $0x140] sm:$0xff]
    %v63 = vld [vmem:[%s1 + $0x148] sm:$0xff]
    %v64 = vld [vmem:[%s1 + $0x150] sm:$0xff]
    %v65 = vld [vmem:[%s1 + $0x158] sm:$0xff]
    %v66 = vld [vmem:[%s1 + $0x160] sm:$0xff]
    %v67 = vld [vmem:[%s1 + $0x168] sm:$0xff]
    %v68 = vld [vmem:[%s1 + $0x170] sm:$0xff]
    %v69 = vld [vmem:[%s1 + $0x178] sm:$0xff]
    %v70 = vld [vmem:[%s1 + $0x180] sm:$0xff]
    %v71 = vld [vmem:[%s1 + $0x188] sm:$0xff]
    %v72 = vld [vmem:[%s1 + $0x190] sm:$0xff]
    %v73 = vld [vmem:[%s1 + $0x198] sm:$0xff]
    %v74 = vld [vmem:[%s1 + $0x1a0] sm:$0xff]
    %v75 = vld [vmem:[%s1 + $0x1a8] sm:$0xff]
    %v76 = vld [vmem:[%s1 + $0x1b0] sm:$0xff]
    %v77 = vld [vmem:[%s1 + $0x1b8] sm:$0xff]
    %v78 = vld [vmem:[%s1 + $0x1c0] sm:$0xff]
    %v79 = vld [vmem:[%s1 + $0x1c8] sm:$0xff]
    %v80 = vld [vmem:[%s1 + $0x1d0] sm:$0xff]
    %v81 = vld [vmem:[%s1 + $0x1d8] sm:$0xff]
    %v82 = vld [vmem:[%s1 + $0x1e0] sm:$0xff]
    %v83 = vld [vmem:[%s1 + $0x1e8] sm:$0xff]
    %v84 = vld [vmem:[%s1 + $0x1f0] sm:$0xff]
    %v85 = vld [vmem:[%s1 + $0x1f8] sm:$0xff]
    %v86 = vld [vmem:[%s1 + $0x200] sm:$0xff]
    %v87 = vld [vmem:[%s1 + $0x208] sm:$0xff]
    %v88 = vld [vmem:[%s1 + $0x210] sm:$0xff]
    %v89 = vld [vmem:[%s1 + $0x218] sm:$0xff]
    %v90 = vld [vmem:[%s1 + $0x220] sm:$0xff]
    %v91 = vld [vmem:[%s1 + $0x228] sm:$0xff]
    %v92 = vld [vmem:[%s1 + $0x230] sm:$0xff]
    %v93 = vld [vmem:[%s1 + $0x238] sm:$0xff]
    %v94 = vld [vmem:[%s1 + $0x240] sm:$0xff]
    %v95 = vld [vmem:[%s1 + $0x248] sm:$0xff]
    %v96 = vld [vmem:[%s1 + $0x250] sm:$0xff]
    %v97 = vld [vmem:[%s1 + $0x258] sm:$0xff]
    %v98 = vld [vmem:[%s1 + $0x260] sm:$0xff]
    %v99 = vld [vmem:[%s1 + $0x268] sm:$0xff]
    %v100 = vld [vmem:[%s1 + $0x270] sm:$0xff]
    %v101 = vld [vmem:[%s1 + $0x278] sm:$0xff]
    %v102 = vld [vmem:[%s1 + $0x280] sm:$0xff]
    %v103 = vld [vmem:[%s1 + $0x288] sm:$0xff]
    %v104 = vld [vmem:[%s1 + $0x290] sm:$0xff]
    %v105 = vld [vmem:[%s1 + $0x298] sm:$0xff]
    %v106 = vld [vmem:[%s1 + $0x2a0] sm:$0xff]
    %v107 = vld [vmem:[%s1 + $0x2a8] sm:$0xff]
    %v108 = vld [vmem:[%s1 + $0x2b0] sm:$0xff]
    %v109 = vld [vmem:[%s1 + $0x2b8] sm:$0xff]
    %v110 = vld [vmem:[%s1 + $0x2c0] sm:$0xff]
    %v111 = vld [vmem:[%s1 + $0x2c8] sm:$0xff]
    %v112 = vld [vmem:[%s1 + $0x2d0] sm:$0xff]
    %v113 = vld [vmem:[%s1 + $0x2d8] sm:$0xff]
    %v114 = vld [vmem:[%s1 + $0x2e0] sm:$0xff]
    %v115 = vld [vmem:[%s1 + $0x2e8] sm:$0xff]
    %v116 = vld [vmem:[%s1 + $0x2f0] sm:$0xff]
    %v117 = vld [vmem:[%s1 + $0x2f8] sm:$0xff]
    %v118 = vld [vmem:[%s1 + $0x300] sm:$0xff]
    %v119 = vld [vmem:[%s1 + $0x308] sm:$0xff]
    %v120 = vld [vmem:[%s1 + $0x310] sm:$0xff]
    %v121 = vld [vmem:[%s1 + $0x318] sm:$0xff]
    %v122 = vld [vmem:[%s1 + $0x320] sm:$0xff]
    %v123 = vld [vmem:[%s1 + $0x328] sm:$0xff]
    %v124 = vld [vmem:[%s1 + $0x330] sm:$0xff]
    %v125 = vld [vmem:[%s1 + $0x338] sm:$0xff]
    %v126 = vld [vmem:[%s1 + $0x340] sm:$0xff]
    %v127 = vld [vmem:[%s1 + $0x348] sm:$0xff]
    %v128 = vld [vmem:[%s1 + $0x350] sm:$0xff]
    %v129 = vld [vmem:[%s1 + $0x358] sm:$0xff]
    %v130 = vld [vmem:[%s1 + $0x360] sm:$0xff]
    %v131 = vld [vmem:[%s1 + $0x368] sm:$0xff]
    %v132 = vld [vmem:[%s1 + $0x370] sm:$0xff]
    %v133 = vld [vmem:[%s1 + $0x378] sm:$0xff]
    %v134 = vld [vmem:[%s1 + $0x380] sm:$0xff]
    %v135 = vld [vmem:[%s1 + $0x388] sm:$0xff]
    %v136 = vld [vmem:[%s1 + $0x390] sm:$0xff]
    %v137 = vld [vmem:[%s1 + $0x398] sm:$0xff]
    %v138 = vld [vmem:[%s1 + $0x3a0] sm:$0xff]
    %v139 = vld [vmem:[%s1 + $0x3a8] sm:$0xff]
    %v140 = vld [vmem:[%s1 + $0x3b0] sm:$0xff]
    %v141 = vld [vmem:[%s1 + $0x3b8] sm:$0xff]
    %v142 = vld [vmem:[%s1 + $0x3c0] sm:$0xff]
    %v143 = vld [vmem:[%s1 + $0x3c8] sm:$0xff]
    %v144 = vld [vmem:[%s1 + $0x3d0] sm:$0xff]
    %v145 = vld [vmem:[%s1 + $0x3d8] sm:$0xff]
    %v146 = vld [vmem:[%s1 + $0x3e0] sm:$0xff]
    %v147 = vld [vmem:[%s1 + $0x3e8] sm:$0xff]
    %v148 = vld [vmem:[%s1 + $0x3f0] sm:$0xff]
    %v149 = vld [vmem:[%s1 + $0x3f8] sm:$0xff]
    %v150 = vld [vmem:[%s1 + $0x400] sm:$0xff]
    %v151 = vld [vmem:[%s1 + $0x408] sm:$0xff]
    %v152 = vld [vmem:[%s1 + $0x410] sm:$0xff]
    %v153 = vld [vmem:[%s1 + $0x418] sm:$0xff]
    %v154 = vld [vmem:[%s1 + $0x420] sm:$0xff]
    %v155 = vld [vmem:[%s1 + $0x428] sm:$0xff]
    %v156 = vld [vmem:[%s1 + $0x430] sm:$0xff]
    %v157 = vld [vmem:[%s1 + $0x438] sm:$0xff]
    %v158 = vld [vmem:[%s1 + $0x440] sm:$0xff]
    %v159 = vld [vmem:[%s1 + $0x448] sm:$0xff]
    %v160 = vld [vmem:[%s1 + $0x450] sm:$0xff]
    %v161 = vld [vmem:[%s1 + $0x458] sm:$0xff]
    %v162 = vld [vmem:[%s1 + $0x460] sm:$0xff]
    %v163 = vld [vmem:[%s1 + $0x468] sm:$0xff]
    %v164 = vld [vmem:[%s1 + $0x470] sm:$0xff]
    %v165 = vld [vmem:[%s1 + $0x478] sm:$0xff]
    %v166 = vld [vmem:[%s1 + $0x480] sm:$0xff]
    %v167 = vld [vmem:[%s1 + $0x488] sm:$0xff]
    %v168 = vld [vmem:[%s1 + $0x490] sm:$0xff]
    %v169 = vld [vmem:[%s1 + $0x498] sm:$0xff]
    %v170 = vld [vmem:[%s1 + $0x4a0] sm:$0xff]
    %v171 = vld [vmem:[%s1 + $0x4a8] sm:$0xff]
    %v172 = vld [vmem:[%s1 + $0x4b0] sm:$0xff]
    %v173 = vld [vmem:[%s1 + $0x4b8] sm:$0xff]
    %v174 = vld [vmem:[%s1 + $0x4c0] sm:$0xff]
    %v175 = vld [vmem:[%s1 + $0x4c8] sm:$0xff]
    %v176 = vld [vmem:[%s1 + $0x4d0] sm:$0xff]
    %v177 = vld [vmem:[%s1 + $0x4d8] sm:$0xff]
    %v178 = vld [vmem:[%s1 + $0x4e0] sm:$0xff]
    %v179 = vld [vmem:[%s1 + $0x4e8] sm:$0xff]
    %v180 = vld [vmem:[%s1 + $0x4f0] sm:$0xff]
    %v181 = vld [vmem:[%s1 + $0x4f8] sm:$0xff]
    %v182 = vld [vmem:[%s1 + $0x500] sm:$0xff]
    %v183 = vld [vmem:[%s1 + $0x508] sm:$0xff]
    %v184 = vld [vmem:[%s1 + $0x510] sm:$0xff]
    %v185 = vld [vmem:[%s1 + $0x518] sm:$0xff]
    %v186 = vld [vmem:[%s1 + $0x520] sm:$0xff]
    %v187 = vld [vmem:[%s1 + $0x528] sm:$0xff]
    %v188 = vld [vmem:[%s1 + $0x530] sm:$0xff]
    %v189 = vld [vmem:[%s1 + $0x538] sm:$0xff]
    %v190 = vld [vmem:[%s1 + $0x540] sm:$0xff]
    %v191 = vld [vmem:[%s1 + $0x548] sm:$0xff]
    %v192 = vld [vmem:[%s1 + $0x550] sm:$0xff]
    %v193 = vld [vmem:[%s1 + $0x558] sm:$0xff]
    %v194 = vld [vmem:[%s1 + $0x560] sm:$0xff]
    %v195 = vld [vmem:[%s1 + $0x568] sm:$0xff]
    %v196 = vld [vmem:[%s1 + $0x570] sm:$0xff]
    %v197 = vld [vmem:[%s1 + $0x578] sm:$0xff]
    %v198 = vld [vmem:[%s1 + $0x580] sm:$0xff]
    %v199 = vld [vmem:[%s1 + $0x588] sm:$0xff]
    %v200 = vld [vmem:[%s1 + $0x590] sm:$0xff]
    %v201 = vld [vmem:[%s1 + $0x598] sm:$0xff]
    %v202 = vld [vmem:[%s1 + $0x5a0] sm:$0xff]
    %v203 = vld [vmem:[%s1 + $0x5a8] sm:$0xff]
    %v204 = vld [vmem:[%s1 + $0x5b0] sm:$0xff]
    %v205 = vld [vmem:[%s1 + $0x5b8] sm:$0xff]
    %v206 = vld [vmem:[%s1 + $0x5c0] sm:$0xff]
    %v207 = vld [vmem:[%s1 + $0x5c8] sm:$0xff]
    %v208 = vld [vmem:[%s1 + $0x5d0] sm:$0xff]
    %v209 = vld [vmem:[%s1 + $0x5d8] sm:$0xff]
    %v210 = vld [vmem:[%s1 + $0x5e0] sm:$0xff]
    %v211 = vld [vmem:[%s1 + $0x5e8] sm:$0xff]
    %v212 = vld [vmem:[%s1 + $0x5f0] sm:$0xff]
    %v213 = vld [vmem:[%s1 + $0x5f8] sm:$0xff]
    %v214 = vld [vmem:[%s1 + $0x600] sm:$0xff]
    %v215 = vld [vmem:[%s1 + $0x608] sm:$0xff]
    %v216 = vld [vmem:[%s1 + $0x610] sm:$0xff]
    %v217 = vld [vmem:[%s1 + $0x618] sm:$0xff]
    %v218 = vld [vmem:[%s1 + $0x620] sm:$0xff]
    %v219 = vld [vmem:[%s1 + $0x628] sm:$0xff]
    %v220 = vld [vmem:[%s1 + $0x630] sm:$0xff]
    %v221 = vld [vmem:[%s1 + $0x638] sm:$0xff]
    %v222 = vld [vmem:[%s1 + $0x640] sm:$0xff]
    %v223 = vld [vmem:[%s1 + $0x648] sm:$0xff]
    %v224 = vld [vmem:[%s1 + $0x650] sm:$0xff]
    %v225 = vld [vmem:[%s1 + $0x658] sm:$0xff]
    %v226 = vld [vmem:[%s1 + $0x660] sm:$0xff]
    %v227 = vld [vmem:[%s1 + $0x668] sm:$0xff]
    %v228 = vld [vmem:[%s1 + $0x670] sm:$0xff]
    %v229 = vld [vmem:[%s1 + $0x678] sm:$0xff]
    %v230 = vld [vmem:[%s1 + $0x680] sm:$0xff]
    %v231 = vld [vmem:[%s1 + $0x688] sm:$0xff]
    %v232 = vld [vmem:[%s1 + $0x690] sm:$0xff]
    %v233 = vld [vmem:[%s1 + $0x698] sm:$0xff]
    %v234 = vld [vmem:[%s1 + $0x6a0] sm:$0xff]
    %v235 = vld [vmem:[%s1 + $0x6a8] sm:$0xff]
    %v236 = vld [vmem:[%s1 + $0x6b0] sm:$0xff]
    %v237 = vld [vmem:[%s1 + $0x6b8] sm:$0xff]
    %v238 = vld [vmem:[%s1 + $0x6c0] sm:$0xff]
    %v239 = vld [vmem:[%s1 + $0x6c8] sm:$0xff]
    %v240 = vld [vmem:[%s1 + $0x6d0] sm:$0xff]
    %v241 = vld [vmem:[%s1 + $0x6d8] sm:$0xff]
    %v242 = vld [vmem:[%s1 + $0x6e0] sm:$0xff]
    %v243 = vld [vmem:[%s1 + $0x6e8] sm:$0xff]
    %v244 = vld [vmem:[%s1 + $0x6f0] sm:$0xff]
    %v245 = vld [vmem:[%s1 + $0x6f8] sm:$0xff]
    %v246 = vld [vmem:[%s1 + $0x700] sm:$0xff]
    %v247 = vld [vmem:[%s1 + $0x708] sm:$0xff]
    %v248 = vld [vmem:[%s1 + $0x710] sm:$0xff]
    %v249 = vld [vmem:[%s1 + $0x718] sm:$0xff]
    %v250 = vld [vmem:[%s1 + $0x720] sm:$0xff]
    %v251 = vld [vmem:[%s1 + $0x728] sm:$0xff]
    %v252 = vld [vmem:[%s1 + $0x730] sm:$0xff]
    %v253 = vld [vmem:[%s1 + $0x738] sm:$0xff]
    %v254 = vld [vmem:[%s1 + $0x740] sm:$0xff]
    %v255 = vld [vmem:[%s1 + $0x748] sm:$0xff]
    %v256 = vld [vmem:[%s1 + $0x750] sm:$0xff]
    %v257 = vld [vmem:[%s1 + $0x758] sm:$0xff]
    %v258 = vld [vmem:[%s1 + $0x760] sm:$0xff]
    %v259 = vld [vmem:[%s1 + $0x768] sm:$0xff]
    %v260 = vld [vmem:[%s1 + $0x770] sm:$0xff]
    %v261 = vld [vmem:[%s1 + $0x778] sm:$0xff]
    %v262 = vld [vmem:[%s1 + $0x780] sm:$0xff]
    %v263 = vld [vmem:[%s1 + $0x788] sm:$0xff]
    %v264 = vld [vmem:[%s1 + $0x790] sm:$0xff]
    %v265 = vld [vmem:[%s1 + $0x798] sm:$0xff]
    %v266 = vld [vmem:[%s1 + $0x7a0] sm:$0xff]
    %v267 = vld [vmem:[%s1 + $0x7a8] sm:$0xff]
    %v268 = vld [vmem:[%s1 + $0x7b0] sm:$0xff]
    %v269 = vld [vmem:[%s1 + $0x7b8] sm:$0xff]
    %v270 = vld [vmem:[%s1 + $0x7c0] sm:$0xff]
    %v271 = vld [vmem:[%s1 + $0x7c8] sm:$0xff]
    %v272 = vld [vmem:[%s1 + $0x7d0] sm:$0xff]
    %v273 = vld [vmem:[%s1 + $0x7d8] sm:$0xff]
    %v274 = vld [vmem:[%s1 + $0x7e0] sm:$0xff]
    %v275 = vld [vmem:[%s1 + $0x7e8] sm:$0xff]
    %v276 = vld [vmem:[%s1 + $0x7f0] sm:$0xff]
    %v277 = vld [vmem:[%s1 + $0x7f8] sm:$0xff]
    %v278 = vld [vmem:[%s1 + $0x800] sm:$0xff]
    %v279 = vld [vmem:[%s1 + $0x808] sm:$0xff]
    %v280 = vld [vmem:[%s1 + $0x810] sm:$0xff]
    %v281 = vld [vmem:[%s1 + $0x818] sm:$0xff]
    %v282 = vld [vmem:[%s1 + $0x820] sm:$0xff]
    %v283 = vld [vmem:[%s1 + $0x828] sm:$0xff]
    %v284 = vld [vmem:[%s1 + $0x830] sm:$0xff]
    %v285 = vld [vmem:[%s1 + $0x838] sm:$0xff]
    %v286 = vld [vmem:[%s1 + $0x840] sm:$0xff]
    %v287 = vld [vmem:[%s1 + $0x848] sm:$0xff]
    %v288 = vld [vmem:[%s1 + $0x850] sm:$0xff]
    %v289 = vld [vmem:[%s1 + $0x858] sm:$0xff]
    %v290 = vld [vmem:[%s1 + $0x860] sm:$0xff]
    %v291 = vld [vmem:[%s1 + $0x868] sm:$0xff]
    %v292 = vld [vmem:[%s1 + $0x870] sm:$0xff]
    %v293 = vld [vmem:[%s1 + $0x878] sm:$0xff]
    %v294 = vld [vmem:[%s1 + $0x880] sm:$0xff]
    %v295 = vld [vmem:[%s1 + $0x888] sm:$0xff]
    %v296 = vld [vmem:[%s1 + $0x890] sm:$0xff]
    %v297 = vld [vmem:[%s1 + $0x898] sm:$0xff]
    %v298 = vld [vmem:[%s1 + $0x8a0] sm:$0xff]
    %v299 = vld [vmem:[%s1 + $0x8a8] sm:$0xff]
    %v300 = vld [vmem:[%s1 + $0x8b0] sm:$0xff]
    %v301 = vld [vmem:[%s1 + $0x8b8] sm:$0xff]
    %v302 = vld [vmem:[%s1 + $0x8c0] sm:$0xff]
    %v303 = vld [vmem:[%s1 + $0x8c8] sm:$0xff]
    %v304 = vld [vmem:[%s1 + $0x8d0] sm:$0xff]
    %v305 = vld [vmem:[%s1 + $0x8d8] sm:$0xff]
    %v306 = vld [vmem:[%s1 + $0x8e0] sm:$0xff]
    %v307 = vld [vmem:[%s1 + $0x8e8] sm:$0xff]
    %v308 = vld [vmem:[%s1 + $0x8f0] sm:$0xff]
    %v309 = vld [vmem:[%s1 + $0x8f8] sm:$0xff]
    %v310 = vld [vmem:[%s1 + $0x900] sm:$0xff]
    %v311 = vld [vmem:[%s1 + $0x908] sm:$0xff]
    %v312 = vld [vmem:[%s1 + $0x910] sm:$0xff]
    %v313 = vld [vmem:[%s1 + $0x918] sm:$0xff]
    %v314 = vld [vmem:[%s1 + $0x920] sm:$0xff]
    %v315 = vld [vmem:[%s1 + $0x928] sm:$0xff]
    %v316 = vld [vmem:[%s1 + $0x930] sm:$0xff]
    %v317 = vld [vmem:[%s1 + $0x938] sm:$0xff]
    %v318 = vld [vmem:[%s1 + $0x940] sm:$0xff]
    %v319 = vld [vmem:[%s1 + $0x948] sm:$0xff]
    %v320 = vld [vmem:[%s1 + $0x950] sm:$0xff]
    %v321 = vld [vmem:[%s1 + $0x958] sm:$0xff]
    %v322 = vld [vmem:[%s1 + $0x960] sm:$0xff]
    %v323 = vld [vmem:[%s1 + $0x968] sm:$0xff]
    %v324 = vld [vmem:[%s1 + $0x970] sm:$0xff]
    %v325 = vld [vmem:[%s1 + $0x978] sm:$0xff]
    %v326 = vld [vmem:[%s1 + $0x980] sm:$0xff]
    %v327 = vld [vmem:[%s1 + $0x988] sm:$0xff]
    %v328 = vld [vmem:[%s1 + $0x990] sm:$0xff]
    %v329 = vld [vmem:[%s1 + $0x998] sm:$0xff]
    %v330 = vld [vmem:[%s1 + $0x9a0] sm:$0xff]
    %v331 = vld [vmem:[%s1 + $0x9a8] sm:$0xff]
    %v332 = vld [vmem:[%s1 + $0x9b0] sm:$0xff]
    %v333 = vld [vmem:[%s1 + $0x9b8] sm:$0xff]
    %v334 = vld [vmem:[%s1 + $0x9c0] sm:$0xff]
    %v335 = vld [vmem:[%s1 + $0x9c8] sm:$0xff]
    %v336 = vld [vmem:[%s1 + $0x9d0] sm:$0xff]
    %v337 = vld [vmem:[%s1 + $0x9d8] sm:$0xff]
    %v338 = vld [vmem:[%s1 + $0x9e0] sm:$0xff]
    %v339 = vld [vmem:[%s1 + $0x9e8] sm:$0xff]
    %v340 = vld [vmem:[%s1 + $0x9f0] sm:$0xff]
    %v341 = vld [vmem:[%s1 + $0x9f8] sm:$0xff]
    %v342 = vld [vmem:[%s1 + $0xa00] sm:$0xff]
    %v343 = vld [vmem:[%s1 + $0xa08] sm:$0xff]
    %v344 = vld [vmem:[%s1 + $0xa10] sm:$0xff]
    %v345 = vld [vmem:[%s1 + $0xa18] sm:$0xff]
    %v346 = vld [vmem:[%s1 + $0xa20] sm:$0xff]
    %v347 = vld [vmem:[%s1 + $0xa28] sm:$0xff]
    %v348 = vld [vmem:[%s1 + $0xa30] sm:$0xff]
    %v349 = vld [vmem:[%s1 + $0xa38] sm:$0xff]
    %v350 = vld [vmem:[%s1 + $0xa40] sm:$0xff]
    %v351 = vld [vmem:[%s1 + $0xa48] sm:$0xff]
    %v352 = vld [vmem:[%s1 + $0xa50] sm:$0xff]
    %v353 = vld [vmem:[%s1 + $0xa58] sm:$0xff]
    %v354 = vld [vmem:[%s1 + $0xa60] sm:$0xff]
    %v355 = vld [vmem:[%s1 + $0xa68] sm:$0xff]
    %v356 = vld [vmem:[%s1 + $0xa70] sm:$0xff]
    %v357 = vld [vmem:[%s1 + $0xa78] sm:$0xff]
    %v358 = vld [vmem:[%s1 + $0xa80] sm:$0xff]
    %v359 = vld [vmem:[%s1 + $0xa88] sm:$0xff]
    %v360 = vld [vmem:[%s1 + $0xa90] sm:$0xff]
    %v361 = vld [vmem:[%s1 + $0xa98] sm:$0xff]
    %v362 = vld [vmem:[%s1 + $0xaa0] sm:$0xff]
    %v363 = vld [vmem:[%s1 + $0xaa8] sm:$0xff]
    %v364 = vld [vmem:[%s1 + $0xab0] sm:$0xff]
    %v365 = vld [vmem:[%s1 + $0xab8] sm:$0xff]
    %v366 = vld [vmem:[%s1 + $0xac0] sm:$0xff]
    %v367 = vld [vmem:[%s1 + $0xac8] sm:$0xff]
    %v368 = vld [vmem:[%s1 + $0xad0] sm:$0xff]
    %v369 = vld [vmem:[%s1 + $0xad8] sm:$0xff]
    %v370 = vld [vmem:[%s1 + $0xae0] sm:$0xff]
    %v371 = vld [vmem:[%s1 + $0xae8] sm:$0xff]
    %v372 = vld [vmem:[%s1 + $0xaf0] sm:$0xff]
    %v373 = vld [vmem:[%s1 + $0xaf8] sm:$0xff]
    %v374 = vld [vmem:[%s1 + $0xb00] sm:$0xff]
    %v375 = vld [vmem:[%s1 + $0xb08] sm:$0xff]
    %v376 = vld [vmem:[%s1 + $0xb10] sm:$0xff]
    %v377 = vld [vmem:[%s1 + $0xb18] sm:$0xff]
    %v378 = vld [vmem:[%s1 + $0xb20] sm:$0xff]
    %v379 = vld [vmem:[%s1 + $0xb28] sm:$0xff]
    %v380 = vld [vmem:[%s1 + $0xb30] sm:$0xff]
    %v381 = vld [vmem:[%s1 + $0xb38] sm:$0xff]
    %v382 = vld [vmem:[%s1 + $0xb40] sm:$0xff]
    %v383 = vld [vmem:[%s1 + $0xb48] sm:$0xff]
    %v384 = vld [vmem:[%s1 + $0xb50] sm:$0xff]
    %v385 = vld [vmem:[%s1 + $0xb58] sm:$0xff]
    %v386 = vld [vmem:[%s1 + $0xb60] sm:$0xff]
    %v387 = vld [vmem:[%s1 + $0xb68] sm:$0xff]
    %v388 = vld [vmem:[%s1 + $0xb70] sm:$0xff]
    %v389 = vld [vmem:[%s1 + $0xb78] sm:$0xff]
    %v390 = vld [vmem:[%s1 + $0xb80] sm:$0xff]
    %v391 = vld [vmem:[%s1 + $0xb88] sm:$0xff]
    %v392 = vld [vmem:[%s1 + $0xb90] sm:$0xff]
    %v393 = vld [vmem:[%s1 + $0xb98] sm:$0xff]
    %v394 = vld [vmem:[%s1 + $0xba0] sm:$0xff]
    %v395 = vld [vmem:[%s1 + $0xba8] sm:$0xff]
    %v396 = vld [vmem:[%s1 + $0xbb0] sm:$0xff]
    %v397 = vld [vmem:[%s1 + $0xbb8] sm:$0xff]
    %v398 = vld [vmem:[%s1 + $0xbc0] sm:$0xff]
    %v399 = vld [vmem:[%s1 + $0xbc8] sm:$0xff]
    %v400 = vld [vmem:[%s1 + $0xbd0] sm:$0xff]
    %v401 = vld [vmem:[%s1 + $0xbd8] sm:$0xff]
    %v402 = vld [vmem:[%s1 + $0xbe0] sm:$0xff]
    %v403 = vld [vmem:[%s1 + $0xbe8] sm:$0xff]
    %v404 = vld [vmem:[%s1 + $0xbf0] sm:$0xff]
    %v405 = vld [vmem:[%s1 + $0xbf8] sm:$0xff]
    %v406 = vld [vmem:[%s1 + $0xc00] sm:$0xff]
    %v407 = vld [vmem:[%s1 + $0xc08] sm:$0xff]
    %v408 = vld [vmem:[%s1 + $0xc10] sm:$0xff]
    %v409 = vld [vmem:[%s1 + $0xc18] sm:$0xff]
    %v410 = vld [vmem:[%s1 + $0xc20] sm:$0xff]
    %v411 = vld [vmem:[%s1 + $0xc28] sm:$0xff]
    %v412 = vld [vmem:[%s1 + $0xc30] sm:$0xff]
    %v413 = vld [vmem:[%s1 + $0xc38] sm:$0xff]
    %v414 = vld [vmem:[%s2] sm:$0x1]
    %v416 = vlaneseq
    %v417 = vshrl.u32 %v416, 7
    %v418 = vsub.s32 0, %v417
    %v419 = vrot.slane %v414, %v418
    %v428 = vcombine.high %v15, %v15
    %v430 = vunpack.c.l.s4 1983009808
    %v431 = vunpack.c.0.s8 %v430
    %v432 = vlaneseq
    %v433 = vshrl.u32 %v432, 7
    %v434 = vsub.s32 %v431, %v433
    %v435 = vrot.slane %v15, %v434
    %v437 = vunpack.c.l.s4 1983009808
    %v438 = vunpack.c.0.s8 %v437
    %v439 = vlaneseq
    %v440 = vshrl.u32 %v439, 7
    %v441 = vsub.s32 %v438, %v440
    %v442 = vrot.slane %v428, %v441
    %v443 = vcombine.high %v435, %v435
    %v444 = vcombine.high %v442, %v442
    %v445 = vcombine.high %v16, %v16
    %v447 = vunpack.c.l.s4 1983009808
    %v448 = vunpack.c.0.s8 %v447
    %v449 = vlaneseq
    %v450 = vshrl.u32 %v449, 7
    %v451 = vsub.s32 %v448, %v450
    %v452 = vrot.slane %v16, %v451
    %v454 = vunpack.c.l.s4 1983009808
    %v455 = vunpack.c.0.s8 %v454
    %v456 = vlaneseq
    %v457 = vshrl.u32 %v456, 7
    %v458 = vsub.s32 %v455, %v457
    %v459 = vrot.slane %v445, %v458
    %v460 = vcombine.high %v452, %v452
    %v461 = vcombine.high %v459, %v459
    %v462 = vcombine.high %v17, %v17
    %v464 = vunpack.c.l.s4 1983009808
    %v465 = vunpack.c.0.s8 %v464
    %v466 = vlaneseq
    %v467 = vshrl.u32 %v466, 7
    %v468 = vsub.s32 %v465, %v467
    %v469 = vrot.slane %v17, %v468
    %v471 = vunpack.c.l.s4 1983009808
    %v472 = vunpack.c.0.s8 %v471
    %v473 = vlaneseq
    %v474 = vshrl.u32 %v473, 7
    %v475 = vsub.s32 %v472, %v474
    %v476 = vrot.slane %v462, %v475
    %v477 = vcombine.high %v469, %v469
    %v478 = vcombine.high %v476, %v476
    %v479 = vcombine.high %v18, %v18
    %v481 = vunpack.c.l.s4 1983009808
    %v482 = vunpack.c.0.s8 %v481
    %v483 = vlaneseq
    %v484 = vshrl.u32 %v483, 7
    %v485 = vsub.s32 %v482, %v484
    %v486 = vrot.slane %v18, %v485
    %v488 = vunpack.c.l.s4 1983009808
    %v489 = vunpack.c.0.s8 %v488
    %v490 = vlaneseq
    %v491 = vshrl.u32 %v490, 7
    %v492 = vsub.s32 %v489, %v491
    %v493 = vrot.slane %v479, %v492
    %v494 = vcombine.high %v486, %v486
    %v495 = vcombine.high %v493, %v493
    %v496 = vcombine.high %v19, %v19
    %v498 = vunpack.c.l.s4 1983009808
    %v499 = vunpack.c.0.s8 %v498
    %v500 = vlaneseq
    %v501 = vshrl.u32 %v500, 7
    %v502 = vsub.s32 %v499, %v501
    %v503 = vrot.slane %v19, %v502
    %v505 = vunpack.c.l.s4 1983009808
    %v506 = vunpack.c.0.s8 %v505
    %v507 = vlaneseq
    %v508 = vshrl.u32 %v507, 7
    %v509 = vsub.s32 %v506, %v508
    %v510 = vrot.slane %v496, %v509
    %v511 = vcombine.high %v503, %v503
    %v512 = vcombine.high %v510, %v510
    %v513 = vcombine.high %v20, %v20
    %v515 = vunpack.c.l.s4 1983009808
    %v516 = vunpack.c.0.s8 %v515
    %v517 = vlaneseq
    %v518 = vshrl.u32 %v517, 7
    %v519 = vsub.s32 %v516, %v518
    %v520 = vrot.slane %v20, %v519
    %v522 = vunpack.c.l.s4 1983009808
    %v523 = vunpack.c.0.s8 %v522
    %v524 = vlaneseq
    %v525 = vshrl.u32 %v524, 7
    %v526 = vsub.s32 %v523, %v525
    %v527 = vrot.slane %v513, %v526
    %v528 = vcombine.high %v520, %v520
    %v529 = vcombine.high %v527, %v527
    %v531 = vunpack.c.l.s4 1983009808
    %v532 = vunpack.c.0.s8 %v531
    %v533 = vlaneseq
    %v534 = vshrl.u32 %v533, 7
    %v535 = vsub.s32 %v532, %v534
    %v536 = vrot.slane %v21, %v535
    %vm561 = vcmask 523264
    %v562 = vsel %vm561, %v536, 0
    %564 = vmatprep.subr.mxu0 0.0
    %565 = vmatpush1.msra.mxu0 %v22
    %566 = vmatprep.subr.mxu0 0.0
    %567 = vmatpush1.msra.mxu0 %v23
    %568 = vmatprep.subr.mxu0 0.0
    %569 = vmatpush1.msra.mxu0 %v24
    %570 = vmatprep.subr.mxu0 0.0
    %571 = vmatpush1.msra.mxu0 %v25
    %572 = vmatprep.subr.mxu0 0.0
    %573 = vmatpush1.msra.mxu0 %v26
    %574 = vmatprep.subr.mxu0 0.0
    %575 = vmatpush1.msra.mxu0 %v27
    %576 = vmatprep.subr.mxu0 0.0
    %577 = vmatpush1.msra.mxu0 %v28
    %578 = vmatprep.subr.mxu0 0.0
    %579 = vmatpush1.msra.mxu0 %v29
    %580 = vmatprep.subr.mxu0 0.0
    %581 = vmatpush1.msra.mxu0 %v30
    %582 = vmatprep.subr.mxu0 0.0
    %583 = vmatpush1.msra.mxu0 %v31
    %584 = vmatprep.subr.mxu0 0.0
    %585 = vmatpush1.msra.mxu0 %v32
    %586 = vmatprep.subr.mxu0 0.0
    %587 = vmatpush1.msra.mxu0 %v33
    %588 = vmatprep.subr.mxu0 0.0
    %589 = vmatpush1.msra.mxu0 %v34
    %590 = vmatprep.subr.mxu0 0.0
    %591 = vmatpush1.msra.mxu0 %v35
    %592 = vmatprep.subr.mxu0 0.0
    %593 = vmatpush1.msra.mxu0 %v36
    %594 = vmatprep.subr.mxu0 0.0
    %595 = vmatpush1.msra.mxu0 %v37
    %596 = vmatprep.subr.mxu0 0.0
    %597 = vmatpush1.msra.mxu0 %v38
    %598 = vmatprep.subr.mxu0 0.0
    %599 = vmatpush1.msra.mxu0 %v39
    %600 = vmatprep.subr.mxu0 0.0
    %601 = vmatpush1.msra.mxu0 %v40
    %602 = vmatprep.subr.mxu0 0.0
    %603 = vmatpush1.msra.mxu0 %v41
    %604 = vmatprep.subr.mxu0 0.0
    %605 = vmatpush1.msra.mxu0 %v42
    %606 = vmatprep.subr.mxu0 0.0
    %607 = vmatpush1.msra.mxu0 %v43
    %608 = vmatprep.subr.mxu0 0.0
    %609 = vmatpush1.msra.mxu0 %v44
    %610 = vmatprep.subr.mxu0 0.0
    %611 = vmatpush1.msra.mxu0 %v45
    %612 = vmatprep.subr.mxu0 0.0
    %613 = vmatpush1.msra.mxu0 %v46
    %614 = vmatprep.subr.mxu0 0.0
    %615 = vmatpush1.msra.mxu0 %v47
    %616 = vmatprep.subr.mxu0 0.0
    %617 = vmatpush1.msra.mxu0 %v48
    %618 = vmatprep.subr.mxu0 0.0
    %619 = vmatpush1.msra.mxu0 %v49
    %620 = vmatprep.subr.mxu0 0.0
    %621 = vmatpush1.msra.mxu0 %v50
    %622 = vmatprep.subr.mxu0 0.0
    %623 = vmatpush1.msra.mxu0 %v51
    %624 = vmatprep.subr.mxu0 0.0
    %625 = vmatpush1.msra.mxu0 %v52
    %626 = vmatprep.subr.mxu0 0.0
    %627 = vmatpush1.msra.mxu0 %v53
    %628 = vmatprep.mubr.f32.mxu0 %v443
    %629 = vmatmul.mubr.f32.gmra.mrb[0].mxu0 %v435
    %v630 = vpop.f32.mrb[0].mxu0
    %v631 = vadd.f32 %v419, %v630
    %v632 = vpop.f32.mrb[0].mxu0
    %633 = vdwg.mxu0
    %634 = vmatprep.subr.mxu0 0.0
    %635 = vmatpush1.msra.mxu0 %v54
    %636 = vmatprep.subr.mxu0 0.0
    %637 = vmatpush1.msra.mxu0 %v55
    %638 = vmatprep.subr.mxu0 0.0
    %639 = vmatpush1.msra.mxu0 %v56
    %640 = vmatprep.subr.mxu0 0.0
    %641 = vmatpush1.msra.mxu0 %v57
    %642 = vmatprep.subr.mxu0 0.0
    %643 = vmatpush1.msra.mxu0 %v58
    %644 = vmatprep.subr.mxu0 0.0
    %645 = vmatpush1.msra.mxu0 %v59
    %646 = vmatprep.subr.mxu0 0.0
    %647 = vmatpush1.msra.mxu0 %v60
    %648 = vmatprep.subr.mxu0 0.0
    %649 = vmatpush1.msra.mxu0 %v61
    %650 = vmatprep.subr.mxu0 0.0
    %651 = vmatpush1.msra.mxu0 %v62
    %652 = vmatprep.subr.mxu0 0.0
    %653 = vmatpush1.msra.mxu0 %v63
    %654 = vmatprep.subr.mxu0 0.0
    %655 = vmatpush1.msra.mxu0 %v64
    %656 = vmatprep.subr.mxu0 0.0
    %657 = vmatpush1.msra.mxu0 %v65
    %658 = vmatprep.subr.mxu0 0.0
    %659 = vmatpush1.msra.mxu0 %v66
    %660 = vmatprep.subr.mxu0 0.0
    %661 = vmatpush1.msra.mxu0 %v67
    %662 = vmatprep.subr.mxu0 0.0
    %663 = vmatpush1.msra.mxu0 %v68
    %664 = vmatprep.subr.mxu0 0.0
    %665 = vmatpush1.msra.mxu0 %v69
    %666 = vmatprep.subr.mxu0 0.0
    %667 = vmatpush1.msra.mxu0 %v70
    %668 = vmatprep.subr.mxu0 0.0
    %669 = vmatpush1.msra.mxu0 %v71
    %670 = vmatprep.subr.mxu0 0.0
    %671 = vmatpush1.msra.mxu0 %v72
    %672 = vmatprep.subr.mxu0 0.0
    %673 = vmatpush1.msra.mxu0 %v73
    %674 = vmatprep.subr.mxu0 0.0
    %675 = vmatpush1.msra.mxu0 %v74
    %676 = vmatprep.subr.mxu0 0.0
    %677 = vmatpush1.msra.mxu0 %v75
    %678 = vmatprep.subr.mxu0 0.0
    %679 = vmatpush1.msra.mxu0 %v76
    %680 = vmatprep.subr.mxu0 0.0
    %681 = vmatpush1.msra.mxu0 %v77
    %682 = vmatprep.subr.mxu0 0.0
    %683 = vmatpush1.msra.mxu0 %v78
    %684 = vmatprep.subr.mxu0 0.0
    %685 = vmatpush1.msra.mxu0 %v79
    %686 = vmatprep.subr.mxu0 0.0
    %687 = vmatpush1.msra.mxu0 %v80
    %688 = vmatprep.subr.mxu0 0.0
    %689 = vmatpush1.msra.mxu0 %v81
    %690 = vmatprep.subr.mxu0 0.0
    %691 = vmatpush1.msra.mxu0 %v82
    %692 = vmatprep.subr.mxu0 0.0
    %693 = vmatpush1.msra.mxu0 %v83
    %694 = vmatprep.subr.mxu0 0.0
    %695 = vmatpush1.msra.mxu0 %v84
    %696 = vmatprep.subr.mxu0 0.0
    %697 = vmatpush1.msra.mxu0 %v85
    %698 = vmatprep.mubr.f32.mxu0 %v444
    %699 = vmatmul.mubr.f32.gmra.mrb[0].mxu0 %v442
    %v700 = vpop.f32.mrb[0].mxu0
    %v701 = vadd.f32 %v631, %v700
    %v702 = vpop.f32.mrb[0].mxu0
    %703 = vdwg.mxu0
    %704 = vmatprep.subr.mxu0 0.0
    %705 = vmatpush1.msra.mxu0 %v86
    %706 = vmatprep.subr.mxu0 0.0
    %707 = vmatpush1.msra.mxu0 %v87
    %708 = vmatprep.subr.mxu0 0.0
    %709 = vmatpush1.msra.mxu0 %v88
    %710 = vmatprep.subr.mxu0 0.0
    %711 = vmatpush1.msra.mxu0 %v89
    %712 = vmatprep.subr.mxu0 0.0
    %713 = vmatpush1.msra.mxu0 %v90
    %714 = vmatprep.subr.mxu0 0.0
    %715 = vmatpush1.msra.mxu0 %v91
    %716 = vmatprep.subr.mxu0 0.0
    %717 = vmatpush1.msra.mxu0 %v92
    %718 = vmatprep.subr.mxu0 0.0
    %719 = vmatpush1.msra.mxu0 %v93
    %720 = vmatprep.subr.mxu0 0.0
    %721 = vmatpush1.msra.mxu0 %v94
    %722 = vmatprep.subr.mxu0 0.0
    %723 = vmatpush1.msra.mxu0 %v95
    %724 = vmatprep.subr.mxu0 0.0
    %725 = vmatpush1.msra.mxu0 %v96
    %726 = vmatprep.subr.mxu0 0.0
    %727 = vmatpush1.msra.mxu0 %v97
    %728 = vmatprep.subr.mxu0 0.0
    %729 = vmatpush1.msra.mxu0 %v98
    %730 = vmatprep.subr.mxu0 0.0
    %731 = vmatpush1.msra.mxu0 %v99
    %732 = vmatprep.subr.mxu0 0.0
    %733 = vmatpush1.msra.mxu0 %v100
    %734 = vmatprep.subr.mxu0 0.0
    %735 = vmatpush1.msra.mxu0 %v101
    %736 = vmatprep.subr.mxu0 0.0
    %737 = vmatpush1.msra.mxu0 %v102
    %738 = vmatprep.subr.mxu0 0.0
    %739 = vmatpush1.msra.mxu0 %v103
    %740 = vmatprep.subr.mxu0 0.0
    %741 = vmatpush1.msra.mxu0 %v104
    %742 = vmatprep.subr.mxu0 0.0
    %743 = vmatpush1.msra.mxu0 %v105
    %744 = vmatprep.subr.mxu0 0.0
    %745 = vmatpush1.msra.mxu0 %v106
    %746 = vmatprep.subr.mxu0 0.0
    %747 = vmatpush1.msra.mxu0 %v107
    %748 = vmatprep.subr.mxu0 0.0
    %749 = vmatpush1.msra.mxu0 %v108
    %750 = vmatprep.subr.mxu0 0.0
    %751 = vmatpush1.msra.mxu0 %v109
    %752 = vmatprep.subr.mxu0 0.0
    %753 = vmatpush1.msra.mxu0 %v110
    %754 = vmatprep.subr.mxu0 0.0
    %755 = vmatpush1.msra.mxu0 %v111
    %756 = vmatprep.subr.mxu0 0.0
    %757 = vmatpush1.msra.mxu0 %v112
    %758 = vmatprep.subr.mxu0 0.0
    %759 = vmatpush1.msra.mxu0 %v113
    %760 = vmatprep.subr.mxu0 0.0
    %761 = vmatpush1.msra.mxu0 %v114
    %762 = vmatprep.subr.mxu0 0.0
    %763 = vmatpush1.msra.mxu0 %v115
    %764 = vmatprep.subr.mxu0 0.0
    %765 = vmatpush1.msra.mxu0 %v116
    %766 = vmatprep.subr.mxu0 0.0
    %767 = vmatpush1.msra.mxu0 %v117
    %768 = vmatprep.mubr.f32.mxu0 %v460
    %769 = vmatmul.mubr.f32.gmra.mrb[0].mxu0 %v452
    %v770 = vpop.f32.mrb[0].mxu0
    %v771 = vadd.f32 %v701, %v770
    %v772 = vpop.f32.mrb[0].mxu0
    %773 = vdwg.mxu0
    %774 = vmatprep.subr.mxu0 0.0
    %775 = vmatpush1.msra.mxu0 %v118
    %776 = vmatprep.subr.mxu0 0.0
    %777 = vmatpush1.msra.mxu0 %v119
    %778 = vmatprep.subr.mxu0 0.0
    %779 = vmatpush1.msra.mxu0 %v120
    %780 = vmatprep.subr.mxu0 0.0
    %781 = vmatpush1.msra.mxu0 %v121
    %782 = vmatprep.subr.mxu0 0.0
    %783 = vmatpush1.msra.mxu0 %v122
    %784 = vmatprep.subr.mxu0 0.0
    %785 = vmatpush1.msra.mxu0 %v123
    %786 = vmatprep.subr.mxu0 0.0
    %787 = vmatpush1.msra.mxu0 %v124
    %788 = vmatprep.subr.mxu0 0.0
    %789 = vmatpush1.msra.mxu0 %v125
    %790 = vmatprep.subr.mxu0 0.0
    %791 = vmatpush1.msra.mxu0 %v126
    %792 = vmatprep.subr.mxu0 0.0
    %793 = vmatpush1.msra.mxu0 %v127
    %794 = vmatprep.subr.mxu0 0.0
    %795 = vmatpush1.msra.mxu0 %v128
    %796 = vmatprep.subr.mxu0 0.0
    %797 = vmatpush1.msra.mxu0 %v129
    %798 = vmatprep.subr.mxu0 0.0
    %799 = vmatpush1.msra.mxu0 %v130
    %800 = vmatprep.subr.mxu0 0.0
    %801 = vmatpush1.msra.mxu0 %v131
    %802 = vmatprep.subr.mxu0 0.0
    %803 = vmatpush1.msra.mxu0 %v132
    %804 = vmatprep.subr.mxu0 0.0
    %805 = vmatpush1.msra.mxu0 %v133
    %806 = vmatprep.subr.mxu0 0.0
    %807 = vmatpush1.msra.mxu0 %v134
    %808 = vmatprep.subr.mxu0 0.0
    %809 = vmatpush1.msra.mxu0 %v135
    %810 = vmatprep.subr.mxu0 0.0
    %811 = vmatpush1.msra.mxu0 %v136
    %812 = vmatprep.subr.mxu0 0.0
    %813 = vmatpush1.msra.mxu0 %v137
    %814 = vmatprep.subr.mxu0 0.0
    %815 = vmatpush1.msra.mxu0 %v138
    %816 = vmatprep.subr.mxu0 0.0
    %817 = vmatpush1.msra.mxu0 %v139
    %818 = vmatprep.subr.mxu0 0.0
    %819 = vmatpush1.msra.mxu0 %v140
    %820 = vmatprep.subr.mxu0 0.0
    %821 = vmatpush1.msra.mxu0 %v141
    %822 = vmatprep.subr.mxu0 0.0
    %823 = vmatpush1.msra.mxu0 %v142
    %824 = vmatprep.subr.mxu0 0.0
    %825 = vmatpush1.msra.mxu0 %v143
    %826 = vmatprep.subr.mxu0 0.0
    %827 = vmatpush1.msra.mxu0 %v144
    %828 = vmatprep.subr.mxu0 0.0
    %829 = vmatpush1.msra.mxu0 %v145
    %830 = vmatprep.subr.mxu0 0.0
    %831 = vmatpush1.msra.mxu0 %v146
    %832 = vmatprep.subr.mxu0 0.0
    %833 = vmatpush1.msra.mxu0 %v147
    %834 = vmatprep.subr.mxu0 0.0
    %835 = vmatpush1.msra.mxu0 %v148
    %836 = vmatprep.subr.mxu0 0.0
    %837 = vmatpush1.msra.mxu0 %v149
    %838 = vmatprep.mubr.f32.mxu0 %v461
    %839 = vmatmul.mubr.f32.gmra.mrb[0].mxu0 %v459
    %v840 = vpop.f32.mrb[0].mxu0
    %v841 = vadd.f32 %v771, %v840
    %v842 = vpop.f32.mrb[0].mxu0
    %843 = vdwg.mxu0
    %844 = vmatprep.subr.mxu0 0.0
    %845 = vmatpush1.msra.mxu0 %v150
    %846 = vmatprep.subr.mxu0 0.0
    %847 = vmatpush1.msra.mxu0 %v151
    %848 = vmatprep.subr.mxu0 0.0
    %849 = vmatpush1.msra.mxu0 %v152
    %850 = vmatprep.subr.mxu0 0.0
    %851 = vmatpush1.msra.mxu0 %v153
    %852 = vmatprep.subr.mxu0 0.0
    %853 = vmatpush1.msra.mxu0 %v154
    %854 = vmatprep.subr.mxu0 0.0
    %855 = vmatpush1.msra.mxu0 %v155
    %856 = vmatprep.subr.mxu0 0.0
    %857 = vmatpush1.msra.mxu0 %v156
    %858 = vmatprep.subr.mxu0 0.0
    %859 = vmatpush1.msra.mxu0 %v157
    %860 = vmatprep.subr.mxu0 0.0
    %861 = vmatpush1.msra.mxu0 %v158
    %862 = vmatprep.subr.mxu0 0.0
    %863 = vmatpush1.msra.mxu0 %v159
    %864 = vmatprep.subr.mxu0 0.0
    %865 = vmatpush1.msra.mxu0 %v160
    %866 = vmatprep.subr.mxu0 0.0
    %867 = vmatpush1.msra.mxu0 %v161
    %868 = vmatprep.subr.mxu0 0.0
    %869 = vmatpush1.msra.mxu0 %v162
    %870 = vmatprep.subr.mxu0 0.0
    %871 = vmatpush1.msra.mxu0 %v163
    %872 = vmatprep.subr.mxu0 0.0
    %873 = vmatpush1.msra.mxu0 %v164
    %874 = vmatprep.subr.mxu0 0.0
    %875 = vmatpush1.msra.mxu0 %v165
    %876 = vmatprep.subr.mxu0 0.0
    %877 = vmatpush1.msra.mxu0 %v166
    %878 = vmatprep.subr.mxu0 0.0
    %879 = vmatpush1.msra.mxu0 %v167
    %880 = vmatprep.subr.mxu0 0.0
    %881 = vmatpush1.msra.mxu0 %v168
    %882 = vmatprep.subr.mxu0 0.0
    %883 = vmatpush1.msra.mxu0 %v169
    %884 = vmatprep.subr.mxu0 0.0
    %885 = vmatpush1.msra.mxu0 %v170
    %886 = vmatprep.subr.mxu0 0.0
    %887 = vmatpush1.msra.mxu0 %v171
    %888 = vmatprep.subr.mxu0 0.0
    %889 = vmatpush1.msra.mxu0 %v172
    %890 = vmatprep.subr.mxu0 0.0
    %891 = vmatpush1.msra.mxu0 %v173
    %892 = vmatprep.subr.mxu0 0.0
    %893 = vmatpush1.msra.mxu0 %v174
    %894 = vmatprep.subr.mxu0 0.0
    %895 = vmatpush1.msra.mxu0 %v175
    %896 = vmatprep.subr.mxu0 0.0
    %897 = vmatpush1.msra.mxu0 %v176
    %898 = vmatprep.subr.mxu0 0.0
    %899 = vmatpush1.msra.mxu0 %v177
    %900 = vmatprep.subr.mxu0 0.0
    %901 = vmatpush1.msra.mxu0 %v178
    %902 = vmatprep.subr.mxu0 0.0
    %903 = vmatpush1.msra.mxu0 %v179
    %904 = vmatprep.subr.mxu0 0.0
    %905 = vmatpush1.msra.mxu0 %v180
    %906 = vmatprep.subr.mxu0 0.0
    %907 = vmatpush1.msra.mxu0 %v181
    %908 = vmatprep.mubr.f32.mxu0 %v477
    %909 = vmatmul.mubr.f32.gmra.mrb[0].mxu0 %v469
    %v910 = vpop.f32.mrb[0].mxu0
    %v911 = vadd.f32 %v841, %v910
    %v912 = vpop.f32.mrb[0].mxu0
    %913 = vdwg.mxu0
    %914 = vmatprep.subr.mxu0 0.0
    %915 = vmatpush1.msra.mxu0 %v182
    %916 = vmatprep.subr.mxu0 0.0
    %917 = vmatpush1.msra.mxu0 %v183
    %918 = vmatprep.subr.mxu0 0.0
    %919 = vmatpush1.msra.mxu0 %v184
    %920 = vmatprep.subr.mxu0 0.0
    %921 = vmatpush1.msra.mxu0 %v185
    %922 = vmatprep.subr.mxu0 0.0
    %923 = vmatpush1.msra.mxu0 %v186
    %924 = vmatprep.subr.mxu0 0.0
    %925 = vmatpush1.msra.mxu0 %v187
    %926 = vmatprep.subr.mxu0 0.0
    %927 = vmatpush1.msra.mxu0 %v188
    %928 = vmatprep.subr.mxu0 0.0
    %929 = vmatpush1.msra.mxu0 %v189
    %930 = vmatprep.subr.mxu0 0.0
    %931 = vmatpush1.msra.mxu0 %v190
    %932 = vmatprep.subr.mxu0 0.0
    %933 = vmatpush1.msra.mxu0 %v191
    %934 = vmatprep.subr.mxu0 0.0
    %935 = vmatpush1.msra.mxu0 %v192
    %936 = vmatprep.subr.mxu0 0.0
    %937 = vmatpush1.msra.mxu0 %v193
    %938 = vmatprep.subr.mxu0 0.0
    %939 = vmatpush1.msra.mxu0 %v194
    %940 = vmatprep.subr.mxu0 0.0
    %941 = vmatpush1.msra.mxu0 %v195
    %942 = vmatprep.subr.mxu0 0.0
    %943 = vmatpush1.msra.mxu0 %v196
    %944 = vmatprep.subr.mxu0 0.0
    %945 = vmatpush1.msra.mxu0 %v197
    %946 = vmatprep.subr.mxu0 0.0
    %947 = vmatpush1.msra.mxu0 %v198
    %948 = vmatprep.subr.mxu0 0.0
    %949 = vmatpush1.msra.mxu0 %v199
    %950 = vmatprep.subr.mxu0 0.0
    %951 = vmatpush1.msra.mxu0 %v200
    %952 = vmatprep.subr.mxu0 0.0
    %953 = vmatpush1.msra.mxu0 %v201
    %954 = vmatprep.subr.mxu0 0.0
    %955 = vmatpush1.msra.mxu0 %v202
    %956 = vmatprep.subr.mxu0 0.0
    %957 = vmatpush1.msra.mxu0 %v203
    %958 = vmatprep.subr.mxu0 0.0
    %959 = vmatpush1.msra.mxu0 %v204
    %960 = vmatprep.subr.mxu0 0.0
    %961 = vmatpush1.msra.mxu0 %v205
    %962 = vmatprep.subr.mxu0 0.0
    %963 = vmatpush1.msra.mxu0 %v206
    %964 = vmatprep.subr.mxu0 0.0
    %965 = vmatpush1.msra.mxu0 %v207
    %966 = vmatprep.subr.mxu0 0.0
    %967 = vmatpush1.msra.mxu0 %v208
    %968 = vmatprep.subr.mxu0 0.0
    %969 = vmatpush1.msra.mxu0 %v209
    %970 = vmatprep.subr.mxu0 0.0
    %971 = vmatpush1.msra.mxu0 %v210
    %972 = vmatprep.subr.mxu0 0.0
    %973 = vmatpush1.msra.mxu0 %v211
    %974 = vmatprep.subr.mxu0 0.0
    %975 = vmatpush1.msra.mxu0 %v212
    %976 = vmatprep.subr.mxu0 0.0
    %977 = vmatpush1.msra.mxu0 %v213
    %978 = vmatprep.mubr.f32.mxu0 %v478
    %979 = vmatmul.mubr.f32.gmra.mrb[0].mxu0 %v476
    %v980 = vpop.f32.mrb[0].mxu0
    %v981 = vadd.f32 %v911, %v980
    %v982 = vpop.f32.mrb[0].mxu0
    %983 = vdwg.mxu0
    %984 = vmatprep.subr.mxu0 0.0
    %985 = vmatpush1.msra.mxu0 %v214
    %986 = vmatprep.subr.mxu0 0.0
    %987 = vmatpush1.msra.mxu0 %v215
    %988 = vmatprep.subr.mxu0 0.0
    %989 = vmatpush1.msra.mxu0 %v216
    %990 = vmatprep.subr.mxu0 0.0
    %991 = vmatpush1.msra.mxu0 %v217
    %992 = vmatprep.subr.mxu0 0.0
    %993 = vmatpush1.msra.mxu0 %v218
    %994 = vmatprep.subr.mxu0 0.0
    %995 = vmatpush1.msra.mxu0 %v219
    %996 = vmatprep.subr.mxu0 0.0
    %997 = vmatpush1.msra.mxu0 %v220
    %998 = vmatprep.subr.mxu0 0.0
    %999 = vmatpush1.msra.mxu0 %v221
    %1000 = vmatprep.subr.mxu0 0.0
    %1001 = vmatpush1.msra.mxu0 %v222
    %1002 = vmatprep.subr.mxu0 0.0
    %1003 = vmatpush1.msra.mxu0 %v223
    %1004 = vmatprep.subr.mxu0 0.0
    %1005 = vmatpush1.msra.mxu0 %v224
    %1006 = vmatprep.subr.mxu0 0.0
    %1007 = vmatpush1.msra.mxu0 %v225
    %1008 = vmatprep.subr.mxu0 0.0
    %1009 = vmatpush1.msra.mxu0 %v226
    %1010 = vmatprep.subr.mxu0 0.0
    %1011 = vmatpush1.msra.mxu0 %v227
    %1012 = vmatprep.subr.mxu0 0.0
    %1013 = vmatpush1.msra.mxu0 %v228
    %1014 = vmatprep.subr.mxu0 0.0
    %1015 = vmatpush1.msra.mxu0 %v229
    %1016 = vmatprep.subr.mxu0 0.0
    %1017 = vmatpush1.msra.mxu0 %v230
    %1018 = vmatprep.subr.mxu0 0.0
    %1019 = vmatpush1.msra.mxu0 %v231
    %1020 = vmatprep.subr.mxu0 0.0
    %1021 = vmatpush1.msra.mxu0 %v232
    %1022 = vmatprep.subr.mxu0 0.0
    %1023 = vmatpush1.msra.mxu0 %v233
    %1024 = vmatprep.subr.mxu0 0.0
    %1025 = vmatpush1.msra.mxu0 %v234
    %1026 = vmatprep.subr.mxu0 0.0
    %1027 = vmatpush1.msra.mxu0 %v235
    %1028 = vmatprep.subr.mxu0 0.0
    %1029 = vmatpush1.msra.mxu0 %v236
    %1030 = vmatprep.subr.mxu0 0.0
    %1031 = vmatpush1.msra.mxu0 %v237
    %1032 = vmatprep.subr.mxu0 0.0
    %1033 = vmatpush1.msra.mxu0 %v238
    %1034 = vmatprep.subr.mxu0 0.0
    %1035 = vmatpush1.msra.mxu0 %v239
    %1036 = vmatprep.subr.mxu0 0.0
    %1037 = vmatpush1.msra.mxu0 %v240
    %1038 = vmatprep.subr.mxu0 0.0
    %1039 = vmatpush1.msra.mxu0 %v241
    %1040 = vmatprep.subr.mxu0 0.0
    %1041 = vmatpush1.msra.mxu0 %v242
    %1042 = vmatprep.subr.mxu0 0.0
    %1043 = vmatpush1.msra.mxu0 %v243
    %1044 = vmatprep.subr.mxu0 0.0
    %1045 = vmatpush1.msra.mxu0 %v244
    %1046 = vmatprep.subr.mxu0 0.0
    %1047 = vmatpush1.msra.mxu0 %v245
    %1048 = vmatprep.mubr.f32.mxu0 %v494
    %1049 = vmatmul.mubr.f32.gmra.mrb[0].mxu0 %v486
    %v1050 = vpop.f32.mrb[0].mxu0
    %v1051 = vadd.f32 %v981, %v1050
    %v1052 = vpop.f32.mrb[0].mxu0
    %1053 = vdwg.mxu0
    %1054 = vmatprep.subr.mxu0 0.0
    %1055 = vmatpush1.msra.mxu0 %v246
    %1056 = vmatprep.subr.mxu0 0.0
    %1057 = vmatpush1.msra.mxu0 %v247
    %1058 = vmatprep.subr.mxu0 0.0
    %1059 = vmatpush1.msra.mxu0 %v248
    %1060 = vmatprep.subr.mxu0 0.0
    %1061 = vmatpush1.msra.mxu0 %v249
    %1062 = vmatprep.subr.mxu0 0.0
    %1063 = vmatpush1.msra.mxu0 %v250
    %1064 = vmatprep.subr.mxu0 0.0
    %1065 = vmatpush1.msra.mxu0 %v251
    %1066 = vmatprep.subr.mxu0 0.0
    %1067 = vmatpush1.msra.mxu0 %v252
    %1068 = vmatprep.subr.mxu0 0.0
    %1069 = vmatpush1.msra.mxu0 %v253
    %1070 = vmatprep.subr.mxu0 0.0
    %1071 = vmatpush1.msra.mxu0 %v254
    %1072 = vmatprep.subr.mxu0 0.0
    %1073 = vmatpush1.msra.mxu0 %v255
    %1074 = vmatprep.subr.mxu0 0.0
    %1075 = vmatpush1.msra.mxu0 %v256
    %1076 = vmatprep.subr.mxu0 0.0
    %1077 = vmatpush1.msra.mxu0 %v257
    %1078 = vmatprep.subr.mxu0 0.0
    %1079 = vmatpush1.msra.mxu0 %v258
    %1080 = vmatprep.subr.mxu0 0.0
    %1081 = vmatpush1.msra.mxu0 %v259
    %1082 = vmatprep.subr.mxu0 0.0
    %1083 = vmatpush1.msra.mxu0 %v260
    %1084 = vmatprep.subr.mxu0 0.0
    %1085 = vmatpush1.msra.mxu0 %v261
    %1086 = vmatprep.subr.mxu0 0.0
    %1087 = vmatpush1.msra.mxu0 %v262
    %1088 = vmatprep.subr.mxu0 0.0
    %1089 = vmatpush1.msra.mxu0 %v263
    %1090 = vmatprep.subr.mxu0 0.0
    %1091 = vmatpush1.msra.mxu0 %v264
    %1092 = vmatprep.subr.mxu0 0.0
    %1093 = vmatpush1.msra.mxu0 %v265
    %1094 = vmatprep.subr.mxu0 0.0
    %1095 = vmatpush1.msra.mxu0 %v266
    %1096 = vmatprep.subr.mxu0 0.0
    %1097 = vmatpush1.msra.mxu0 %v267
    %1098 = vmatprep.subr.mxu0 0.0
    %1099 = vmatpush1.msra.mxu0 %v268
    %1100 = vmatprep.subr.mxu0 0.0
    %1101 = vmatpush1.msra.mxu0 %v269
    %1102 = vmatprep.subr.mxu0 0.0
    %1103 = vmatpush1.msra.mxu0 %v270
    %1104 = vmatprep.subr.mxu0 0.0
    %1105 = vmatpush1.msra.mxu0 %v271
    %1106 = vmatprep.subr.mxu0 0.0
    %1107 = vmatpush1.msra.mxu0 %v272
    %1108 = vmatprep.subr.mxu0 0.0
    %1109 = vmatpush1.msra.mxu0 %v273
    %1110 = vmatprep.subr.mxu0 0.0
    %1111 = vmatpush1.msra.mxu0 %v274
    %1112 = vmatprep.subr.mxu0 0.0
    %1113 = vmatpush1.msra.mxu0 %v275
    %1114 = vmatprep.subr.mxu0 0.0
    %1115 = vmatpush1.msra.mxu0 %v276
    %1116 = vmatprep.subr.mxu0 0.0
    %1117 = vmatpush1.msra.mxu0 %v277
    %1118 = vmatprep.mubr.f32.mxu0 %v495
    %1119 = vmatmul.mubr.f32.gmra.mrb[0].mxu0 %v493
    %v1120 = vpop.f32.mrb[0].mxu0
    %v1121 = vadd.f32 %v1051, %v1120
    %v1122 = vpop.f32.mrb[0].mxu0
    %1123 = vdwg.mxu0
    %1124 = vmatprep.subr.mxu0 0.0
    %1125 = vmatpush1.msra.mxu0 %v278
    %1126 = vmatprep.subr.mxu0 0.0
    %1127 = vmatpush1.msra.mxu0 %v279
    %1128 = vmatprep.subr.mxu0 0.0
    %1129 = vmatpush1.msra.mxu0 %v280
    %1130 = vmatprep.subr.mxu0 0.0
    %1131 = vmatpush1.msra.mxu0 %v281
    %1132 = vmatprep.subr.mxu0 0.0
    %1133 = vmatpush1.msra.mxu0 %v282
    %1134 = vmatprep.subr.mxu0 0.0
    %1135 = vmatpush1.msra.mxu0 %v283
    %1136 = vmatprep.subr.mxu0 0.0
    %1137 = vmatpush1.msra.mxu0 %v284
    %1138 = vmatprep.subr.mxu0 0.0
    %1139 = vmatpush1.msra.mxu0 %v285
    %1140 = vmatprep.subr.mxu0 0.0
    %1141 = vmatpush1.msra.mxu0 %v286
    %1142 = vmatprep.subr.mxu0 0.0
    %1143 = vmatpush1.msra.mxu0 %v287
    %1144 = vmatprep.subr.mxu0 0.0
    %1145 = vmatpush1.msra.mxu0 %v288
    %1146 = vmatprep.subr.mxu0 0.0
    %1147 = vmatpush1.msra.mxu0 %v289
    %1148 = vmatprep.subr.mxu0 0.0
    %1149 = vmatpush1.msra.mxu0 %v290
    %1150 = vmatprep.subr.mxu0 0.0
    %1151 = vmatpush1.msra.mxu0 %v291
    %1152 = vmatprep.subr.mxu0 0.0
    %1153 = vmatpush1.msra.mxu0 %v292
    %1154 = vmatprep.subr.mxu0 0.0
    %1155 = vmatpush1.msra.mxu0 %v293
    %1156 = vmatprep.subr.mxu0 0.0
    %1157 = vmatpush1.msra.mxu0 %v294
    %1158 = vmatprep.subr.mxu0 0.0
    %1159 = vmatpush1.msra.mxu0 %v295
    %1160 = vmatprep.subr.mxu0 0.0
    %1161 = vmatpush1.msra.mxu0 %v296
    %1162 = vmatprep.subr.mxu0 0.0
    %1163 = vmatpush1.msra.mxu0 %v297
    %1164 = vmatprep.subr.mxu0 0.0
    %1165 = vmatpush1.msra.mxu0 %v298
    %1166 = vmatprep.subr.mxu0 0.0
    %1167 = vmatpush1.msra.mxu0 %v299
    %1168 = vmatprep.subr.mxu0 0.0
    %1169 = vmatpush1.msra.mxu0 %v300
    %1170 = vmatprep.subr.mxu0 0.0
    %1171 = vmatpush1.msra.mxu0 %v301
    %1172 = vmatprep.subr.mxu0 0.0
    %1173 = vmatpush1.msra.mxu0 %v302
    %1174 = vmatprep.subr.mxu0 0.0
    %1175 = vmatpush1.msra.mxu0 %v303
    %1176 = vmatprep.subr.mxu0 0.0
    %1177 = vmatpush1.msra.mxu0 %v304
    %1178 = vmatprep.subr.mxu0 0.0
    %1179 = vmatpush1.msra.mxu0 %v305
    %1180 = vmatprep.subr.mxu0 0.0
    %1181 = vmatpush1.msra.mxu0 %v306
    %1182 = vmatprep.subr.mxu0 0.0
    %1183 = vmatpush1.msra.mxu0 %v307
    %1184 = vmatprep.subr.mxu0 0.0
    %1185 = vmatpush1.msra.mxu0 %v308
    %1186 = vmatprep.subr.mxu0 0.0
    %1187 = vmatpush1.msra.mxu0 %v309
    %1188 = vmatprep.mubr.f32.mxu0 %v511
    %1189 = vmatmul.mubr.f32.gmra.mrb[0].mxu0 %v503
    %v1190 = vpop.f32.mrb[0].mxu0
    %v1191 = vadd.f32 %v1121, %v1190
    %v1192 = vpop.f32.mrb[0].mxu0
    %1193 = vdwg.mxu0
    %1194 = vmatprep.subr.mxu0 0.0
    %1195 = vmatpush1.msra.mxu0 %v310
    %1196 = vmatprep.subr.mxu0 0.0
    %1197 = vmatpush1.msra.mxu0 %v311
    %1198 = vmatprep.subr.mxu0 0.0
    %1199 = vmatpush1.msra.mxu0 %v312
    %1200 = vmatprep.subr.mxu0 0.0
    %1201 = vmatpush1.msra.mxu0 %v313
    %1202 = vmatprep.subr.mxu0 0.0
    %1203 = vmatpush1.msra.mxu0 %v314
    %1204 = vmatprep.subr.mxu0 0.0
    %1205 = vmatpush1.msra.mxu0 %v315
    %1206 = vmatprep.subr.mxu0 0.0
    %1207 = vmatpush1.msra.mxu0 %v316
    %1208 = vmatprep.subr.mxu0 0.0
    %1209 = vmatpush1.msra.mxu0 %v317
    %1210 = vmatprep.subr.mxu0 0.0
    %1211 = vmatpush1.msra.mxu0 %v318
    %1212 = vmatprep.subr.mxu0 0.0
    %1213 = vmatpush1.msra.mxu0 %v319
    %1214 = vmatprep.subr.mxu0 0.0
    %1215 = vmatpush1.msra.mxu0 %v320
    %1216 = vmatprep.subr.mxu0 0.0
    %1217 = vmatpush1.msra.mxu0 %v321
    %1218 = vmatprep.subr.mxu0 0.0
    %1219 = vmatpush1.msra.mxu0 %v322
    %1220 = vmatprep.subr.mxu0 0.0
    %1221 = vmatpush1.msra.mxu0 %v323
    %1222 = vmatprep.subr.mxu0 0.0
    %1223 = vmatpush1.msra.mxu0 %v324
    %1224 = vmatprep.subr.mxu0 0.0
    %1225 = vmatpush1.msra.mxu0 %v325
    %1226 = vmatprep.subr.mxu0 0.0
    %1227 = vmatpush1.msra.mxu0 %v326
    %1228 = vmatprep.subr.mxu0 0.0
    %1229 = vmatpush1.msra.mxu0 %v327
    %1230 = vmatprep.subr.mxu0 0.0
    %1231 = vmatpush1.msra.mxu0 %v328
    %1232 = vmatprep.subr.mxu0 0.0
    %1233 = vmatpush1.msra.mxu0 %v329
    %1234 = vmatprep.subr.mxu0 0.0
    %1235 = vmatpush1.msra.mxu0 %v330
    %1236 = vmatprep.subr.mxu0 0.0
    %1237 = vmatpush1.msra.mxu0 %v331
    %1238 = vmatprep.subr.mxu0 0.0
    %1239 = vmatpush1.msra.mxu0 %v332
    %1240 = vmatprep.subr.mxu0 0.0
    %1241 = vmatpush1.msra.mxu0 %v333
    %1242 = vmatprep.subr.mxu0 0.0
    %1243 = vmatpush1.msra.mxu0 %v334
    %1244 = vmatprep.subr.mxu0 0.0
    %1245 = vmatpush1.msra.mxu0 %v335
    %1246 = vmatprep.subr.mxu0 0.0
    %1247 = vmatpush1.msra.mxu0 %v336
    %1248 = vmatprep.subr.mxu0 0.0
    %1249 = vmatpush1.msra.mxu0 %v337
    %1250 = vmatprep.subr.mxu0 0.0
    %1251 = vmatpush1.msra.mxu0 %v338
    %1252 = vmatprep.subr.mxu0 0.0
    %1253 = vmatpush1.msra.mxu0 %v339
    %1254 = vmatprep.subr.mxu0 0.0
    %1255 = vmatpush1.msra.mxu0 %v340
    %1256 = vmatprep.subr.mxu0 0.0
    %1257 = vmatpush1.msra.mxu0 %v341
    %1258 = vmatprep.mubr.f32.mxu0 %v512
    %1259 = vmatmul.mubr.f32.gmra.mrb[0].mxu0 %v510
    %v1260 = vpop.f32.mrb[0].mxu0
    %v1261 = vadd.f32 %v1191, %v1260
    %v1262 = vpop.f32.mrb[0].mxu0
    %1263 = vdwg.mxu0
    %1264 = vmatprep.subr.mxu0 0.0
    %1265 = vmatpush1.msra.mxu0 %v342
    %1266 = vmatprep.subr.mxu0 0.0
    %1267 = vmatpush1.msra.mxu0 %v343
    %1268 = vmatprep.subr.mxu0 0.0
    %1269 = vmatpush1.msra.mxu0 %v344
    %1270 = vmatprep.subr.mxu0 0.0
    %1271 = vmatpush1.msra.mxu0 %v345
    %1272 = vmatprep.subr.mxu0 0.0
    %1273 = vmatpush1.msra.mxu0 %v346
    %1274 = vmatprep.subr.mxu0 0.0
    %1275 = vmatpush1.msra.mxu0 %v347
    %1276 = vmatprep.subr.mxu0 0.0
    %1277 = vmatpush1.msra.mxu0 %v348
    %1278 = vmatprep.subr.mxu0 0.0
    %1279 = vmatpush1.msra.mxu0 %v349
    %1280 = vmatprep.subr.mxu0 0.0
    %1281 = vmatpush1.msra.mxu0 %v350
    %1282 = vmatprep.subr.mxu0 0.0
    %1283 = vmatpush1.msra.mxu0 %v351
    %1284 = vmatprep.subr.mxu0 0.0
    %1285 = vmatpush1.msra.mxu0 %v352
    %1286 = vmatprep.subr.mxu0 0.0
    %1287 = vmatpush1.msra.mxu0 %v353
    %1288 = vmatprep.subr.mxu0 0.0
    %1289 = vmatpush1.msra.mxu0 %v354
    %1290 = vmatprep.subr.mxu0 0.0
    %1291 = vmatpush1.msra.mxu0 %v355
    %1292 = vmatprep.subr.mxu0 0.0
    %1293 = vmatpush1.msra.mxu0 %v356
    %1294 = vmatprep.subr.mxu0 0.0
    %1295 = vmatpush1.msra.mxu0 %v357
    %1296 = vmatprep.subr.mxu0 0.0
    %1297 = vmatpush1.msra.mxu0 %v358
    %1298 = vmatprep.subr.mxu0 0.0
    %1299 = vmatpush1.msra.mxu0 %v359
    %1300 = vmatprep.subr.mxu0 0.0
    %1301 = vmatpush1.msra.mxu0 %v360
    %1302 = vmatprep.subr.mxu0 0.0
    %1303 = vmatpush1.msra.mxu0 %v361
    %1304 = vmatprep.subr.mxu0 0.0
    %1305 = vmatpush1.msra.mxu0 %v362
    %1306 = vmatprep.subr.mxu0 0.0
    %1307 = vmatpush1.msra.mxu0 %v363
    %1308 = vmatprep.subr.mxu0 0.0
    %1309 = vmatpush1.msra.mxu0 %v364
    %1310 = vmatprep.subr.mxu0 0.0
    %1311 = vmatpush1.msra.mxu0 %v365
    %1312 = vmatprep.subr.mxu0 0.0
    %1313 = vmatpush1.msra.mxu0 %v366
    %1314 = vmatprep.subr.mxu0 0.0
    %1315 = vmatpush1.msra.mxu0 %v367
    %1316 = vmatprep.subr.mxu0 0.0
    %1317 = vmatpush1.msra.mxu0 %v368
    %1318 = vmatprep.subr.mxu0 0.0
    %1319 = vmatpush1.msra.mxu0 %v369
    %1320 = vmatprep.subr.mxu0 0.0
    %1321 = vmatpush1.msra.mxu0 %v370
    %1322 = vmatprep.subr.mxu0 0.0
    %1323 = vmatpush1.msra.mxu0 %v371
    %1324 = vmatprep.subr.mxu0 0.0
    %1325 = vmatpush1.msra.mxu0 %v372
    %1326 = vmatprep.subr.mxu0 0.0
    %1327 = vmatpush1.msra.mxu0 %v373
    %1328 = vmatprep.mubr.f32.mxu0 %v528
    %1329 = vmatmul.mubr.f32.gmra.mrb[0].mxu0 %v520
    %v1330 = vpop.f32.mrb[0].mxu0
    %v1331 = vadd.f32 %v1261, %v1330
    %v1332 = vpop.f32.mrb[0].mxu0
    %1333 = vdwg.mxu0
    %1334 = vmatprep.subr.mxu0 0.0
    %1335 = vmatpush1.msra.mxu0 %v374
    %1336 = vmatprep.subr.mxu0 0.0
    %1337 = vmatpush1.msra.mxu0 %v375
    %1338 = vmatprep.subr.mxu0 0.0
    %1339 = vmatpush1.msra.mxu0 %v376
    %1340 = vmatprep.subr.mxu0 0.0
    %1341 = vmatpush1.msra.mxu0 %v377
    %1342 = vmatprep.subr.mxu0 0.0
    %1343 = vmatpush1.msra.mxu0 %v378
    %1344 = vmatprep.subr.mxu0 0.0
    %1345 = vmatpush1.msra.mxu0 %v379
    %1346 = vmatprep.subr.mxu0 0.0
    %1347 = vmatpush1.msra.mxu0 %v380
    %1348 = vmatprep.subr.mxu0 0.0
    %1349 = vmatpush1.msra.mxu0 %v381
    %1350 = vmatprep.subr.mxu0 0.0
    %1351 = vmatpush1.msra.mxu0 %v382
    %1352 = vmatprep.subr.mxu0 0.0
    %1353 = vmatpush1.msra.mxu0 %v383
    %1354 = vmatprep.subr.mxu0 0.0
    %1355 = vmatpush1.msra.mxu0 %v384
    %1356 = vmatprep.subr.mxu0 0.0
    %1357 = vmatpush1.msra.mxu0 %v385
    %1358 = vmatprep.subr.mxu0 0.0
    %1359 = vmatpush1.msra.mxu0 %v386
    %1360 = vmatprep.subr.mxu0 0.0
    %1361 = vmatpush1.msra.mxu0 %v387
    %1362 = vmatprep.subr.mxu0 0.0
    %1363 = vmatpush1.msra.mxu0 %v388
    %1364 = vmatprep.subr.mxu0 0.0
    %1365 = vmatpush1.msra.mxu0 %v389
    %1366 = vmatprep.subr.mxu0 0.0
    %1367 = vmatpush1.msra.mxu0 %v390
    %1368 = vmatprep.subr.mxu0 0.0
    %1369 = vmatpush1.msra.mxu0 %v391
    %1370 = vmatprep.subr.mxu0 0.0
    %1371 = vmatpush1.msra.mxu0 %v392
    %1372 = vmatprep.subr.mxu0 0.0
    %1373 = vmatpush1.msra.mxu0 %v393
    %1374 = vmatprep.subr.mxu0 0.0
    %1375 = vmatpush1.msra.mxu0 %v394
    %1376 = vmatprep.subr.mxu0 0.0
    %1377 = vmatpush1.msra.mxu0 %v395
    %1378 = vmatprep.subr.mxu0 0.0
    %1379 = vmatpush1.msra.mxu0 %v396
    %1380 = vmatprep.subr.mxu0 0.0
    %1381 = vmatpush1.msra.mxu0 %v397
    %1382 = vmatprep.subr.mxu0 0.0
    %1383 = vmatpush1.msra.mxu0 %v398
    %1384 = vmatprep.subr.mxu0 0.0
    %1385 = vmatpush1.msra.mxu0 %v399
    %1386 = vmatprep.subr.mxu0 0.0
    %1387 = vmatpush1.msra.mxu0 %v400
    %1388 = vmatprep.subr.mxu0 0.0
    %1389 = vmatpush1.msra.mxu0 %v401
    %1390 = vmatprep.subr.mxu0 0.0
    %1391 = vmatpush1.msra.mxu0 %v402
    %1392 = vmatprep.subr.mxu0 0.0
    %1393 = vmatpush1.msra.mxu0 %v403
    %1394 = vmatprep.subr.mxu0 0.0
    %1395 = vmatpush1.msra.mxu0 %v404
    %1396 = vmatprep.subr.mxu0 0.0
    %1397 = vmatpush1.msra.mxu0 %v405
    %1398 = vmatprep.mubr.f32.mxu0 %v529
    %1399 = vmatmul.mubr.f32.gmra.mrb[0].mxu0 %v527
    %v1400 = vpop.f32.mrb[0].mxu0
    %v1401 = vadd.f32 %v1331, %v1400
    %v1402 = vpop.f32.mrb[0].mxu0
    %1403 = vdwg.mxu0
    %1404 = vmatprep.subr.mxu0 0.0
    %1405 = vmatpush1.msra.mxu0 %v406
    %1406 = vmatprep.subr.mxu0 0.0
    %1407 = vmatpush1.msra.mxu0 %v407
    %1408 = vmatprep.subr.mxu0 0.0
    %1409 = vmatpush1.msra.mxu0 %v408
    %1410 = vmatprep.subr.mxu0 0.0
    %1411 = vmatpush1.msra.mxu0 %v409
    %1412 = vmatprep.subr.mxu0 0.0
    %1413 = vmatpush1.msra.mxu0 %v410
    %1414 = vmatprep.subr.mxu0 0.0
    %1415 = vmatpush1.msra.mxu0 %v411
    %1416 = vmatprep.subr.mxu0 0.0
    %1417 = vmatpush1.msra.mxu0 %v412
    %1418 = vmatprep.subr.mxu0 0.0
    %1419 = vmatpush1.msra.mxu0 %v413
    %1420 = vmatprep.subr.mxu0 0.0
    %1421 = vmatpush1.msra.mxu0 0.0
    %1422 = vmatprep.subr.mxu0 0.0
    %1423 = vmatpush1.msra.mxu0 0.0
    %1424 = vmatprep.subr.mxu0 0.0
    %1425 = vmatpush1.msra.mxu0 0.0
    %1426 = vmatprep.subr.mxu0 0.0
    %1427 = vmatpush1.msra.mxu0 0.0
    %1428 = vmatprep.subr.mxu0 0.0
    %1429 = vmatpush1.msra.mxu0 0.0
    %1430 = vmatprep.subr.mxu0 0.0
    %1431 = vmatpush1.msra.mxu0 0.0
    %1432 = vmatprep.subr.mxu0 0.0
    %1433 = vmatpush1.msra.mxu0 0.0
    %1434 = vmatprep.subr.mxu0 0.0
    %1435 = vmatpush1.msra.mxu0 0.0
    %1436 = vmatprep.subr.mxu0 0.0
    %1437 = vmatpush1.msra.mxu0 0.0
    %1438 = vmatprep.subr.mxu0 0.0
    %1439 = vmatpush1.msra.mxu0 0.0
    %1440 = vmatprep.subr.mxu0 0.0
    %1441 = vmatpush1.msra.mxu0 0.0
    %1442 = vmatprep.subr.mxu0 0.0
    %1443 = vmatpush1.msra.mxu0 0.0
    %1444 = vmatprep.subr.mxu0 0.0
    %1445 = vmatpush1.msra.mxu0 0.0
    %1446 = vmatprep.subr.mxu0 0.0
    %1447 = vmatpush1.msra.mxu0 0.0
    %1448 = vmatprep.subr.mxu0 0.0
    %1449 = vmatpush1.msra.mxu0 0.0
    %1450 = vmatprep.subr.mxu0 0.0
    %1451 = vmatpush1.msra.mxu0 0.0
    %1452 = vmatprep.subr.mxu0 0.0
    %1453 = vmatpush1.msra.mxu0 0.0
    %1454 = vmatprep.subr.mxu0 0.0
    %1455 = vmatpush1.msra.mxu0 0.0
    %1456 = vmatprep.subr.mxu0 0.0
    %1457 = vmatpush1.msra.mxu0 0.0
    %1458 = vmatprep.subr.mxu0 0.0
    %1459 = vmatpush1.msra.mxu0 0.0
    %1460 = vmatprep.subr.mxu0 0.0
    %1461 = vmatpush1.msra.mxu0 0.0
    %1462 = vmatprep.subr.mxu0 0.0
    %1463 = vmatpush1.msra.mxu0 0.0
    %1464 = vmatprep.subr.mxu0 0.0
    %1465 = vmatpush1.msra.mxu0 0.0
    %1466 = vmatprep.subr.mxu0 0.0
    %1467 = vmatpush1.msra.mxu0 0.0
    %1468 = vmatprep.mubr.f32.mxu0 0.0
    %1469 = vmatmul.mubr.f32.gmra.mrb[0].mxu0 %v562
    %v1470 = vpop.f32.mrb[0].mxu0
    %v1471 = vadd.f32 %v1401, %v1470
    %v1472 = vpop.f32.mrb[0].mxu0
    %1473 = vdwg.mxu0
    %1474 = vst [vmem:[#allocation2] sm:$0x3] %v1471
    // Predicated region
    $region14: #{net_forward.5} parent=1 // pred_check
      _
    $region15: #{net_forward.5} parent=1 // pred_check_branch
      %1476 = sbr.rel (0) target = $region17
    $region16: #{net_forward.5} parent=1 // pred_region
      %s1478 = ssub.s32 32, 32
      %1479 = vsyncadd [#allocation3], %s1478
      %s1481 = sshll.u32 [#allocation2], 4
      %s1482 = int_to_ptr.vmem [resolvable:$true] %s1481
      %1484 = dma.vmem_to_hbm [thread:$0]  %s1482, 32, %s3, [#allocation3]
    $region17: #{net_forward.5} parent=1 // pred_fallthru
      _
    // Predicated region
    $region18: #{net_forward.5} parent=1 // pred_check
      _
    $region19: #{net_forward.5} parent=1 // pred_check_branch
      %1486 = sbr.rel (0) target = $region21
    $region20: #{net_forward.5} parent=1 // pred_region
      %1487 = dma.done [#allocation3], 32
    $region21: #{net_forward.5} parent=1 // pred_fallthru
      _
    %1488 = vsyncpa [#allocation3], 1

</llo_original>
